<compile_context>
chip_gen: v7x
topology: tpu7x:2x2x1
jax: 0.10.0
libtpu: 0.0.40
codegen_flags: <defaults>
</compile_context>

<pallas_src>
import functools

import jax
import jax.numpy as jnp
from jax.experimental import pallas as pl
from jax.experimental.pallas import tpu as pltpu

beta = 0.8
num_hidden = 1500
num_inputs = 28 * 28
num_outputs = 10
num_steps = 25
threshold = 1.3

# Padded, MXU / lane friendly sizes.
K_PAD = 896    # 784  -> 7 * 128
H_PAD = 1536   # 1500 -> 12 * 128
O_PAD = 128    # 10   -> 1 * 128


def _snn_kernel(x_ref, w1_ref, b1_ref, w2_ref, b2_ref, out_ref, spk1_ref, *,
                matmul_dtype):
    """Whole forward pass in one kernel invocation.

    x_ref:   (B, K_PAD)          matmul_dtype  VMEM
    w1_ref:  (K_PAD, H_PAD)      matmul_dtype  VMEM  (fc1 weight, (in, out))
    b1_ref:  (1, H_PAD)          f32           VMEM
    w2_ref:  (H_PAD, O_PAD)      matmul_dtype  VMEM  (fc2 weight, (in, out))
    b2_ref:  (1, O_PAD)          f32           VMEM
    out_ref: (num_steps*B, O_PAD) f32          VMEM  (spk2 record; staged cur2 first)
    spk1_ref:(num_steps*B, H_PAD) f32          VMEM scratch (spk1 record)
    """
    B = x_ref.shape[0]

    # ---- fc1: computed once, x does not change across time steps (f32 accumulation).
    cur1 = jnp.dot(x_ref[...], w1_ref[...],
                   preferred_element_type=jnp.float32) + b1_ref[...]

    # ---- phase 1: lif1 recurrence; record spk1 for every step into VMEM scratch.
    # Static unroll: each store offset t*B is a static multiple of 8 -> aligned,
    # unmasked (8,128)-tile stores; spk1 never stays live in vregs.
    mem1 = jnp.zeros((B, H_PAD), jnp.float32)
    for t in range(num_steps):
        # reset='zero' fused:  mem_new = where(mem_prev > thr, 0, beta*mem_prev + cur)
        mem1 = jnp.where(mem1 > threshold, 0.0, beta * mem1 + cur1)
        spk1_ref[t * B:(t + 1) * B, :] = (mem1 > threshold).astype(jnp.float32)

    # ---- phase 2: ONE fc2 matmul over all steps (M = num_steps*B), staged into out_ref.
    spk1_all = spk1_ref[...].astype(matmul_dtype)   # 0/1 values: lossless cast
    out_ref[...] = jnp.dot(spk1_all, w2_ref[...],
                           preferred_element_type=jnp.float32) + b2_ref[...]

    # ---- phase 3: lif2 recurrence on tiny (B, O_PAD) slices; overwrite cur2 with spk2.
    mem2 = jnp.zeros((B, O_PAD), jnp.float32)
    for t in range(num_steps):
        cur2 = out_ref[t * B:(t + 1) * B, :]
        mem2 = jnp.where(mem2 > threshold, 0.0, beta * mem2 + cur2)
        out_ref[t * B:(t + 1) * B, :] = (mem2 > threshold).astype(jnp.float32)


@functools.partial(jax.jit, static_argnames=("matmul_dtype",))
def snn_forward(x_nchw, w1, b1, w2, b2, matmul_dtype=jnp.bfloat16):
    """x_nchw: (B, 1, 28, 28) f32.  Weights stored as (in, out).

    Returns (num_steps, B, num_outputs) f32 spike record.
    """
    B = x_nchw.shape[0]
    x_flat = x_nchw.reshape(B, -1).astype(jnp.float32)   # flatten(1)

    # Zero-pad to MXU/lane friendly shapes (padded rows/cols/lanes contribute exactly 0
    # and padded units never cross threshold), then cast matmul operands.
    x_p = jnp.zeros((B, K_PAD), jnp.float32).at[:, :num_inputs].set(x_flat)
    w1_p = jnp.zeros((K_PAD, H_PAD), jnp.float32).at[:num_inputs, :num_hidden].set(w1)
    b1_p = jnp.zeros((1, H_PAD), jnp.float32).at[:, :num_hidden].set(b1)
    w2_p = jnp.zeros((H_PAD, O_PAD), jnp.float32).at[:num_hidden, :num_outputs].set(w2)
    b2_p = jnp.zeros((1, O_PAD), jnp.float32).at[:, :num_outputs].set(b2)

    x_p = x_p.astype(matmul_dtype)
    w1_p = w1_p.astype(matmul_dtype)
    w2_p = w2_p.astype(matmul_dtype)

    kernel = functools.partial(_snn_kernel, matmul_dtype=matmul_dtype)

    out = pl.pallas_call(
        kernel,
        out_shape=jax.ShapeDtypeStruct((num_steps * B, O_PAD), jnp.float32),
        in_specs=[pl.BlockSpec(memory_space=pltpu.MemorySpace.VMEM)] * 5,
        out_specs=pl.BlockSpec(memory_space=pltpu.MemorySpace.VMEM),
        scratch_shapes=[pltpu.VMEM((num_steps * B, H_PAD), jnp.float32)],
    )(x_p, w1_p, b1_p, w2_p, b2_p)

    # (T*B, O_PAD) -> (T, B, O_PAD) -> drop padded output lanes.
    return out.reshape(num_steps, B, O_PAD)[:, :, :num_outputs]


def _reference_forward(x_nchw, w1, b1, w2, b2, matmul_dtype=jnp.float32):
    """Pure-JAX reference mirroring the PyTorch/snnTorch forward.

    With matmul_dtype=f32 it is the exact module semantics; with bf16 it applies the
    same operand casts as the kernel (f32 accumulation) for apples-to-apples checks.
    """
    B = x_nchw.shape[0]
    x = x_nchw.reshape(B, -1).astype(jnp.float32).astype(matmul_dtype)
    w1c = w1.astype(matmul_dtype)
    w2c = w2.astype(matmul_dtype)
    cur1 = jnp.dot(x, w1c, preferred_element_type=jnp.float32) + b1
    mem1 = jnp.zeros((B, num_hidden), jnp.float32)
    mem2 = jnp.zeros((B, num_outputs), jnp.float32)
    rec = []
    for _ in range(num_steps):
        r1 = (mem1 > threshold).astype(jnp.float32)
        mem1 = (beta * mem1 + cur1) * (1.0 - r1)
        spk1 = (mem1 > threshold).astype(jnp.float32)
        cur2 = jnp.dot(spk1.astype(matmul_dtype), w2c,
                       preferred_element_type=jnp.float32) + b2
        r2 = (mem2 > threshold).astype(jnp.float32)
        mem2 = (beta * mem2 + cur2) * (1.0 - r2)
        spk2 = (mem2 > threshold).astype(jnp.float32)
        rec.append(spk2)
    return jnp.stack(rec, axis=0)


if __name__ == "__main__":
    key = jax.random.PRNGKey(0)
    k_x, k_w1, k_b1, k_w2, k_b2 = jax.random.split(key, 5)

    batch = 8

    # Deterministic parameter init (nn.Linear-style uniform bounds).
    bound1 = 1.0 / (num_inputs ** 0.5)
    bound2 = 1.0 / (num_hidden ** 0.5)
    # Weights stored as (in, out) == transpose of PyTorch's (out, in).
    w1 = jax.random.uniform(k_w1, (num_inputs, num_hidden), jnp.float32,
                            -bound1, bound1)
    b1 = jax.random.uniform(k_b1, (1, num_hidden), jnp.float32, -bound1, bound1)
    w2 = jax.random.uniform(k_w2, (num_hidden, num_outputs), jnp.float32,
                            -bound2, bound2)
    b2 = jax.random.uniform(k_b2, (1, num_outputs), jnp.float32, -bound2, bound2)

    # Input like a batch of MNIST images, NCHW.
    x = jax.random.uniform(k_x, (batch, 1, 28, 28), jnp.float32)

    # --- exactness check: f32 matmul path must reproduce the module semantics bit-for-spike.
    ref_f32 = jax.block_until_ready(_reference_forward(x, w1, b1, w2, b2))
    out_f32 = jax.block_until_ready(
        snn_forward(x, w1, b1, w2, b2, matmul_dtype=jnp.float32))
    assert out_f32.shape == (num_steps, batch, num_outputs), out_f32.shape
    assert jnp.allclose(out_f32, ref_f32, atol=1e-5), "f32 kernel mismatch vs reference"

    # --- default (bf16 matmul operands, f32 accumulation) path: compare against a
    # reference that applies the same operand casts; spikes may flip only where a
    # membrane potential sits within matmul-rounding of the threshold.
    out_bf16 = jax.block_until_ready(snn_forward(x, w1, b1, w2, b2))
    ref_bf16 = jax.block_until_ready(
        _reference_forward(x, w1, b1, w2, b2, matmul_dtype=jnp.bfloat16))
    assert out_bf16.shape == (num_steps, batch, num_outputs), out_bf16.shape
    mismatch = float(jnp.mean(jnp.abs(out_bf16 - ref_bf16) > 0.5))
    assert mismatch <= 0.02, f"bf16 spike disagreement too high: {mismatch}"

    print("KERNEL_OK")
</pallas_src>

<mosaic_0001>
module attributes {stable_mosaic.version = 11 : i64} {
  func.func @_snn_kernel(%arg0: memref<8x896xf32, #tpu.memory_space<vmem>>, %arg1: memref<896x1536xf32, #tpu.memory_space<vmem>>, %arg2: memref<1x1536xf32, #tpu.memory_space<vmem>>, %arg3: memref<1536x128xf32, #tpu.memory_space<vmem>>, %arg4: memref<1x128xf32, #tpu.memory_space<vmem>>, %arg5: memref<200x128xf32, #tpu.memory_space<vmem>>, %arg6: memref<200x1536xf32, #tpu.memory_space<vmem>>) attributes {dimension_semantics = [], scalar_prefetch = 0 : i64, scratch_operands = 1 : i64, tpu.core_type = #tpu.core_type<tc>} {
    %c0 = arith.constant 0 : index
    %c0_0 = arith.constant 0 : index
    %0 = vector.load %arg0[%c0, %c0_0] : memref<8x896xf32, #tpu.memory_space<vmem>>, vector<8x896xf32>
    %c0_1 = arith.constant 0 : index
    %c0_2 = arith.constant 0 : index
    %1 = vector.load %arg1[%c0_1, %c0_2] : memref<896x1536xf32, #tpu.memory_space<vmem>>, vector<896x1536xf32>
    %cst = arith.constant dense<0.000000e+00> : vector<8x1536xf32>
    %2 = tpu.matmul %0, %1, %cst {dimension_numbers = #tpu.dot_dimension_numbers<[1], [0], [0], [1], [0, 0, 1, 1], [], []>} : vector<8x896xf32>, vector<896x1536xf32>, vector<8x1536xf32> -> vector<8x1536xf32>
    %c0_3 = arith.constant 0 : index
    %c0_4 = arith.constant 0 : index
    %3 = vector.load %arg2[%c0_3, %c0_4] : memref<1x1536xf32, #tpu.memory_space<vmem>>, vector<1x1536xf32>
    %4 = vector.broadcast %3 : vector<1x1536xf32> to vector<8x1536xf32>
    %5 = arith.addf %2, %4 : vector<8x1536xf32>
    %cst_5 = arith.constant 0.000000e+00 : f32
    %6 = vector.broadcast %cst_5 : f32 to vector<8x1536xf32>
    %cst_6 = arith.constant 1.300000e+00 : f32
    %7 = vector.broadcast %cst_6 : f32 to vector<8x1536xf32>
    %8 = arith.cmpf ogt, %6, %7 : vector<8x1536xf32>
    %cst_7 = arith.constant 8.000000e-01 : f32
    %9 = vector.broadcast %cst_7 : f32 to vector<8x1536xf32>
    %10 = arith.mulf %9, %6 : vector<8x1536xf32>
    %11 = arith.addf %10, %5 : vector<8x1536xf32>
    %cst_8 = arith.constant 0.000000e+00 : f32
    %12 = vector.broadcast %cst_8 : f32 to vector<8x1536xf32>
    %13 = arith.select %8, %12, %11 : vector<8x1536xi1>, vector<8x1536xf32>
    %cst_9 = arith.constant 1.300000e+00 : f32
    %14 = vector.broadcast %cst_9 : f32 to vector<8x1536xf32>
    %15 = arith.cmpf ogt, %13, %14 : vector<8x1536xf32>
    %16 = arith.extui %15 : vector<8x1536xi1> to vector<8x1536xi32>
    %17 = arith.sitofp %16 : vector<8x1536xi32> to vector<8x1536xf32>
    %c0_10 = arith.constant 0 : index
    %c0_11 = arith.constant 0 : index
    %18 = vector.load %arg6[%c0_10, %c0_11] : memref<200x1536xf32, #tpu.memory_space<vmem>>, vector<8x1536xf32>
    tpu.vector_store %arg6[%c0_10, %c0_11], %17 {strides = array<i32>} : memref<200x1536xf32, #tpu.memory_space<vmem>>, vector<8x1536xf32>,
    %cst_12 = arith.constant 1.300000e+00 : f32
    %19 = vector.broadcast %cst_12 : f32 to vector<8x1536xf32>
    %20 = arith.cmpf ogt, %13, %19 : vector<8x1536xf32>
    %cst_13 = arith.constant 8.000000e-01 : f32
    %21 = vector.broadcast %cst_13 : f32 to vector<8x1536xf32>
    %22 = arith.mulf %21, %13 : vector<8x1536xf32>
    %23 = arith.addf %22, %5 : vector<8x1536xf32>
    %cst_14 = arith.constant 0.000000e+00 : f32
    %24 = vector.broadcast %cst_14 : f32 to vector<8x1536xf32>
    %25 = arith.select %20, %24, %23 : vector<8x1536xi1>, vector<8x1536xf32>
    %cst_15 = arith.constant 1.300000e+00 : f32
    %26 = vector.broadcast %cst_15 : f32 to vector<8x1536xf32>
    %27 = arith.cmpf ogt, %25, %26 : vector<8x1536xf32>
    %28 = arith.extui %27 : vector<8x1536xi1> to vector<8x1536xi32>
    %29 = arith.sitofp %28 : vector<8x1536xi32> to vector<8x1536xf32>
    %c8 = arith.constant 8 : index
    %c0_16 = arith.constant 0 : index
    %30 = vector.load %arg6[%c8, %c0_16] : memref<200x1536xf32, #tpu.memory_space<vmem>>, vector<8x1536xf32>
    tpu.vector_store %arg6[%c8, %c0_16], %29 {strides = array<i32>} : memref<200x1536xf32, #tpu.memory_space<vmem>>, vector<8x1536xf32>,
    %cst_17 = arith.constant 1.300000e+00 : f32
    %31 = vector.broadcast %cst_17 : f32 to vector<8x1536xf32>
    %32 = arith.cmpf ogt, %25, %31 : vector<8x1536xf32>
    %cst_18 = arith.constant 8.000000e-01 : f32
    %33 = vector.broadcast %cst_18 : f32 to vector<8x1536xf32>
    %34 = arith.mulf %33, %25 : vector<8x1536xf32>
    %35 = arith.addf %34, %5 : vector<8x1536xf32>
    %cst_19 = arith.constant 0.000000e+00 : f32
    %36 = vector.broadcast %cst_19 : f32 to vector<8x1536xf32>
    %37 = arith.select %32, %36, %35 : vector<8x1536xi1>, vector<8x1536xf32>
    %cst_20 = arith.constant 1.300000e+00 : f32
    %38 = vector.broadcast %cst_20 : f32 to vector<8x1536xf32>
    %39 = arith.cmpf ogt, %37, %38 : vector<8x1536xf32>
    %40 = arith.extui %39 : vector<8x1536xi1> to vector<8x1536xi32>
    %41 = arith.sitofp %40 : vector<8x1536xi32> to vector<8x1536xf32>
    %c16 = arith.constant 16 : index
    %c0_21 = arith.constant 0 : index
    %42 = vector.load %arg6[%c16, %c0_21] : memref<200x1536xf32, #tpu.memory_space<vmem>>, vector<8x1536xf32>
    tpu.vector_store %arg6[%c16, %c0_21], %41 {strides = array<i32>} : memref<200x1536xf32, #tpu.memory_space<vmem>>, vector<8x1536xf32>,
    %cst_22 = arith.constant 1.300000e+00 : f32
    %43 = vector.broadcast %cst_22 : f32 to vector<8x1536xf32>
    %44 = arith.cmpf ogt, %37, %43 : vector<8x1536xf32>
    %cst_23 = arith.constant 8.000000e-01 : f32
    %45 = vector.broadcast %cst_23 : f32 to vector<8x1536xf32>
    %46 = arith.mulf %45, %37 : vector<8x1536xf32>
    %47 = arith.addf %46, %5 : vector<8x1536xf32>
    %cst_24 = arith.constant 0.000000e+00 : f32
    %48 = vector.broadcast %cst_24 : f32 to vector<8x1536xf32>
    %49 = arith.select %44, %48, %47 : vector<8x1536xi1>, vector<8x1536xf32>
    %cst_25 = arith.constant 1.300000e+00 : f32
    %50 = vector.broadcast %cst_25 : f32 to vector<8x1536xf32>
    %51 = arith.cmpf ogt, %49, %50 : vector<8x1536xf32>
    %52 = arith.extui %51 : vector<8x1536xi1> to vector<8x1536xi32>
    %53 = arith.sitofp %52 : vector<8x1536xi32> to vector<8x1536xf32>
    %c24 = arith.constant 24 : index
    %c0_26 = arith.constant 0 : index
    %54 = vector.load %arg6[%c24, %c0_26] : memref<200x1536xf32, #tpu.memory_space<vmem>>, vector<8x1536xf32>
    tpu.vector_store %arg6[%c24, %c0_26], %53 {strides = array<i32>} : memref<200x1536xf32, #tpu.memory_space<vmem>>, vector<8x1536xf32>,
    %cst_27 = arith.constant 1.300000e+00 : f32
    %55 = vector.broadcast %cst_27 : f32 to vector<8x1536xf32>
    %56 = arith.cmpf ogt, %49, %55 : vector<8x1536xf32>
    %cst_28 = arith.constant 8.000000e-01 : f32
    %57 = vector.broadcast %cst_28 : f32 to vector<8x1536xf32>
    %58 = arith.mulf %57, %49 : vector<8x1536xf32>
    %59 = arith.addf %58, %5 : vector<8x1536xf32>
    %cst_29 = arith.constant 0.000000e+00 : f32
    %60 = vector.broadcast %cst_29 : f32 to vector<8x1536xf32>
    %61 = arith.select %56, %60, %59 : vector<8x1536xi1>, vector<8x1536xf32>
    %cst_30 = arith.constant 1.300000e+00 : f32
    %62 = vector.broadcast %cst_30 : f32 to vector<8x1536xf32>
    %63 = arith.cmpf ogt, %61, %62 : vector<8x1536xf32>
    %64 = arith.extui %63 : vector<8x1536xi1> to vector<8x1536xi32>
    %65 = arith.sitofp %64 : vector<8x1536xi32> to vector<8x1536xf32>
    %c32 = arith.constant 32 : index
    %c0_31 = arith.constant 0 : index
    %66 = vector.load %arg6[%c32, %c0_31] : memref<200x1536xf32, #tpu.memory_space<vmem>>, vector<8x1536xf32>
    tpu.vector_store %arg6[%c32, %c0_31], %65 {strides = array<i32>} : memref<200x1536xf32, #tpu.memory_space<vmem>>, vector<8x1536xf32>,
    %cst_32 = arith.constant 1.300000e+00 : f32
    %67 = vector.broadcast %cst_32 : f32 to vector<8x1536xf32>
    %68 = arith.cmpf ogt, %61, %67 : vector<8x1536xf32>
    %cst_33 = arith.constant 8.000000e-01 : f32
    %69 = vector.broadcast %cst_33 : f32 to vector<8x1536xf32>
    %70 = arith.mulf %69, %61 : vector<8x1536xf32>
    %71 = arith.addf %70, %5 : vector<8x1536xf32>
    %cst_34 = arith.constant 0.000000e+00 : f32
    %72 = vector.broadcast %cst_34 : f32 to vector<8x1536xf32>
    %73 = arith.select %68, %72, %71 : vector<8x1536xi1>, vector<8x1536xf32>
    %cst_35 = arith.constant 1.300000e+00 : f32
    %74 = vector.broadcast %cst_35 : f32 to vector<8x1536xf32>
    %75 = arith.cmpf ogt, %73, %74 : vector<8x1536xf32>
    %76 = arith.extui %75 : vector<8x1536xi1> to vector<8x1536xi32>
    %77 = arith.sitofp %76 : vector<8x1536xi32> to vector<8x1536xf32>
    %c40 = arith.constant 40 : index
    %c0_36 = arith.constant 0 : index
    %78 = vector.load %arg6[%c40, %c0_36] : memref<200x1536xf32, #tpu.memory_space<vmem>>, vector<8x1536xf32>
    tpu.vector_store %arg6[%c40, %c0_36], %77 {strides = array<i32>} : memref<200x1536xf32, #tpu.memory_space<vmem>>, vector<8x1536xf32>,
    %cst_37 = arith.constant 1.300000e+00 : f32
    %79 = vector.broadcast %cst_37 : f32 to vector<8x1536xf32>
    %80 = arith.cmpf ogt, %73, %79 : vector<8x1536xf32>
    %cst_38 = arith.constant 8.000000e-01 : f32
    %81 = vector.broadcast %cst_38 : f32 to vector<8x1536xf32>
    %82 = arith.mulf %81, %73 : vector<8x1536xf32>
    %83 = arith.addf %82, %5 : vector<8x1536xf32>
    %cst_39 = arith.constant 0.000000e+00 : f32
    %84 = vector.broadcast %cst_39 : f32 to vector<8x1536xf32>
    %85 = arith.select %80, %84, %83 : vector<8x1536xi1>, vector<8x1536xf32>
    %cst_40 = arith.constant 1.300000e+00 : f32
    %86 = vector.broadcast %cst_40 : f32 to vector<8x1536xf32>
    %87 = arith.cmpf ogt, %85, %86 : vector<8x1536xf32>
    %88 = arith.extui %87 : vector<8x1536xi1> to vector<8x1536xi32>
    %89 = arith.sitofp %88 : vector<8x1536xi32> to vector<8x1536xf32>
    %c48 = arith.constant 48 : index
    %c0_41 = arith.constant 0 : index
    %90 = vector.load %arg6[%c48, %c0_41] : memref<200x1536xf32, #tpu.memory_space<vmem>>, vector<8x1536xf32>
    tpu.vector_store %arg6[%c48, %c0_41], %89 {strides = array<i32>} : memref<200x1536xf32, #tpu.memory_space<vmem>>, vector<8x1536xf32>,
    %cst_42 = arith.constant 1.300000e+00 : f32
    %91 = vector.broadcast %cst_42 : f32 to vector<8x1536xf32>
    %92 = arith.cmpf ogt, %85, %91 : vector<8x1536xf32>
    %cst_43 = arith.constant 8.000000e-01 : f32
    %93 = vector.broadcast %cst_43 : f32 to vector<8x1536xf32>
    %94 = arith.mulf %93, %85 : vector<8x1536xf32>
    %95 = arith.addf %94, %5 : vector<8x1536xf32>
    %cst_44 = arith.constant 0.000000e+00 : f32
    %96 = vector.broadcast %cst_44 : f32 to vector<8x1536xf32>
    %97 = arith.select %92, %96, %95 : vector<8x1536xi1>, vector<8x1536xf32>
    %cst_45 = arith.constant 1.300000e+00 : f32
    %98 = vector.broadcast %cst_45 : f32 to vector<8x1536xf32>
    %99 = arith.cmpf ogt, %97, %98 : vector<8x1536xf32>
    %100 = arith.extui %99 : vector<8x1536xi1> to vector<8x1536xi32>
    %101 = arith.sitofp %100 : vector<8x1536xi32> to vector<8x1536xf32>
    %c56 = arith.constant 56 : index
    %c0_46 = arith.constant 0 : index
    %102 = vector.load %arg6[%c56, %c0_46] : memref<200x1536xf32, #tpu.memory_space<vmem>>, vector<8x1536xf32>
    tpu.vector_store %arg6[%c56, %c0_46], %101 {strides = array<i32>} : memref<200x1536xf32, #tpu.memory_space<vmem>>, vector<8x1536xf32>,
    %cst_47 = arith.constant 1.300000e+00 : f32
    %103 = vector.broadcast %cst_47 : f32 to vector<8x1536xf32>
    %104 = arith.cmpf ogt, %97, %103 : vector<8x1536xf32>
    %cst_48 = arith.constant 8.000000e-01 : f32
    %105 = vector.broadcast %cst_48 : f32 to vector<8x1536xf32>
    %106 = arith.mulf %105, %97 : vector<8x1536xf32>
    %107 = arith.addf %106, %5 : vector<8x1536xf32>
    %cst_49 = arith.constant 0.000000e+00 : f32
    %108 = vector.broadcast %cst_49 : f32 to vector<8x1536xf32>
    %109 = arith.select %104, %108, %107 : vector<8x1536xi1>, vector<8x1536xf32>
    %cst_50 = arith.constant 1.300000e+00 : f32
    %110 = vector.broadcast %cst_50 : f32 to vector<8x1536xf32>
    %111 = arith.cmpf ogt, %109, %110 : vector<8x1536xf32>
    %112 = arith.extui %111 : vector<8x1536xi1> to vector<8x1536xi32>
    %113 = arith.sitofp %112 : vector<8x1536xi32> to vector<8x1536xf32>
    %c64 = arith.constant 64 : index
    %c0_51 = arith.constant 0 : index
    %114 = vector.load %arg6[%c64, %c0_51] : memref<200x1536xf32, #tpu.memory_space<vmem>>, vector<8x1536xf32>
    tpu.vector_store %arg6[%c64, %c0_51], %113 {strides = array<i32>} : memref<200x1536xf32, #tpu.memory_space<vmem>>, vector<8x1536xf32>,
    %cst_52 = arith.constant 1.300000e+00 : f32
    %115 = vector.broadcast %cst_52 : f32 to vector<8x1536xf32>
    %116 = arith.cmpf ogt, %109, %115 : vector<8x1536xf32>
    %cst_53 = arith.constant 8.000000e-01 : f32
    %117 = vector.broadcast %cst_53 : f32 to vector<8x1536xf32>
    %118 = arith.mulf %117, %109 : vector<8x1536xf32>
    %119 = arith.addf %118, %5 : vector<8x1536xf32>
    %cst_54 = arith.constant 0.000000e+00 : f32
    %120 = vector.broadcast %cst_54 : f32 to vector<8x1536xf32>
    %121 = arith.select %116, %120, %119 : vector<8x1536xi1>, vector<8x1536xf32>
    %cst_55 = arith.constant 1.300000e+00 : f32
    %122 = vector.broadcast %cst_55 : f32 to vector<8x1536xf32>
    %123 = arith.cmpf ogt, %121, %122 : vector<8x1536xf32>
    %124 = arith.extui %123 : vector<8x1536xi1> to vector<8x1536xi32>
    %125 = arith.sitofp %124 : vector<8x1536xi32> to vector<8x1536xf32>
    %c72 = arith.constant 72 : index
    %c0_56 = arith.constant 0 : index
    %126 = vector.load %arg6[%c72, %c0_56] : memref<200x1536xf32, #tpu.memory_space<vmem>>, vector<8x1536xf32>
    tpu.vector_store %arg6[%c72, %c0_56], %125 {strides = array<i32>} : memref<200x1536xf32, #tpu.memory_space<vmem>>, vector<8x1536xf32>,
    %cst_57 = arith.constant 1.300000e+00 : f32
    %127 = vector.broadcast %cst_57 : f32 to vector<8x1536xf32>
    %128 = arith.cmpf ogt, %121, %127 : vector<8x1536xf32>
    %cst_58 = arith.constant 8.000000e-01 : f32
    %129 = vector.broadcast %cst_58 : f32 to vector<8x1536xf32>
    %130 = arith.mulf %129, %121 : vector<8x1536xf32>
    %131 = arith.addf %130, %5 : vector<8x1536xf32>
    %cst_59 = arith.constant 0.000000e+00 : f32
    %132 = vector.broadcast %cst_59 : f32 to vector<8x1536xf32>
    %133 = arith.select %128, %132, %131 : vector<8x1536xi1>, vector<8x1536xf32>
    %cst_60 = arith.constant 1.300000e+00 : f32
    %134 = vector.broadcast %cst_60 : f32 to vector<8x1536xf32>
    %135 = arith.cmpf ogt, %133, %134 : vector<8x1536xf32>
    %136 = arith.extui %135 : vector<8x1536xi1> to vector<8x1536xi32>
    %137 = arith.sitofp %136 : vector<8x1536xi32> to vector<8x1536xf32>
    %c80 = arith.constant 80 : index
    %c0_61 = arith.constant 0 : index
    %138 = vector.load %arg6[%c80, %c0_61] : memref<200x1536xf32, #tpu.memory_space<vmem>>, vector<8x1536xf32>
    tpu.vector_store %arg6[%c80, %c0_61], %137 {strides = array<i32>} : memref<200x1536xf32, #tpu.memory_space<vmem>>, vector<8x1536xf32>,
    %cst_62 = arith.constant 1.300000e+00 : f32
    %139 = vector.broadcast %cst_62 : f32 to vector<8x1536xf32>
    %140 = arith.cmpf ogt, %133, %139 : vector<8x1536xf32>
    %cst_63 = arith.constant 8.000000e-01 : f32
    %141 = vector.broadcast %cst_63 : f32 to vector<8x1536xf32>
    %142 = arith.mulf %141, %133 : vector<8x1536xf32>
    %143 = arith.addf %142, %5 : vector<8x1536xf32>
    %cst_64 = arith.constant 0.000000e+00 : f32
    %144 = vector.broadcast %cst_64 : f32 to vector<8x1536xf32>
    %145 = arith.select %140, %144, %143 : vector<8x1536xi1>, vector<8x1536xf32>
    %cst_65 = arith.constant 1.300000e+00 : f32
    %146 = vector.broadcast %cst_65 : f32 to vector<8x1536xf32>
    %147 = arith.cmpf ogt, %145, %146 : vector<8x1536xf32>
    %148 = arith.extui %147 : vector<8x1536xi1> to vector<8x1536xi32>
    %149 = arith.sitofp %148 : vector<8x1536xi32> to vector<8x1536xf32>
    %c88 = arith.constant 88 : index
    %c0_66 = arith.constant 0 : index
    %150 = vector.load %arg6[%c88, %c0_66] : memref<200x1536xf32, #tpu.memory_space<vmem>>, vector<8x1536xf32>
    tpu.vector_store %arg6[%c88, %c0_66], %149 {strides = array<i32>} : memref<200x1536xf32, #tpu.memory_space<vmem>>, vector<8x1536xf32>,
    %cst_67 = arith.constant 1.300000e+00 : f32
    %151 = vector.broadcast %cst_67 : f32 to vector<8x1536xf32>
    %152 = arith.cmpf ogt, %145, %151 : vector<8x1536xf32>
    %cst_68 = arith.constant 8.000000e-01 : f32
    %153 = vector.broadcast %cst_68 : f32 to vector<8x1536xf32>
    %154 = arith.mulf %153, %145 : vector<8x1536xf32>
    %155 = arith.addf %154, %5 : vector<8x1536xf32>
    %cst_69 = arith.constant 0.000000e+00 : f32
    %156 = vector.broadcast %cst_69 : f32 to vector<8x1536xf32>
    %157 = arith.select %152, %156, %155 : vector<8x1536xi1>, vector<8x1536xf32>
    %cst_70 = arith.constant 1.300000e+00 : f32
    %158 = vector.broadcast %cst_70 : f32 to vector<8x1536xf32>
    %159 = arith.cmpf ogt, %157, %158 : vector<8x1536xf32>
    %160 = arith.extui %159 : vector<8x1536xi1> to vector<8x1536xi32>
    %161 = arith.sitofp %160 : vector<8x1536xi32> to vector<8x1536xf32>
    %c96 = arith.constant 96 : index
    %c0_71 = arith.constant 0 : index
    %162 = vector.load %arg6[%c96, %c0_71] : memref<200x1536xf32, #tpu.memory_space<vmem>>, vector<8x1536xf32>
    tpu.vector_store %arg6[%c96, %c0_71], %161 {strides = array<i32>} : memref<200x1536xf32, #tpu.memory_space<vmem>>, vector<8x1536xf32>,
    %cst_72 = arith.constant 1.300000e+00 : f32
    %163 = vector.broadcast %cst_72 : f32 to vector<8x1536xf32>
    %164 = arith.cmpf ogt, %157, %163 : vector<8x1536xf32>
    %cst_73 = arith.constant 8.000000e-01 : f32
    %165 = vector.broadcast %cst_73 : f32 to vector<8x1536xf32>
    %166 = arith.mulf %165, %157 : vector<8x1536xf32>
    %167 = arith.addf %166, %5 : vector<8x1536xf32>
    %cst_74 = arith.constant 0.000000e+00 : f32
    %168 = vector.broadcast %cst_74 : f32 to vector<8x1536xf32>
    %169 = arith.select %164, %168, %167 : vector<8x1536xi1>, vector<8x1536xf32>
    %cst_75 = arith.constant 1.300000e+00 : f32
    %170 = vector.broadcast %cst_75 : f32 to vector<8x1536xf32>
    %171 = arith.cmpf ogt, %169, %170 : vector<8x1536xf32>
    %172 = arith.extui %171 : vector<8x1536xi1> to vector<8x1536xi32>
    %173 = arith.sitofp %172 : vector<8x1536xi32> to vector<8x1536xf32>
    %c104 = arith.constant 104 : index
    %c0_76 = arith.constant 0 : index
    %174 = vector.load %arg6[%c104, %c0_76] : memref<200x1536xf32, #tpu.memory_space<vmem>>, vector<8x1536xf32>
    tpu.vector_store %arg6[%c104, %c0_76], %173 {strides = array<i32>} : memref<200x1536xf32, #tpu.memory_space<vmem>>, vector<8x1536xf32>,
    %cst_77 = arith.constant 1.300000e+00 : f32
    %175 = vector.broadcast %cst_77 : f32 to vector<8x1536xf32>
    %176 = arith.cmpf ogt, %169, %175 : vector<8x1536xf32>
    %cst_78 = arith.constant 8.000000e-01 : f32
    %177 = vector.broadcast %cst_78 : f32 to vector<8x1536xf32>
    %178 = arith.mulf %177, %169 : vector<8x1536xf32>
    %179 = arith.addf %178, %5 : vector<8x1536xf32>
    %cst_79 = arith.constant 0.000000e+00 : f32
    %180 = vector.broadcast %cst_79 : f32 to vector<8x1536xf32>
    %181 = arith.select %176, %180, %179 : vector<8x1536xi1>, vector<8x1536xf32>
    %cst_80 = arith.constant 1.300000e+00 : f32
    %182 = vector.broadcast %cst_80 : f32 to vector<8x1536xf32>
    %183 = arith.cmpf ogt, %181, %182 : vector<8x1536xf32>
    %184 = arith.extui %183 : vector<8x1536xi1> to vector<8x1536xi32>
    %185 = arith.sitofp %184 : vector<8x1536xi32> to vector<8x1536xf32>
    %c112 = arith.constant 112 : index
    %c0_81 = arith.constant 0 : index
    %186 = vector.load %arg6[%c112, %c0_81] : memref<200x1536xf32, #tpu.memory_space<vmem>>, vector<8x1536xf32>
    tpu.vector_store %arg6[%c112, %c0_81], %185 {strides = array<i32>} : memref<200x1536xf32, #tpu.memory_space<vmem>>, vector<8x1536xf32>,
    %cst_82 = arith.constant 1.300000e+00 : f32
    %187 = vector.broadcast %cst_82 : f32 to vector<8x1536xf32>
    %188 = arith.cmpf ogt, %181, %187 : vector<8x1536xf32>
    %cst_83 = arith.constant 8.000000e-01 : f32
    %189 = vector.broadcast %cst_83 : f32 to vector<8x1536xf32>
    %190 = arith.mulf %189, %181 : vector<8x1536xf32>
    %191 = arith.addf %190, %5 : vector<8x1536xf32>
    %cst_84 = arith.constant 0.000000e+00 : f32
    %192 = vector.broadcast %cst_84 : f32 to vector<8x1536xf32>
    %193 = arith.select %188, %192, %191 : vector<8x1536xi1>, vector<8x1536xf32>
    %cst_85 = arith.constant 1.300000e+00 : f32
    %194 = vector.broadcast %cst_85 : f32 to vector<8x1536xf32>
    %195 = arith.cmpf ogt, %193, %194 : vector<8x1536xf32>
    %196 = arith.extui %195 : vector<8x1536xi1> to vector<8x1536xi32>
    %197 = arith.sitofp %196 : vector<8x1536xi32> to vector<8x1536xf32>
    %c120 = arith.constant 120 : index
    %c0_86 = arith.constant 0 : index
    %198 = vector.load %arg6[%c120, %c0_86] : memref<200x1536xf32, #tpu.memory_space<vmem>>, vector<8x1536xf32>
    tpu.vector_store %arg6[%c120, %c0_86], %197 {strides = array<i32>} : memref<200x1536xf32, #tpu.memory_space<vmem>>, vector<8x1536xf32>,
    %cst_87 = arith.constant 1.300000e+00 : f32
    %199 = vector.broadcast %cst_87 : f32 to vector<8x1536xf32>
    %200 = arith.cmpf ogt, %193, %199 : vector<8x1536xf32>
    %cst_88 = arith.constant 8.000000e-01 : f32
    %201 = vector.broadcast %cst_88 : f32 to vector<8x1536xf32>
    %202 = arith.mulf %201, %193 : vector<8x1536xf32>
    %203 = arith.addf %202, %5 : vector<8x1536xf32>
    %cst_89 = arith.constant 0.000000e+00 : f32
    %204 = vector.broadcast %cst_89 : f32 to vector<8x1536xf32>
    %205 = arith.select %200, %204, %203 : vector<8x1536xi1>, vector<8x1536xf32>
    %cst_90 = arith.constant 1.300000e+00 : f32
    %206 = vector.broadcast %cst_90 : f32 to vector<8x1536xf32>
    %207 = arith.cmpf ogt, %205, %206 : vector<8x1536xf32>
    %208 = arith.extui %207 : vector<8x1536xi1> to vector<8x1536xi32>
    %209 = arith.sitofp %208 : vector<8x1536xi32> to vector<8x1536xf32>
    %c128 = arith.constant 128 : index
    %c0_91 = arith.constant 0 : index
    %210 = vector.load %arg6[%c128, %c0_91] : memref<200x1536xf32, #tpu.memory_space<vmem>>, vector<8x1536xf32>
    tpu.vector_store %arg6[%c128, %c0_91], %209 {strides = array<i32>} : memref<200x1536xf32, #tpu.memory_space<vmem>>, vector<8x1536xf32>,
    %cst_92 = arith.constant 1.300000e+00 : f32
    %211 = vector.broadcast %cst_92 : f32 to vector<8x1536xf32>
    %212 = arith.cmpf ogt, %205, %211 : vector<8x1536xf32>
    %cst_93 = arith.constant 8.000000e-01 : f32
    %213 = vector.broadcast %cst_93 : f32 to vector<8x1536xf32>
    %214 = arith.mulf %213, %205 : vector<8x1536xf32>
    %215 = arith.addf %214, %5 : vector<8x1536xf32>
    %cst_94 = arith.constant 0.000000e+00 : f32
    %216 = vector.broadcast %cst_94 : f32 to vector<8x1536xf32>
    %217 = arith.select %212, %216, %215 : vector<8x1536xi1>, vector<8x1536xf32>
    %cst_95 = arith.constant 1.300000e+00 : f32
    %218 = vector.broadcast %cst_95 : f32 to vector<8x1536xf32>
    %219 = arith.cmpf ogt, %217, %218 : vector<8x1536xf32>
    %220 = arith.extui %219 : vector<8x1536xi1> to vector<8x1536xi32>
    %221 = arith.sitofp %220 : vector<8x1536xi32> to vector<8x1536xf32>
    %c136 = arith.constant 136 : index
    %c0_96 = arith.constant 0 : index
    %222 = vector.load %arg6[%c136, %c0_96] : memref<200x1536xf32, #tpu.memory_space<vmem>>, vector<8x1536xf32>
    tpu.vector_store %arg6[%c136, %c0_96], %221 {strides = array<i32>} : memref<200x1536xf32, #tpu.memory_space<vmem>>, vector<8x1536xf32>,
    %cst_97 = arith.constant 1.300000e+00 : f32
    %223 = vector.broadcast %cst_97 : f32 to vector<8x1536xf32>
    %224 = arith.cmpf ogt, %217, %223 : vector<8x1536xf32>
    %cst_98 = arith.constant 8.000000e-01 : f32
    %225 = vector.broadcast %cst_98 : f32 to vector<8x1536xf32>
    %226 = arith.mulf %225, %217 : vector<8x1536xf32>
    %227 = arith.addf %226, %5 : vector<8x1536xf32>
    %cst_99 = arith.constant 0.000000e+00 : f32
    %228 = vector.broadcast %cst_99 : f32 to vector<8x1536xf32>
    %229 = arith.select %224, %228, %227 : vector<8x1536xi1>, vector<8x1536xf32>
    %cst_100 = arith.constant 1.300000e+00 : f32
    %230 = vector.broadcast %cst_100 : f32 to vector<8x1536xf32>
    %231 = arith.cmpf ogt, %229, %230 : vector<8x1536xf32>
    %232 = arith.extui %231 : vector<8x1536xi1> to vector<8x1536xi32>
    %233 = arith.sitofp %232 : vector<8x1536xi32> to vector<8x1536xf32>
    %c144 = arith.constant 144 : index
    %c0_101 = arith.constant 0 : index
    %234 = vector.load %arg6[%c144, %c0_101] : memref<200x1536xf32, #tpu.memory_space<vmem>>, vector<8x1536xf32>
    tpu.vector_store %arg6[%c144, %c0_101], %233 {strides = array<i32>} : memref<200x1536xf32, #tpu.memory_space<vmem>>, vector<8x1536xf32>,
    %cst_102 = arith.constant 1.300000e+00 : f32
    %235 = vector.broadcast %cst_102 : f32 to vector<8x1536xf32>
    %236 = arith.cmpf ogt, %229, %235 : vector<8x1536xf32>
    %cst_103 = arith.constant 8.000000e-01 : f32
    %237 = vector.broadcast %cst_103 : f32 to vector<8x1536xf32>
    %238 = arith.mulf %237, %229 : vector<8x1536xf32>
    %239 = arith.addf %238, %5 : vector<8x1536xf32>
    %cst_104 = arith.constant 0.000000e+00 : f32
    %240 = vector.broadcast %cst_104 : f32 to vector<8x1536xf32>
    %241 = arith.select %236, %240, %239 : vector<8x1536xi1>, vector<8x1536xf32>
    %cst_105 = arith.constant 1.300000e+00 : f32
    %242 = vector.broadcast %cst_105 : f32 to vector<8x1536xf32>
    %243 = arith.cmpf ogt, %241, %242 : vector<8x1536xf32>
    %244 = arith.extui %243 : vector<8x1536xi1> to vector<8x1536xi32>
    %245 = arith.sitofp %244 : vector<8x1536xi32> to vector<8x1536xf32>
    %c152 = arith.constant 152 : index
    %c0_106 = arith.constant 0 : index
    %246 = vector.load %arg6[%c152, %c0_106] : memref<200x1536xf32, #tpu.memory_space<vmem>>, vector<8x1536xf32>
    tpu.vector_store %arg6[%c152, %c0_106], %245 {strides = array<i32>} : memref<200x1536xf32, #tpu.memory_space<vmem>>, vector<8x1536xf32>,
    %cst_107 = arith.constant 1.300000e+00 : f32
    %247 = vector.broadcast %cst_107 : f32 to vector<8x1536xf32>
    %248 = arith.cmpf ogt, %241, %247 : vector<8x1536xf32>
    %cst_108 = arith.constant 8.000000e-01 : f32
    %249 = vector.broadcast %cst_108 : f32 to vector<8x1536xf32>
    %250 = arith.mulf %249, %241 : vector<8x1536xf32>
    %251 = arith.addf %250, %5 : vector<8x1536xf32>
    %cst_109 = arith.constant 0.000000e+00 : f32
    %252 = vector.broadcast %cst_109 : f32 to vector<8x1536xf32>
    %253 = arith.select %248, %252, %251 : vector<8x1536xi1>, vector<8x1536xf32>
    %cst_110 = arith.constant 1.300000e+00 : f32
    %254 = vector.broadcast %cst_110 : f32 to vector<8x1536xf32>
    %255 = arith.cmpf ogt, %253, %254 : vector<8x1536xf32>
    %256 = arith.extui %255 : vector<8x1536xi1> to vector<8x1536xi32>
    %257 = arith.sitofp %256 : vector<8x1536xi32> to vector<8x1536xf32>
    %c160 = arith.constant 160 : index
    %c0_111 = arith.constant 0 : index
    %258 = vector.load %arg6[%c160, %c0_111] : memref<200x1536xf32, #tpu.memory_space<vmem>>, vector<8x1536xf32>
    tpu.vector_store %arg6[%c160, %c0_111], %257 {strides = array<i32>} : memref<200x1536xf32, #tpu.memory_space<vmem>>, vector<8x1536xf32>,
    %cst_112 = arith.constant 1.300000e+00 : f32
    %259 = vector.broadcast %cst_112 : f32 to vector<8x1536xf32>
    %260 = arith.cmpf ogt, %253, %259 : vector<8x1536xf32>
    %cst_113 = arith.constant 8.000000e-01 : f32
    %261 = vector.broadcast %cst_113 : f32 to vector<8x1536xf32>
    %262 = arith.mulf %261, %253 : vector<8x1536xf32>
    %263 = arith.addf %262, %5 : vector<8x1536xf32>
    %cst_114 = arith.constant 0.000000e+00 : f32
    %264 = vector.broadcast %cst_114 : f32 to vector<8x1536xf32>
    %265 = arith.select %260, %264, %263 : vector<8x1536xi1>, vector<8x1536xf32>
    %cst_115 = arith.constant 1.300000e+00 : f32
    %266 = vector.broadcast %cst_115 : f32 to vector<8x1536xf32>
    %267 = arith.cmpf ogt, %265, %266 : vector<8x1536xf32>
    %268 = arith.extui %267 : vector<8x1536xi1> to vector<8x1536xi32>
    %269 = arith.sitofp %268 : vector<8x1536xi32> to vector<8x1536xf32>
    %c168 = arith.constant 168 : index
    %c0_116 = arith.constant 0 : index
    %270 = vector.load %arg6[%c168, %c0_116] : memref<200x1536xf32, #tpu.memory_space<vmem>>, vector<8x1536xf32>
    tpu.vector_store %arg6[%c168, %c0_116], %269 {strides = array<i32>} : memref<200x1536xf32, #tpu.memory_space<vmem>>, vector<8x1536xf32>,
    %cst_117 = arith.constant 1.300000e+00 : f32
    %271 = vector.broadcast %cst_117 : f32 to vector<8x1536xf32>
    %272 = arith.cmpf ogt, %265, %271 : vector<8x1536xf32>
    %cst_118 = arith.constant 8.000000e-01 : f32
    %273 = vector.broadcast %cst_118 : f32 to vector<8x1536xf32>
    %274 = arith.mulf %273, %265 : vector<8x1536xf32>
    %275 = arith.addf %274, %5 : vector<8x1536xf32>
    %cst_119 = arith.constant 0.000000e+00 : f32
    %276 = vector.broadcast %cst_119 : f32 to vector<8x1536xf32>
    %277 = arith.select %272, %276, %275 : vector<8x1536xi1>, vector<8x1536xf32>
    %cst_120 = arith.constant 1.300000e+00 : f32
    %278 = vector.broadcast %cst_120 : f32 to vector<8x1536xf32>
    %279 = arith.cmpf ogt, %277, %278 : vector<8x1536xf32>
    %280 = arith.extui %279 : vector<8x1536xi1> to vector<8x1536xi32>
    %281 = arith.sitofp %280 : vector<8x1536xi32> to vector<8x1536xf32>
    %c176 = arith.constant 176 : index
    %c0_121 = arith.constant 0 : index
    %282 = vector.load %arg6[%c176, %c0_121] : memref<200x1536xf32, #tpu.memory_space<vmem>>, vector<8x1536xf32>
    tpu.vector_store %arg6[%c176, %c0_121], %281 {strides = array<i32>} : memref<200x1536xf32, #tpu.memory_space<vmem>>, vector<8x1536xf32>,
    %cst_122 = arith.constant 1.300000e+00 : f32
    %283 = vector.broadcast %cst_122 : f32 to vector<8x1536xf32>
    %284 = arith.cmpf ogt, %277, %283 : vector<8x1536xf32>
    %cst_123 = arith.constant 8.000000e-01 : f32
    %285 = vector.broadcast %cst_123 : f32 to vector<8x1536xf32>
    %286 = arith.mulf %285, %277 : vector<8x1536xf32>
    %287 = arith.addf %286, %5 : vector<8x1536xf32>
    %cst_124 = arith.constant 0.000000e+00 : f32
    %288 = vector.broadcast %cst_124 : f32 to vector<8x1536xf32>
    %289 = arith.select %284, %288, %287 : vector<8x1536xi1>, vector<8x1536xf32>
    %cst_125 = arith.constant 1.300000e+00 : f32
    %290 = vector.broadcast %cst_125 : f32 to vector<8x1536xf32>
    %291 = arith.cmpf ogt, %289, %290 : vector<8x1536xf32>
    %292 = arith.extui %291 : vector<8x1536xi1> to vector<8x1536xi32>
    %293 = arith.sitofp %292 : vector<8x1536xi32> to vector<8x1536xf32>
    %c184 = arith.constant 184 : index
    %c0_126 = arith.constant 0 : index
    %294 = vector.load %arg6[%c184, %c0_126] : memref<200x1536xf32, #tpu.memory_space<vmem>>, vector<8x1536xf32>
    tpu.vector_store %arg6[%c184, %c0_126], %293 {strides = array<i32>} : memref<200x1536xf32, #tpu.memory_space<vmem>>, vector<8x1536xf32>,
    %cst_127 = arith.constant 1.300000e+00 : f32
    %295 = vector.broadcast %cst_127 : f32 to vector<8x1536xf32>
    %296 = arith.cmpf ogt, %289, %295 : vector<8x1536xf32>
    %cst_128 = arith.constant 8.000000e-01 : f32
    %297 = vector.broadcast %cst_128 : f32 to vector<8x1536xf32>
    %298 = arith.mulf %297, %289 : vector<8x1536xf32>
    %299 = arith.addf %298, %5 : vector<8x1536xf32>
    %cst_129 = arith.constant 0.000000e+00 : f32
    %300 = vector.broadcast %cst_129 : f32 to vector<8x1536xf32>
    %301 = arith.select %296, %300, %299 : vector<8x1536xi1>, vector<8x1536xf32>
    %cst_130 = arith.constant 1.300000e+00 : f32
    %302 = vector.broadcast %cst_130 : f32 to vector<8x1536xf32>
    %303 = arith.cmpf ogt, %301, %302 : vector<8x1536xf32>
    %304 = arith.extui %303 : vector<8x1536xi1> to vector<8x1536xi32>
    %305 = arith.sitofp %304 : vector<8x1536xi32> to vector<8x1536xf32>
    %c192 = arith.constant 192 : index
    %c0_131 = arith.constant 0 : index
    %306 = vector.load %arg6[%c192, %c0_131] : memref<200x1536xf32, #tpu.memory_space<vmem>>, vector<8x1536xf32>
    tpu.vector_store %arg6[%c192, %c0_131], %305 {strides = array<i32>} : memref<200x1536xf32, #tpu.memory_space<vmem>>, vector<8x1536xf32>,
    %c0_132 = arith.constant 0 : index
    %c0_133 = arith.constant 0 : index
    %307 = vector.load %arg6[%c0_132, %c0_133] : memref<200x1536xf32, #tpu.memory_space<vmem>>, vector<200x1536xf32>
    %c0_134 = arith.constant 0 : index
    %c0_135 = arith.constant 0 : index
    %308 = vector.load %arg3[%c0_134, %c0_135] : memref<1536x128xf32, #tpu.memory_space<vmem>>, vector<1536x128xf32>
    %cst_136 = arith.constant dense<0.000000e+00> : vector<200x128xf32>
    %309 = tpu.matmul %307, %308, %cst_136 {dimension_numbers = #tpu.dot_dimension_numbers<[1], [0], [0], [1], [0, 0, 1, 1], [], []>} : vector<200x1536xf32>, vector<1536x128xf32>, vector<200x128xf32> -> vector<200x128xf32>
    %c0_137 = arith.constant 0 : index
    %c0_138 = arith.constant 0 : index
    %310 = vector.load %arg4[%c0_137, %c0_138] : memref<1x128xf32, #tpu.memory_space<vmem>>, vector<1x128xf32>
    %311 = vector.broadcast %310 : vector<1x128xf32> to vector<200x128xf32>
    %312 = arith.addf %309, %311 : vector<200x128xf32>
    %c0_139 = arith.constant 0 : index
    %c0_140 = arith.constant 0 : index
    %313 = vector.load %arg5[%c0_139, %c0_140] : memref<200x128xf32, #tpu.memory_space<vmem>>, vector<200x128xf32>
    tpu.vector_store %arg5[%c0_139, %c0_140], %312 {strides = array<i32>} : memref<200x128xf32, #tpu.memory_space<vmem>>, vector<200x128xf32>,
    %cst_141 = arith.constant 0.000000e+00 : f32
    %314 = vector.broadcast %cst_141 : f32 to vector<8x128xf32>
    %c0_142 = arith.constant 0 : index
    %c0_143 = arith.constant 0 : index
    %315 = vector.load %arg5[%c0_142, %c0_143] : memref<200x128xf32, #tpu.memory_space<vmem>>, vector<8x128xf32>
    %cst_144 = arith.constant 1.300000e+00 : f32
    %316 = vector.broadcast %cst_144 : f32 to vector<8x128xf32>
    %317 = arith.cmpf ogt, %314, %316 : vector<8x128xf32>
    %cst_145 = arith.constant 8.000000e-01 : f32
    %318 = vector.broadcast %cst_145 : f32 to vector<8x128xf32>
    %319 = arith.mulf %318, %314 : vector<8x128xf32>
    %320 = arith.addf %319, %315 : vector<8x128xf32>
    %cst_146 = arith.constant 0.000000e+00 : f32
    %321 = vector.broadcast %cst_146 : f32 to vector<8x128xf32>
    %322 = arith.select %317, %321, %320 : vector<8x128xi1>, vector<8x128xf32>
    %cst_147 = arith.constant 1.300000e+00 : f32
    %323 = vector.broadcast %cst_147 : f32 to vector<8x128xf32>
    %324 = arith.cmpf ogt, %322, %323 : vector<8x128xf32>
    %325 = arith.extui %324 : vector<8x128xi1> to vector<8x128xi32>
    %326 = arith.sitofp %325 : vector<8x128xi32> to vector<8x128xf32>
    %c0_148 = arith.constant 0 : index
    %c0_149 = arith.constant 0 : index
    %327 = vector.load %arg5[%c0_148, %c0_149] : memref<200x128xf32, #tpu.memory_space<vmem>>, vector<8x128xf32>
    tpu.vector_store %arg5[%c0_148, %c0_149], %326 {strides = array<i32>} : memref<200x128xf32, #tpu.memory_space<vmem>>, vector<8x128xf32>,
    %c8_150 = arith.constant 8 : index
    %c0_151 = arith.constant 0 : index
    %328 = vector.load %arg5[%c8_150, %c0_151] : memref<200x128xf32, #tpu.memory_space<vmem>>, vector<8x128xf32>
    %cst_152 = arith.constant 1.300000e+00 : f32
    %329 = vector.broadcast %cst_152 : f32 to vector<8x128xf32>
    %330 = arith.cmpf ogt, %322, %329 : vector<8x128xf32>
    %cst_153 = arith.constant 8.000000e-01 : f32
    %331 = vector.broadcast %cst_153 : f32 to vector<8x128xf32>
    %332 = arith.mulf %331, %322 : vector<8x128xf32>
    %333 = arith.addf %332, %328 : vector<8x128xf32>
    %cst_154 = arith.constant 0.000000e+00 : f32
    %334 = vector.broadcast %cst_154 : f32 to vector<8x128xf32>
    %335 = arith.select %330, %334, %333 : vector<8x128xi1>, vector<8x128xf32>
    %cst_155 = arith.constant 1.300000e+00 : f32
    %336 = vector.broadcast %cst_155 : f32 to vector<8x128xf32>
    %337 = arith.cmpf ogt, %335, %336 : vector<8x128xf32>
    %338 = arith.extui %337 : vector<8x128xi1> to vector<8x128xi32>
    %339 = arith.sitofp %338 : vector<8x128xi32> to vector<8x128xf32>
    %c8_156 = arith.constant 8 : index
    %c0_157 = arith.constant 0 : index
    %340 = vector.load %arg5[%c8_156, %c0_157] : memref<200x128xf32, #tpu.memory_space<vmem>>, vector<8x128xf32>
    tpu.vector_store %arg5[%c8_156, %c0_157], %339 {strides = array<i32>} : memref<200x128xf32, #tpu.memory_space<vmem>>, vector<8x128xf32>,
    %c16_158 = arith.constant 16 : index
    %c0_159 = arith.constant 0 : index
    %341 = vector.load %arg5[%c16_158, %c0_159] : memref<200x128xf32, #tpu.memory_space<vmem>>, vector<8x128xf32>
    %cst_160 = arith.constant 1.300000e+00 : f32
    %342 = vector.broadcast %cst_160 : f32 to vector<8x128xf32>
    %343 = arith.cmpf ogt, %335, %342 : vector<8x128xf32>
    %cst_161 = arith.constant 8.000000e-01 : f32
    %344 = vector.broadcast %cst_161 : f32 to vector<8x128xf32>
    %345 = arith.mulf %344, %335 : vector<8x128xf32>
    %346 = arith.addf %345, %341 : vector<8x128xf32>
    %cst_162 = arith.constant 0.000000e+00 : f32
    %347 = vector.broadcast %cst_162 : f32 to vector<8x128xf32>
    %348 = arith.select %343, %347, %346 : vector<8x128xi1>, vector<8x128xf32>
    %cst_163 = arith.constant 1.300000e+00 : f32
    %349 = vector.broadcast %cst_163 : f32 to vector<8x128xf32>
    %350 = arith.cmpf ogt, %348, %349 : vector<8x128xf32>
    %351 = arith.extui %350 : vector<8x128xi1> to vector<8x128xi32>
    %352 = arith.sitofp %351 : vector<8x128xi32> to vector<8x128xf32>
    %c16_164 = arith.constant 16 : index
    %c0_165 = arith.constant 0 : index
    %353 = vector.load %arg5[%c16_164, %c0_165] : memref<200x128xf32, #tpu.memory_space<vmem>>, vector<8x128xf32>
    tpu.vector_store %arg5[%c16_164, %c0_165], %352 {strides = array<i32>} : memref<200x128xf32, #tpu.memory_space<vmem>>, vector<8x128xf32>,
    %c24_166 = arith.constant 24 : index
    %c0_167 = arith.constant 0 : index
    %354 = vector.load %arg5[%c24_166, %c0_167] : memref<200x128xf32, #tpu.memory_space<vmem>>, vector<8x128xf32>
    %cst_168 = arith.constant 1.300000e+00 : f32
    %355 = vector.broadcast %cst_168 : f32 to vector<8x128xf32>
    %356 = arith.cmpf ogt, %348, %355 : vector<8x128xf32>
    %cst_169 = arith.constant 8.000000e-01 : f32
    %357 = vector.broadcast %cst_169 : f32 to vector<8x128xf32>
    %358 = arith.mulf %357, %348 : vector<8x128xf32>
    %359 = arith.addf %358, %354 : vector<8x128xf32>
    %cst_170 = arith.constant 0.000000e+00 : f32
    %360 = vector.broadcast %cst_170 : f32 to vector<8x128xf32>
    %361 = arith.select %356, %360, %359 : vector<8x128xi1>, vector<8x128xf32>
    %cst_171 = arith.constant 1.300000e+00 : f32
    %362 = vector.broadcast %cst_171 : f32 to vector<8x128xf32>
    %363 = arith.cmpf ogt, %361, %362 : vector<8x128xf32>
    %364 = arith.extui %363 : vector<8x128xi1> to vector<8x128xi32>
    %365 = arith.sitofp %364 : vector<8x128xi32> to vector<8x128xf32>
    %c24_172 = arith.constant 24 : index
    %c0_173 = arith.constant 0 : index
    %366 = vector.load %arg5[%c24_172, %c0_173] : memref<200x128xf32, #tpu.memory_space<vmem>>, vector<8x128xf32>
    tpu.vector_store %arg5[%c24_172, %c0_173], %365 {strides = array<i32>} : memref<200x128xf32, #tpu.memory_space<vmem>>, vector<8x128xf32>,
    %c32_174 = arith.constant 32 : index
    %c0_175 = arith.constant 0 : index
    %367 = vector.load %arg5[%c32_174, %c0_175] : memref<200x128xf32, #tpu.memory_space<vmem>>, vector<8x128xf32>
    %cst_176 = arith.constant 1.300000e+00 : f32
    %368 = vector.broadcast %cst_176 : f32 to vector<8x128xf32>
    %369 = arith.cmpf ogt, %361, %368 : vector<8x128xf32>
    %cst_177 = arith.constant 8.000000e-01 : f32
    %370 = vector.broadcast %cst_177 : f32 to vector<8x128xf32>
    %371 = arith.mulf %370, %361 : vector<8x128xf32>
    %372 = arith.addf %371, %367 : vector<8x128xf32>
    %cst_178 = arith.constant 0.000000e+00 : f32
    %373 = vector.broadcast %cst_178 : f32 to vector<8x128xf32>
    %374 = arith.select %369, %373, %372 : vector<8x128xi1>, vector<8x128xf32>
    %cst_179 = arith.constant 1.300000e+00 : f32
    %375 = vector.broadcast %cst_179 : f32 to vector<8x128xf32>
    %376 = arith.cmpf ogt, %374, %375 : vector<8x128xf32>
    %377 = arith.extui %376 : vector<8x128xi1> to vector<8x128xi32>
    %378 = arith.sitofp %377 : vector<8x128xi32> to vector<8x128xf32>
    %c32_180 = arith.constant 32 : index
    %c0_181 = arith.constant 0 : index
    %379 = vector.load %arg5[%c32_180, %c0_181] : memref<200x128xf32, #tpu.memory_space<vmem>>, vector<8x128xf32>
    tpu.vector_store %arg5[%c32_180, %c0_181], %378 {strides = array<i32>} : memref<200x128xf32, #tpu.memory_space<vmem>>, vector<8x128xf32>,
    %c40_182 = arith.constant 40 : index
    %c0_183 = arith.constant 0 : index
    %380 = vector.load %arg5[%c40_182, %c0_183] : memref<200x128xf32, #tpu.memory_space<vmem>>, vector<8x128xf32>
    %cst_184 = arith.constant 1.300000e+00 : f32
    %381 = vector.broadcast %cst_184 : f32 to vector<8x128xf32>
    %382 = arith.cmpf ogt, %374, %381 : vector<8x128xf32>
    %cst_185 = arith.constant 8.000000e-01 : f32
    %383 = vector.broadcast %cst_185 : f32 to vector<8x128xf32>
    %384 = arith.mulf %383, %374 : vector<8x128xf32>
    %385 = arith.addf %384, %380 : vector<8x128xf32>
    %cst_186 = arith.constant 0.000000e+00 : f32
    %386 = vector.broadcast %cst_186 : f32 to vector<8x128xf32>
    %387 = arith.select %382, %386, %385 : vector<8x128xi1>, vector<8x128xf32>
    %cst_187 = arith.constant 1.300000e+00 : f32
    %388 = vector.broadcast %cst_187 : f32 to vector<8x128xf32>
    %389 = arith.cmpf ogt, %387, %388 : vector<8x128xf32>
    %390 = arith.extui %389 : vector<8x128xi1> to vector<8x128xi32>
    %391 = arith.sitofp %390 : vector<8x128xi32> to vector<8x128xf32>
    %c40_188 = arith.constant 40 : index
    %c0_189 = arith.constant 0 : index
    %392 = vector.load %arg5[%c40_188, %c0_189] : memref<200x128xf32, #tpu.memory_space<vmem>>, vector<8x128xf32>
    tpu.vector_store %arg5[%c40_188, %c0_189], %391 {strides = array<i32>} : memref<200x128xf32, #tpu.memory_space<vmem>>, vector<8x128xf32>,
    %c48_190 = arith.constant 48 : index
    %c0_191 = arith.constant 0 : index
    %393 = vector.load %arg5[%c48_190, %c0_191] : memref<200x128xf32, #tpu.memory_space<vmem>>, vector<8x128xf32>
    %cst_192 = arith.constant 1.300000e+00 : f32
    %394 = vector.broadcast %cst_192 : f32 to vector<8x128xf32>
    %395 = arith.cmpf ogt, %387, %394 : vector<8x128xf32>
    %cst_193 = arith.constant 8.000000e-01 : f32
    %396 = vector.broadcast %cst_193 : f32 to vector<8x128xf32>
    %397 = arith.mulf %396, %387 : vector<8x128xf32>
    %398 = arith.addf %397, %393 : vector<8x128xf32>
    %cst_194 = arith.constant 0.000000e+00 : f32
    %399 = vector.broadcast %cst_194 : f32 to vector<8x128xf32>
    %400 = arith.select %395, %399, %398 : vector<8x128xi1>, vector<8x128xf32>
    %cst_195 = arith.constant 1.300000e+00 : f32
    %401 = vector.broadcast %cst_195 : f32 to vector<8x128xf32>
    %402 = arith.cmpf ogt, %400, %401 : vector<8x128xf32>
    %403 = arith.extui %402 : vector<8x128xi1> to vector<8x128xi32>
    %404 = arith.sitofp %403 : vector<8x128xi32> to vector<8x128xf32>
    %c48_196 = arith.constant 48 : index
    %c0_197 = arith.constant 0 : index
    %405 = vector.load %arg5[%c48_196, %c0_197] : memref<200x128xf32, #tpu.memory_space<vmem>>, vector<8x128xf32>
    tpu.vector_store %arg5[%c48_196, %c0_197], %404 {strides = array<i32>} : memref<200x128xf32, #tpu.memory_space<vmem>>, vector<8x128xf32>,
    %c56_198 = arith.constant 56 : index
    %c0_199 = arith.constant 0 : index
    %406 = vector.load %arg5[%c56_198, %c0_199] : memref<200x128xf32, #tpu.memory_space<vmem>>, vector<8x128xf32>
    %cst_200 = arith.constant 1.300000e+00 : f32
    %407 = vector.broadcast %cst_200 : f32 to vector<8x128xf32>
    %408 = arith.cmpf ogt, %400, %407 : vector<8x128xf32>
    %cst_201 = arith.constant 8.000000e-01 : f32
    %409 = vector.broadcast %cst_201 : f32 to vector<8x128xf32>
    %410 = arith.mulf %409, %400 : vector<8x128xf32>
    %411 = arith.addf %410, %406 : vector<8x128xf32>
    %cst_202 = arith.constant 0.000000e+00 : f32
    %412 = vector.broadcast %cst_202 : f32 to vector<8x128xf32>
    %413 = arith.select %408, %412, %411 : vector<8x128xi1>, vector<8x128xf32>
    %cst_203 = arith.constant 1.300000e+00 : f32
    %414 = vector.broadcast %cst_203 : f32 to vector<8x128xf32>
    %415 = arith.cmpf ogt, %413, %414 : vector<8x128xf32>
    %416 = arith.extui %415 : vector<8x128xi1> to vector<8x128xi32>
    %417 = arith.sitofp %416 : vector<8x128xi32> to vector<8x128xf32>
    %c56_204 = arith.constant 56 : index
    %c0_205 = arith.constant 0 : index
    %418 = vector.load %arg5[%c56_204, %c0_205] : memref<200x128xf32, #tpu.memory_space<vmem>>, vector<8x128xf32>
    tpu.vector_store %arg5[%c56_204, %c0_205], %417 {strides = array<i32>} : memref<200x128xf32, #tpu.memory_space<vmem>>, vector<8x128xf32>,
    %c64_206 = arith.constant 64 : index
    %c0_207 = arith.constant 0 : index
    %419 = vector.load %arg5[%c64_206, %c0_207] : memref<200x128xf32, #tpu.memory_space<vmem>>, vector<8x128xf32>
    %cst_208 = arith.constant 1.300000e+00 : f32
    %420 = vector.broadcast %cst_208 : f32 to vector<8x128xf32>
    %421 = arith.cmpf ogt, %413, %420 : vector<8x128xf32>
    %cst_209 = arith.constant 8.000000e-01 : f32
    %422 = vector.broadcast %cst_209 : f32 to vector<8x128xf32>
    %423 = arith.mulf %422, %413 : vector<8x128xf32>
    %424 = arith.addf %423, %419 : vector<8x128xf32>
    %cst_210 = arith.constant 0.000000e+00 : f32
    %425 = vector.broadcast %cst_210 : f32 to vector<8x128xf32>
    %426 = arith.select %421, %425, %424 : vector<8x128xi1>, vector<8x128xf32>
    %cst_211 = arith.constant 1.300000e+00 : f32
    %427 = vector.broadcast %cst_211 : f32 to vector<8x128xf32>
    %428 = arith.cmpf ogt, %426, %427 : vector<8x128xf32>
    %429 = arith.extui %428 : vector<8x128xi1> to vector<8x128xi32>
    %430 = arith.sitofp %429 : vector<8x128xi32> to vector<8x128xf32>
    %c64_212 = arith.constant 64 : index
    %c0_213 = arith.constant 0 : index
    %431 = vector.load %arg5[%c64_212, %c0_213] : memref<200x128xf32, #tpu.memory_space<vmem>>, vector<8x128xf32>
    tpu.vector_store %arg5[%c64_212, %c0_213], %430 {strides = array<i32>} : memref<200x128xf32, #tpu.memory_space<vmem>>, vector<8x128xf32>,
    %c72_214 = arith.constant 72 : index
    %c0_215 = arith.constant 0 : index
    %432 = vector.load %arg5[%c72_214, %c0_215] : memref<200x128xf32, #tpu.memory_space<vmem>>, vector<8x128xf32>
    %cst_216 = arith.constant 1.300000e+00 : f32
    %433 = vector.broadcast %cst_216 : f32 to vector<8x128xf32>
    %434 = arith.cmpf ogt, %426, %433 : vector<8x128xf32>
    %cst_217 = arith.constant 8.000000e-01 : f32
    %435 = vector.broadcast %cst_217 : f32 to vector<8x128xf32>
    %436 = arith.mulf %435, %426 : vector<8x128xf32>
    %437 = arith.addf %436, %432 : vector<8x128xf32>
    %cst_218 = arith.constant 0.000000e+00 : f32
    %438 = vector.broadcast %cst_218 : f32 to vector<8x128xf32>
    %439 = arith.select %434, %438, %437 : vector<8x128xi1>, vector<8x128xf32>
    %cst_219 = arith.constant 1.300000e+00 : f32
    %440 = vector.broadcast %cst_219 : f32 to vector<8x128xf32>
    %441 = arith.cmpf ogt, %439, %440 : vector<8x128xf32>
    %442 = arith.extui %441 : vector<8x128xi1> to vector<8x128xi32>
    %443 = arith.sitofp %442 : vector<8x128xi32> to vector<8x128xf32>
    %c72_220 = arith.constant 72 : index
    %c0_221 = arith.constant 0 : index
    %444 = vector.load %arg5[%c72_220, %c0_221] : memref<200x128xf32, #tpu.memory_space<vmem>>, vector<8x128xf32>
    tpu.vector_store %arg5[%c72_220, %c0_221], %443 {strides = array<i32>} : memref<200x128xf32, #tpu.memory_space<vmem>>, vector<8x128xf32>,
    %c80_222 = arith.constant 80 : index
    %c0_223 = arith.constant 0 : index
    %445 = vector.load %arg5[%c80_222, %c0_223] : memref<200x128xf32, #tpu.memory_space<vmem>>, vector<8x128xf32>
    %cst_224 = arith.constant 1.300000e+00 : f32
    %446 = vector.broadcast %cst_224 : f32 to vector<8x128xf32>
    %447 = arith.cmpf ogt, %439, %446 : vector<8x128xf32>
    %cst_225 = arith.constant 8.000000e-01 : f32
    %448 = vector.broadcast %cst_225 : f32 to vector<8x128xf32>
    %449 = arith.mulf %448, %439 : vector<8x128xf32>
    %450 = arith.addf %449, %445 : vector<8x128xf32>
    %cst_226 = arith.constant 0.000000e+00 : f32
    %451 = vector.broadcast %cst_226 : f32 to vector<8x128xf32>
    %452 = arith.select %447, %451, %450 : vector<8x128xi1>, vector<8x128xf32>
    %cst_227 = arith.constant 1.300000e+00 : f32
    %453 = vector.broadcast %cst_227 : f32 to vector<8x128xf32>
    %454 = arith.cmpf ogt, %452, %453 : vector<8x128xf32>
    %455 = arith.extui %454 : vector<8x128xi1> to vector<8x128xi32>
    %456 = arith.sitofp %455 : vector<8x128xi32> to vector<8x128xf32>
    %c80_228 = arith.constant 80 : index
    %c0_229 = arith.constant 0 : index
    %457 = vector.load %arg5[%c80_228, %c0_229] : memref<200x128xf32, #tpu.memory_space<vmem>>, vector<8x128xf32>
    tpu.vector_store %arg5[%c80_228, %c0_229], %456 {strides = array<i32>} : memref<200x128xf32, #tpu.memory_space<vmem>>, vector<8x128xf32>,
    %c88_230 = arith.constant 88 : index
    %c0_231 = arith.constant 0 : index
    %458 = vector.load %arg5[%c88_230, %c0_231] : memref<200x128xf32, #tpu.memory_space<vmem>>, vector<8x128xf32>
    %cst_232 = arith.constant 1.300000e+00 : f32
    %459 = vector.broadcast %cst_232 : f32 to vector<8x128xf32>
    %460 = arith.cmpf ogt, %452, %459 : vector<8x128xf32>
    %cst_233 = arith.constant 8.000000e-01 : f32
    %461 = vector.broadcast %cst_233 : f32 to vector<8x128xf32>
    %462 = arith.mulf %461, %452 : vector<8x128xf32>
    %463 = arith.addf %462, %458 : vector<8x128xf32>
    %cst_234 = arith.constant 0.000000e+00 : f32
    %464 = vector.broadcast %cst_234 : f32 to vector<8x128xf32>
    %465 = arith.select %460, %464, %463 : vector<8x128xi1>, vector<8x128xf32>
    %cst_235 = arith.constant 1.300000e+00 : f32
    %466 = vector.broadcast %cst_235 : f32 to vector<8x128xf32>
    %467 = arith.cmpf ogt, %465, %466 : vector<8x128xf32>
    %468 = arith.extui %467 : vector<8x128xi1> to vector<8x128xi32>
    %469 = arith.sitofp %468 : vector<8x128xi32> to vector<8x128xf32>
    %c88_236 = arith.constant 88 : index
    %c0_237 = arith.constant 0 : index
    %470 = vector.load %arg5[%c88_236, %c0_237] : memref<200x128xf32, #tpu.memory_space<vmem>>, vector<8x128xf32>
    tpu.vector_store %arg5[%c88_236, %c0_237], %469 {strides = array<i32>} : memref<200x128xf32, #tpu.memory_space<vmem>>, vector<8x128xf32>,
    %c96_238 = arith.constant 96 : index
    %c0_239 = arith.constant 0 : index
    %471 = vector.load %arg5[%c96_238, %c0_239] : memref<200x128xf32, #tpu.memory_space<vmem>>, vector<8x128xf32>
    %cst_240 = arith.constant 1.300000e+00 : f32
    %472 = vector.broadcast %cst_240 : f32 to vector<8x128xf32>
    %473 = arith.cmpf ogt, %465, %472 : vector<8x128xf32>
    %cst_241 = arith.constant 8.000000e-01 : f32
    %474 = vector.broadcast %cst_241 : f32 to vector<8x128xf32>
    %475 = arith.mulf %474, %465 : vector<8x128xf32>
    %476 = arith.addf %475, %471 : vector<8x128xf32>
    %cst_242 = arith.constant 0.000000e+00 : f32
    %477 = vector.broadcast %cst_242 : f32 to vector<8x128xf32>
    %478 = arith.select %473, %477, %476 : vector<8x128xi1>, vector<8x128xf32>
    %cst_243 = arith.constant 1.300000e+00 : f32
    %479 = vector.broadcast %cst_243 : f32 to vector<8x128xf32>
    %480 = arith.cmpf ogt, %478, %479 : vector<8x128xf32>
    %481 = arith.extui %480 : vector<8x128xi1> to vector<8x128xi32>
    %482 = arith.sitofp %481 : vector<8x128xi32> to vector<8x128xf32>
    %c96_244 = arith.constant 96 : index
    %c0_245 = arith.constant 0 : index
    %483 = vector.load %arg5[%c96_244, %c0_245] : memref<200x128xf32, #tpu.memory_space<vmem>>, vector<8x128xf32>
    tpu.vector_store %arg5[%c96_244, %c0_245], %482 {strides = array<i32>} : memref<200x128xf32, #tpu.memory_space<vmem>>, vector<8x128xf32>,
    %c104_246 = arith.constant 104 : index
    %c0_247 = arith.constant 0 : index
    %484 = vector.load %arg5[%c104_246, %c0_247] : memref<200x128xf32, #tpu.memory_space<vmem>>, vector<8x128xf32>
    %cst_248 = arith.constant 1.300000e+00 : f32
    %485 = vector.broadcast %cst_248 : f32 to vector<8x128xf32>
    %486 = arith.cmpf ogt, %478, %485 : vector<8x128xf32>
    %cst_249 = arith.constant 8.000000e-01 : f32
    %487 = vector.broadcast %cst_249 : f32 to vector<8x128xf32>
    %488 = arith.mulf %487, %478 : vector<8x128xf32>
    %489 = arith.addf %488, %484 : vector<8x128xf32>
    %cst_250 = arith.constant 0.000000e+00 : f32
    %490 = vector.broadcast %cst_250 : f32 to vector<8x128xf32>
    %491 = arith.select %486, %490, %489 : vector<8x128xi1>, vector<8x128xf32>
    %cst_251 = arith.constant 1.300000e+00 : f32
    %492 = vector.broadcast %cst_251 : f32 to vector<8x128xf32>
    %493 = arith.cmpf ogt, %491, %492 : vector<8x128xf32>
    %494 = arith.extui %493 : vector<8x128xi1> to vector<8x128xi32>
    %495 = arith.sitofp %494 : vector<8x128xi32> to vector<8x128xf32>
    %c104_252 = arith.constant 104 : index
    %c0_253 = arith.constant 0 : index
    %496 = vector.load %arg5[%c104_252, %c0_253] : memref<200x128xf32, #tpu.memory_space<vmem>>, vector<8x128xf32>
    tpu.vector_store %arg5[%c104_252, %c0_253], %495 {strides = array<i32>} : memref<200x128xf32, #tpu.memory_space<vmem>>, vector<8x128xf32>,
    %c112_254 = arith.constant 112 : index
    %c0_255 = arith.constant 0 : index
    %497 = vector.load %arg5[%c112_254, %c0_255] : memref<200x128xf32, #tpu.memory_space<vmem>>, vector<8x128xf32>
    %cst_256 = arith.constant 1.300000e+00 : f32
    %498 = vector.broadcast %cst_256 : f32 to vector<8x128xf32>
    %499 = arith.cmpf ogt, %491, %498 : vector<8x128xf32>
    %cst_257 = arith.constant 8.000000e-01 : f32
    %500 = vector.broadcast %cst_257 : f32 to vector<8x128xf32>
    %501 = arith.mulf %500, %491 : vector<8x128xf32>
    %502 = arith.addf %501, %497 : vector<8x128xf32>
    %cst_258 = arith.constant 0.000000e+00 : f32
    %503 = vector.broadcast %cst_258 : f32 to vector<8x128xf32>
    %504 = arith.select %499, %503, %502 : vector<8x128xi1>, vector<8x128xf32>
    %cst_259 = arith.constant 1.300000e+00 : f32
    %505 = vector.broadcast %cst_259 : f32 to vector<8x128xf32>
    %506 = arith.cmpf ogt, %504, %505 : vector<8x128xf32>
    %507 = arith.extui %506 : vector<8x128xi1> to vector<8x128xi32>
    %508 = arith.sitofp %507 : vector<8x128xi32> to vector<8x128xf32>
    %c112_260 = arith.constant 112 : index
    %c0_261 = arith.constant 0 : index
    %509 = vector.load %arg5[%c112_260, %c0_261] : memref<200x128xf32, #tpu.memory_space<vmem>>, vector<8x128xf32>
    tpu.vector_store %arg5[%c112_260, %c0_261], %508 {strides = array<i32>} : memref<200x128xf32, #tpu.memory_space<vmem>>, vector<8x128xf32>,
    %c120_262 = arith.constant 120 : index
    %c0_263 = arith.constant 0 : index
    %510 = vector.load %arg5[%c120_262, %c0_263] : memref<200x128xf32, #tpu.memory_space<vmem>>, vector<8x128xf32>
    %cst_264 = arith.constant 1.300000e+00 : f32
    %511 = vector.broadcast %cst_264 : f32 to vector<8x128xf32>
    %512 = arith.cmpf ogt, %504, %511 : vector<8x128xf32>
    %cst_265 = arith.constant 8.000000e-01 : f32
    %513 = vector.broadcast %cst_265 : f32 to vector<8x128xf32>
    %514 = arith.mulf %513, %504 : vector<8x128xf32>
    %515 = arith.addf %514, %510 : vector<8x128xf32>
    %cst_266 = arith.constant 0.000000e+00 : f32
    %516 = vector.broadcast %cst_266 : f32 to vector<8x128xf32>
    %517 = arith.select %512, %516, %515 : vector<8x128xi1>, vector<8x128xf32>
    %cst_267 = arith.constant 1.300000e+00 : f32
    %518 = vector.broadcast %cst_267 : f32 to vector<8x128xf32>
    %519 = arith.cmpf ogt, %517, %518 : vector<8x128xf32>
    %520 = arith.extui %519 : vector<8x128xi1> to vector<8x128xi32>
    %521 = arith.sitofp %520 : vector<8x128xi32> to vector<8x128xf32>
    %c120_268 = arith.constant 120 : index
    %c0_269 = arith.constant 0 : index
    %522 = vector.load %arg5[%c120_268, %c0_269] : memref<200x128xf32, #tpu.memory_space<vmem>>, vector<8x128xf32>
    tpu.vector_store %arg5[%c120_268, %c0_269], %521 {strides = array<i32>} : memref<200x128xf32, #tpu.memory_space<vmem>>, vector<8x128xf32>,
    %c128_270 = arith.constant 128 : index
    %c0_271 = arith.constant 0 : index
    %523 = vector.load %arg5[%c128_270, %c0_271] : memref<200x128xf32, #tpu.memory_space<vmem>>, vector<8x128xf32>
    %cst_272 = arith.constant 1.300000e+00 : f32
    %524 = vector.broadcast %cst_272 : f32 to vector<8x128xf32>
    %525 = arith.cmpf ogt, %517, %524 : vector<8x128xf32>
    %cst_273 = arith.constant 8.000000e-01 : f32
    %526 = vector.broadcast %cst_273 : f32 to vector<8x128xf32>
    %527 = arith.mulf %526, %517 : vector<8x128xf32>
    %528 = arith.addf %527, %523 : vector<8x128xf32>
    %cst_274 = arith.constant 0.000000e+00 : f32
    %529 = vector.broadcast %cst_274 : f32 to vector<8x128xf32>
    %530 = arith.select %525, %529, %528 : vector<8x128xi1>, vector<8x128xf32>
    %cst_275 = arith.constant 1.300000e+00 : f32
    %531 = vector.broadcast %cst_275 : f32 to vector<8x128xf32>
    %532 = arith.cmpf ogt, %530, %531 : vector<8x128xf32>
    %533 = arith.extui %532 : vector<8x128xi1> to vector<8x128xi32>
    %534 = arith.sitofp %533 : vector<8x128xi32> to vector<8x128xf32>
    %c128_276 = arith.constant 128 : index
    %c0_277 = arith.constant 0 : index
    %535 = vector.load %arg5[%c128_276, %c0_277] : memref<200x128xf32, #tpu.memory_space<vmem>>, vector<8x128xf32>
    tpu.vector_store %arg5[%c128_276, %c0_277], %534 {strides = array<i32>} : memref<200x128xf32, #tpu.memory_space<vmem>>, vector<8x128xf32>,
    %c136_278 = arith.constant 136 : index
    %c0_279 = arith.constant 0 : index
    %536 = vector.load %arg5[%c136_278, %c0_279] : memref<200x128xf32, #tpu.memory_space<vmem>>, vector<8x128xf32>
    %cst_280 = arith.constant 1.300000e+00 : f32
    %537 = vector.broadcast %cst_280 : f32 to vector<8x128xf32>
    %538 = arith.cmpf ogt, %530, %537 : vector<8x128xf32>
    %cst_281 = arith.constant 8.000000e-01 : f32
    %539 = vector.broadcast %cst_281 : f32 to vector<8x128xf32>
    %540 = arith.mulf %539, %530 : vector<8x128xf32>
    %541 = arith.addf %540, %536 : vector<8x128xf32>
    %cst_282 = arith.constant 0.000000e+00 : f32
    %542 = vector.broadcast %cst_282 : f32 to vector<8x128xf32>
    %543 = arith.select %538, %542, %541 : vector<8x128xi1>, vector<8x128xf32>
    %cst_283 = arith.constant 1.300000e+00 : f32
    %544 = vector.broadcast %cst_283 : f32 to vector<8x128xf32>
    %545 = arith.cmpf ogt, %543, %544 : vector<8x128xf32>
    %546 = arith.extui %545 : vector<8x128xi1> to vector<8x128xi32>
    %547 = arith.sitofp %546 : vector<8x128xi32> to vector<8x128xf32>
    %c136_284 = arith.constant 136 : index
    %c0_285 = arith.constant 0 : index
    %548 = vector.load %arg5[%c136_284, %c0_285] : memref<200x128xf32, #tpu.memory_space<vmem>>, vector<8x128xf32>
    tpu.vector_store %arg5[%c136_284, %c0_285], %547 {strides = array<i32>} : memref<200x128xf32, #tpu.memory_space<vmem>>, vector<8x128xf32>,
    %c144_286 = arith.constant 144 : index
    %c0_287 = arith.constant 0 : index
    %549 = vector.load %arg5[%c144_286, %c0_287] : memref<200x128xf32, #tpu.memory_space<vmem>>, vector<8x128xf32>
    %cst_288 = arith.constant 1.300000e+00 : f32
    %550 = vector.broadcast %cst_288 : f32 to vector<8x128xf32>
    %551 = arith.cmpf ogt, %543, %550 : vector<8x128xf32>
    %cst_289 = arith.constant 8.000000e-01 : f32
    %552 = vector.broadcast %cst_289 : f32 to vector<8x128xf32>
    %553 = arith.mulf %552, %543 : vector<8x128xf32>
    %554 = arith.addf %553, %549 : vector<8x128xf32>
    %cst_290 = arith.constant 0.000000e+00 : f32
    %555 = vector.broadcast %cst_290 : f32 to vector<8x128xf32>
    %556 = arith.select %551, %555, %554 : vector<8x128xi1>, vector<8x128xf32>
    %cst_291 = arith.constant 1.300000e+00 : f32
    %557 = vector.broadcast %cst_291 : f32 to vector<8x128xf32>
    %558 = arith.cmpf ogt, %556, %557 : vector<8x128xf32>
    %559 = arith.extui %558 : vector<8x128xi1> to vector<8x128xi32>
    %560 = arith.sitofp %559 : vector<8x128xi32> to vector<8x128xf32>
    %c144_292 = arith.constant 144 : index
    %c0_293 = arith.constant 0 : index
    %561 = vector.load %arg5[%c144_292, %c0_293] : memref<200x128xf32, #tpu.memory_space<vmem>>, vector<8x128xf32>
    tpu.vector_store %arg5[%c144_292, %c0_293], %560 {strides = array<i32>} : memref<200x128xf32, #tpu.memory_space<vmem>>, vector<8x128xf32>,
    %c152_294 = arith.constant 152 : index
    %c0_295 = arith.constant 0 : index
    %562 = vector.load %arg5[%c152_294, %c0_295] : memref<200x128xf32, #tpu.memory_space<vmem>>, vector<8x128xf32>
    %cst_296 = arith.constant 1.300000e+00 : f32
    %563 = vector.broadcast %cst_296 : f32 to vector<8x128xf32>
    %564 = arith.cmpf ogt, %556, %563 : vector<8x128xf32>
    %cst_297 = arith.constant 8.000000e-01 : f32
    %565 = vector.broadcast %cst_297 : f32 to vector<8x128xf32>
    %566 = arith.mulf %565, %556 : vector<8x128xf32>
    %567 = arith.addf %566, %562 : vector<8x128xf32>
    %cst_298 = arith.constant 0.000000e+00 : f32
    %568 = vector.broadcast %cst_298 : f32 to vector<8x128xf32>
    %569 = arith.select %564, %568, %567 : vector<8x128xi1>, vector<8x128xf32>
    %cst_299 = arith.constant 1.300000e+00 : f32
    %570 = vector.broadcast %cst_299 : f32 to vector<8x128xf32>
    %571 = arith.cmpf ogt, %569, %570 : vector<8x128xf32>
    %572 = arith.extui %571 : vector<8x128xi1> to vector<8x128xi32>
    %573 = arith.sitofp %572 : vector<8x128xi32> to vector<8x128xf32>
    %c152_300 = arith.constant 152 : index
    %c0_301 = arith.constant 0 : index
    %574 = vector.load %arg5[%c152_300, %c0_301] : memref<200x128xf32, #tpu.memory_space<vmem>>, vector<8x128xf32>
    tpu.vector_store %arg5[%c152_300, %c0_301], %573 {strides = array<i32>} : memref<200x128xf32, #tpu.memory_space<vmem>>, vector<8x128xf32>,
    %c160_302 = arith.constant 160 : index
    %c0_303 = arith.constant 0 : index
    %575 = vector.load %arg5[%c160_302, %c0_303] : memref<200x128xf32, #tpu.memory_space<vmem>>, vector<8x128xf32>
    %cst_304 = arith.constant 1.300000e+00 : f32
    %576 = vector.broadcast %cst_304 : f32 to vector<8x128xf32>
    %577 = arith.cmpf ogt, %569, %576 : vector<8x128xf32>
    %cst_305 = arith.constant 8.000000e-01 : f32
    %578 = vector.broadcast %cst_305 : f32 to vector<8x128xf32>
    %579 = arith.mulf %578, %569 : vector<8x128xf32>
    %580 = arith.addf %579, %575 : vector<8x128xf32>
    %cst_306 = arith.constant 0.000000e+00 : f32
    %581 = vector.broadcast %cst_306 : f32 to vector<8x128xf32>
    %582 = arith.select %577, %581, %580 : vector<8x128xi1>, vector<8x128xf32>
    %cst_307 = arith.constant 1.300000e+00 : f32
    %583 = vector.broadcast %cst_307 : f32 to vector<8x128xf32>
    %584 = arith.cmpf ogt, %582, %583 : vector<8x128xf32>
    %585 = arith.extui %584 : vector<8x128xi1> to vector<8x128xi32>
    %586 = arith.sitofp %585 : vector<8x128xi32> to vector<8x128xf32>
    %c160_308 = arith.constant 160 : index
    %c0_309 = arith.constant 0 : index
    %587 = vector.load %arg5[%c160_308, %c0_309] : memref<200x128xf32, #tpu.memory_space<vmem>>, vector<8x128xf32>
    tpu.vector_store %arg5[%c160_308, %c0_309], %586 {strides = array<i32>} : memref<200x128xf32, #tpu.memory_space<vmem>>, vector<8x128xf32>,
    %c168_310 = arith.constant 168 : index
    %c0_311 = arith.constant 0 : index
    %588 = vector.load %arg5[%c168_310, %c0_311] : memref<200x128xf32, #tpu.memory_space<vmem>>, vector<8x128xf32>
    %cst_312 = arith.constant 1.300000e+00 : f32
    %589 = vector.broadcast %cst_312 : f32 to vector<8x128xf32>
    %590 = arith.cmpf ogt, %582, %589 : vector<8x128xf32>
    %cst_313 = arith.constant 8.000000e-01 : f32
    %591 = vector.broadcast %cst_313 : f32 to vector<8x128xf32>
    %592 = arith.mulf %591, %582 : vector<8x128xf32>
    %593 = arith.addf %592, %588 : vector<8x128xf32>
    %cst_314 = arith.constant 0.000000e+00 : f32
    %594 = vector.broadcast %cst_314 : f32 to vector<8x128xf32>
    %595 = arith.select %590, %594, %593 : vector<8x128xi1>, vector<8x128xf32>
    %cst_315 = arith.constant 1.300000e+00 : f32
    %596 = vector.broadcast %cst_315 : f32 to vector<8x128xf32>
    %597 = arith.cmpf ogt, %595, %596 : vector<8x128xf32>
    %598 = arith.extui %597 : vector<8x128xi1> to vector<8x128xi32>
    %599 = arith.sitofp %598 : vector<8x128xi32> to vector<8x128xf32>
    %c168_316 = arith.constant 168 : index
    %c0_317 = arith.constant 0 : index
    %600 = vector.load %arg5[%c168_316, %c0_317] : memref<200x128xf32, #tpu.memory_space<vmem>>, vector<8x128xf32>
    tpu.vector_store %arg5[%c168_316, %c0_317], %599 {strides = array<i32>} : memref<200x128xf32, #tpu.memory_space<vmem>>, vector<8x128xf32>,
    %c176_318 = arith.constant 176 : index
    %c0_319 = arith.constant 0 : index
    %601 = vector.load %arg5[%c176_318, %c0_319] : memref<200x128xf32, #tpu.memory_space<vmem>>, vector<8x128xf32>
    %cst_320 = arith.constant 1.300000e+00 : f32
    %602 = vector.broadcast %cst_320 : f32 to vector<8x128xf32>
    %603 = arith.cmpf ogt, %595, %602 : vector<8x128xf32>
    %cst_321 = arith.constant 8.000000e-01 : f32
    %604 = vector.broadcast %cst_321 : f32 to vector<8x128xf32>
    %605 = arith.mulf %604, %595 : vector<8x128xf32>
    %606 = arith.addf %605, %601 : vector<8x128xf32>
    %cst_322 = arith.constant 0.000000e+00 : f32
    %607 = vector.broadcast %cst_322 : f32 to vector<8x128xf32>
    %608 = arith.select %603, %607, %606 : vector<8x128xi1>, vector<8x128xf32>
    %cst_323 = arith.constant 1.300000e+00 : f32
    %609 = vector.broadcast %cst_323 : f32 to vector<8x128xf32>
    %610 = arith.cmpf ogt, %608, %609 : vector<8x128xf32>
    %611 = arith.extui %610 : vector<8x128xi1> to vector<8x128xi32>
    %612 = arith.sitofp %611 : vector<8x128xi32> to vector<8x128xf32>
    %c176_324 = arith.constant 176 : index
    %c0_325 = arith.constant 0 : index
    %613 = vector.load %arg5[%c176_324, %c0_325] : memref<200x128xf32, #tpu.memory_space<vmem>>, vector<8x128xf32>
    tpu.vector_store %arg5[%c176_324, %c0_325], %612 {strides = array<i32>} : memref<200x128xf32, #tpu.memory_space<vmem>>, vector<8x128xf32>,
    %c184_326 = arith.constant 184 : index
    %c0_327 = arith.constant 0 : index
    %614 = vector.load %arg5[%c184_326, %c0_327] : memref<200x128xf32, #tpu.memory_space<vmem>>, vector<8x128xf32>
    %cst_328 = arith.constant 1.300000e+00 : f32
    %615 = vector.broadcast %cst_328 : f32 to vector<8x128xf32>
    %616 = arith.cmpf ogt, %608, %615 : vector<8x128xf32>
    %cst_329 = arith.constant 8.000000e-01 : f32
    %617 = vector.broadcast %cst_329 : f32 to vector<8x128xf32>
    %618 = arith.mulf %617, %608 : vector<8x128xf32>
    %619 = arith.addf %618, %614 : vector<8x128xf32>
    %cst_330 = arith.constant 0.000000e+00 : f32
    %620 = vector.broadcast %cst_330 : f32 to vector<8x128xf32>
    %621 = arith.select %616, %620, %619 : vector<8x128xi1>, vector<8x128xf32>
    %cst_331 = arith.constant 1.300000e+00 : f32
    %622 = vector.broadcast %cst_331 : f32 to vector<8x128xf32>
    %623 = arith.cmpf ogt, %621, %622 : vector<8x128xf32>
    %624 = arith.extui %623 : vector<8x128xi1> to vector<8x128xi32>
    %625 = arith.sitofp %624 : vector<8x128xi32> to vector<8x128xf32>
    %c184_332 = arith.constant 184 : index
    %c0_333 = arith.constant 0 : index
    %626 = vector.load %arg5[%c184_332, %c0_333] : memref<200x128xf32, #tpu.memory_space<vmem>>, vector<8x128xf32>
    tpu.vector_store %arg5[%c184_332, %c0_333], %625 {strides = array<i32>} : memref<200x128xf32, #tpu.memory_space<vmem>>, vector<8x128xf32>,
    %c192_334 = arith.constant 192 : index
    %c0_335 = arith.constant 0 : index
    %627 = vector.load %arg5[%c192_334, %c0_335] : memref<200x128xf32, #tpu.memory_space<vmem>>, vector<8x128xf32>
    %cst_336 = arith.constant 1.300000e+00 : f32
    %628 = vector.broadcast %cst_336 : f32 to vector<8x128xf32>
    %629 = arith.cmpf ogt, %621, %628 : vector<8x128xf32>
    %cst_337 = arith.constant 8.000000e-01 : f32
    %630 = vector.broadcast %cst_337 : f32 to vector<8x128xf32>
    %631 = arith.mulf %630, %621 : vector<8x128xf32>
    %632 = arith.addf %631, %627 : vector<8x128xf32>
    %cst_338 = arith.constant 0.000000e+00 : f32
    %633 = vector.broadcast %cst_338 : f32 to vector<8x128xf32>
    %634 = arith.select %629, %633, %632 : vector<8x128xi1>, vector<8x128xf32>
    %cst_339 = arith.constant 1.300000e+00 : f32
    %635 = vector.broadcast %cst_339 : f32 to vector<8x128xf32>
    %636 = arith.cmpf ogt, %634, %635 : vector<8x128xf32>
    %637 = arith.extui %636 : vector<8x128xi1> to vector<8x128xi32>
    %638 = arith.sitofp %637 : vector<8x128xi32> to vector<8x128xf32>
    %c192_340 = arith.constant 192 : index
    %c0_341 = arith.constant 0 : index
    %639 = vector.load %arg5[%c192_340, %c0_341] : memref<200x128xf32, #tpu.memory_space<vmem>>, vector<8x128xf32>
    tpu.vector_store %arg5[%c192_340, %c0_341], %638 {strides = array<i32>} : memref<200x128xf32, #tpu.memory_space<vmem>>, vector<8x128xf32>,
    return
  }
}

</mosaic_0001>

<llo_original>
// kernel: snn_forward.1
$region0: #{snn_forward.1}
  #allocation0 [shape = 'u32[]', space=smem, size = 0x4, offset = 0x4, fixed_abs, tag = 'smem constant byte address 0x4 - core index']
  #allocation1 [shape = 'u32[144,128]{1,0:T(1,128)}', space=vmem, size = 0x12000, scoped, tag = 'internal scratch']
  #allocation2 [shape = 'f32[200,1536]{1,0:T(8,128)}', space=vmem, size = 0x12c000, scoped, tag = 'scratch operand']
  %s0 = inlined_call_operand.vmem [shape: f32[8,896], index: 0, kind: input, shape index: {}]
  %s1 = inlined_call_operand.vmem [shape: f32[896,1536], index: 1, kind: input, shape index: {}]
  %s2 = inlined_call_operand.vmem [shape: f32[1,1536], index: 2, kind: input, shape index: {}]
  %s3 = inlined_call_operand.vmem [shape: f32[1536,128], index: 3, kind: input, shape index: {}]
  %s4 = inlined_call_operand.vmem [shape: f32[1,128], index: 4, kind: input, shape index: {}]
  %s5 = inlined_call_operand.vmem [shape: f32[200,128], index: 5, kind: output, shape index: {}]
  %s6 = sld [smem:[#allocation0]]
  $region30: #{snn_forward.1} parent=0
    _
  %s8 = ssub.s32 1, %s6
  %s9 = scalar_select 0, %s8, %s6
  // Predicated region
  $region2: #{snn_forward.1} parent=0 // pred_check
    _
  $region3: #{snn_forward.1} parent=0 // pred_check_branch
    %11 = sbr.rel (0) target = $region5
  $region4: #{snn_forward.1} parent=0 // pred_region
    _
  $region5: #{snn_forward.1} parent=0 // pred_fallthru
    _
  // Predicated region
  $region6: #{snn_forward.1} parent=0 // pred_check
    _
  $region7: #{snn_forward.1} parent=0 // pred_check_branch
    %13 = sbr.rel (0) target = $region9
  $region8: #{snn_forward.1} parent=0 // pred_region
    _
  $region9: #{snn_forward.1} parent=0 // pred_fallthru
    _
  // Predicated region
  $region10: #{snn_forward.1} parent=0 // pred_check
    _
  $region11: #{snn_forward.1} parent=0 // pred_check_branch
    %15 = sbr.rel (0) target = $region13
  $region12: #{snn_forward.1} parent=0 // pred_region
    _
  $region13: #{snn_forward.1} parent=0 // pred_fallthru
    _
  // Predicated region
  $region14: #{snn_forward.1} parent=0 // pred_check
    _
  $region15: #{snn_forward.1} parent=0 // pred_check_branch
    %17 = sbr.rel (0) target = $region17
  $region16: #{snn_forward.1} parent=0 // pred_region
    _
  $region17: #{snn_forward.1} parent=0 // pred_fallthru
    _
  // Predicated region
  $region18: #{snn_forward.1} parent=0 // pred_check
    _
  $region19: #{snn_forward.1} parent=0 // pred_check_branch
    %19 = sbr.rel (0) target = $region21
  $region20: #{snn_forward.1} parent=0 // pred_region
    _
  $region21: #{snn_forward.1} parent=0 // pred_fallthru
    _
  %v20 = vld [vmem:[%s0] sm:$0xff]
  %v21 = vld [vmem:[%s0 + $0x8] sm:$0xff]
  %v22 = vld [vmem:[%s0 + $0x10] sm:$0xff]
  %v23 = vld [vmem:[%s0 + $0x18] sm:$0xff]
  %v24 = vld [vmem:[%s0 + $0x20] sm:$0xff]
  %v25 = vld [vmem:[%s0 + $0x28] sm:$0xff]
  %v26 = vld [vmem:[%s0 + $0x30] sm:$0xff]
  %v27 = vld [vmem:[%s1] sm:$0xff]
  %v28 = vld [vmem:[%s1 + $0x8] sm:$0xff]
  %v29 = vld [vmem:[%s1 + $0x10] sm:$0xff]
  %v30 = vld [vmem:[%s1 + $0x18] sm:$0xff]
  %v31 = vld [vmem:[%s1 + $0x20] sm:$0xff]
  %v32 = vld [vmem:[%s1 + $0x28] sm:$0xff]
  %v33 = vld [vmem:[%s1 + $0x30] sm:$0xff]
  %v34 = vld [vmem:[%s1 + $0x38] sm:$0xff]
  %v35 = vld [vmem:[%s1 + $0x40] sm:$0xff]
  %v36 = vld [vmem:[%s1 + $0x48] sm:$0xff]
  %v37 = vld [vmem:[%s1 + $0x50] sm:$0xff]
  %v38 = vld [vmem:[%s1 + $0x58] sm:$0xff]
  %v39 = vld [vmem:[%s1 + $0x60] sm:$0xff]
  %v40 = vld [vmem:[%s1 + $0x68] sm:$0xff]
  %v41 = vld [vmem:[%s1 + $0x70] sm:$0xff]
  %v42 = vld [vmem:[%s1 + $0x78] sm:$0xff]
  %v43 = vld [vmem:[%s1 + $0x80] sm:$0xff]
  %v44 = vld [vmem:[%s1 + $0x88] sm:$0xff]
  %v45 = vld [vmem:[%s1 + $0x90] sm:$0xff]
  %v46 = vld [vmem:[%s1 + $0x98] sm:$0xff]
  %v47 = vld [vmem:[%s1 + $0xa0] sm:$0xff]
  %v48 = vld [vmem:[%s1 + $0xa8] sm:$0xff]
  %v49 = vld [vmem:[%s1 + $0xb0] sm:$0xff]
  %v50 = vld [vmem:[%s1 + $0xb8] sm:$0xff]
  %v51 = vld [vmem:[%s1 + $0xc0] sm:$0xff]
  %v52 = vld [vmem:[%s1 + $0xc8] sm:$0xff]
  %v53 = vld [vmem:[%s1 + $0xd0] sm:$0xff]
  %v54 = vld [vmem:[%s1 + $0xd8] sm:$0xff]
  %v55 = vld [vmem:[%s1 + $0xe0] sm:$0xff]
  %v56 = vld [vmem:[%s1 + $0xe8] sm:$0xff]
  %v57 = vld [vmem:[%s1 + $0xf0] sm:$0xff]
  %v58 = vld [vmem:[%s1 + $0xf8] sm:$0xff]
  %v59 = vld [vmem:[%s1 + $0x100] sm:$0xff]
  %v60 = vld [vmem:[%s1 + $0x108] sm:$0xff]
  %v61 = vld [vmem:[%s1 + $0x110] sm:$0xff]
  %v62 = vld [vmem:[%s1 + $0x118] sm:$0xff]
  %v63 = vld [vmem:[%s1 + $0x120] sm:$0xff]
  %v64 = vld [vmem:[%s1 + $0x128] sm:$0xff]
  %v65 = vld [vmem:[%s1 + $0x130] sm:$0xff]
  %v66 = vld [vmem:[%s1 + $0x138] sm:$0xff]
  %v67 = vld [vmem:[%s1 + $0x140] sm:$0xff]
  %v68 = vld [vmem:[%s1 + $0x148] sm:$0xff]
  %v69 = vld [vmem:[%s1 + $0x150] sm:$0xff]
  %v70 = vld [vmem:[%s1 + $0x158] sm:$0xff]
  %v71 = vld [vmem:[%s1 + $0x160] sm:$0xff]
  %v72 = vld [vmem:[%s1 + $0x168] sm:$0xff]
  %v73 = vld [vmem:[%s1 + $0x170] sm:$0xff]
  %v74 = vld [vmem:[%s1 + $0x178] sm:$0xff]
  %v75 = vld [vmem:[%s1 + $0x180] sm:$0xff]
  %v76 = vld [vmem:[%s1 + $0x188] sm:$0xff]
  %v77 = vld [vmem:[%s1 + $0x190] sm:$0xff]
  %v78 = vld [vmem:[%s1 + $0x198] sm:$0xff]
  %v79 = vld [vmem:[%s1 + $0x1a0] sm:$0xff]
  %v80 = vld [vmem:[%s1 + $0x1a8] sm:$0xff]
  %v81 = vld [vmem:[%s1 + $0x1b0] sm:$0xff]
  %v82 = vld [vmem:[%s1 + $0x1b8] sm:$0xff]
  %v83 = vld [vmem:[%s1 + $0x1c0] sm:$0xff]
  %v84 = vld [vmem:[%s1 + $0x1c8] sm:$0xff]
  %v85 = vld [vmem:[%s1 + $0x1d0] sm:$0xff]
  %v86 = vld [vmem:[%s1 + $0x1d8] sm:$0xff]
  %v87 = vld [vmem:[%s1 + $0x1e0] sm:$0xff]
  %v88 = vld [vmem:[%s1 + $0x1e8] sm:$0xff]
  %v89 = vld [vmem:[%s1 + $0x1f0] sm:$0xff]
  %v90 = vld [vmem:[%s1 + $0x1f8] sm:$0xff]
  %v91 = vld [vmem:[%s1 + $0x200] sm:$0xff]
  %v92 = vld [vmem:[%s1 + $0x208] sm:$0xff]
  %v93 = vld [vmem:[%s1 + $0x210] sm:$0xff]
  %v94 = vld [vmem:[%s1 + $0x218] sm:$0xff]
  %v95 = vld [vmem:[%s1 + $0x220] sm:$0xff]
  %v96 = vld [vmem:[%s1 + $0x228] sm:$0xff]
  %v97 = vld [vmem:[%s1 + $0x230] sm:$0xff]
  %v98 = vld [vmem:[%s1 + $0x238] sm:$0xff]
  %v99 = vld [vmem:[%s1 + $0x240] sm:$0xff]
  %v100 = vld [vmem:[%s1 + $0x248] sm:$0xff]
  %v101 = vld [vmem:[%s1 + $0x250] sm:$0xff]
  %v102 = vld [vmem:[%s1 + $0x258] sm:$0xff]
  %v103 = vld [vmem:[%s1 + $0x260] sm:$0xff]
  %v104 = vld [vmem:[%s1 + $0x268] sm:$0xff]
  %v105 = vld [vmem:[%s1 + $0x270] sm:$0xff]
  %v106 = vld [vmem:[%s1 + $0x278] sm:$0xff]
  %v107 = vld [vmem:[%s1 + $0x280] sm:$0xff]
  %v108 = vld [vmem:[%s1 + $0x288] sm:$0xff]
  %v109 = vld [vmem:[%s1 + $0x290] sm:$0xff]
  %v110 = vld [vmem:[%s1 + $0x298] sm:$0xff]
  %v111 = vld [vmem:[%s1 + $0x2a0] sm:$0xff]
  %v112 = vld [vmem:[%s1 + $0x2a8] sm:$0xff]
  %v113 = vld [vmem:[%s1 + $0x2b0] sm:$0xff]
  %v114 = vld [vmem:[%s1 + $0x2b8] sm:$0xff]
  %v115 = vld [vmem:[%s1 + $0x2c0] sm:$0xff]
  %v116 = vld [vmem:[%s1 + $0x2c8] sm:$0xff]
  %v117 = vld [vmem:[%s1 + $0x2d0] sm:$0xff]
  %v118 = vld [vmem:[%s1 + $0x2d8] sm:$0xff]
  %v119 = vld [vmem:[%s1 + $0x2e0] sm:$0xff]
  %v120 = vld [vmem:[%s1 + $0x2e8] sm:$0xff]
  %v121 = vld [vmem:[%s1 + $0x2f0] sm:$0xff]
  %v122 = vld [vmem:[%s1 + $0x2f8] sm:$0xff]
  %v123 = vld [vmem:[%s1 + $0x300] sm:$0xff]
  %v124 = vld [vmem:[%s1 + $0x308] sm:$0xff]
  %v125 = vld [vmem:[%s1 + $0x310] sm:$0xff]
  %v126 = vld [vmem:[%s1 + $0x318] sm:$0xff]
  %v127 = vld [vmem:[%s1 + $0x320] sm:$0xff]
  %v128 = vld [vmem:[%s1 + $0x328] sm:$0xff]
  %v129 = vld [vmem:[%s1 + $0x330] sm:$0xff]
  %v130 = vld [vmem:[%s1 + $0x338] sm:$0xff]
  %v131 = vld [vmem:[%s1 + $0x340] sm:$0xff]
  %v132 = vld [vmem:[%s1 + $0x348] sm:$0xff]
  %v133 = vld [vmem:[%s1 + $0x350] sm:$0xff]
  %v134 = vld [vmem:[%s1 + $0x358] sm:$0xff]
  %v135 = vld [vmem:[%s1 + $0x360] sm:$0xff]
  %v136 = vld [vmem:[%s1 + $0x368] sm:$0xff]
  %v137 = vld [vmem:[%s1 + $0x370] sm:$0xff]
  %v138 = vld [vmem:[%s1 + $0x378] sm:$0xff]
  %v139 = vld [vmem:[%s1 + $0x380] sm:$0xff]
  %v140 = vld [vmem:[%s1 + $0x388] sm:$0xff]
  %v141 = vld [vmem:[%s1 + $0x390] sm:$0xff]
  %v142 = vld [vmem:[%s1 + $0x398] sm:$0xff]
  %v143 = vld [vmem:[%s1 + $0x3a0] sm:$0xff]
  %v144 = vld [vmem:[%s1 + $0x3a8] sm:$0xff]
  %v145 = vld [vmem:[%s1 + $0x3b0] sm:$0xff]
  %v146 = vld [vmem:[%s1 + $0x3b8] sm:$0xff]
  %v147 = vld [vmem:[%s1 + $0x3c0] sm:$0xff]
  %v148 = vld [vmem:[%s1 + $0x3c8] sm:$0xff]
  %v149 = vld [vmem:[%s1 + $0x3d0] sm:$0xff]
  %v150 = vld [vmem:[%s1 + $0x3d8] sm:$0xff]
  %v151 = vld [vmem:[%s1 + $0x3e0] sm:$0xff]
  %v152 = vld [vmem:[%s1 + $0x3e8] sm:$0xff]
  %v153 = vld [vmem:[%s1 + $0x3f0] sm:$0xff]
  %v154 = vld [vmem:[%s1 + $0x3f8] sm:$0xff]
  %v155 = vld [vmem:[%s1 + $0x400] sm:$0xff]
  %v156 = vld [vmem:[%s1 + $0x408] sm:$0xff]
  %v157 = vld [vmem:[%s1 + $0x410] sm:$0xff]
  %v158 = vld [vmem:[%s1 + $0x418] sm:$0xff]
  %v159 = vld [vmem:[%s1 + $0x420] sm:$0xff]
  %v160 = vld [vmem:[%s1 + $0x428] sm:$0xff]
  %v161 = vld [vmem:[%s1 + $0x430] sm:$0xff]
  %v162 = vld [vmem:[%s1 + $0x438] sm:$0xff]
  %v163 = vld [vmem:[%s1 + $0x440] sm:$0xff]
  %v164 = vld [vmem:[%s1 + $0x448] sm:$0xff]
  %v165 = vld [vmem:[%s1 + $0x450] sm:$0xff]
  %v166 = vld [vmem:[%s1 + $0x458] sm:$0xff]
  %v167 = vld [vmem:[%s1 + $0x460] sm:$0xff]
  %v168 = vld [vmem:[%s1 + $0x468] sm:$0xff]
  %v169 = vld [vmem:[%s1 + $0x470] sm:$0xff]
  %v170 = vld [vmem:[%s1 + $0x478] sm:$0xff]
  %v171 = vld [vmem:[%s1 + $0x480] sm:$0xff]
  %v172 = vld [vmem:[%s1 + $0x488] sm:$0xff]
  %v173 = vld [vmem:[%s1 + $0x490] sm:$0xff]
  %v174 = vld [vmem:[%s1 + $0x498] sm:$0xff]
  %v175 = vld [vmem:[%s1 + $0x4a0] sm:$0xff]
  %v176 = vld [vmem:[%s1 + $0x4a8] sm:$0xff]
  %v177 = vld [vmem:[%s1 + $0x4b0] sm:$0xff]
  %v178 = vld [vmem:[%s1 + $0x4b8] sm:$0xff]
  %v179 = vld [vmem:[%s1 + $0x4c0] sm:$0xff]
  %v180 = vld [vmem:[%s1 + $0x4c8] sm:$0xff]
  %v181 = vld [vmem:[%s1 + $0x4d0] sm:$0xff]
  %v182 = vld [vmem:[%s1 + $0x4d8] sm:$0xff]
  %v183 = vld [vmem:[%s1 + $0x4e0] sm:$0xff]
  %v184 = vld [vmem:[%s1 + $0x4e8] sm:$0xff]
  %v185 = vld [vmem:[%s1 + $0x4f0] sm:$0xff]
  %v186 = vld [vmem:[%s1 + $0x4f8] sm:$0xff]
  %v187 = vld [vmem:[%s1 + $0x500] sm:$0xff]
  %v188 = vld [vmem:[%s1 + $0x508] sm:$0xff]
  %v189 = vld [vmem:[%s1 + $0x510] sm:$0xff]
  %v190 = vld [vmem:[%s1 + $0x518] sm:$0xff]
  %v191 = vld [vmem:[%s1 + $0x520] sm:$0xff]
  %v192 = vld [vmem:[%s1 + $0x528] sm:$0xff]
  %v193 = vld [vmem:[%s1 + $0x530] sm:$0xff]
  %v194 = vld [vmem:[%s1 + $0x538] sm:$0xff]
  %v195 = vld [vmem:[%s1 + $0x540] sm:$0xff]
  %v196 = vld [vmem:[%s1 + $0x548] sm:$0xff]
  %v197 = vld [vmem:[%s1 + $0x550] sm:$0xff]
  %v198 = vld [vmem:[%s1 + $0x558] sm:$0xff]
  %v199 = vld [vmem:[%s1 + $0x560] sm:$0xff]
  %v200 = vld [vmem:[%s1 + $0x568] sm:$0xff]
  %v201 = vld [vmem:[%s1 + $0x570] sm:$0xff]
  %v202 = vld [vmem:[%s1 + $0x578] sm:$0xff]
  %v203 = vld [vmem:[%s1 + $0x580] sm:$0xff]
  %v204 = vld [vmem:[%s1 + $0x588] sm:$0xff]
  %v205 = vld [vmem:[%s1 + $0x590] sm:$0xff]
  %v206 = vld [vmem:[%s1 + $0x598] sm:$0xff]
  %v207 = vld [vmem:[%s1 + $0x5a0] sm:$0xff]
  %v208 = vld [vmem:[%s1 + $0x5a8] sm:$0xff]
  %v209 = vld [vmem:[%s1 + $0x5b0] sm:$0xff]
  %v210 = vld [vmem:[%s1 + $0x5b8] sm:$0xff]
  %v211 = vld [vmem:[%s1 + $0x5c0] sm:$0xff]
  %v212 = vld [vmem:[%s1 + $0x5c8] sm:$0xff]
  %v213 = vld [vmem:[%s1 + $0x5d0] sm:$0xff]
  %v214 = vld [vmem:[%s1 + $0x5d8] sm:$0xff]
  %v215 = vld [vmem:[%s1 + $0x5e0] sm:$0xff]
  %v216 = vld [vmem:[%s1 + $0x5e8] sm:$0xff]
  %v217 = vld [vmem:[%s1 + $0x5f0] sm:$0xff]
  %v218 = vld [vmem:[%s1 + $0x5f8] sm:$0xff]
  %v219 = vld [vmem:[%s1 + $0x600] sm:$0xff]
  %v220 = vld [vmem:[%s1 + $0x608] sm:$0xff]
  %v221 = vld [vmem:[%s1 + $0x610] sm:$0xff]
  %v222 = vld [vmem:[%s1 + $0x618] sm:$0xff]
  %v223 = vld [vmem:[%s1 + $0x620] sm:$0xff]
  %v224 = vld [vmem:[%s1 + $0x628] sm:$0xff]
  %v225 = vld [vmem:[%s1 + $0x630] sm:$0xff]
  %v226 = vld [vmem:[%s1 + $0x638] sm:$0xff]
  %v227 = vld [vmem:[%s1 + $0x640] sm:$0xff]
  %v228 = vld [vmem:[%s1 + $0x648] sm:$0xff]
  %v229 = vld [vmem:[%s1 + $0x650] sm:$0xff]
  %v230 = vld [vmem:[%s1 + $0x658] sm:$0xff]
  %v231 = vld [vmem:[%s1 + $0x660] sm:$0xff]
  %v232 = vld [vmem:[%s1 + $0x668] sm:$0xff]
  %v233 = vld [vmem:[%s1 + $0x670] sm:$0xff]
  %v234 = vld [vmem:[%s1 + $0x678] sm:$0xff]
  %v235 = vld [vmem:[%s1 + $0x680] sm:$0xff]
  %v236 = vld [vmem:[%s1 + $0x688] sm:$0xff]
  %v237 = vld [vmem:[%s1 + $0x690] sm:$0xff]
  %v238 = vld [vmem:[%s1 + $0x698] sm:$0xff]
  %v239 = vld [vmem:[%s1 + $0x6a0] sm:$0xff]
  %v240 = vld [vmem:[%s1 + $0x6a8] sm:$0xff]
  %v241 = vld [vmem:[%s1 + $0x6b0] sm:$0xff]
  %v242 = vld [vmem:[%s1 + $0x6b8] sm:$0xff]
  %v243 = vld [vmem:[%s1 + $0x6c0] sm:$0xff]
  %v244 = vld [vmem:[%s1 + $0x6c8] sm:$0xff]
  %v245 = vld [vmem:[%s1 + $0x6d0] sm:$0xff]
  %v246 = vld [vmem:[%s1 + $0x6d8] sm:$0xff]
  %v247 = vld [vmem:[%s1 + $0x6e0] sm:$0xff]
  %v248 = vld [vmem:[%s1 + $0x6e8] sm:$0xff]
  %v249 = vld [vmem:[%s1 + $0x6f0] sm:$0xff]
  %v250 = vld [vmem:[%s1 + $0x6f8] sm:$0xff]
  %v251 = vld [vmem:[%s1 + $0x700] sm:$0xff]
  %v252 = vld [vmem:[%s1 + $0x708] sm:$0xff]
  %v253 = vld [vmem:[%s1 + $0x710] sm:$0xff]
  %v254 = vld [vmem:[%s1 + $0x718] sm:$0xff]
  %v255 = vld [vmem:[%s1 + $0x720] sm:$0xff]
  %v256 = vld [vmem:[%s1 + $0x728] sm:$0xff]
  %v257 = vld [vmem:[%s1 + $0x730] sm:$0xff]
  %v258 = vld [vmem:[%s1 + $0x738] sm:$0xff]
  %v259 = vld [vmem:[%s1 + $0x740] sm:$0xff]
  %v260 = vld [vmem:[%s1 + $0x748] sm:$0xff]
  %v261 = vld [vmem:[%s1 + $0x750] sm:$0xff]
  %v262 = vld [vmem:[%s1 + $0x758] sm:$0xff]
  %v263 = vld [vmem:[%s1 + $0x760] sm:$0xff]
  %v264 = vld [vmem:[%s1 + $0x768] sm:$0xff]
  %v265 = vld [vmem:[%s1 + $0x770] sm:$0xff]
  %v266 = vld [vmem:[%s1 + $0x778] sm:$0xff]
  %v267 = vld [vmem:[%s1 + $0x780] sm:$0xff]
  %v268 = vld [vmem:[%s1 + $0x788] sm:$0xff]
  %v269 = vld [vmem:[%s1 + $0x790] sm:$0xff]
  %v270 = vld [vmem:[%s1 + $0x798] sm:$0xff]
  %v271 = vld [vmem:[%s1 + $0x7a0] sm:$0xff]
  %v272 = vld [vmem:[%s1 + $0x7a8] sm:$0xff]
  %v273 = vld [vmem:[%s1 + $0x7b0] sm:$0xff]
  %v274 = vld [vmem:[%s1 + $0x7b8] sm:$0xff]
  %v275 = vld [vmem:[%s1 + $0x7c0] sm:$0xff]
  %v276 = vld [vmem:[%s1 + $0x7c8] sm:$0xff]
  %v277 = vld [vmem:[%s1 + $0x7d0] sm:$0xff]
  %v278 = vld [vmem:[%s1 + $0x7d8] sm:$0xff]
  %v279 = vld [vmem:[%s1 + $0x7e0] sm:$0xff]
  %v280 = vld [vmem:[%s1 + $0x7e8] sm:$0xff]
  %v281 = vld [vmem:[%s1 + $0x7f0] sm:$0xff]
  %v282 = vld [vmem:[%s1 + $0x7f8] sm:$0xff]
  %v283 = vld [vmem:[%s1 + $0x800] sm:$0xff]
  %v284 = vld [vmem:[%s1 + $0x808] sm:$0xff]
  %v285 = vld [vmem:[%s1 + $0x810] sm:$0xff]
  %v286 = vld [vmem:[%s1 + $0x818] sm:$0xff]
  %v287 = vld [vmem:[%s1 + $0x820] sm:$0xff]
  %v288 = vld [vmem:[%s1 + $0x828] sm:$0xff]
  %v289 = vld [vmem:[%s1 + $0x830] sm:$0xff]
  %v290 = vld [vmem:[%s1 + $0x838] sm:$0xff]
  %v291 = vld [vmem:[%s1 + $0x840] sm:$0xff]
  %v292 = vld [vmem:[%s1 + $0x848] sm:$0xff]
  %v293 = vld [vmem:[%s1 + $0x850] sm:$0xff]
  %v294 = vld [vmem:[%s1 + $0x858] sm:$0xff]
  %v295 = vld [vmem:[%s1 + $0x860] sm:$0xff]
  %v296 = vld [vmem:[%s1 + $0x868] sm:$0xff]
  %v297 = vld [vmem:[%s1 + $0x870] sm:$0xff]
  %v298 = vld [vmem:[%s1 + $0x878] sm:$0xff]
  %v299 = vld [vmem:[%s1 + $0x880] sm:$0xff]
  %v300 = vld [vmem:[%s1 + $0x888] sm:$0xff]
  %v301 = vld [vmem:[%s1 + $0x890] sm:$0xff]
  %v302 = vld [vmem:[%s1 + $0x898] sm:$0xff]
  %v303 = vld [vmem:[%s1 + $0x8a0] sm:$0xff]
  %v304 = vld [vmem:[%s1 + $0x8a8] sm:$0xff]
  %v305 = vld [vmem:[%s1 + $0x8b0] sm:$0xff]
  %v306 = vld [vmem:[%s1 + $0x8b8] sm:$0xff]
  %v307 = vld [vmem:[%s1 + $0x8c0] sm:$0xff]
  %v308 = vld [vmem:[%s1 + $0x8c8] sm:$0xff]
  %v309 = vld [vmem:[%s1 + $0x8d0] sm:$0xff]
  %v310 = vld [vmem:[%s1 + $0x8d8] sm:$0xff]
  %v311 = vld [vmem:[%s1 + $0x8e0] sm:$0xff]
  %v312 = vld [vmem:[%s1 + $0x8e8] sm:$0xff]
  %v313 = vld [vmem:[%s1 + $0x8f0] sm:$0xff]
  %v314 = vld [vmem:[%s1 + $0x8f8] sm:$0xff]
  %v315 = vld [vmem:[%s1 + $0x900] sm:$0xff]
  %v316 = vld [vmem:[%s1 + $0x908] sm:$0xff]
  %v317 = vld [vmem:[%s1 + $0x910] sm:$0xff]
  %v318 = vld [vmem:[%s1 + $0x918] sm:$0xff]
  %v319 = vld [vmem:[%s1 + $0x920] sm:$0xff]
  %v320 = vld [vmem:[%s1 + $0x928] sm:$0xff]
  %v321 = vld [vmem:[%s1 + $0x930] sm:$0xff]
  %v322 = vld [vmem:[%s1 + $0x938] sm:$0xff]
  %v323 = vld [vmem:[%s1 + $0x940] sm:$0xff]
  %v324 = vld [vmem:[%s1 + $0x948] sm:$0xff]
  %v325 = vld [vmem:[%s1 + $0x950] sm:$0xff]
  %v326 = vld [vmem:[%s1 + $0x958] sm:$0xff]
  %v327 = vld [vmem:[%s1 + $0x960] sm:$0xff]
  %v328 = vld [vmem:[%s1 + $0x968] sm:$0xff]
  %v329 = vld [vmem:[%s1 + $0x970] sm:$0xff]
  %v330 = vld [vmem:[%s1 + $0x978] sm:$0xff]
  %v331 = vld [vmem:[%s1 + $0x980] sm:$0xff]
  %v332 = vld [vmem:[%s1 + $0x988] sm:$0xff]
  %v333 = vld [vmem:[%s1 + $0x990] sm:$0xff]
  %v334 = vld [vmem:[%s1 + $0x998] sm:$0xff]
  %v335 = vld [vmem:[%s1 + $0x9a0] sm:$0xff]
  %v336 = vld [vmem:[%s1 + $0x9a8] sm:$0xff]
  %v337 = vld [vmem:[%s1 + $0x9b0] sm:$0xff]
  %v338 = vld [vmem:[%s1 + $0x9b8] sm:$0xff]
  %v339 = vld [vmem:[%s1 + $0x9c0] sm:$0xff]
  %v340 = vld [vmem:[%s1 + $0x9c8] sm:$0xff]
  %v341 = vld [vmem:[%s1 + $0x9d0] sm:$0xff]
  %v342 = vld [vmem:[%s1 + $0x9d8] sm:$0xff]
  %v343 = vld [vmem:[%s1 + $0x9e0] sm:$0xff]
  %v344 = vld [vmem:[%s1 + $0x9e8] sm:$0xff]
  %v345 = vld [vmem:[%s1 + $0x9f0] sm:$0xff]
  %v346 = vld [vmem:[%s1 + $0x9f8] sm:$0xff]
  %v347 = vld [vmem:[%s1 + $0xa00] sm:$0xff]
  %v348 = vld [vmem:[%s1 + $0xa08] sm:$0xff]
  %v349 = vld [vmem:[%s1 + $0xa10] sm:$0xff]
  %v350 = vld [vmem:[%s1 + $0xa18] sm:$0xff]
  %v351 = vld [vmem:[%s1 + $0xa20] sm:$0xff]
  %v352 = vld [vmem:[%s1 + $0xa28] sm:$0xff]
  %v353 = vld [vmem:[%s1 + $0xa30] sm:$0xff]
  %v354 = vld [vmem:[%s1 + $0xa38] sm:$0xff]
  %v355 = vld [vmem:[%s1 + $0xa40] sm:$0xff]
  %v356 = vld [vmem:[%s1 + $0xa48] sm:$0xff]
  %v357 = vld [vmem:[%s1 + $0xa50] sm:$0xff]
  %v358 = vld [vmem:[%s1 + $0xa58] sm:$0xff]
  %v359 = vld [vmem:[%s1 + $0xa60] sm:$0xff]
  %v360 = vld [vmem:[%s1 + $0xa68] sm:$0xff]
  %v361 = vld [vmem:[%s1 + $0xa70] sm:$0xff]
  %v362 = vld [vmem:[%s1 + $0xa78] sm:$0xff]
  %v363 = vld [vmem:[%s1 + $0xa80] sm:$0xff]
  %v364 = vld [vmem:[%s1 + $0xa88] sm:$0xff]
  %v365 = vld [vmem:[%s1 + $0xa90] sm:$0xff]
  %v366 = vld [vmem:[%s1 + $0xa98] sm:$0xff]
  %v367 = vld [vmem:[%s1 + $0xaa0] sm:$0xff]
  %v368 = vld [vmem:[%s1 + $0xaa8] sm:$0xff]
  %v369 = vld [vmem:[%s1 + $0xab0] sm:$0xff]
  %v370 = vld [vmem:[%s1 + $0xab8] sm:$0xff]
  %v371 = vld [vmem:[%s1 + $0xac0] sm:$0xff]
  %v372 = vld [vmem:[%s1 + $0xac8] sm:$0xff]
  %v373 = vld [vmem:[%s1 + $0xad0] sm:$0xff]
  %v374 = vld [vmem:[%s1 + $0xad8] sm:$0xff]
  %v375 = vld [vmem:[%s1 + $0xae0] sm:$0xff]
  %v376 = vld [vmem:[%s1 + $0xae8] sm:$0xff]
  %v377 = vld [vmem:[%s1 + $0xaf0] sm:$0xff]
  %v378 = vld [vmem:[%s1 + $0xaf8] sm:$0xff]
  %v379 = vld [vmem:[%s1 + $0xb00] sm:$0xff]
  %v380 = vld [vmem:[%s1 + $0xb08] sm:$0xff]
  %v381 = vld [vmem:[%s1 + $0xb10] sm:$0xff]
  %v382 = vld [vmem:[%s1 + $0xb18] sm:$0xff]
  %v383 = vld [vmem:[%s1 + $0xb20] sm:$0xff]
  %v384 = vld [vmem:[%s1 + $0xb28] sm:$0xff]
  %v385 = vld [vmem:[%s1 + $0xb30] sm:$0xff]
  %v386 = vld [vmem:[%s1 + $0xb38] sm:$0xff]
  %v387 = vld [vmem:[%s1 + $0xb40] sm:$0xff]
  %v388 = vld [vmem:[%s1 + $0xb48] sm:$0xff]
  %v389 = vld [vmem:[%s1 + $0xb50] sm:$0xff]
  %v390 = vld [vmem:[%s1 + $0xb58] sm:$0xff]
  %v391 = vld [vmem:[%s1 + $0xb60] sm:$0xff]
  %v392 = vld [vmem:[%s1 + $0xb68] sm:$0xff]
  %v393 = vld [vmem:[%s1 + $0xb70] sm:$0xff]
  %v394 = vld [vmem:[%s1 + $0xb78] sm:$0xff]
  %v395 = vld [vmem:[%s1 + $0xb80] sm:$0xff]
  %v396 = vld [vmem:[%s1 + $0xb88] sm:$0xff]
  %v397 = vld [vmem:[%s1 + $0xb90] sm:$0xff]
  %v398 = vld [vmem:[%s1 + $0xb98] sm:$0xff]
  %v399 = vld [vmem:[%s1 + $0xba0] sm:$0xff]
  %v400 = vld [vmem:[%s1 + $0xba8] sm:$0xff]
  %v401 = vld [vmem:[%s1 + $0xbb0] sm:$0xff]
  %v402 = vld [vmem:[%s1 + $0xbb8] sm:$0xff]
  %v403 = vld [vmem:[%s1 + $0xbc0] sm:$0xff]
  %v404 = vld [vmem:[%s1 + $0xbc8] sm:$0xff]
  %v405 = vld [vmem:[%s1 + $0xbd0] sm:$0xff]
  %v406 = vld [vmem:[%s1 + $0xbd8] sm:$0xff]
  %v407 = vld [vmem:[%s1 + $0xbe0] sm:$0xff]
  %v408 = vld [vmem:[%s1 + $0xbe8] sm:$0xff]
  %v409 = vld [vmem:[%s1 + $0xbf0] sm:$0xff]
  %v410 = vld [vmem:[%s1 + $0xbf8] sm:$0xff]
  %v411 = vld [vmem:[%s1 + $0xc00] sm:$0xff]
  %v412 = vld [vmem:[%s1 + $0xc08] sm:$0xff]
  %v413 = vld [vmem:[%s1 + $0xc10] sm:$0xff]
  %v414 = vld [vmem:[%s1 + $0xc18] sm:$0xff]
  %v415 = vld [vmem:[%s1 + $0xc20] sm:$0xff]
  %v416 = vld [vmem:[%s1 + $0xc28] sm:$0xff]
  %v417 = vld [vmem:[%s1 + $0xc30] sm:$0xff]
  %v418 = vld [vmem:[%s1 + $0xc38] sm:$0xff]
  %v419 = vld [vmem:[%s1 + $0xc40] sm:$0xff]
  %v420 = vld [vmem:[%s1 + $0xc48] sm:$0xff]
  %v421 = vld [vmem:[%s1 + $0xc50] sm:$0xff]
  %v422 = vld [vmem:[%s1 + $0xc58] sm:$0xff]
  %v423 = vld [vmem:[%s1 + $0xc60] sm:$0xff]
  %v424 = vld [vmem:[%s1 + $0xc68] sm:$0xff]
  %v425 = vld [vmem:[%s1 + $0xc70] sm:$0xff]
  %v426 = vld [vmem:[%s1 + $0xc78] sm:$0xff]
  %v427 = vld [vmem:[%s1 + $0xc80] sm:$0xff]
  %v428 = vld [vmem:[%s1 + $0xc88] sm:$0xff]
  %v429 = vld [vmem:[%s1 + $0xc90] sm:$0xff]
  %v430 = vld [vmem:[%s1 + $0xc98] sm:$0xff]
  %v431 = vld [vmem:[%s1 + $0xca0] sm:$0xff]
  %v432 = vld [vmem:[%s1 + $0xca8] sm:$0xff]
  %v433 = vld [vmem:[%s1 + $0xcb0] sm:$0xff]
  %v434 = vld [vmem:[%s1 + $0xcb8] sm:$0xff]
  %v435 = vld [vmem:[%s1 + $0xcc0] sm:$0xff]
  %v436 = vld [vmem:[%s1 + $0xcc8] sm:$0xff]
  %v437 = vld [vmem:[%s1 + $0xcd0] sm:$0xff]
  %v438 = vld [vmem:[%s1 + $0xcd8] sm:$0xff]
  %v439 = vld [vmem:[%s1 + $0xce0] sm:$0xff]
  %v440 = vld [vmem:[%s1 + $0xce8] sm:$0xff]
  %v441 = vld [vmem:[%s1 + $0xcf0] sm:$0xff]
  %v442 = vld [vmem:[%s1 + $0xcf8] sm:$0xff]
  %v443 = vld [vmem:[%s1 + $0xd00] sm:$0xff]
  %v444 = vld [vmem:[%s1 + $0xd08] sm:$0xff]
  %v445 = vld [vmem:[%s1 + $0xd10] sm:$0xff]
  %v446 = vld [vmem:[%s1 + $0xd18] sm:$0xff]
  %v447 = vld [vmem:[%s1 + $0xd20] sm:$0xff]
  %v448 = vld [vmem:[%s1 + $0xd28] sm:$0xff]
  %v449 = vld [vmem:[%s1 + $0xd30] sm:$0xff]
  %v450 = vld [vmem:[%s1 + $0xd38] sm:$0xff]
  %v451 = vld [vmem:[%s1 + $0xd40] sm:$0xff]
  %v452 = vld [vmem:[%s1 + $0xd48] sm:$0xff]
  %v453 = vld [vmem:[%s1 + $0xd50] sm:$0xff]
  %v454 = vld [vmem:[%s1 + $0xd58] sm:$0xff]
  %v455 = vld [vmem:[%s1 + $0xd60] sm:$0xff]
  %v456 = vld [vmem:[%s1 + $0xd68] sm:$0xff]
  %v457 = vld [vmem:[%s1 + $0xd70] sm:$0xff]
  %v458 = vld [vmem:[%s1 + $0xd78] sm:$0xff]
  %v459 = vld [vmem:[%s1 + $0xd80] sm:$0xff]
  %v460 = vld [vmem:[%s1 + $0xd88] sm:$0xff]
  %v461 = vld [vmem:[%s1 + $0xd90] sm:$0xff]
  %v462 = vld [vmem:[%s1 + $0xd98] sm:$0xff]
  %v463 = vld [vmem:[%s1 + $0xda0] sm:$0xff]
  %v464 = vld [vmem:[%s1 + $0xda8] sm:$0xff]
  %v465 = vld [vmem:[%s1 + $0xdb0] sm:$0xff]
  %v466 = vld [vmem:[%s1 + $0xdb8] sm:$0xff]
  %v467 = vld [vmem:[%s1 + $0xdc0] sm:$0xff]
  %v468 = vld [vmem:[%s1 + $0xdc8] sm:$0xff]
  %v469 = vld [vmem:[%s1 + $0xdd0] sm:$0xff]
  %v470 = vld [vmem:[%s1 + $0xdd8] sm:$0xff]
  %v471 = vld [vmem:[%s1 + $0xde0] sm:$0xff]
  %v472 = vld [vmem:[%s1 + $0xde8] sm:$0xff]
  %v473 = vld [vmem:[%s1 + $0xdf0] sm:$0xff]
  %v474 = vld [vmem:[%s1 + $0xdf8] sm:$0xff]
  %v475 = vld [vmem:[%s1 + $0xe00] sm:$0xff]
  %v476 = vld [vmem:[%s1 + $0xe08] sm:$0xff]
  %v477 = vld [vmem:[%s1 + $0xe10] sm:$0xff]
  %v478 = vld [vmem:[%s1 + $0xe18] sm:$0xff]
  %v479 = vld [vmem:[%s1 + $0xe20] sm:$0xff]
  %v480 = vld [vmem:[%s1 + $0xe28] sm:$0xff]
  %v481 = vld [vmem:[%s1 + $0xe30] sm:$0xff]
  %v482 = vld [vmem:[%s1 + $0xe38] sm:$0xff]
  %v483 = vld [vmem:[%s1 + $0xe40] sm:$0xff]
  %v484 = vld [vmem:[%s1 + $0xe48] sm:$0xff]
  %v485 = vld [vmem:[%s1 + $0xe50] sm:$0xff]
  %v486 = vld [vmem:[%s1 + $0xe58] sm:$0xff]
  %v487 = vld [vmem:[%s1 + $0xe60] sm:$0xff]
  %v488 = vld [vmem:[%s1 + $0xe68] sm:$0xff]
  %v489 = vld [vmem:[%s1 + $0xe70] sm:$0xff]
  %v490 = vld [vmem:[%s1 + $0xe78] sm:$0xff]
  %v491 = vld [vmem:[%s1 + $0xe80] sm:$0xff]
  %v492 = vld [vmem:[%s1 + $0xe88] sm:$0xff]
  %v493 = vld [vmem:[%s1 + $0xe90] sm:$0xff]
  %v494 = vld [vmem:[%s1 + $0xe98] sm:$0xff]
  %v495 = vld [vmem:[%s1 + $0xea0] sm:$0xff]
  %v496 = vld [vmem:[%s1 + $0xea8] sm:$0xff]
  %v497 = vld [vmem:[%s1 + $0xeb0] sm:$0xff]
  %v498 = vld [vmem:[%s1 + $0xeb8] sm:$0xff]
  %v499 = vld [vmem:[%s1 + $0xec0] sm:$0xff]
  %v500 = vld [vmem:[%s1 + $0xec8] sm:$0xff]
  %v501 = vld [vmem:[%s1 + $0xed0] sm:$0xff]
  %v502 = vld [vmem:[%s1 + $0xed8] sm:$0xff]
  %v503 = vld [vmem:[%s1 + $0xee0] sm:$0xff]
  %v504 = vld [vmem:[%s1 + $0xee8] sm:$0xff]
  %v505 = vld [vmem:[%s1 + $0xef0] sm:$0xff]
  %v506 = vld [vmem:[%s1 + $0xef8] sm:$0xff]
  %v507 = vld [vmem:[%s1 + $0xf00] sm:$0xff]
  %v508 = vld [vmem:[%s1 + $0xf08] sm:$0xff]
  %v509 = vld [vmem:[%s1 + $0xf10] sm:$0xff]
  %v510 = vld [vmem:[%s1 + $0xf18] sm:$0xff]
  %v511 = vld [vmem:[%s1 + $0xf20] sm:$0xff]
  %v512 = vld [vmem:[%s1 + $0xf28] sm:$0xff]
  %v513 = vld [vmem:[%s1 + $0xf30] sm:$0xff]
  %v514 = vld [vmem:[%s1 + $0xf38] sm:$0xff]
  %v515 = vld [vmem:[%s1 + $0xf40] sm:$0xff]
  %v516 = vld [vmem:[%s1 + $0xf48] sm:$0xff]
  %v517 = vld [vmem:[%s1 + $0xf50] sm:$0xff]
  %v518 = vld [vmem:[%s1 + $0xf58] sm:$0xff]
  %v519 = vld [vmem:[%s1 + $0xf60] sm:$0xff]
  %v520 = vld [vmem:[%s1 + $0xf68] sm:$0xff]
  %v521 = vld [vmem:[%s1 + $0xf70] sm:$0xff]
  %v522 = vld [vmem:[%s1 + $0xf78] sm:$0xff]
  %v523 = vld [vmem:[%s1 + $0xf80] sm:$0xff]
  %v524 = vld [vmem:[%s1 + $0xf88] sm:$0xff]
  %v525 = vld [vmem:[%s1 + $0xf90] sm:$0xff]
  %v526 = vld [vmem:[%s1 + $0xf98] sm:$0xff]
  %v527 = vld [vmem:[%s1 + $0xfa0] sm:$0xff]
  %v528 = vld [vmem:[%s1 + $0xfa8] sm:$0xff]
  %v529 = vld [vmem:[%s1 + $0xfb0] sm:$0xff]
  %v530 = vld [vmem:[%s1 + $0xfb8] sm:$0xff]
  %v531 = vld [vmem:[%s1 + $0xfc0] sm:$0xff]
  %v532 = vld [vmem:[%s1 + $0xfc8] sm:$0xff]
  %v533 = vld [vmem:[%s1 + $0xfd0] sm:$0xff]
  %v534 = vld [vmem:[%s1 + $0xfd8] sm:$0xff]
  %v535 = vld [vmem:[%s1 + $0xfe0] sm:$0xff]
  %v536 = vld [vmem:[%s1 + $0xfe8] sm:$0xff]
  %v537 = vld [vmem:[%s1 + $0xff0] sm:$0xff]
  %v538 = vld [vmem:[%s1 + $0xff8] sm:$0xff]
  %v539 = vld [vmem:[%s1 + $0x1000] sm:$0xff]
  %v540 = vld [vmem:[%s1 + $0x1008] sm:$0xff]
  %v541 = vld [vmem:[%s1 + $0x1010] sm:$0xff]
  %v542 = vld [vmem:[%s1 + $0x1018] sm:$0xff]
  %v543 = vld [vmem:[%s1 + $0x1020] sm:$0xff]
  %v544 = vld [vmem:[%s1 + $0x1028] sm:$0xff]
  %v545 = vld [vmem:[%s1 + $0x1030] sm:$0xff]
  %v546 = vld [vmem:[%s1 + $0x1038] sm:$0xff]
  %v547 = vld [vmem:[%s1 + $0x1040] sm:$0xff]
  %v548 = vld [vmem:[%s1 + $0x1048] sm:$0xff]
  %v549 = vld [vmem:[%s1 + $0x1050] sm:$0xff]
  %v550 = vld [vmem:[%s1 + $0x1058] sm:$0xff]
  %v551 = vld [vmem:[%s1 + $0x1060] sm:$0xff]
  %v552 = vld [vmem:[%s1 + $0x1068] sm:$0xff]
  %v553 = vld [vmem:[%s1 + $0x1070] sm:$0xff]
  %v554 = vld [vmem:[%s1 + $0x1078] sm:$0xff]
  %v555 = vld [vmem:[%s1 + $0x1080] sm:$0xff]
  %v556 = vld [vmem:[%s1 + $0x1088] sm:$0xff]
  %v557 = vld [vmem:[%s1 + $0x1090] sm:$0xff]
  %v558 = vld [vmem:[%s1 + $0x1098] sm:$0xff]
  %v559 = vld [vmem:[%s1 + $0x10a0] sm:$0xff]
  %v560 = vld [vmem:[%s1 + $0x10a8] sm:$0xff]
  %v561 = vld [vmem:[%s1 + $0x10b0] sm:$0xff]
  %v562 = vld [vmem:[%s1 + $0x10b8] sm:$0xff]
  %v563 = vld [vmem:[%s1 + $0x10c0] sm:$0xff]
  %v564 = vld [vmem:[%s1 + $0x10c8] sm:$0xff]
  %v565 = vld [vmem:[%s1 + $0x10d0] sm:$0xff]
  %v566 = vld [vmem:[%s1 + $0x10d8] sm:$0xff]
  %v567 = vld [vmem:[%s1 + $0x10e0] sm:$0xff]
  %v568 = vld [vmem:[%s1 + $0x10e8] sm:$0xff]
  %v569 = vld [vmem:[%s1 + $0x10f0] sm:$0xff]
  %v570 = vld [vmem:[%s1 + $0x10f8] sm:$0xff]
  %v571 = vld [vmem:[%s1 + $0x1100] sm:$0xff]
  %v572 = vld [vmem:[%s1 + $0x1108] sm:$0xff]
  %v573 = vld [vmem:[%s1 + $0x1110] sm:$0xff]
  %v574 = vld [vmem:[%s1 + $0x1118] sm:$0xff]
  %v575 = vld [vmem:[%s1 + $0x1120] sm:$0xff]
  %v576 = vld [vmem:[%s1 + $0x1128] sm:$0xff]
  %v577 = vld [vmem:[%s1 + $0x1130] sm:$0xff]
  %v578 = vld [vmem:[%s1 + $0x1138] sm:$0xff]
  %v579 = vld [vmem:[%s1 + $0x1140] sm:$0xff]
  %v580 = vld [vmem:[%s1 + $0x1148] sm:$0xff]
  %v581 = vld [vmem:[%s1 + $0x1150] sm:$0xff]
  %v582 = vld [vmem:[%s1 + $0x1158] sm:$0xff]
  %v583 = vld [vmem:[%s1 + $0x1160] sm:$0xff]
  %v584 = vld [vmem:[%s1 + $0x1168] sm:$0xff]
  %v585 = vld [vmem:[%s1 + $0x1170] sm:$0xff]
  %v586 = vld [vmem:[%s1 + $0x1178] sm:$0xff]
  %v587 = vld [vmem:[%s1 + $0x1180] sm:$0xff]
  %v588 = vld [vmem:[%s1 + $0x1188] sm:$0xff]
  %v589 = vld [vmem:[%s1 + $0x1190] sm:$0xff]
  %v590 = vld [vmem:[%s1 + $0x1198] sm:$0xff]
  %v591 = vld [vmem:[%s1 + $0x11a0] sm:$0xff]
  %v592 = vld [vmem:[%s1 + $0x11a8] sm:$0xff]
  %v593 = vld [vmem:[%s1 + $0x11b0] sm:$0xff]
  %v594 = vld [vmem:[%s1 + $0x11b8] sm:$0xff]
  %v595 = vld [vmem:[%s1 + $0x11c0] sm:$0xff]
  %v596 = vld [vmem:[%s1 + $0x11c8] sm:$0xff]
  %v597 = vld [vmem:[%s1 + $0x11d0] sm:$0xff]
  %v598 = vld [vmem:[%s1 + $0x11d8] sm:$0xff]
  %v599 = vld [vmem:[%s1 + $0x11e0] sm:$0xff]
  %v600 = vld [vmem:[%s1 + $0x11e8] sm:$0xff]
  %v601 = vld [vmem:[%s1 + $0x11f0] sm:$0xff]
  %v602 = vld [vmem:[%s1 + $0x11f8] sm:$0xff]
  %v603 = vld [vmem:[%s1 + $0x1200] sm:$0xff]
  %v604 = vld [vmem:[%s1 + $0x1208] sm:$0xff]
  %v605 = vld [vmem:[%s1 + $0x1210] sm:$0xff]
  %v606 = vld [vmem:[%s1 + $0x1218] sm:$0xff]
  %v607 = vld [vmem:[%s1 + $0x1220] sm:$0xff]
  %v608 = vld [vmem:[%s1 + $0x1228] sm:$0xff]
  %v609 = vld [vmem:[%s1 + $0x1230] sm:$0xff]
  %v610 = vld [vmem:[%s1 + $0x1238] sm:$0xff]
  %v611 = vld [vmem:[%s1 + $0x1240] sm:$0xff]
  %v612 = vld [vmem:[%s1 + $0x1248] sm:$0xff]
  %v613 = vld [vmem:[%s1 + $0x1250] sm:$0xff]
  %v614 = vld [vmem:[%s1 + $0x1258] sm:$0xff]
  %v615 = vld [vmem:[%s1 + $0x1260] sm:$0xff]
  %v616 = vld [vmem:[%s1 + $0x1268] sm:$0xff]
  %v617 = vld [vmem:[%s1 + $0x1270] sm:$0xff]
  %v618 = vld [vmem:[%s1 + $0x1278] sm:$0xff]
  %v619 = vld [vmem:[%s1 + $0x1280] sm:$0xff]
  %v620 = vld [vmem:[%s1 + $0x1288] sm:$0xff]
  %v621 = vld [vmem:[%s1 + $0x1290] sm:$0xff]
  %v622 = vld [vmem:[%s1 + $0x1298] sm:$0xff]
  %v623 = vld [vmem:[%s1 + $0x12a0] sm:$0xff]
  %v624 = vld [vmem:[%s1 + $0x12a8] sm:$0xff]
  %v625 = vld [vmem:[%s1 + $0x12b0] sm:$0xff]
  %v626 = vld [vmem:[%s1 + $0x12b8] sm:$0xff]
  %v627 = vld [vmem:[%s1 + $0x12c0] sm:$0xff]
  %v628 = vld [vmem:[%s1 + $0x12c8] sm:$0xff]
  %v629 = vld [vmem:[%s1 + $0x12d0] sm:$0xff]
  %v630 = vld [vmem:[%s1 + $0x12d8] sm:$0xff]
  %v631 = vld [vmem:[%s1 + $0x12e0] sm:$0xff]
  %v632 = vld [vmem:[%s1 + $0x12e8] sm:$0xff]
  %v633 = vld [vmem:[%s1 + $0x12f0] sm:$0xff]
  %v634 = vld [vmem:[%s1 + $0x12f8] sm:$0xff]
  %v635 = vld [vmem:[%s1 + $0x1300] sm:$0xff]
  %v636 = vld [vmem:[%s1 + $0x1308] sm:$0xff]
  %v637 = vld [vmem:[%s1 + $0x1310] sm:$0xff]
  %v638 = vld [vmem:[%s1 + $0x1318] sm:$0xff]
  %v639 = vld [vmem:[%s1 + $0x1320] sm:$0xff]
  %v640 = vld [vmem:[%s1 + $0x1328] sm:$0xff]
  %v641 = vld [vmem:[%s1 + $0x1330] sm:$0xff]
  %v642 = vld [vmem:[%s1 + $0x1338] sm:$0xff]
  %v643 = vld [vmem:[%s1 + $0x1340] sm:$0xff]
  %v644 = vld [vmem:[%s1 + $0x1348] sm:$0xff]
  %v645 = vld [vmem:[%s1 + $0x1350] sm:$0xff]
  %v646 = vld [vmem:[%s1 + $0x1358] sm:$0xff]
  %v647 = vld [vmem:[%s1 + $0x1360] sm:$0xff]
  %v648 = vld [vmem:[%s1 + $0x1368] sm:$0xff]
  %v649 = vld [vmem:[%s1 + $0x1370] sm:$0xff]
  %v650 = vld [vmem:[%s1 + $0x1378] sm:$0xff]
  %v651 = vld [vmem:[%s1 + $0x1380] sm:$0xff]
  %v652 = vld [vmem:[%s1 + $0x1388] sm:$0xff]
  %v653 = vld [vmem:[%s1 + $0x1390] sm:$0xff]
  %v654 = vld [vmem:[%s1 + $0x1398] sm:$0xff]
  %v655 = vld [vmem:[%s1 + $0x13a0] sm:$0xff]
  %v656 = vld [vmem:[%s1 + $0x13a8] sm:$0xff]
  %v657 = vld [vmem:[%s1 + $0x13b0] sm:$0xff]
  %v658 = vld [vmem:[%s1 + $0x13b8] sm:$0xff]
  %v659 = vld [vmem:[%s1 + $0x13c0] sm:$0xff]
  %v660 = vld [vmem:[%s1 + $0x13c8] sm:$0xff]
  %v661 = vld [vmem:[%s1 + $0x13d0] sm:$0xff]
  %v662 = vld [vmem:[%s1 + $0x13d8] sm:$0xff]
  %v663 = vld [vmem:[%s1 + $0x13e0] sm:$0xff]
  %v664 = vld [vmem:[%s1 + $0x13e8] sm:$0xff]
  %v665 = vld [vmem:[%s1 + $0x13f0] sm:$0xff]
  %v666 = vld [vmem:[%s1 + $0x13f8] sm:$0xff]
  %v667 = vld [vmem:[%s1 + $0x1400] sm:$0xff]
  %v668 = vld [vmem:[%s1 + $0x1408] sm:$0xff]
  %v669 = vld [vmem:[%s1 + $0x1410] sm:$0xff]
  %v670 = vld [vmem:[%s1 + $0x1418] sm:$0xff]
  %v671 = vld [vmem:[%s1 + $0x1420] sm:$0xff]
  %v672 = vld [vmem:[%s1 + $0x1428] sm:$0xff]
  %v673 = vld [vmem:[%s1 + $0x1430] sm:$0xff]
  %v674 = vld [vmem:[%s1 + $0x1438] sm:$0xff]
  %v675 = vld [vmem:[%s1 + $0x1440] sm:$0xff]
  %v676 = vld [vmem:[%s1 + $0x1448] sm:$0xff]
  %v677 = vld [vmem:[%s1 + $0x1450] sm:$0xff]
  %v678 = vld [vmem:[%s1 + $0x1458] sm:$0xff]
  %v679 = vld [vmem:[%s1 + $0x1460] sm:$0xff]
  %v680 = vld [vmem:[%s1 + $0x1468] sm:$0xff]
  %v681 = vld [vmem:[%s1 + $0x1470] sm:$0xff]
  %v682 = vld [vmem:[%s1 + $0x1478] sm:$0xff]
  %v683 = vld [vmem:[%s1 + $0x1480] sm:$0xff]
  %v684 = vld [vmem:[%s1 + $0x1488] sm:$0xff]
  %v685 = vld [vmem:[%s1 + $0x1490] sm:$0xff]
  %v686 = vld [vmem:[%s1 + $0x1498] sm:$0xff]
  %v687 = vld [vmem:[%s1 + $0x14a0] sm:$0xff]
  %v688 = vld [vmem:[%s1 + $0x14a8] sm:$0xff]
  %v689 = vld [vmem:[%s1 + $0x14b0] sm:$0xff]
  %v690 = vld [vmem:[%s1 + $0x14b8] sm:$0xff]
  %v691 = vld [vmem:[%s1 + $0x14c0] sm:$0xff]
  %v692 = vld [vmem:[%s1 + $0x14c8] sm:$0xff]
  %v693 = vld [vmem:[%s1 + $0x14d0] sm:$0xff]
  %v694 = vld [vmem:[%s1 + $0x14d8] sm:$0xff]
  %v695 = vld [vmem:[%s1 + $0x14e0] sm:$0xff]
  %v696 = vld [vmem:[%s1 + $0x14e8] sm:$0xff]
  %v697 = vld [vmem:[%s1 + $0x14f0] sm:$0xff]
  %v698 = vld [vmem:[%s1 + $0x14f8] sm:$0xff]
  %v699 = vld [vmem:[%s1 + $0x1500] sm:$0xff]
  %v700 = vld [vmem:[%s1 + $0x1508] sm:$0xff]
  %v701 = vld [vmem:[%s1 + $0x1510] sm:$0xff]
  %v702 = vld [vmem:[%s1 + $0x1518] sm:$0xff]
  %v703 = vld [vmem:[%s1 + $0x1520] sm:$0xff]
  %v704 = vld [vmem:[%s1 + $0x1528] sm:$0xff]
  %v705 = vld [vmem:[%s1 + $0x1530] sm:$0xff]
  %v706 = vld [vmem:[%s1 + $0x1538] sm:$0xff]
  %v707 = vld [vmem:[%s1 + $0x1540] sm:$0xff]
  %v708 = vld [vmem:[%s1 + $0x1548] sm:$0xff]
  %v709 = vld [vmem:[%s1 + $0x1550] sm:$0xff]
  %v710 = vld [vmem:[%s1 + $0x1558] sm:$0xff]
  %v711 = vld [vmem:[%s1 + $0x1560] sm:$0xff]
  %v712 = vld [vmem:[%s1 + $0x1568] sm:$0xff]
  %v713 = vld [vmem:[%s1 + $0x1570] sm:$0xff]
  %v714 = vld [vmem:[%s1 + $0x1578] sm:$0xff]
  %v715 = vld [vmem:[%s1 + $0x1580] sm:$0xff]
  %v716 = vld [vmem:[%s1 + $0x1588] sm:$0xff]
  %v717 = vld [vmem:[%s1 + $0x1590] sm:$0xff]
  %v718 = vld [vmem:[%s1 + $0x1598] sm:$0xff]
  %v719 = vld [vmem:[%s1 + $0x15a0] sm:$0xff]
  %v720 = vld [vmem:[%s1 + $0x15a8] sm:$0xff]
  %v721 = vld [vmem:[%s1 + $0x15b0] sm:$0xff]
  %v722 = vld [vmem:[%s1 + $0x15b8] sm:$0xff]
  %v723 = vld [vmem:[%s1 + $0x15c0] sm:$0xff]
  %v724 = vld [vmem:[%s1 + $0x15c8] sm:$0xff]
  %v725 = vld [vmem:[%s1 + $0x15d0] sm:$0xff]
  %v726 = vld [vmem:[%s1 + $0x15d8] sm:$0xff]
  %v727 = vld [vmem:[%s1 + $0x15e0] sm:$0xff]
  %v728 = vld [vmem:[%s1 + $0x15e8] sm:$0xff]
  %v729 = vld [vmem:[%s1 + $0x15f0] sm:$0xff]
  %v730 = vld [vmem:[%s1 + $0x15f8] sm:$0xff]
  %v731 = vld [vmem:[%s1 + $0x1600] sm:$0xff]
  %v732 = vld [vmem:[%s1 + $0x1608] sm:$0xff]
  %v733 = vld [vmem:[%s1 + $0x1610] sm:$0xff]
  %v734 = vld [vmem:[%s1 + $0x1618] sm:$0xff]
  %v735 = vld [vmem:[%s1 + $0x1620] sm:$0xff]
  %v736 = vld [vmem:[%s1 + $0x1628] sm:$0xff]
  %v737 = vld [vmem:[%s1 + $0x1630] sm:$0xff]
  %v738 = vld [vmem:[%s1 + $0x1638] sm:$0xff]
  %v739 = vld [vmem:[%s1 + $0x1640] sm:$0xff]
  %v740 = vld [vmem:[%s1 + $0x1648] sm:$0xff]
  %v741 = vld [vmem:[%s1 + $0x1650] sm:$0xff]
  %v742 = vld [vmem:[%s1 + $0x1658] sm:$0xff]
  %v743 = vld [vmem:[%s1 + $0x1660] sm:$0xff]
  %v744 = vld [vmem:[%s1 + $0x1668] sm:$0xff]
  %v745 = vld [vmem:[%s1 + $0x1670] sm:$0xff]
  %v746 = vld [vmem:[%s1 + $0x1678] sm:$0xff]
  %v747 = vld [vmem:[%s1 + $0x1680] sm:$0xff]
  %v748 = vld [vmem:[%s1 + $0x1688] sm:$0xff]
  %v749 = vld [vmem:[%s1 + $0x1690] sm:$0xff]
  %v750 = vld [vmem:[%s1 + $0x1698] sm:$0xff]
  %v751 = vld [vmem:[%s1 + $0x16a0] sm:$0xff]
  %v752 = vld [vmem:[%s1 + $0x16a8] sm:$0xff]
  %v753 = vld [vmem:[%s1 + $0x16b0] sm:$0xff]
  %v754 = vld [vmem:[%s1 + $0x16b8] sm:$0xff]
  %v755 = vld [vmem:[%s1 + $0x16c0] sm:$0xff]
  %v756 = vld [vmem:[%s1 + $0x16c8] sm:$0xff]
  %v757 = vld [vmem:[%s1 + $0x16d0] sm:$0xff]
  %v758 = vld [vmem:[%s1 + $0x16d8] sm:$0xff]
  %v759 = vld [vmem:[%s1 + $0x16e0] sm:$0xff]
  %v760 = vld [vmem:[%s1 + $0x16e8] sm:$0xff]
  %v761 = vld [vmem:[%s1 + $0x16f0] sm:$0xff]
  %v762 = vld [vmem:[%s1 + $0x16f8] sm:$0xff]
  %v763 = vld [vmem:[%s1 + $0x1700] sm:$0xff]
  %v764 = vld [vmem:[%s1 + $0x1708] sm:$0xff]
  %v765 = vld [vmem:[%s1 + $0x1710] sm:$0xff]
  %v766 = vld [vmem:[%s1 + $0x1718] sm:$0xff]
  %v767 = vld [vmem:[%s1 + $0x1720] sm:$0xff]
  %v768 = vld [vmem:[%s1 + $0x1728] sm:$0xff]
  %v769 = vld [vmem:[%s1 + $0x1730] sm:$0xff]
  %v770 = vld [vmem:[%s1 + $0x1738] sm:$0xff]
  %v771 = vld [vmem:[%s1 + $0x1740] sm:$0xff]
  %v772 = vld [vmem:[%s1 + $0x1748] sm:$0xff]
  %v773 = vld [vmem:[%s1 + $0x1750] sm:$0xff]
  %v774 = vld [vmem:[%s1 + $0x1758] sm:$0xff]
  %v775 = vld [vmem:[%s1 + $0x1760] sm:$0xff]
  %v776 = vld [vmem:[%s1 + $0x1768] sm:$0xff]
  %v777 = vld [vmem:[%s1 + $0x1770] sm:$0xff]
  %v778 = vld [vmem:[%s1 + $0x1778] sm:$0xff]
  %v779 = vld [vmem:[%s1 + $0x1780] sm:$0xff]
  %v780 = vld [vmem:[%s1 + $0x1788] sm:$0xff]
  %v781 = vld [vmem:[%s1 + $0x1790] sm:$0xff]
  %v782 = vld [vmem:[%s1 + $0x1798] sm:$0xff]
  %v783 = vld [vmem:[%s1 + $0x17a0] sm:$0xff]
  %v784 = vld [vmem:[%s1 + $0x17a8] sm:$0xff]
  %v785 = vld [vmem:[%s1 + $0x17b0] sm:$0xff]
  %v786 = vld [vmem:[%s1 + $0x17b8] sm:$0xff]
  %v787 = vld [vmem:[%s1 + $0x17c0] sm:$0xff]
  %v788 = vld [vmem:[%s1 + $0x17c8] sm:$0xff]
  %v789 = vld [vmem:[%s1 + $0x17d0] sm:$0xff]
  %v790 = vld [vmem:[%s1 + $0x17d8] sm:$0xff]
  %v791 = vld [vmem:[%s1 + $0x17e0] sm:$0xff]
  %v792 = vld [vmem:[%s1 + $0x17e8] sm:$0xff]
  %v793 = vld [vmem:[%s1 + $0x17f0] sm:$0xff]
  %v794 = vld [vmem:[%s1 + $0x17f8] sm:$0xff]
  %v795 = vld [vmem:[%s1 + $0x1800] sm:$0xff]
  %v796 = vld [vmem:[%s1 + $0x1808] sm:$0xff]
  %v797 = vld [vmem:[%s1 + $0x1810] sm:$0xff]
  %v798 = vld [vmem:[%s1 + $0x1818] sm:$0xff]
  %v799 = vld [vmem:[%s1 + $0x1820] sm:$0xff]
  %v800 = vld [vmem:[%s1 + $0x1828] sm:$0xff]
  %v801 = vld [vmem:[%s1 + $0x1830] sm:$0xff]
  %v802 = vld [vmem:[%s1 + $0x1838] sm:$0xff]
  %v803 = vld [vmem:[%s1 + $0x1840] sm:$0xff]
  %v804 = vld [vmem:[%s1 + $0x1848] sm:$0xff]
  %v805 = vld [vmem:[%s1 + $0x1850] sm:$0xff]
  %v806 = vld [vmem:[%s1 + $0x1858] sm:$0xff]
  %v807 = vld [vmem:[%s1 + $0x1860] sm:$0xff]
  %v808 = vld [vmem:[%s1 + $0x1868] sm:$0xff]
  %v809 = vld [vmem:[%s1 + $0x1870] sm:$0xff]
  %v810 = vld [vmem:[%s1 + $0x1878] sm:$0xff]
  %v811 = vld [vmem:[%s1 + $0x1880] sm:$0xff]
  %v812 = vld [vmem:[%s1 + $0x1888] sm:$0xff]
  %v813 = vld [vmem:[%s1 + $0x1890] sm:$0xff]
  %v814 = vld [vmem:[%s1 + $0x1898] sm:$0xff]
  %v815 = vld [vmem:[%s1 + $0x18a0] sm:$0xff]
  %v816 = vld [vmem:[%s1 + $0x18a8] sm:$0xff]
  %v817 = vld [vmem:[%s1 + $0x18b0] sm:$0xff]
  %v818 = vld [vmem:[%s1 + $0x18b8] sm:$0xff]
  %v819 = vld [vmem:[%s1 + $0x18c0] sm:$0xff]
  %v820 = vld [vmem:[%s1 + $0x18c8] sm:$0xff]
  %v821 = vld [vmem:[%s1 + $0x18d0] sm:$0xff]
  %v822 = vld [vmem:[%s1 + $0x18d8] sm:$0xff]
  %v823 = vld [vmem:[%s1 + $0x18e0] sm:$0xff]
  %v824 = vld [vmem:[%s1 + $0x18e8] sm:$0xff]
  %v825 = vld [vmem:[%s1 + $0x18f0] sm:$0xff]
  %v826 = vld [vmem:[%s1 + $0x18f8] sm:$0xff]
  %v827 = vld [vmem:[%s1 + $0x1900] sm:$0xff]
  %v828 = vld [vmem:[%s1 + $0x1908] sm:$0xff]
  %v829 = vld [vmem:[%s1 + $0x1910] sm:$0xff]
  %v830 = vld [vmem:[%s1 + $0x1918] sm:$0xff]
  %v831 = vld [vmem:[%s1 + $0x1920] sm:$0xff]
  %v832 = vld [vmem:[%s1 + $0x1928] sm:$0xff]
  %v833 = vld [vmem:[%s1 + $0x1930] sm:$0xff]
  %v834 = vld [vmem:[%s1 + $0x1938] sm:$0xff]
  %v835 = vld [vmem:[%s1 + $0x1940] sm:$0xff]
  %v836 = vld [vmem:[%s1 + $0x1948] sm:$0xff]
  %v837 = vld [vmem:[%s1 + $0x1950] sm:$0xff]
  %v838 = vld [vmem:[%s1 + $0x1958] sm:$0xff]
  %v839 = vld [vmem:[%s1 + $0x1960] sm:$0xff]
  %v840 = vld [vmem:[%s1 + $0x1968] sm:$0xff]
  %v841 = vld [vmem:[%s1 + $0x1970] sm:$0xff]
  %v842 = vld [vmem:[%s1 + $0x1978] sm:$0xff]
  %v843 = vld [vmem:[%s1 + $0x1980] sm:$0xff]
  %v844 = vld [vmem:[%s1 + $0x1988] sm:$0xff]
  %v845 = vld [vmem:[%s1 + $0x1990] sm:$0xff]
  %v846 = vld [vmem:[%s1 + $0x1998] sm:$0xff]
  %v847 = vld [vmem:[%s1 + $0x19a0] sm:$0xff]
  %v848 = vld [vmem:[%s1 + $0x19a8] sm:$0xff]
  %v849 = vld [vmem:[%s1 + $0x19b0] sm:$0xff]
  %v850 = vld [vmem:[%s1 + $0x19b8] sm:$0xff]
  %v851 = vld [vmem:[%s1 + $0x19c0] sm:$0xff]
  %v852 = vld [vmem:[%s1 + $0x19c8] sm:$0xff]
  %v853 = vld [vmem:[%s1 + $0x19d0] sm:$0xff]
  %v854 = vld [vmem:[%s1 + $0x19d8] sm:$0xff]
  %v855 = vld [vmem:[%s1 + $0x19e0] sm:$0xff]
  %v856 = vld [vmem:[%s1 + $0x19e8] sm:$0xff]
  %v857 = vld [vmem:[%s1 + $0x19f0] sm:$0xff]
  %v858 = vld [vmem:[%s1 + $0x19f8] sm:$0xff]
  %v859 = vld [vmem:[%s1 + $0x1a00] sm:$0xff]
  %v860 = vld [vmem:[%s1 + $0x1a08] sm:$0xff]
  %v861 = vld [vmem:[%s1 + $0x1a10] sm:$0xff]
  %v862 = vld [vmem:[%s1 + $0x1a18] sm:$0xff]
  %v863 = vld [vmem:[%s1 + $0x1a20] sm:$0xff]
  %v864 = vld [vmem:[%s1 + $0x1a28] sm:$0xff]
  %v865 = vld [vmem:[%s1 + $0x1a30] sm:$0xff]
  %v866 = vld [vmem:[%s1 + $0x1a38] sm:$0xff]
  %v867 = vld [vmem:[%s1 + $0x1a40] sm:$0xff]
  %v868 = vld [vmem:[%s1 + $0x1a48] sm:$0xff]
  %v869 = vld [vmem:[%s1 + $0x1a50] sm:$0xff]
  %v870 = vld [vmem:[%s1 + $0x1a58] sm:$0xff]
  %v871 = vld [vmem:[%s1 + $0x1a60] sm:$0xff]
  %v872 = vld [vmem:[%s1 + $0x1a68] sm:$0xff]
  %v873 = vld [vmem:[%s1 + $0x1a70] sm:$0xff]
  %v874 = vld [vmem:[%s1 + $0x1a78] sm:$0xff]
  %v875 = vld [vmem:[%s1 + $0x1a80] sm:$0xff]
  %v876 = vld [vmem:[%s1 + $0x1a88] sm:$0xff]
  %v877 = vld [vmem:[%s1 + $0x1a90] sm:$0xff]
  %v878 = vld [vmem:[%s1 + $0x1a98] sm:$0xff]
  %v879 = vld [vmem:[%s1 + $0x1aa0] sm:$0xff]
  %v880 = vld [vmem:[%s1 + $0x1aa8] sm:$0xff]
  %v881 = vld [vmem:[%s1 + $0x1ab0] sm:$0xff]
  %v882 = vld [vmem:[%s1 + $0x1ab8] sm:$0xff]
  %v883 = vld [vmem:[%s1 + $0x1ac0] sm:$0xff]
  %v884 = vld [vmem:[%s1 + $0x1ac8] sm:$0xff]
  %v885 = vld [vmem:[%s1 + $0x1ad0] sm:$0xff]
  %v886 = vld [vmem:[%s1 + $0x1ad8] sm:$0xff]
  %v887 = vld [vmem:[%s1 + $0x1ae0] sm:$0xff]
  %v888 = vld [vmem:[%s1 + $0x1ae8] sm:$0xff]
  %v889 = vld [vmem:[%s1 + $0x1af0] sm:$0xff]
  %v890 = vld [vmem:[%s1 + $0x1af8] sm:$0xff]
  %v891 = vld [vmem:[%s1 + $0x1b00] sm:$0xff]
  %v892 = vld [vmem:[%s1 + $0x1b08] sm:$0xff]
  %v893 = vld [vmem:[%s1 + $0x1b10] sm:$0xff]
  %v894 = vld [vmem:[%s1 + $0x1b18] sm:$0xff]
  %v895 = vld [vmem:[%s1 + $0x1b20] sm:$0xff]
  %v896 = vld [vmem:[%s1 + $0x1b28] sm:$0xff]
  %v897 = vld [vmem:[%s1 + $0x1b30] sm:$0xff]
  %v898 = vld [vmem:[%s1 + $0x1b38] sm:$0xff]
  %v899 = vld [vmem:[%s1 + $0x1b40] sm:$0xff]
  %v900 = vld [vmem:[%s1 + $0x1b48] sm:$0xff]
  %v901 = vld [vmem:[%s1 + $0x1b50] sm:$0xff]
  %v902 = vld [vmem:[%s1 + $0x1b58] sm:$0xff]
  %v903 = vld [vmem:[%s1 + $0x1b60] sm:$0xff]
  %v904 = vld [vmem:[%s1 + $0x1b68] sm:$0xff]
  %v905 = vld [vmem:[%s1 + $0x1b70] sm:$0xff]
  %v906 = vld [vmem:[%s1 + $0x1b78] sm:$0xff]
  %v907 = vld [vmem:[%s1 + $0x1b80] sm:$0xff]
  %v908 = vld [vmem:[%s1 + $0x1b88] sm:$0xff]
  %v909 = vld [vmem:[%s1 + $0x1b90] sm:$0xff]
  %v910 = vld [vmem:[%s1 + $0x1b98] sm:$0xff]
  %v911 = vld [vmem:[%s1 + $0x1ba0] sm:$0xff]
  %v912 = vld [vmem:[%s1 + $0x1ba8] sm:$0xff]
  %v913 = vld [vmem:[%s1 + $0x1bb0] sm:$0xff]
  %v914 = vld [vmem:[%s1 + $0x1bb8] sm:$0xff]
  %v915 = vld [vmem:[%s1 + $0x1bc0] sm:$0xff]
  %v916 = vld [vmem:[%s1 + $0x1bc8] sm:$0xff]
  %v917 = vld [vmem:[%s1 + $0x1bd0] sm:$0xff]
  %v918 = vld [vmem:[%s1 + $0x1bd8] sm:$0xff]
  %v919 = vld [vmem:[%s1 + $0x1be0] sm:$0xff]
  %v920 = vld [vmem:[%s1 + $0x1be8] sm:$0xff]
  %v921 = vld [vmem:[%s1 + $0x1bf0] sm:$0xff]
  %v922 = vld [vmem:[%s1 + $0x1bf8] sm:$0xff]
  %v923 = vld [vmem:[%s1 + $0x1c00] sm:$0xff]
  %v924 = vld [vmem:[%s1 + $0x1c08] sm:$0xff]
  %v925 = vld [vmem:[%s1 + $0x1c10] sm:$0xff]
  %v926 = vld [vmem:[%s1 + $0x1c18] sm:$0xff]
  %v927 = vld [vmem:[%s1 + $0x1c20] sm:$0xff]
  %v928 = vld [vmem:[%s1 + $0x1c28] sm:$0xff]
  %v929 = vld [vmem:[%s1 + $0x1c30] sm:$0xff]
  %v930 = vld [vmem:[%s1 + $0x1c38] sm:$0xff]
  %v931 = vld [vmem:[%s1 + $0x1c40] sm:$0xff]
  %v932 = vld [vmem:[%s1 + $0x1c48] sm:$0xff]
  %v933 = vld [vmem:[%s1 + $0x1c50] sm:$0xff]
  %v934 = vld [vmem:[%s1 + $0x1c58] sm:$0xff]
  %v935 = vld [vmem:[%s1 + $0x1c60] sm:$0xff]
  %v936 = vld [vmem:[%s1 + $0x1c68] sm:$0xff]
  %v937 = vld [vmem:[%s1 + $0x1c70] sm:$0xff]
  %v938 = vld [vmem:[%s1 + $0x1c78] sm:$0xff]
  %v939 = vld [vmem:[%s1 + $0x1c80] sm:$0xff]
  %v940 = vld [vmem:[%s1 + $0x1c88] sm:$0xff]
  %v941 = vld [vmem:[%s1 + $0x1c90] sm:$0xff]
  %v942 = vld [vmem:[%s1 + $0x1c98] sm:$0xff]
  %v943 = vld [vmem:[%s1 + $0x1ca0] sm:$0xff]
  %v944 = vld [vmem:[%s1 + $0x1ca8] sm:$0xff]
  %v945 = vld [vmem:[%s1 + $0x1cb0] sm:$0xff]
  %v946 = vld [vmem:[%s1 + $0x1cb8] sm:$0xff]
  %v947 = vld [vmem:[%s1 + $0x1cc0] sm:$0xff]
  %v948 = vld [vmem:[%s1 + $0x1cc8] sm:$0xff]
  %v949 = vld [vmem:[%s1 + $0x1cd0] sm:$0xff]
  %v950 = vld [vmem:[%s1 + $0x1cd8] sm:$0xff]
  %v951 = vld [vmem:[%s1 + $0x1ce0] sm:$0xff]
  %v952 = vld [vmem:[%s1 + $0x1ce8] sm:$0xff]
  %v953 = vld [vmem:[%s1 + $0x1cf0] sm:$0xff]
  %v954 = vld [vmem:[%s1 + $0x1cf8] sm:$0xff]
  %v955 = vld [vmem:[%s1 + $0x1d00] sm:$0xff]
  %v956 = vld [vmem:[%s1 + $0x1d08] sm:$0xff]
  %v957 = vld [vmem:[%s1 + $0x1d10] sm:$0xff]
  %v958 = vld [vmem:[%s1 + $0x1d18] sm:$0xff]
  %v959 = vld [vmem:[%s1 + $0x1d20] sm:$0xff]
  %v960 = vld [vmem:[%s1 + $0x1d28] sm:$0xff]
  %v961 = vld [vmem:[%s1 + $0x1d30] sm:$0xff]
  %v962 = vld [vmem:[%s1 + $0x1d38] sm:$0xff]
  %v963 = vld [vmem:[%s1 + $0x1d40] sm:$0xff]
  %v964 = vld [vmem:[%s1 + $0x1d48] sm:$0xff]
  %v965 = vld [vmem:[%s1 + $0x1d50] sm:$0xff]
  %v966 = vld [vmem:[%s1 + $0x1d58] sm:$0xff]
  %v967 = vld [vmem:[%s1 + $0x1d60] sm:$0xff]
  %v968 = vld [vmem:[%s1 + $0x1d68] sm:$0xff]
  %v969 = vld [vmem:[%s1 + $0x1d70] sm:$0xff]
  %v970 = vld [vmem:[%s1 + $0x1d78] sm:$0xff]
  %v971 = vld [vmem:[%s1 + $0x1d80] sm:$0xff]
  %v972 = vld [vmem:[%s1 + $0x1d88] sm:$0xff]
  %v973 = vld [vmem:[%s1 + $0x1d90] sm:$0xff]
  %v974 = vld [vmem:[%s1 + $0x1d98] sm:$0xff]
  %v975 = vld [vmem:[%s1 + $0x1da0] sm:$0xff]
  %v976 = vld [vmem:[%s1 + $0x1da8] sm:$0xff]
  %v977 = vld [vmem:[%s1 + $0x1db0] sm:$0xff]
  %v978 = vld [vmem:[%s1 + $0x1db8] sm:$0xff]
  %v979 = vld [vmem:[%s1 + $0x1dc0] sm:$0xff]
  %v980 = vld [vmem:[%s1 + $0x1dc8] sm:$0xff]
  %v981 = vld [vmem:[%s1 + $0x1dd0] sm:$0xff]
  %v982 = vld [vmem:[%s1 + $0x1dd8] sm:$0xff]
  %v983 = vld [vmem:[%s1 + $0x1de0] sm:$0xff]
  %v984 = vld [vmem:[%s1 + $0x1de8] sm:$0xff]
  %v985 = vld [vmem:[%s1 + $0x1df0] sm:$0xff]
  %v986 = vld [vmem:[%s1 + $0x1df8] sm:$0xff]
  %v987 = vld [vmem:[%s1 + $0x1e00] sm:$0xff]
  %v988 = vld [vmem:[%s1 + $0x1e08] sm:$0xff]
  %v989 = vld [vmem:[%s1 + $0x1e10] sm:$0xff]
  %v990 = vld [vmem:[%s1 + $0x1e18] sm:$0xff]
  %v991 = vld [vmem:[%s1 + $0x1e20] sm:$0xff]
  %v992 = vld [vmem:[%s1 + $0x1e28] sm:$0xff]
  %v993 = vld [vmem:[%s1 + $0x1e30] sm:$0xff]
  %v994 = vld [vmem:[%s1 + $0x1e38] sm:$0xff]
  %v995 = vld [vmem:[%s1 + $0x1e40] sm:$0xff]
  %v996 = vld [vmem:[%s1 + $0x1e48] sm:$0xff]
  %v997 = vld [vmem:[%s1 + $0x1e50] sm:$0xff]
  %v998 = vld [vmem:[%s1 + $0x1e58] sm:$0xff]
  %v999 = vld [vmem:[%s1 + $0x1e60] sm:$0xff]
  %v1000 = vld [vmem:[%s1 + $0x1e68] sm:$0xff]
  %v1001 = vld [vmem:[%s1 + $0x1e70] sm:$0xff]
  %v1002 = vld [vmem:[%s1 + $0x1e78] sm:$0xff]
  %v1003 = vld [vmem:[%s1 + $0x1e80] sm:$0xff]
  %v1004 = vld [vmem:[%s1 + $0x1e88] sm:$0xff]
  %v1005 = vld [vmem:[%s1 + $0x1e90] sm:$0xff]
  %v1006 = vld [vmem:[%s1 + $0x1e98] sm:$0xff]
  %v1007 = vld [vmem:[%s1 + $0x1ea0] sm:$0xff]
  %v1008 = vld [vmem:[%s1 + $0x1ea8] sm:$0xff]
  %v1009 = vld [vmem:[%s1 + $0x1eb0] sm:$0xff]
  %v1010 = vld [vmem:[%s1 + $0x1eb8] sm:$0xff]
  %v1011 = vld [vmem:[%s1 + $0x1ec0] sm:$0xff]
  %v1012 = vld [vmem:[%s1 + $0x1ec8] sm:$0xff]
  %v1013 = vld [vmem:[%s1 + $0x1ed0] sm:$0xff]
  %v1014 = vld [vmem:[%s1 + $0x1ed8] sm:$0xff]
  %v1015 = vld [vmem:[%s1 + $0x1ee0] sm:$0xff]
  %v1016 = vld [vmem:[%s1 + $0x1ee8] sm:$0xff]
  %v1017 = vld [vmem:[%s1 + $0x1ef0] sm:$0xff]
  %v1018 = vld [vmem:[%s1 + $0x1ef8] sm:$0xff]
  %v1019 = vld [vmem:[%s1 + $0x1f00] sm:$0xff]
  %v1020 = vld [vmem:[%s1 + $0x1f08] sm:$0xff]
  %v1021 = vld [vmem:[%s1 + $0x1f10] sm:$0xff]
  %v1022 = vld [vmem:[%s1 + $0x1f18] sm:$0xff]
  %v1023 = vld [vmem:[%s1 + $0x1f20] sm:$0xff]
  %v1024 = vld [vmem:[%s1 + $0x1f28] sm:$0xff]
  %v1025 = vld [vmem:[%s1 + $0x1f30] sm:$0xff]
  %v1026 = vld [vmem:[%s1 + $0x1f38] sm:$0xff]
  %v1027 = vld [vmem:[%s1 + $0x1f40] sm:$0xff]
  %v1028 = vld [vmem:[%s1 + $0x1f48] sm:$0xff]
  %v1029 = vld [vmem:[%s1 + $0x1f50] sm:$0xff]
  %v1030 = vld [vmem:[%s1 + $0x1f58] sm:$0xff]
  %v1031 = vld [vmem:[%s1 + $0x1f60] sm:$0xff]
  %v1032 = vld [vmem:[%s1 + $0x1f68] sm:$0xff]
  %v1033 = vld [vmem:[%s1 + $0x1f70] sm:$0xff]
  %v1034 = vld [vmem:[%s1 + $0x1f78] sm:$0xff]
  %v1035 = vld [vmem:[%s1 + $0x1f80] sm:$0xff]
  %v1036 = vld [vmem:[%s1 + $0x1f88] sm:$0xff]
  %v1037 = vld [vmem:[%s1 + $0x1f90] sm:$0xff]
  %v1038 = vld [vmem:[%s1 + $0x1f98] sm:$0xff]
  %v1039 = vld [vmem:[%s1 + $0x1fa0] sm:$0xff]
  %v1040 = vld [vmem:[%s1 + $0x1fa8] sm:$0xff]
  %v1041 = vld [vmem:[%s1 + $0x1fb0] sm:$0xff]
  %v1042 = vld [vmem:[%s1 + $0x1fb8] sm:$0xff]
  %v1043 = vld [vmem:[%s1 + $0x1fc0] sm:$0xff]
  %v1044 = vld [vmem:[%s1 + $0x1fc8] sm:$0xff]
  %v1045 = vld [vmem:[%s1 + $0x1fd0] sm:$0xff]
  %v1046 = vld [vmem:[%s1 + $0x1fd8] sm:$0xff]
  %v1047 = vld [vmem:[%s1 + $0x1fe0] sm:$0xff]
  %v1048 = vld [vmem:[%s1 + $0x1fe8] sm:$0xff]
  %v1049 = vld [vmem:[%s1 + $0x1ff0] sm:$0xff]
  %v1050 = vld [vmem:[%s1 + $0x1ff8] sm:$0xff]
  %v1051 = vld [vmem:[%s1 + $0x2000] sm:$0xff]
  %v1052 = vld [vmem:[%s1 + $0x2008] sm:$0xff]
  %v1053 = vld [vmem:[%s1 + $0x2010] sm:$0xff]
  %v1054 = vld [vmem:[%s1 + $0x2018] sm:$0xff]
  %v1055 = vld [vmem:[%s1 + $0x2020] sm:$0xff]
  %v1056 = vld [vmem:[%s1 + $0x2028] sm:$0xff]
  %v1057 = vld [vmem:[%s1 + $0x2030] sm:$0xff]
  %v1058 = vld [vmem:[%s1 + $0x2038] sm:$0xff]
  %v1059 = vld [vmem:[%s1 + $0x2040] sm:$0xff]
  %v1060 = vld [vmem:[%s1 + $0x2048] sm:$0xff]
  %v1061 = vld [vmem:[%s1 + $0x2050] sm:$0xff]
  %v1062 = vld [vmem:[%s1 + $0x2058] sm:$0xff]
  %v1063 = vld [vmem:[%s1 + $0x2060] sm:$0xff]
  %v1064 = vld [vmem:[%s1 + $0x2068] sm:$0xff]
  %v1065 = vld [vmem:[%s1 + $0x2070] sm:$0xff]
  %v1066 = vld [vmem:[%s1 + $0x2078] sm:$0xff]
  %v1067 = vld [vmem:[%s1 + $0x2080] sm:$0xff]
  %v1068 = vld [vmem:[%s1 + $0x2088] sm:$0xff]
  %v1069 = vld [vmem:[%s1 + $0x2090] sm:$0xff]
  %v1070 = vld [vmem:[%s1 + $0x2098] sm:$0xff]
  %v1071 = vld [vmem:[%s1 + $0x20a0] sm:$0xff]
  %v1072 = vld [vmem:[%s1 + $0x20a8] sm:$0xff]
  %v1073 = vld [vmem:[%s1 + $0x20b0] sm:$0xff]
  %v1074 = vld [vmem:[%s1 + $0x20b8] sm:$0xff]
  %v1075 = vld [vmem:[%s1 + $0x20c0] sm:$0xff]
  %v1076 = vld [vmem:[%s1 + $0x20c8] sm:$0xff]
  %v1077 = vld [vmem:[%s1 + $0x20d0] sm:$0xff]
  %v1078 = vld [vmem:[%s1 + $0x20d8] sm:$0xff]
  %v1079 = vld [vmem:[%s1 + $0x20e0] sm:$0xff]
  %v1080 = vld [vmem:[%s1 + $0x20e8] sm:$0xff]
  %v1081 = vld [vmem:[%s1 + $0x20f0] sm:$0xff]
  %v1082 = vld [vmem:[%s1 + $0x20f8] sm:$0xff]
  %v1083 = vld [vmem:[%s1 + $0x2100] sm:$0xff]
  %v1084 = vld [vmem:[%s1 + $0x2108] sm:$0xff]
  %v1085 = vld [vmem:[%s1 + $0x2110] sm:$0xff]
  %v1086 = vld [vmem:[%s1 + $0x2118] sm:$0xff]
  %v1087 = vld [vmem:[%s1 + $0x2120] sm:$0xff]
  %v1088 = vld [vmem:[%s1 + $0x2128] sm:$0xff]
  %v1089 = vld [vmem:[%s1 + $0x2130] sm:$0xff]
  %v1090 = vld [vmem:[%s1 + $0x2138] sm:$0xff]
  %v1091 = vld [vmem:[%s1 + $0x2140] sm:$0xff]
  %v1092 = vld [vmem:[%s1 + $0x2148] sm:$0xff]
  %v1093 = vld [vmem:[%s1 + $0x2150] sm:$0xff]
  %v1094 = vld [vmem:[%s1 + $0x2158] sm:$0xff]
  %v1095 = vld [vmem:[%s1 + $0x2160] sm:$0xff]
  %v1096 = vld [vmem:[%s1 + $0x2168] sm:$0xff]
  %v1097 = vld [vmem:[%s1 + $0x2170] sm:$0xff]
  %v1098 = vld [vmem:[%s1 + $0x2178] sm:$0xff]
  %v1099 = vld [vmem:[%s1 + $0x2180] sm:$0xff]
  %v1100 = vld [vmem:[%s1 + $0x2188] sm:$0xff]
  %v1101 = vld [vmem:[%s1 + $0x2190] sm:$0xff]
  %v1102 = vld [vmem:[%s1 + $0x2198] sm:$0xff]
  %v1103 = vld [vmem:[%s1 + $0x21a0] sm:$0xff]
  %v1104 = vld [vmem:[%s1 + $0x21a8] sm:$0xff]
  %v1105 = vld [vmem:[%s1 + $0x21b0] sm:$0xff]
  %v1106 = vld [vmem:[%s1 + $0x21b8] sm:$0xff]
  %v1107 = vld [vmem:[%s1 + $0x21c0] sm:$0xff]
  %v1108 = vld [vmem:[%s1 + $0x21c8] sm:$0xff]
  %v1109 = vld [vmem:[%s1 + $0x21d0] sm:$0xff]
  %v1110 = vld [vmem:[%s1 + $0x21d8] sm:$0xff]
  %v1111 = vld [vmem:[%s1 + $0x21e0] sm:$0xff]
  %v1112 = vld [vmem:[%s1 + $0x21e8] sm:$0xff]
  %v1113 = vld [vmem:[%s1 + $0x21f0] sm:$0xff]
  %v1114 = vld [vmem:[%s1 + $0x21f8] sm:$0xff]
  %v1115 = vld [vmem:[%s1 + $0x2200] sm:$0xff]
  %v1116 = vld [vmem:[%s1 + $0x2208] sm:$0xff]
  %v1117 = vld [vmem:[%s1 + $0x2210] sm:$0xff]
  %v1118 = vld [vmem:[%s1 + $0x2218] sm:$0xff]
  %v1119 = vld [vmem:[%s1 + $0x2220] sm:$0xff]
  %v1120 = vld [vmem:[%s1 + $0x2228] sm:$0xff]
  %v1121 = vld [vmem:[%s1 + $0x2230] sm:$0xff]
  %v1122 = vld [vmem:[%s1 + $0x2238] sm:$0xff]
  %v1123 = vld [vmem:[%s1 + $0x2240] sm:$0xff]
  %v1124 = vld [vmem:[%s1 + $0x2248] sm:$0xff]
  %v1125 = vld [vmem:[%s1 + $0x2250] sm:$0xff]
  %v1126 = vld [vmem:[%s1 + $0x2258] sm:$0xff]
  %v1127 = vld [vmem:[%s1 + $0x2260] sm:$0xff]
  %v1128 = vld [vmem:[%s1 + $0x2268] sm:$0xff]
  %v1129 = vld [vmem:[%s1 + $0x2270] sm:$0xff]
  %v1130 = vld [vmem:[%s1 + $0x2278] sm:$0xff]
  %v1131 = vld [vmem:[%s1 + $0x2280] sm:$0xff]
  %v1132 = vld [vmem:[%s1 + $0x2288] sm:$0xff]
  %v1133 = vld [vmem:[%s1 + $0x2290] sm:$0xff]
  %v1134 = vld [vmem:[%s1 + $0x2298] sm:$0xff]
  %v1135 = vld [vmem:[%s1 + $0x22a0] sm:$0xff]
  %v1136 = vld [vmem:[%s1 + $0x22a8] sm:$0xff]
  %v1137 = vld [vmem:[%s1 + $0x22b0] sm:$0xff]
  %v1138 = vld [vmem:[%s1 + $0x22b8] sm:$0xff]
  %v1139 = vld [vmem:[%s1 + $0x22c0] sm:$0xff]
  %v1140 = vld [vmem:[%s1 + $0x22c8] sm:$0xff]
  %v1141 = vld [vmem:[%s1 + $0x22d0] sm:$0xff]
  %v1142 = vld [vmem:[%s1 + $0x22d8] sm:$0xff]
  %v1143 = vld [vmem:[%s1 + $0x22e0] sm:$0xff]
  %v1144 = vld [vmem:[%s1 + $0x22e8] sm:$0xff]
  %v1145 = vld [vmem:[%s1 + $0x22f0] sm:$0xff]
  %v1146 = vld [vmem:[%s1 + $0x22f8] sm:$0xff]
  %v1147 = vld [vmem:[%s1 + $0x2300] sm:$0xff]
  %v1148 = vld [vmem:[%s1 + $0x2308] sm:$0xff]
  %v1149 = vld [vmem:[%s1 + $0x2310] sm:$0xff]
  %v1150 = vld [vmem:[%s1 + $0x2318] sm:$0xff]
  %v1151 = vld [vmem:[%s1 + $0x2320] sm:$0xff]
  %v1152 = vld [vmem:[%s1 + $0x2328] sm:$0xff]
  %v1153 = vld [vmem:[%s1 + $0x2330] sm:$0xff]
  %v1154 = vld [vmem:[%s1 + $0x2338] sm:$0xff]
  %v1155 = vld [vmem:[%s1 + $0x2340] sm:$0xff]
  %v1156 = vld [vmem:[%s1 + $0x2348] sm:$0xff]
  %v1157 = vld [vmem:[%s1 + $0x2350] sm:$0xff]
  %v1158 = vld [vmem:[%s1 + $0x2358] sm:$0xff]
  %v1159 = vld [vmem:[%s1 + $0x2360] sm:$0xff]
  %v1160 = vld [vmem:[%s1 + $0x2368] sm:$0xff]
  %v1161 = vld [vmem:[%s1 + $0x2370] sm:$0xff]
  %v1162 = vld [vmem:[%s1 + $0x2378] sm:$0xff]
  %v1163 = vld [vmem:[%s1 + $0x2380] sm:$0xff]
  %v1164 = vld [vmem:[%s1 + $0x2388] sm:$0xff]
  %v1165 = vld [vmem:[%s1 + $0x2390] sm:$0xff]
  %v1166 = vld [vmem:[%s1 + $0x2398] sm:$0xff]
  %v1167 = vld [vmem:[%s1 + $0x23a0] sm:$0xff]
  %v1168 = vld [vmem:[%s1 + $0x23a8] sm:$0xff]
  %v1169 = vld [vmem:[%s1 + $0x23b0] sm:$0xff]
  %v1170 = vld [vmem:[%s1 + $0x23b8] sm:$0xff]
  %v1171 = vld [vmem:[%s1 + $0x23c0] sm:$0xff]
  %v1172 = vld [vmem:[%s1 + $0x23c8] sm:$0xff]
  %v1173 = vld [vmem:[%s1 + $0x23d0] sm:$0xff]
  %v1174 = vld [vmem:[%s1 + $0x23d8] sm:$0xff]
  %v1175 = vld [vmem:[%s1 + $0x23e0] sm:$0xff]
  %v1176 = vld [vmem:[%s1 + $0x23e8] sm:$0xff]
  %v1177 = vld [vmem:[%s1 + $0x23f0] sm:$0xff]
  %v1178 = vld [vmem:[%s1 + $0x23f8] sm:$0xff]
  %v1179 = vld [vmem:[%s1 + $0x2400] sm:$0xff]
  %v1180 = vld [vmem:[%s1 + $0x2408] sm:$0xff]
  %v1181 = vld [vmem:[%s1 + $0x2410] sm:$0xff]
  %v1182 = vld [vmem:[%s1 + $0x2418] sm:$0xff]
  %v1183 = vld [vmem:[%s1 + $0x2420] sm:$0xff]
  %v1184 = vld [vmem:[%s1 + $0x2428] sm:$0xff]
  %v1185 = vld [vmem:[%s1 + $0x2430] sm:$0xff]
  %v1186 = vld [vmem:[%s1 + $0x2438] sm:$0xff]
  %v1187 = vld [vmem:[%s1 + $0x2440] sm:$0xff]
  %v1188 = vld [vmem:[%s1 + $0x2448] sm:$0xff]
  %v1189 = vld [vmem:[%s1 + $0x2450] sm:$0xff]
  %v1190 = vld [vmem:[%s1 + $0x2458] sm:$0xff]
  %v1191 = vld [vmem:[%s1 + $0x2460] sm:$0xff]
  %v1192 = vld [vmem:[%s1 + $0x2468] sm:$0xff]
  %v1193 = vld [vmem:[%s1 + $0x2470] sm:$0xff]
  %v1194 = vld [vmem:[%s1 + $0x2478] sm:$0xff]
  %v1195 = vld [vmem:[%s1 + $0x2480] sm:$0xff]
  %v1196 = vld [vmem:[%s1 + $0x2488] sm:$0xff]
  %v1197 = vld [vmem:[%s1 + $0x2490] sm:$0xff]
  %v1198 = vld [vmem:[%s1 + $0x2498] sm:$0xff]
  %v1199 = vld [vmem:[%s1 + $0x24a0] sm:$0xff]
  %v1200 = vld [vmem:[%s1 + $0x24a8] sm:$0xff]
  %v1201 = vld [vmem:[%s1 + $0x24b0] sm:$0xff]
  %v1202 = vld [vmem:[%s1 + $0x24b8] sm:$0xff]
  %v1203 = vld [vmem:[%s1 + $0x24c0] sm:$0xff]
  %v1204 = vld [vmem:[%s1 + $0x24c8] sm:$0xff]
  %v1205 = vld [vmem:[%s1 + $0x24d0] sm:$0xff]
  %v1206 = vld [vmem:[%s1 + $0x24d8] sm:$0xff]
  %v1207 = vld [vmem:[%s1 + $0x24e0] sm:$0xff]
  %v1208 = vld [vmem:[%s1 + $0x24e8] sm:$0xff]
  %v1209 = vld [vmem:[%s1 + $0x24f0] sm:$0xff]
  %v1210 = vld [vmem:[%s1 + $0x24f8] sm:$0xff]
  %v1211 = vld [vmem:[%s1 + $0x2500] sm:$0xff]
  %v1212 = vld [vmem:[%s1 + $0x2508] sm:$0xff]
  %v1213 = vld [vmem:[%s1 + $0x2510] sm:$0xff]
  %v1214 = vld [vmem:[%s1 + $0x2518] sm:$0xff]
  %v1215 = vld [vmem:[%s1 + $0x2520] sm:$0xff]
  %v1216 = vld [vmem:[%s1 + $0x2528] sm:$0xff]
  %v1217 = vld [vmem:[%s1 + $0x2530] sm:$0xff]
  %v1218 = vld [vmem:[%s1 + $0x2538] sm:$0xff]
  %v1219 = vld [vmem:[%s1 + $0x2540] sm:$0xff]
  %v1220 = vld [vmem:[%s1 + $0x2548] sm:$0xff]
  %v1221 = vld [vmem:[%s1 + $0x2550] sm:$0xff]
  %v1222 = vld [vmem:[%s1 + $0x2558] sm:$0xff]
  %v1223 = vld [vmem:[%s1 + $0x2560] sm:$0xff]
  %v1224 = vld [vmem:[%s1 + $0x2568] sm:$0xff]
  %v1225 = vld [vmem:[%s1 + $0x2570] sm:$0xff]
  %v1226 = vld [vmem:[%s1 + $0x2578] sm:$0xff]
  %v1227 = vld [vmem:[%s1 + $0x2580] sm:$0xff]
  %v1228 = vld [vmem:[%s1 + $0x2588] sm:$0xff]
  %v1229 = vld [vmem:[%s1 + $0x2590] sm:$0xff]
  %v1230 = vld [vmem:[%s1 + $0x2598] sm:$0xff]
  %v1231 = vld [vmem:[%s1 + $0x25a0] sm:$0xff]
  %v1232 = vld [vmem:[%s1 + $0x25a8] sm:$0xff]
  %v1233 = vld [vmem:[%s1 + $0x25b0] sm:$0xff]
  %v1234 = vld [vmem:[%s1 + $0x25b8] sm:$0xff]
  %v1235 = vld [vmem:[%s1 + $0x25c0] sm:$0xff]
  %v1236 = vld [vmem:[%s1 + $0x25c8] sm:$0xff]
  %v1237 = vld [vmem:[%s1 + $0x25d0] sm:$0xff]
  %v1238 = vld [vmem:[%s1 + $0x25d8] sm:$0xff]
  %v1239 = vld [vmem:[%s1 + $0x25e0] sm:$0xff]
  %v1240 = vld [vmem:[%s1 + $0x25e8] sm:$0xff]
  %v1241 = vld [vmem:[%s1 + $0x25f0] sm:$0xff]
  %v1242 = vld [vmem:[%s1 + $0x25f8] sm:$0xff]
  %v1243 = vld [vmem:[%s1 + $0x2600] sm:$0xff]
  %v1244 = vld [vmem:[%s1 + $0x2608] sm:$0xff]
  %v1245 = vld [vmem:[%s1 + $0x2610] sm:$0xff]
  %v1246 = vld [vmem:[%s1 + $0x2618] sm:$0xff]
  %v1247 = vld [vmem:[%s1 + $0x2620] sm:$0xff]
  %v1248 = vld [vmem:[%s1 + $0x2628] sm:$0xff]
  %v1249 = vld [vmem:[%s1 + $0x2630] sm:$0xff]
  %v1250 = vld [vmem:[%s1 + $0x2638] sm:$0xff]
  %v1251 = vld [vmem:[%s1 + $0x2640] sm:$0xff]
  %v1252 = vld [vmem:[%s1 + $0x2648] sm:$0xff]
  %v1253 = vld [vmem:[%s1 + $0x2650] sm:$0xff]
  %v1254 = vld [vmem:[%s1 + $0x2658] sm:$0xff]
  %v1255 = vld [vmem:[%s1 + $0x2660] sm:$0xff]
  %v1256 = vld [vmem:[%s1 + $0x2668] sm:$0xff]
  %v1257 = vld [vmem:[%s1 + $0x2670] sm:$0xff]
  %v1258 = vld [vmem:[%s1 + $0x2678] sm:$0xff]
  %v1259 = vld [vmem:[%s1 + $0x2680] sm:$0xff]
  %v1260 = vld [vmem:[%s1 + $0x2688] sm:$0xff]
  %v1261 = vld [vmem:[%s1 + $0x2690] sm:$0xff]
  %v1262 = vld [vmem:[%s1 + $0x2698] sm:$0xff]
  %v1263 = vld [vmem:[%s1 + $0x26a0] sm:$0xff]
  %v1264 = vld [vmem:[%s1 + $0x26a8] sm:$0xff]
  %v1265 = vld [vmem:[%s1 + $0x26b0] sm:$0xff]
  %v1266 = vld [vmem:[%s1 + $0x26b8] sm:$0xff]
  %v1267 = vld [vmem:[%s1 + $0x26c0] sm:$0xff]
  %v1268 = vld [vmem:[%s1 + $0x26c8] sm:$0xff]
  %v1269 = vld [vmem:[%s1 + $0x26d0] sm:$0xff]
  %v1270 = vld [vmem:[%s1 + $0x26d8] sm:$0xff]
  %v1271 = vld [vmem:[%s1 + $0x26e0] sm:$0xff]
  %v1272 = vld [vmem:[%s1 + $0x26e8] sm:$0xff]
  %v1273 = vld [vmem:[%s1 + $0x26f0] sm:$0xff]
  %v1274 = vld [vmem:[%s1 + $0x26f8] sm:$0xff]
  %v1275 = vld [vmem:[%s1 + $0x2700] sm:$0xff]
  %v1276 = vld [vmem:[%s1 + $0x2708] sm:$0xff]
  %v1277 = vld [vmem:[%s1 + $0x2710] sm:$0xff]
  %v1278 = vld [vmem:[%s1 + $0x2718] sm:$0xff]
  %v1279 = vld [vmem:[%s1 + $0x2720] sm:$0xff]
  %v1280 = vld [vmem:[%s1 + $0x2728] sm:$0xff]
  %v1281 = vld [vmem:[%s1 + $0x2730] sm:$0xff]
  %v1282 = vld [vmem:[%s1 + $0x2738] sm:$0xff]
  %v1283 = vld [vmem:[%s1 + $0x2740] sm:$0xff]
  %v1284 = vld [vmem:[%s1 + $0x2748] sm:$0xff]
  %v1285 = vld [vmem:[%s1 + $0x2750] sm:$0xff]
  %v1286 = vld [vmem:[%s1 + $0x2758] sm:$0xff]
  %v1287 = vld [vmem:[%s1 + $0x2760] sm:$0xff]
  %v1288 = vld [vmem:[%s1 + $0x2768] sm:$0xff]
  %v1289 = vld [vmem:[%s1 + $0x2770] sm:$0xff]
  %v1290 = vld [vmem:[%s1 + $0x2778] sm:$0xff]
  %v1291 = vld [vmem:[%s1 + $0x2780] sm:$0xff]
  %v1292 = vld [vmem:[%s1 + $0x2788] sm:$0xff]
  %v1293 = vld [vmem:[%s1 + $0x2790] sm:$0xff]
  %v1294 = vld [vmem:[%s1 + $0x2798] sm:$0xff]
  %v1295 = vld [vmem:[%s1 + $0x27a0] sm:$0xff]
  %v1296 = vld [vmem:[%s1 + $0x27a8] sm:$0xff]
  %v1297 = vld [vmem:[%s1 + $0x27b0] sm:$0xff]
  %v1298 = vld [vmem:[%s1 + $0x27b8] sm:$0xff]
  %v1299 = vld [vmem:[%s1 + $0x27c0] sm:$0xff]
  %v1300 = vld [vmem:[%s1 + $0x27c8] sm:$0xff]
  %v1301 = vld [vmem:[%s1 + $0x27d0] sm:$0xff]
  %v1302 = vld [vmem:[%s1 + $0x27d8] sm:$0xff]
  %v1303 = vld [vmem:[%s1 + $0x27e0] sm:$0xff]
  %v1304 = vld [vmem:[%s1 + $0x27e8] sm:$0xff]
  %v1305 = vld [vmem:[%s1 + $0x27f0] sm:$0xff]
  %v1306 = vld [vmem:[%s1 + $0x27f8] sm:$0xff]
  %v1307 = vld [vmem:[%s1 + $0x2800] sm:$0xff]
  %v1308 = vld [vmem:[%s1 + $0x2808] sm:$0xff]
  %v1309 = vld [vmem:[%s1 + $0x2810] sm:$0xff]
  %v1310 = vld [vmem:[%s1 + $0x2818] sm:$0xff]
  %v1311 = vld [vmem:[%s1 + $0x2820] sm:$0xff]
  %v1312 = vld [vmem:[%s1 + $0x2828] sm:$0xff]
  %v1313 = vld [vmem:[%s1 + $0x2830] sm:$0xff]
  %v1314 = vld [vmem:[%s1 + $0x2838] sm:$0xff]
  %v1315 = vld [vmem:[%s1 + $0x2840] sm:$0xff]
  %v1316 = vld [vmem:[%s1 + $0x2848] sm:$0xff]
  %v1317 = vld [vmem:[%s1 + $0x2850] sm:$0xff]
  %v1318 = vld [vmem:[%s1 + $0x2858] sm:$0xff]
  %v1319 = vld [vmem:[%s1 + $0x2860] sm:$0xff]
  %v1320 = vld [vmem:[%s1 + $0x2868] sm:$0xff]
  %v1321 = vld [vmem:[%s1 + $0x2870] sm:$0xff]
  %v1322 = vld [vmem:[%s1 + $0x2878] sm:$0xff]
  %v1323 = vld [vmem:[%s1 + $0x2880] sm:$0xff]
  %v1324 = vld [vmem:[%s1 + $0x2888] sm:$0xff]
  %v1325 = vld [vmem:[%s1 + $0x2890] sm:$0xff]
  %v1326 = vld [vmem:[%s1 + $0x2898] sm:$0xff]
  %v1327 = vld [vmem:[%s1 + $0x28a0] sm:$0xff]
  %v1328 = vld [vmem:[%s1 + $0x28a8] sm:$0xff]
  %v1329 = vld [vmem:[%s1 + $0x28b0] sm:$0xff]
  %v1330 = vld [vmem:[%s1 + $0x28b8] sm:$0xff]
  %v1331 = vld [vmem:[%s1 + $0x28c0] sm:$0xff]
  %v1332 = vld [vmem:[%s1 + $0x28c8] sm:$0xff]
  %v1333 = vld [vmem:[%s1 + $0x28d0] sm:$0xff]
  %v1334 = vld [vmem:[%s1 + $0x28d8] sm:$0xff]
  %v1335 = vld [vmem:[%s1 + $0x28e0] sm:$0xff]
  %v1336 = vld [vmem:[%s1 + $0x28e8] sm:$0xff]
  %v1337 = vld [vmem:[%s1 + $0x28f0] sm:$0xff]
  %v1338 = vld [vmem:[%s1 + $0x28f8] sm:$0xff]
  %v1339 = vld [vmem:[%s1 + $0x2900] sm:$0xff]
  %v1340 = vld [vmem:[%s1 + $0x2908] sm:$0xff]
  %v1341 = vld [vmem:[%s1 + $0x2910] sm:$0xff]
  %v1342 = vld [vmem:[%s1 + $0x2918] sm:$0xff]
  %v1343 = vld [vmem:[%s1 + $0x2920] sm:$0xff]
  %v1344 = vld [vmem:[%s1 + $0x2928] sm:$0xff]
  %v1345 = vld [vmem:[%s1 + $0x2930] sm:$0xff]
  %v1346 = vld [vmem:[%s1 + $0x2938] sm:$0xff]
  %v1347 = vld [vmem:[%s1 + $0x2940] sm:$0xff]
  %v1348 = vld [vmem:[%s1 + $0x2948] sm:$0xff]
  %v1349 = vld [vmem:[%s1 + $0x2950] sm:$0xff]
  %v1350 = vld [vmem:[%s1 + $0x2958] sm:$0xff]
  %v1351 = vld [vmem:[%s1 + $0x2960] sm:$0xff]
  %v1352 = vld [vmem:[%s1 + $0x2968] sm:$0xff]
  %v1353 = vld [vmem:[%s1 + $0x2970] sm:$0xff]
  %v1354 = vld [vmem:[%s1 + $0x2978] sm:$0xff]
  %v1355 = vld [vmem:[%s1 + $0x2980] sm:$0xff]
  %v1356 = vld [vmem:[%s1 + $0x2988] sm:$0xff]
  %v1357 = vld [vmem:[%s1 + $0x2990] sm:$0xff]
  %v1358 = vld [vmem:[%s1 + $0x2998] sm:$0xff]
  %v1359 = vld [vmem:[%s1 + $0x29a0] sm:$0xff]
  %v1360 = vld [vmem:[%s1 + $0x29a8] sm:$0xff]
  %v1361 = vld [vmem:[%s1 + $0x29b0] sm:$0xff]
  %v1362 = vld [vmem:[%s1 + $0x29b8] sm:$0xff]
  %v1363 = vld [vmem:[%s1 + $0x29c0] sm:$0xff]
  %v1364 = vld [vmem:[%s1 + $0x29c8] sm:$0xff]
  %v1365 = vld [vmem:[%s1 + $0x29d0] sm:$0xff]
  %v1366 = vld [vmem:[%s1 + $0x29d8] sm:$0xff]
  %v1367 = vld [vmem:[%s1 + $0x29e0] sm:$0xff]
  %v1368 = vld [vmem:[%s1 + $0x29e8] sm:$0xff]
  %v1369 = vld [vmem:[%s1 + $0x29f0] sm:$0xff]
  %v1370 = vld [vmem:[%s1 + $0x29f8] sm:$0xff]
  %v1371 = vld [vmem:[%s2] sm:$0xff]
  %v1372 = vld [vmem:[%s2 + $0x8] sm:$0xf]
  %v1375 = vlaneseq
  %v1376 = vshrl.u32 %v1375, 7
  %v1377 = vsub.s32 0, %v1376
  %v1378 = vrot.slane %v1371, %v1377
  %v1379 = vlaneseq
  %v1380 = vshrl.u32 %v1379, 7
  %v1381 = vsub.s32 1, %v1380
  %v1382 = vrot.slane %v1371, %v1381
  %v1383 = vlaneseq
  %v1384 = vshrl.u32 %v1383, 7
  %v1385 = vsub.s32 2, %v1384
  %v1386 = vrot.slane %v1371, %v1385
  %v1387 = vlaneseq
  %v1388 = vshrl.u32 %v1387, 7
  %v1389 = vsub.s32 3, %v1388
  %v1390 = vrot.slane %v1371, %v1389
  %v1391 = vlaneseq
  %v1392 = vshrl.u32 %v1391, 7
  %v1393 = vsub.s32 4, %v1392
  %v1394 = vrot.slane %v1371, %v1393
  %v1395 = vlaneseq
  %v1396 = vshrl.u32 %v1395, 7
  %v1397 = vsub.s32 5, %v1396
  %v1398 = vrot.slane %v1371, %v1397
  %v1399 = vlaneseq
  %v1400 = vshrl.u32 %v1399, 7
  %v1401 = vsub.s32 6, %v1400
  %v1402 = vrot.slane %v1371, %v1401
  %v1403 = vlaneseq
  %v1404 = vshrl.u32 %v1403, 7
  %v1405 = vsub.s32 7, %v1404
  %v1406 = vrot.slane %v1371, %v1405
  %v1407 = vlaneseq
  %v1408 = vshrl.u32 %v1407, 7
  %v1409 = vsub.s32 0, %v1408
  %v1410 = vrot.slane %v1372, %v1409
  %v1411 = vlaneseq
  %v1412 = vshrl.u32 %v1411, 7
  %v1413 = vsub.s32 1, %v1412
  %v1414 = vrot.slane %v1372, %v1413
  %v1415 = vlaneseq
  %v1416 = vshrl.u32 %v1415, 7
  %v1417 = vsub.s32 2, %v1416
  %v1418 = vrot.slane %v1372, %v1417
  %v1419 = vlaneseq
  %v1420 = vshrl.u32 %v1419, 7
  %v1421 = vsub.s32 3, %v1420
  %v1422 = vrot.slane %v1372, %v1421
  %1435 = vmatprep.subr.mxu0 %v28
  %1436 = vmatpush1.msra.mxu0 %v27
  %1437 = vmatprep.subr.mxu0 %v40
  %1438 = vmatpush1.msra.mxu0 %v39
  %1439 = vmatprep.subr.mxu0 %v52
  %1440 = vmatpush1.msra.mxu0 %v51
  %1441 = vmatprep.subr.mxu0 %v64
  %1442 = vmatpush1.msra.mxu0 %v63
  %1443 = vmatprep.subr.mxu0 %v76
  %1444 = vmatpush1.msra.mxu0 %v75
  %1445 = vmatprep.subr.mxu0 %v88
  %1446 = vmatpush1.msra.mxu0 %v87
  %1447 = vmatprep.subr.mxu0 %v100
  %1448 = vmatpush1.msra.mxu0 %v99
  %1449 = vmatprep.subr.mxu0 %v112
  %1450 = vmatpush1.msra.mxu0 %v111
  %1451 = vmatprep.subr.mxu0 %v124
  %1452 = vmatpush1.msra.mxu0 %v123
  %1453 = vmatprep.subr.mxu0 %v136
  %1454 = vmatpush1.msra.mxu0 %v135
  %1455 = vmatprep.subr.mxu0 %v148
  %1456 = vmatpush1.msra.mxu0 %v147
  %1457 = vmatprep.subr.mxu0 %v160
  %1458 = vmatpush1.msra.mxu0 %v159
  %1459 = vmatprep.subr.mxu0 %v172
  %1460 = vmatpush1.msra.mxu0 %v171
  %1461 = vmatprep.subr.mxu0 %v184
  %1462 = vmatpush1.msra.mxu0 %v183
  %1463 = vmatprep.subr.mxu0 %v196
  %1464 = vmatpush1.msra.mxu0 %v195
  %1465 = vmatprep.subr.mxu0 %v208
  %1466 = vmatpush1.msra.mxu0 %v207
  %1467 = vmatprep.subr.mxu0 %v220
  %1468 = vmatpush1.msra.mxu0 %v219
  %1469 = vmatprep.subr.mxu0 %v232
  %1470 = vmatpush1.msra.mxu0 %v231
  %1471 = vmatprep.subr.mxu0 %v244
  %1472 = vmatpush1.msra.mxu0 %v243
  %1473 = vmatprep.subr.mxu0 %v256
  %1474 = vmatpush1.msra.mxu0 %v255
  %1475 = vmatprep.subr.mxu0 %v268
  %1476 = vmatpush1.msra.mxu0 %v267
  %1477 = vmatprep.subr.mxu0 %v280
  %1478 = vmatpush1.msra.mxu0 %v279
  %1479 = vmatprep.subr.mxu0 %v292
  %1480 = vmatpush1.msra.mxu0 %v291
  %1481 = vmatprep.subr.mxu0 %v304
  %1482 = vmatpush1.msra.mxu0 %v303
  %1483 = vmatprep.subr.mxu0 %v316
  %1484 = vmatpush1.msra.mxu0 %v315
  %1485 = vmatprep.subr.mxu0 %v328
  %1486 = vmatpush1.msra.mxu0 %v327
  %1487 = vmatprep.subr.mxu0 %v340
  %1488 = vmatpush1.msra.mxu0 %v339
  %1489 = vmatprep.subr.mxu0 %v352
  %1490 = vmatpush1.msra.mxu0 %v351
  %1491 = vmatprep.subr.mxu0 %v364
  %1492 = vmatpush1.msra.mxu0 %v363
  %1493 = vmatprep.subr.mxu0 %v376
  %1494 = vmatpush1.msra.mxu0 %v375
  %1495 = vmatprep.subr.mxu0 %v388
  %1496 = vmatpush1.msra.mxu0 %v387
  %1497 = vmatprep.subr.mxu0 %v400
  %1498 = vmatpush1.msra.mxu0 %v399
  %1499 = vmatprep.mubr.f32.mxu0 %v21
  %1500 = vmatmul.mubr.f32.gmra.mrb[0].mxu0 %v20
  %v1501 = vpop.f32.mrb[0].mxu0
  %v1502 = vadd.f32 %v1378, %v1501
  %v1503 = vpop.f32.mrb[0].mxu0
  %v1504 = vadd.f32 %v1382, %v1503
  %1505 = vdwg.mxu0
  %1506 = vmatprep.subr.mxu0 %v412
  %1507 = vmatpush1.msra.mxu0 %v411
  %1508 = vmatprep.subr.mxu0 %v424
  %1509 = vmatpush1.msra.mxu0 %v423
  %1510 = vmatprep.subr.mxu0 %v436
  %1511 = vmatpush1.msra.mxu0 %v435
  %1512 = vmatprep.subr.mxu0 %v448
  %1513 = vmatpush1.msra.mxu0 %v447
  %1514 = vmatprep.subr.mxu0 %v460
  %1515 = vmatpush1.msra.mxu0 %v459
  %1516 = vmatprep.subr.mxu0 %v472
  %1517 = vmatpush1.msra.mxu0 %v471
  %1518 = vmatprep.subr.mxu0 %v484
  %1519 = vmatpush1.msra.mxu0 %v483
  %1520 = vmatprep.subr.mxu0 %v496
  %1521 = vmatpush1.msra.mxu0 %v495
  %1522 = vmatprep.subr.mxu0 %v508
  %1523 = vmatpush1.msra.mxu0 %v507
  %1524 = vmatprep.subr.mxu0 %v520
  %1525 = vmatpush1.msra.mxu0 %v519
  %1526 = vmatprep.subr.mxu0 %v532
  %1527 = vmatpush1.msra.mxu0 %v531
  %1528 = vmatprep.subr.mxu0 %v544
  %1529 = vmatpush1.msra.mxu0 %v543
  %1530 = vmatprep.subr.mxu0 %v556
  %1531 = vmatpush1.msra.mxu0 %v555
  %1532 = vmatprep.subr.mxu0 %v568
  %1533 = vmatpush1.msra.mxu0 %v567
  %1534 = vmatprep.subr.mxu0 %v580
  %1535 = vmatpush1.msra.mxu0 %v579
  %1536 = vmatprep.subr.mxu0 %v592
  %1537 = vmatpush1.msra.mxu0 %v591
  %1538 = vmatprep.subr.mxu0 %v604
  %1539 = vmatpush1.msra.mxu0 %v603
  %1540 = vmatprep.subr.mxu0 %v616
  %1541 = vmatpush1.msra.mxu0 %v615
  %1542 = vmatprep.subr.mxu0 %v628
  %1543 = vmatpush1.msra.mxu0 %v627
  %1544 = vmatprep.subr.mxu0 %v640
  %1545 = vmatpush1.msra.mxu0 %v639
  %1546 = vmatprep.subr.mxu0 %v652
  %1547 = vmatpush1.msra.mxu0 %v651
  %1548 = vmatprep.subr.mxu0 %v664
  %1549 = vmatpush1.msra.mxu0 %v663
  %1550 = vmatprep.subr.mxu0 %v676
  %1551 = vmatpush1.msra.mxu0 %v675
  %1552 = vmatprep.subr.mxu0 %v688
  %1553 = vmatpush1.msra.mxu0 %v687
  %1554 = vmatprep.subr.mxu0 %v700
  %1555 = vmatpush1.msra.mxu0 %v699
  %1556 = vmatprep.subr.mxu0 %v712
  %1557 = vmatpush1.msra.mxu0 %v711
  %1558 = vmatprep.subr.mxu0 %v724
  %1559 = vmatpush1.msra.mxu0 %v723
  %1560 = vmatprep.subr.mxu0 %v736
  %1561 = vmatpush1.msra.mxu0 %v735
  %1562 = vmatprep.subr.mxu0 %v748
  %1563 = vmatpush1.msra.mxu0 %v747
  %1564 = vmatprep.subr.mxu0 %v760
  %1565 = vmatpush1.msra.mxu0 %v759
  %1566 = vmatprep.subr.mxu0 %v772
  %1567 = vmatpush1.msra.mxu0 %v771
  %1568 = vmatprep.subr.mxu0 %v784
  %1569 = vmatpush1.msra.mxu0 %v783
  %1570 = vmatprep.mubr.f32.mxu0 %v23
  %1571 = vmatmul.mubr.f32.gmra.mrb[0].mxu0 %v22
  %v1572 = vpop.f32.mrb[0].mxu0
  %v1573 = vadd.f32 %v1502, %v1572
  %v1574 = vpop.f32.mrb[0].mxu0
  %v1575 = vadd.f32 %v1504, %v1574
  %1576 = vdwg.mxu0
  %1577 = vmatprep.subr.mxu0 %v796
  %1578 = vmatpush1.msra.mxu0 %v795
  %1579 = vmatprep.subr.mxu0 %v808
  %1580 = vmatpush1.msra.mxu0 %v807
  %1581 = vmatprep.subr.mxu0 %v820
  %1582 = vmatpush1.msra.mxu0 %v819
  %1583 = vmatprep.subr.mxu0 %v832
  %1584 = vmatpush1.msra.mxu0 %v831
  %1585 = vmatprep.subr.mxu0 %v844
  %1586 = vmatpush1.msra.mxu0 %v843
  %1587 = vmatprep.subr.mxu0 %v856
  %1588 = vmatpush1.msra.mxu0 %v855
  %1589 = vmatprep.subr.mxu0 %v868
  %1590 = vmatpush1.msra.mxu0 %v867
  %1591 = vmatprep.subr.mxu0 %v880
  %1592 = vmatpush1.msra.mxu0 %v879
  %1593 = vmatprep.subr.mxu0 %v892
  %1594 = vmatpush1.msra.mxu0 %v891
  %1595 = vmatprep.subr.mxu0 %v904
  %1596 = vmatpush1.msra.mxu0 %v903
  %1597 = vmatprep.subr.mxu0 %v916
  %1598 = vmatpush1.msra.mxu0 %v915
  %1599 = vmatprep.subr.mxu0 %v928
  %1600 = vmatpush1.msra.mxu0 %v927
  %1601 = vmatprep.subr.mxu0 %v940
  %1602 = vmatpush1.msra.mxu0 %v939
  %1603 = vmatprep.subr.mxu0 %v952
  %1604 = vmatpush1.msra.mxu0 %v951
  %1605 = vmatprep.subr.mxu0 %v964
  %1606 = vmatpush1.msra.mxu0 %v963
  %1607 = vmatprep.subr.mxu0 %v976
  %1608 = vmatpush1.msra.mxu0 %v975
  %1609 = vmatprep.subr.mxu0 %v988
  %1610 = vmatpush1.msra.mxu0 %v987
  %1611 = vmatprep.subr.mxu0 %v1000
  %1612 = vmatpush1.msra.mxu0 %v999
  %1613 = vmatprep.subr.mxu0 %v1012
  %1614 = vmatpush1.msra.mxu0 %v1011
  %1615 = vmatprep.subr.mxu0 %v1024
  %1616 = vmatpush1.msra.mxu0 %v1023
  %1617 = vmatprep.subr.mxu0 %v1036
  %1618 = vmatpush1.msra.mxu0 %v1035
  %1619 = vmatprep.subr.mxu0 %v1048
  %1620 = vmatpush1.msra.mxu0 %v1047
  %1621 = vmatprep.subr.mxu0 %v1060
  %1622 = vmatpush1.msra.mxu0 %v1059
  %1623 = vmatprep.subr.mxu0 %v1072
  %1624 = vmatpush1.msra.mxu0 %v1071
  %1625 = vmatprep.subr.mxu0 %v1084
  %1626 = vmatpush1.msra.mxu0 %v1083
  %1627 = vmatprep.subr.mxu0 %v1096
  %1628 = vmatpush1.msra.mxu0 %v1095
  %1629 = vmatprep.subr.mxu0 %v1108
  %1630 = vmatpush1.msra.mxu0 %v1107
  %1631 = vmatprep.subr.mxu0 %v1120
  %1632 = vmatpush1.msra.mxu0 %v1119
  %1633 = vmatprep.subr.mxu0 %v1132
  %1634 = vmatpush1.msra.mxu0 %v1131
  %1635 = vmatprep.subr.mxu0 %v1144
  %1636 = vmatpush1.msra.mxu0 %v1143
  %1637 = vmatprep.subr.mxu0 %v1156
  %1638 = vmatpush1.msra.mxu0 %v1155
  %1639 = vmatprep.subr.mxu0 %v1168
  %1640 = vmatpush1.msra.mxu0 %v1167
  %1641 = vmatprep.mubr.f32.mxu0 %v25
  %1642 = vmatmul.mubr.f32.gmra.mrb[0].mxu0 %v24
  %v1643 = vpop.f32.mrb[0].mxu0
  %v1644 = vadd.f32 %v1573, %v1643
  %v1645 = vpop.f32.mrb[0].mxu0
  %v1646 = vadd.f32 %v1575, %v1645
  %1647 = vdwg.mxu0
  %1648 = vmatprep.subr.mxu0 %v1180
  %1649 = vmatpush1.msra.mxu0 %v1179
  %1650 = vmatprep.subr.mxu0 %v1192
  %1651 = vmatpush1.msra.mxu0 %v1191
  %1652 = vmatprep.subr.mxu0 %v1204
  %1653 = vmatpush1.msra.mxu0 %v1203
  %1654 = vmatprep.subr.mxu0 %v1216
  %1655 = vmatpush1.msra.mxu0 %v1215
  %1656 = vmatprep.subr.mxu0 %v1228
  %1657 = vmatpush1.msra.mxu0 %v1227
  %1658 = vmatprep.subr.mxu0 %v1240
  %1659 = vmatpush1.msra.mxu0 %v1239
  %1660 = vmatprep.subr.mxu0 %v1252
  %1661 = vmatpush1.msra.mxu0 %v1251
  %1662 = vmatprep.subr.mxu0 %v1264
  %1663 = vmatpush1.msra.mxu0 %v1263
  %1664 = vmatprep.subr.mxu0 %v1276
  %1665 = vmatpush1.msra.mxu0 %v1275
  %1666 = vmatprep.subr.mxu0 %v1288
  %1667 = vmatpush1.msra.mxu0 %v1287
  %1668 = vmatprep.subr.mxu0 %v1300
  %1669 = vmatpush1.msra.mxu0 %v1299
  %1670 = vmatprep.subr.mxu0 %v1312
  %1671 = vmatpush1.msra.mxu0 %v1311
  %1672 = vmatprep.subr.mxu0 %v1324
  %1673 = vmatpush1.msra.mxu0 %v1323
  %1674 = vmatprep.subr.mxu0 %v1336
  %1675 = vmatpush1.msra.mxu0 %v1335
  %1676 = vmatprep.subr.mxu0 %v1348
  %1677 = vmatpush1.msra.mxu0 %v1347
  %1678 = vmatprep.subr.mxu0 %v1360
  %1679 = vmatpush1.msra.mxu0 %v1359
  %1680 = vmatprep.subr.mxu0 0.0
  %1681 = vmatpush1.msra.mxu0 0.0
  %1682 = vmatprep.subr.mxu0 0.0
  %1683 = vmatpush1.msra.mxu0 0.0
  %1684 = vmatprep.subr.mxu0 0.0
  %1685 = vmatpush1.msra.mxu0 0.0
  %1686 = vmatprep.subr.mxu0 0.0
  %1687 = vmatpush1.msra.mxu0 0.0
  %1688 = vmatprep.subr.mxu0 0.0
  %1689 = vmatpush1.msra.mxu0 0.0
  %1690 = vmatprep.subr.mxu0 0.0
  %1691 = vmatpush1.msra.mxu0 0.0
  %1692 = vmatprep.subr.mxu0 0.0
  %1693 = vmatpush1.msra.mxu0 0.0
  %1694 = vmatprep.subr.mxu0 0.0
  %1695 = vmatpush1.msra.mxu0 0.0
  %1696 = vmatprep.subr.mxu0 0.0
  %1697 = vmatpush1.msra.mxu0 0.0
  %1698 = vmatprep.subr.mxu0 0.0
  %1699 = vmatpush1.msra.mxu0 0.0
  %1700 = vmatprep.subr.mxu0 0.0
  %1701 = vmatpush1.msra.mxu0 0.0
  %1702 = vmatprep.subr.mxu0 0.0
  %1703 = vmatpush1.msra.mxu0 0.0
  %1704 = vmatprep.subr.mxu0 0.0
  %1705 = vmatpush1.msra.mxu0 0.0
  %1706 = vmatprep.subr.mxu0 0.0
  %1707 = vmatpush1.msra.mxu0 0.0
  %1708 = vmatprep.subr.mxu0 0.0
  %1709 = vmatpush1.msra.mxu0 0.0
  %1710 = vmatprep.subr.mxu0 0.0
  %1711 = vmatpush1.msra.mxu0 0.0
  %1712 = vmatprep.mubr.f32.mxu0 0.0
  %1713 = vmatmul.mubr.f32.gmra.mrb[0].mxu0 %v26
  %v1714 = vpop.f32.mrb[0].mxu0
  %v1715 = vadd.f32 %v1644, %v1714
  %v1716 = vpop.f32.mrb[0].mxu0
  %v1717 = vadd.f32 %v1646, %v1716
  %1718 = vdwg.mxu0
  %1719 = vmatprep.subr.mxu0 %v30
  %1720 = vmatpush1.msra.mxu0 %v29
  %1721 = vmatprep.subr.mxu0 %v42
  %1722 = vmatpush1.msra.mxu0 %v41
  %1723 = vmatprep.subr.mxu0 %v54
  %1724 = vmatpush1.msra.mxu0 %v53
  %1725 = vmatprep.subr.mxu0 %v66
  %1726 = vmatpush1.msra.mxu0 %v65
  %1727 = vmatprep.subr.mxu0 %v78
  %1728 = vmatpush1.msra.mxu0 %v77
  %1729 = vmatprep.subr.mxu0 %v90
  %1730 = vmatpush1.msra.mxu0 %v89
  %1731 = vmatprep.subr.mxu0 %v102
  %1732 = vmatpush1.msra.mxu0 %v101
  %1733 = vmatprep.subr.mxu0 %v114
  %1734 = vmatpush1.msra.mxu0 %v113
  %1735 = vmatprep.subr.mxu0 %v126
  %1736 = vmatpush1.msra.mxu0 %v125
  %1737 = vmatprep.subr.mxu0 %v138
  %1738 = vmatpush1.msra.mxu0 %v137
  %1739 = vmatprep.subr.mxu0 %v150
  %1740 = vmatpush1.msra.mxu0 %v149
  %1741 = vmatprep.subr.mxu0 %v162
  %1742 = vmatpush1.msra.mxu0 %v161
  %1743 = vmatprep.subr.mxu0 %v174
  %1744 = vmatpush1.msra.mxu0 %v173
  %1745 = vmatprep.subr.mxu0 %v186
  %1746 = vmatpush1.msra.mxu0 %v185
  %1747 = vmatprep.subr.mxu0 %v198
  %1748 = vmatpush1.msra.mxu0 %v197
  %1749 = vmatprep.subr.mxu0 %v210
  %1750 = vmatpush1.msra.mxu0 %v209
  %1751 = vmatprep.subr.mxu0 %v222
  %1752 = vmatpush1.msra.mxu0 %v221
  %1753 = vmatprep.subr.mxu0 %v234
  %1754 = vmatpush1.msra.mxu0 %v233
  %1755 = vmatprep.subr.mxu0 %v246
  %1756 = vmatpush1.msra.mxu0 %v245
  %1757 = vmatprep.subr.mxu0 %v258
  %1758 = vmatpush1.msra.mxu0 %v257
  %1759 = vmatprep.subr.mxu0 %v270
  %1760 = vmatpush1.msra.mxu0 %v269
  %1761 = vmatprep.subr.mxu0 %v282
  %1762 = vmatpush1.msra.mxu0 %v281
  %1763 = vmatprep.subr.mxu0 %v294
  %1764 = vmatpush1.msra.mxu0 %v293
  %1765 = vmatprep.subr.mxu0 %v306
  %1766 = vmatpush1.msra.mxu0 %v305
  %1767 = vmatprep.subr.mxu0 %v318
  %1768 = vmatpush1.msra.mxu0 %v317
  %1769 = vmatprep.subr.mxu0 %v330
  %1770 = vmatpush1.msra.mxu0 %v329
  %1771 = vmatprep.subr.mxu0 %v342
  %1772 = vmatpush1.msra.mxu0 %v341
  %1773 = vmatprep.subr.mxu0 %v354
  %1774 = vmatpush1.msra.mxu0 %v353
  %1775 = vmatprep.subr.mxu0 %v366
  %1776 = vmatpush1.msra.mxu0 %v365
  %1777 = vmatprep.subr.mxu0 %v378
  %1778 = vmatpush1.msra.mxu0 %v377
  %1779 = vmatprep.subr.mxu0 %v390
  %1780 = vmatpush1.msra.mxu0 %v389
  %1781 = vmatprep.subr.mxu0 %v402
  %1782 = vmatpush1.msra.mxu0 %v401
  %1783 = vmatprep.mubr.f32.mxu0 %v21
  %1784 = vmatmul.mubr.f32.gmra.mrb[0].mxu0 %v20
  %v1785 = vpop.f32.mrb[0].mxu0
  %v1786 = vadd.f32 %v1386, %v1785
  %v1787 = vpop.f32.mrb[0].mxu0
  %v1788 = vadd.f32 %v1390, %v1787
  %1789 = vdwg.mxu0
  %1790 = vmatprep.subr.mxu0 %v414
  %1791 = vmatpush1.msra.mxu0 %v413
  %1792 = vmatprep.subr.mxu0 %v426
  %1793 = vmatpush1.msra.mxu0 %v425
  %1794 = vmatprep.subr.mxu0 %v438
  %1795 = vmatpush1.msra.mxu0 %v437
  %1796 = vmatprep.subr.mxu0 %v450
  %1797 = vmatpush1.msra.mxu0 %v449
  %1798 = vmatprep.subr.mxu0 %v462
  %1799 = vmatpush1.msra.mxu0 %v461
  %1800 = vmatprep.subr.mxu0 %v474
  %1801 = vmatpush1.msra.mxu0 %v473
  %1802 = vmatprep.subr.mxu0 %v486
  %1803 = vmatpush1.msra.mxu0 %v485
  %1804 = vmatprep.subr.mxu0 %v498
  %1805 = vmatpush1.msra.mxu0 %v497
  %1806 = vmatprep.subr.mxu0 %v510
  %1807 = vmatpush1.msra.mxu0 %v509
  %1808 = vmatprep.subr.mxu0 %v522
  %1809 = vmatpush1.msra.mxu0 %v521
  %1810 = vmatprep.subr.mxu0 %v534
  %1811 = vmatpush1.msra.mxu0 %v533
  %1812 = vmatprep.subr.mxu0 %v546
  %1813 = vmatpush1.msra.mxu0 %v545
  %1814 = vmatprep.subr.mxu0 %v558
  %1815 = vmatpush1.msra.mxu0 %v557
  %1816 = vmatprep.subr.mxu0 %v570
  %1817 = vmatpush1.msra.mxu0 %v569
  %1818 = vmatprep.subr.mxu0 %v582
  %1819 = vmatpush1.msra.mxu0 %v581
  %1820 = vmatprep.subr.mxu0 %v594
  %1821 = vmatpush1.msra.mxu0 %v593
  %1822 = vmatprep.subr.mxu0 %v606
  %1823 = vmatpush1.msra.mxu0 %v605
  %1824 = vmatprep.subr.mxu0 %v618
  %1825 = vmatpush1.msra.mxu0 %v617
  %1826 = vmatprep.subr.mxu0 %v630
  %1827 = vmatpush1.msra.mxu0 %v629
  %1828 = vmatprep.subr.mxu0 %v642
  %1829 = vmatpush1.msra.mxu0 %v641
  %1830 = vmatprep.subr.mxu0 %v654
  %1831 = vmatpush1.msra.mxu0 %v653
  %1832 = vmatprep.subr.mxu0 %v666
  %1833 = vmatpush1.msra.mxu0 %v665
  %1834 = vmatprep.subr.mxu0 %v678
  %1835 = vmatpush1.msra.mxu0 %v677
  %1836 = vmatprep.subr.mxu0 %v690
  %1837 = vmatpush1.msra.mxu0 %v689
  %1838 = vmatprep.subr.mxu0 %v702
  %1839 = vmatpush1.msra.mxu0 %v701
  %1840 = vmatprep.subr.mxu0 %v714
  %1841 = vmatpush1.msra.mxu0 %v713
  %1842 = vmatprep.subr.mxu0 %v726
  %1843 = vmatpush1.msra.mxu0 %v725
  %1844 = vmatprep.subr.mxu0 %v738
  %1845 = vmatpush1.msra.mxu0 %v737
  %1846 = vmatprep.subr.mxu0 %v750
  %1847 = vmatpush1.msra.mxu0 %v749
  %1848 = vmatprep.subr.mxu0 %v762
  %1849 = vmatpush1.msra.mxu0 %v761
  %1850 = vmatprep.subr.mxu0 %v774
  %1851 = vmatpush1.msra.mxu0 %v773
  %1852 = vmatprep.subr.mxu0 %v786
  %1853 = vmatpush1.msra.mxu0 %v785
  %1854 = vmatprep.mubr.f32.mxu0 %v23
  %1855 = vmatmul.mubr.f32.gmra.mrb[0].mxu0 %v22
  %v1856 = vpop.f32.mrb[0].mxu0
  %v1857 = vadd.f32 %v1786, %v1856
  %v1858 = vpop.f32.mrb[0].mxu0
  %v1859 = vadd.f32 %v1788, %v1858
  %1860 = vdwg.mxu0
  %1861 = vmatprep.subr.mxu0 %v798
  %1862 = vmatpush1.msra.mxu0 %v797
  %1863 = vmatprep.subr.mxu0 %v810
  %1864 = vmatpush1.msra.mxu0 %v809
  %1865 = vmatprep.subr.mxu0 %v822
  %1866 = vmatpush1.msra.mxu0 %v821
  %1867 = vmatprep.subr.mxu0 %v834
  %1868 = vmatpush1.msra.mxu0 %v833
  %1869 = vmatprep.subr.mxu0 %v846
  %1870 = vmatpush1.msra.mxu0 %v845
  %1871 = vmatprep.subr.mxu0 %v858
  %1872 = vmatpush1.msra.mxu0 %v857
  %1873 = vmatprep.subr.mxu0 %v870
  %1874 = vmatpush1.msra.mxu0 %v869
  %1875 = vmatprep.subr.mxu0 %v882
  %1876 = vmatpush1.msra.mxu0 %v881
  %1877 = vmatprep.subr.mxu0 %v894
  %1878 = vmatpush1.msra.mxu0 %v893
  %1879 = vmatprep.subr.mxu0 %v906
  %1880 = vmatpush1.msra.mxu0 %v905
  %1881 = vmatprep.subr.mxu0 %v918
  %1882 = vmatpush1.msra.mxu0 %v917
  %1883 = vmatprep.subr.mxu0 %v930
  %1884 = vmatpush1.msra.mxu0 %v929
  %1885 = vmatprep.subr.mxu0 %v942
  %1886 = vmatpush1.msra.mxu0 %v941
  %1887 = vmatprep.subr.mxu0 %v954
  %1888 = vmatpush1.msra.mxu0 %v953
  %1889 = vmatprep.subr.mxu0 %v966
  %1890 = vmatpush1.msra.mxu0 %v965
  %1891 = vmatprep.subr.mxu0 %v978
  %1892 = vmatpush1.msra.mxu0 %v977
  %1893 = vmatprep.subr.mxu0 %v990
  %1894 = vmatpush1.msra.mxu0 %v989
  %1895 = vmatprep.subr.mxu0 %v1002
  %1896 = vmatpush1.msra.mxu0 %v1001
  %1897 = vmatprep.subr.mxu0 %v1014
  %1898 = vmatpush1.msra.mxu0 %v1013
  %1899 = vmatprep.subr.mxu0 %v1026
  %1900 = vmatpush1.msra.mxu0 %v1025
  %1901 = vmatprep.subr.mxu0 %v1038
  %1902 = vmatpush1.msra.mxu0 %v1037
  %1903 = vmatprep.subr.mxu0 %v1050
  %1904 = vmatpush1.msra.mxu0 %v1049
  %1905 = vmatprep.subr.mxu0 %v1062
  %1906 = vmatpush1.msra.mxu0 %v1061
  %1907 = vmatprep.subr.mxu0 %v1074
  %1908 = vmatpush1.msra.mxu0 %v1073
  %1909 = vmatprep.subr.mxu0 %v1086
  %1910 = vmatpush1.msra.mxu0 %v1085
  %1911 = vmatprep.subr.mxu0 %v1098
  %1912 = vmatpush1.msra.mxu0 %v1097
  %1913 = vmatprep.subr.mxu0 %v1110
  %1914 = vmatpush1.msra.mxu0 %v1109
  %1915 = vmatprep.subr.mxu0 %v1122
  %1916 = vmatpush1.msra.mxu0 %v1121
  %1917 = vmatprep.subr.mxu0 %v1134
  %1918 = vmatpush1.msra.mxu0 %v1133
  %1919 = vmatprep.subr.mxu0 %v1146
  %1920 = vmatpush1.msra.mxu0 %v1145
  %1921 = vmatprep.subr.mxu0 %v1158
  %1922 = vmatpush1.msra.mxu0 %v1157
  %1923 = vmatprep.subr.mxu0 %v1170
  %1924 = vmatpush1.msra.mxu0 %v1169
  %1925 = vmatprep.mubr.f32.mxu0 %v25
  %1926 = vmatmul.mubr.f32.gmra.mrb[0].mxu0 %v24
  %v1927 = vpop.f32.mrb[0].mxu0
  %v1928 = vadd.f32 %v1857, %v1927
  %v1929 = vpop.f32.mrb[0].mxu0
  %v1930 = vadd.f32 %v1859, %v1929
  %1931 = vdwg.mxu0
  %1932 = vmatprep.subr.mxu0 %v1182
  %1933 = vmatpush1.msra.mxu0 %v1181
  %1934 = vmatprep.subr.mxu0 %v1194
  %1935 = vmatpush1.msra.mxu0 %v1193
  %1936 = vmatprep.subr.mxu0 %v1206
  %1937 = vmatpush1.msra.mxu0 %v1205
  %1938 = vmatprep.subr.mxu0 %v1218
  %1939 = vmatpush1.msra.mxu0 %v1217
  %1940 = vmatprep.subr.mxu0 %v1230
  %1941 = vmatpush1.msra.mxu0 %v1229
  %1942 = vmatprep.subr.mxu0 %v1242
  %1943 = vmatpush1.msra.mxu0 %v1241
  %1944 = vmatprep.subr.mxu0 %v1254
  %1945 = vmatpush1.msra.mxu0 %v1253
  %1946 = vmatprep.subr.mxu0 %v1266
  %1947 = vmatpush1.msra.mxu0 %v1265
  %1948 = vmatprep.subr.mxu0 %v1278
  %1949 = vmatpush1.msra.mxu0 %v1277
  %1950 = vmatprep.subr.mxu0 %v1290
  %1951 = vmatpush1.msra.mxu0 %v1289
  %1952 = vmatprep.subr.mxu0 %v1302
  %1953 = vmatpush1.msra.mxu0 %v1301
  %1954 = vmatprep.subr.mxu0 %v1314
  %1955 = vmatpush1.msra.mxu0 %v1313
  %1956 = vmatprep.subr.mxu0 %v1326
  %1957 = vmatpush1.msra.mxu0 %v1325
  %1958 = vmatprep.subr.mxu0 %v1338
  %1959 = vmatpush1.msra.mxu0 %v1337
  %1960 = vmatprep.subr.mxu0 %v1350
  %1961 = vmatpush1.msra.mxu0 %v1349
  %1962 = vmatprep.subr.mxu0 %v1362
  %1963 = vmatpush1.msra.mxu0 %v1361
  %1964 = vmatprep.subr.mxu0 0.0
  %1965 = vmatpush1.msra.mxu0 0.0
  %1966 = vmatprep.subr.mxu0 0.0
  %1967 = vmatpush1.msra.mxu0 0.0
  %1968 = vmatprep.subr.mxu0 0.0
  %1969 = vmatpush1.msra.mxu0 0.0
  %1970 = vmatprep.subr.mxu0 0.0
  %1971 = vmatpush1.msra.mxu0 0.0
  %1972 = vmatprep.subr.mxu0 0.0
  %1973 = vmatpush1.msra.mxu0 0.0
  %1974 = vmatprep.subr.mxu0 0.0
  %1975 = vmatpush1.msra.mxu0 0.0
  %1976 = vmatprep.subr.mxu0 0.0
  %1977 = vmatpush1.msra.mxu0 0.0
  %1978 = vmatprep.subr.mxu0 0.0
  %1979 = vmatpush1.msra.mxu0 0.0
  %1980 = vmatprep.subr.mxu0 0.0
  %1981 = vmatpush1.msra.mxu0 0.0
  %1982 = vmatprep.subr.mxu0 0.0
  %1983 = vmatpush1.msra.mxu0 0.0
  %1984 = vmatprep.subr.mxu0 0.0
  %1985 = vmatpush1.msra.mxu0 0.0
  %1986 = vmatprep.subr.mxu0 0.0
  %1987 = vmatpush1.msra.mxu0 0.0
  %1988 = vmatprep.subr.mxu0 0.0
  %1989 = vmatpush1.msra.mxu0 0.0
  %1990 = vmatprep.subr.mxu0 0.0
  %1991 = vmatpush1.msra.mxu0 0.0
  %1992 = vmatprep.subr.mxu0 0.0
  %1993 = vmatpush1.msra.mxu0 0.0
  %1994 = vmatprep.subr.mxu0 0.0
  %1995 = vmatpush1.msra.mxu0 0.0
  %1996 = vmatprep.mubr.f32.mxu0 0.0
  %1997 = vmatmul.mubr.f32.gmra.mrb[0].mxu0 %v26
  %v1998 = vpop.f32.mrb[0].mxu0
  %v1999 = vadd.f32 %v1928, %v1998
  %v2000 = vpop.f32.mrb[0].mxu0
  %v2001 = vadd.f32 %v1930, %v2000
  %2002 = vdwg.mxu0
  %2003 = vmatprep.subr.mxu0 %v32
  %2004 = vmatpush1.msra.mxu0 %v31
  %2005 = vmatprep.subr.mxu0 %v44
  %2006 = vmatpush1.msra.mxu0 %v43
  %2007 = vmatprep.subr.mxu0 %v56
  %2008 = vmatpush1.msra.mxu0 %v55
  %2009 = vmatprep.subr.mxu0 %v68
  %2010 = vmatpush1.msra.mxu0 %v67
  %2011 = vmatprep.subr.mxu0 %v80
  %2012 = vmatpush1.msra.mxu0 %v79
  %2013 = vmatprep.subr.mxu0 %v92
  %2014 = vmatpush1.msra.mxu0 %v91
  %2015 = vmatprep.subr.mxu0 %v104
  %2016 = vmatpush1.msra.mxu0 %v103
  %2017 = vmatprep.subr.mxu0 %v116
  %2018 = vmatpush1.msra.mxu0 %v115
  %2019 = vmatprep.subr.mxu0 %v128
  %2020 = vmatpush1.msra.mxu0 %v127
  %2021 = vmatprep.subr.mxu0 %v140
  %2022 = vmatpush1.msra.mxu0 %v139
  %2023 = vmatprep.subr.mxu0 %v152
  %2024 = vmatpush1.msra.mxu0 %v151
  %2025 = vmatprep.subr.mxu0 %v164
  %2026 = vmatpush1.msra.mxu0 %v163
  %2027 = vmatprep.subr.mxu0 %v176
  %2028 = vmatpush1.msra.mxu0 %v175
  %2029 = vmatprep.subr.mxu0 %v188
  %2030 = vmatpush1.msra.mxu0 %v187
  %2031 = vmatprep.subr.mxu0 %v200
  %2032 = vmatpush1.msra.mxu0 %v199
  %2033 = vmatprep.subr.mxu0 %v212
  %2034 = vmatpush1.msra.mxu0 %v211
  %2035 = vmatprep.subr.mxu0 %v224
  %2036 = vmatpush1.msra.mxu0 %v223
  %2037 = vmatprep.subr.mxu0 %v236
  %2038 = vmatpush1.msra.mxu0 %v235
  %2039 = vmatprep.subr.mxu0 %v248
  %2040 = vmatpush1.msra.mxu0 %v247
  %2041 = vmatprep.subr.mxu0 %v260
  %2042 = vmatpush1.msra.mxu0 %v259
  %2043 = vmatprep.subr.mxu0 %v272
  %2044 = vmatpush1.msra.mxu0 %v271
  %2045 = vmatprep.subr.mxu0 %v284
  %2046 = vmatpush1.msra.mxu0 %v283
  %2047 = vmatprep.subr.mxu0 %v296
  %2048 = vmatpush1.msra.mxu0 %v295
  %2049 = vmatprep.subr.mxu0 %v308
  %2050 = vmatpush1.msra.mxu0 %v307
  %2051 = vmatprep.subr.mxu0 %v320
  %2052 = vmatpush1.msra.mxu0 %v319
  %2053 = vmatprep.subr.mxu0 %v332
  %2054 = vmatpush1.msra.mxu0 %v331
  %2055 = vmatprep.subr.mxu0 %v344
  %2056 = vmatpush1.msra.mxu0 %v343
  %2057 = vmatprep.subr.mxu0 %v356
  %2058 = vmatpush1.msra.mxu0 %v355
  %2059 = vmatprep.subr.mxu0 %v368
  %2060 = vmatpush1.msra.mxu0 %v367
  %2061 = vmatprep.subr.mxu0 %v380
  %2062 = vmatpush1.msra.mxu0 %v379
  %2063 = vmatprep.subr.mxu0 %v392
  %2064 = vmatpush1.msra.mxu0 %v391
  %2065 = vmatprep.subr.mxu0 %v404
  %2066 = vmatpush1.msra.mxu0 %v403
  %2067 = vmatprep.mubr.f32.mxu0 %v21
  %2068 = vmatmul.mubr.f32.gmra.mrb[0].mxu0 %v20
  %v2069 = vpop.f32.mrb[0].mxu0
  %v2070 = vadd.f32 %v1394, %v2069
  %v2071 = vpop.f32.mrb[0].mxu0
  %v2072 = vadd.f32 %v1398, %v2071
  %2073 = vdwg.mxu0
  %2074 = vmatprep.subr.mxu0 %v416
  %2075 = vmatpush1.msra.mxu0 %v415
  %2076 = vmatprep.subr.mxu0 %v428
  %2077 = vmatpush1.msra.mxu0 %v427
  %2078 = vmatprep.subr.mxu0 %v440
  %2079 = vmatpush1.msra.mxu0 %v439
  %2080 = vmatprep.subr.mxu0 %v452
  %2081 = vmatpush1.msra.mxu0 %v451
  %2082 = vmatprep.subr.mxu0 %v464
  %2083 = vmatpush1.msra.mxu0 %v463
  %2084 = vmatprep.subr.mxu0 %v476
  %2085 = vmatpush1.msra.mxu0 %v475
  %2086 = vmatprep.subr.mxu0 %v488
  %2087 = vmatpush1.msra.mxu0 %v487
  %2088 = vmatprep.subr.mxu0 %v500
  %2089 = vmatpush1.msra.mxu0 %v499
  %2090 = vmatprep.subr.mxu0 %v512
  %2091 = vmatpush1.msra.mxu0 %v511
  %2092 = vmatprep.subr.mxu0 %v524
  %2093 = vmatpush1.msra.mxu0 %v523
  %2094 = vmatprep.subr.mxu0 %v536
  %2095 = vmatpush1.msra.mxu0 %v535
  %2096 = vmatprep.subr.mxu0 %v548
  %2097 = vmatpush1.msra.mxu0 %v547
  %2098 = vmatprep.subr.mxu0 %v560
  %2099 = vmatpush1.msra.mxu0 %v559
  %2100 = vmatprep.subr.mxu0 %v572
  %2101 = vmatpush1.msra.mxu0 %v571
  %2102 = vmatprep.subr.mxu0 %v584
  %2103 = vmatpush1.msra.mxu0 %v583
  %2104 = vmatprep.subr.mxu0 %v596
  %2105 = vmatpush1.msra.mxu0 %v595
  %2106 = vmatprep.subr.mxu0 %v608
  %2107 = vmatpush1.msra.mxu0 %v607
  %2108 = vmatprep.subr.mxu0 %v620
  %2109 = vmatpush1.msra.mxu0 %v619
  %2110 = vmatprep.subr.mxu0 %v632
  %2111 = vmatpush1.msra.mxu0 %v631
  %2112 = vmatprep.subr.mxu0 %v644
  %2113 = vmatpush1.msra.mxu0 %v643
  %2114 = vmatprep.subr.mxu0 %v656
  %2115 = vmatpush1.msra.mxu0 %v655
  %2116 = vmatprep.subr.mxu0 %v668
  %2117 = vmatpush1.msra.mxu0 %v667
  %2118 = vmatprep.subr.mxu0 %v680
  %2119 = vmatpush1.msra.mxu0 %v679
  %2120 = vmatprep.subr.mxu0 %v692
  %2121 = vmatpush1.msra.mxu0 %v691
  %2122 = vmatprep.subr.mxu0 %v704
  %2123 = vmatpush1.msra.mxu0 %v703
  %2124 = vmatprep.subr.mxu0 %v716
  %2125 = vmatpush1.msra.mxu0 %v715
  %2126 = vmatprep.subr.mxu0 %v728
  %2127 = vmatpush1.msra.mxu0 %v727
  %2128 = vmatprep.subr.mxu0 %v740
  %2129 = vmatpush1.msra.mxu0 %v739
  %2130 = vmatprep.subr.mxu0 %v752
  %2131 = vmatpush1.msra.mxu0 %v751
  %2132 = vmatprep.subr.mxu0 %v764
  %2133 = vmatpush1.msra.mxu0 %v763
  %2134 = vmatprep.subr.mxu0 %v776
  %2135 = vmatpush1.msra.mxu0 %v775
  %2136 = vmatprep.subr.mxu0 %v788
  %2137 = vmatpush1.msra.mxu0 %v787
  %2138 = vmatprep.mubr.f32.mxu0 %v23
  %2139 = vmatmul.mubr.f32.gmra.mrb[0].mxu0 %v22
  %v2140 = vpop.f32.mrb[0].mxu0
  %v2141 = vadd.f32 %v2070, %v2140
  %v2142 = vpop.f32.mrb[0].mxu0
  %v2143 = vadd.f32 %v2072, %v2142
  %2144 = vdwg.mxu0
  %2145 = vmatprep.subr.mxu0 %v800
  %2146 = vmatpush1.msra.mxu0 %v799
  %2147 = vmatprep.subr.mxu0 %v812
  %2148 = vmatpush1.msra.mxu0 %v811
  %2149 = vmatprep.subr.mxu0 %v824
  %2150 = vmatpush1.msra.mxu0 %v823
  %2151 = vmatprep.subr.mxu0 %v836
  %2152 = vmatpush1.msra.mxu0 %v835
  %2153 = vmatprep.subr.mxu0 %v848
  %2154 = vmatpush1.msra.mxu0 %v847
  %2155 = vmatprep.subr.mxu0 %v860
  %2156 = vmatpush1.msra.mxu0 %v859
  %2157 = vmatprep.subr.mxu0 %v872
  %2158 = vmatpush1.msra.mxu0 %v871
  %2159 = vmatprep.subr.mxu0 %v884
  %2160 = vmatpush1.msra.mxu0 %v883
  %2161 = vmatprep.subr.mxu0 %v896
  %2162 = vmatpush1.msra.mxu0 %v895
  %2163 = vmatprep.subr.mxu0 %v908
  %2164 = vmatpush1.msra.mxu0 %v907
  %2165 = vmatprep.subr.mxu0 %v920
  %2166 = vmatpush1.msra.mxu0 %v919
  %2167 = vmatprep.subr.mxu0 %v932
  %2168 = vmatpush1.msra.mxu0 %v931
  %2169 = vmatprep.subr.mxu0 %v944
  %2170 = vmatpush1.msra.mxu0 %v943
  %2171 = vmatprep.subr.mxu0 %v956
  %2172 = vmatpush1.msra.mxu0 %v955
  %2173 = vmatprep.subr.mxu0 %v968
  %2174 = vmatpush1.msra.mxu0 %v967
  %2175 = vmatprep.subr.mxu0 %v980
  %2176 = vmatpush1.msra.mxu0 %v979
  %2177 = vmatprep.subr.mxu0 %v992
  %2178 = vmatpush1.msra.mxu0 %v991
  %2179 = vmatprep.subr.mxu0 %v1004
  %2180 = vmatpush1.msra.mxu0 %v1003
  %2181 = vmatprep.subr.mxu0 %v1016
  %2182 = vmatpush1.msra.mxu0 %v1015
  %2183 = vmatprep.subr.mxu0 %v1028
  %2184 = vmatpush1.msra.mxu0 %v1027
  %2185 = vmatprep.subr.mxu0 %v1040
  %2186 = vmatpush1.msra.mxu0 %v1039
  %2187 = vmatprep.subr.mxu0 %v1052
  %2188 = vmatpush1.msra.mxu0 %v1051
  %2189 = vmatprep.subr.mxu0 %v1064
  %2190 = vmatpush1.msra.mxu0 %v1063
  %2191 = vmatprep.subr.mxu0 %v1076
  %2192 = vmatpush1.msra.mxu0 %v1075
  %2193 = vmatprep.subr.mxu0 %v1088
  %2194 = vmatpush1.msra.mxu0 %v1087
  %2195 = vmatprep.subr.mxu0 %v1100
  %2196 = vmatpush1.msra.mxu0 %v1099
  %2197 = vmatprep.subr.mxu0 %v1112
  %2198 = vmatpush1.msra.mxu0 %v1111
  %2199 = vmatprep.subr.mxu0 %v1124
  %2200 = vmatpush1.msra.mxu0 %v1123
  %2201 = vmatprep.subr.mxu0 %v1136
  %2202 = vmatpush1.msra.mxu0 %v1135
  %2203 = vmatprep.subr.mxu0 %v1148
  %2204 = vmatpush1.msra.mxu0 %v1147
  %2205 = vmatprep.subr.mxu0 %v1160
  %2206 = vmatpush1.msra.mxu0 %v1159
  %2207 = vmatprep.subr.mxu0 %v1172
  %2208 = vmatpush1.msra.mxu0 %v1171
  %2209 = vmatprep.mubr.f32.mxu0 %v25
  %2210 = vmatmul.mubr.f32.gmra.mrb[0].mxu0 %v24
  %v2211 = vpop.f32.mrb[0].mxu0
  %v2212 = vadd.f32 %v2141, %v2211
  %v2213 = vpop.f32.mrb[0].mxu0
  %v2214 = vadd.f32 %v2143, %v2213
  %2215 = vdwg.mxu0
  %2216 = vmatprep.subr.mxu0 %v1184
  %2217 = vmatpush1.msra.mxu0 %v1183
  %2218 = vmatprep.subr.mxu0 %v1196
  %2219 = vmatpush1.msra.mxu0 %v1195
  %2220 = vmatprep.subr.mxu0 %v1208
  %2221 = vmatpush1.msra.mxu0 %v1207
  %2222 = vmatprep.subr.mxu0 %v1220
  %2223 = vmatpush1.msra.mxu0 %v1219
  %2224 = vmatprep.subr.mxu0 %v1232
  %2225 = vmatpush1.msra.mxu0 %v1231
  %2226 = vmatprep.subr.mxu0 %v1244
  %2227 = vmatpush1.msra.mxu0 %v1243
  %2228 = vmatprep.subr.mxu0 %v1256
  %2229 = vmatpush1.msra.mxu0 %v1255
  %2230 = vmatprep.subr.mxu0 %v1268
  %2231 = vmatpush1.msra.mxu0 %v1267
  %2232 = vmatprep.subr.mxu0 %v1280
  %2233 = vmatpush1.msra.mxu0 %v1279
  %2234 = vmatprep.subr.mxu0 %v1292
  %2235 = vmatpush1.msra.mxu0 %v1291
  %2236 = vmatprep.subr.mxu0 %v1304
  %2237 = vmatpush1.msra.mxu0 %v1303
  %2238 = vmatprep.subr.mxu0 %v1316
  %2239 = vmatpush1.msra.mxu0 %v1315
  %2240 = vmatprep.subr.mxu0 %v1328
  %2241 = vmatpush1.msra.mxu0 %v1327
  %2242 = vmatprep.subr.mxu0 %v1340
  %2243 = vmatpush1.msra.mxu0 %v1339
  %2244 = vmatprep.subr.mxu0 %v1352
  %2245 = vmatpush1.msra.mxu0 %v1351
  %2246 = vmatprep.subr.mxu0 %v1364
  %2247 = vmatpush1.msra.mxu0 %v1363
  %2248 = vmatprep.subr.mxu0 0.0
  %2249 = vmatpush1.msra.mxu0 0.0
  %2250 = vmatprep.subr.mxu0 0.0
  %2251 = vmatpush1.msra.mxu0 0.0
  %2252 = vmatprep.subr.mxu0 0.0
  %2253 = vmatpush1.msra.mxu0 0.0
  %2254 = vmatprep.subr.mxu0 0.0
  %2255 = vmatpush1.msra.mxu0 0.0
  %2256 = vmatprep.subr.mxu0 0.0
  %2257 = vmatpush1.msra.mxu0 0.0
  %2258 = vmatprep.subr.mxu0 0.0
  %2259 = vmatpush1.msra.mxu0 0.0
  %2260 = vmatprep.subr.mxu0 0.0
  %2261 = vmatpush1.msra.mxu0 0.0
  %2262 = vmatprep.subr.mxu0 0.0
  %2263 = vmatpush1.msra.mxu0 0.0
  %2264 = vmatprep.subr.mxu0 0.0
  %2265 = vmatpush1.msra.mxu0 0.0
  %2266 = vmatprep.subr.mxu0 0.0
  %2267 = vmatpush1.msra.mxu0 0.0
  %2268 = vmatprep.subr.mxu0 0.0
  %2269 = vmatpush1.msra.mxu0 0.0
  %2270 = vmatprep.subr.mxu0 0.0
  %2271 = vmatpush1.msra.mxu0 0.0
  %2272 = vmatprep.subr.mxu0 0.0
  %2273 = vmatpush1.msra.mxu0 0.0
  %2274 = vmatprep.subr.mxu0 0.0
  %2275 = vmatpush1.msra.mxu0 0.0
  %2276 = vmatprep.subr.mxu0 0.0
  %2277 = vmatpush1.msra.mxu0 0.0
  %2278 = vmatprep.subr.mxu0 0.0
  %2279 = vmatpush1.msra.mxu0 0.0
  %2280 = vmatprep.mubr.f32.mxu0 0.0
  %2281 = vmatmul.mubr.f32.gmra.mrb[0].mxu0 %v26
  %v2282 = vpop.f32.mrb[0].mxu0
  %v2283 = vadd.f32 %v2212, %v2282
  %v2284 = vpop.f32.mrb[0].mxu0
  %v2285 = vadd.f32 %v2214, %v2284
  %2286 = vdwg.mxu0
  %2287 = vmatprep.subr.mxu0 %v34
  %2288 = vmatpush1.msra.mxu0 %v33
  %2289 = vmatprep.subr.mxu0 %v46
  %2290 = vmatpush1.msra.mxu0 %v45
  %2291 = vmatprep.subr.mxu0 %v58
  %2292 = vmatpush1.msra.mxu0 %v57
  %2293 = vmatprep.subr.mxu0 %v70
  %2294 = vmatpush1.msra.mxu0 %v69
  %2295 = vmatprep.subr.mxu0 %v82
  %2296 = vmatpush1.msra.mxu0 %v81
  %2297 = vmatprep.subr.mxu0 %v94
  %2298 = vmatpush1.msra.mxu0 %v93
  %2299 = vmatprep.subr.mxu0 %v106
  %2300 = vmatpush1.msra.mxu0 %v105
  %2301 = vmatprep.subr.mxu0 %v118
  %2302 = vmatpush1.msra.mxu0 %v117
  %2303 = vmatprep.subr.mxu0 %v130
  %2304 = vmatpush1.msra.mxu0 %v129
  %2305 = vmatprep.subr.mxu0 %v142
  %2306 = vmatpush1.msra.mxu0 %v141
  %2307 = vmatprep.subr.mxu0 %v154
  %2308 = vmatpush1.msra.mxu0 %v153
  %2309 = vmatprep.subr.mxu0 %v166
  %2310 = vmatpush1.msra.mxu0 %v165
  %2311 = vmatprep.subr.mxu0 %v178
  %2312 = vmatpush1.msra.mxu0 %v177
  %2313 = vmatprep.subr.mxu0 %v190
  %2314 = vmatpush1.msra.mxu0 %v189
  %2315 = vmatprep.subr.mxu0 %v202
  %2316 = vmatpush1.msra.mxu0 %v201
  %2317 = vmatprep.subr.mxu0 %v214
  %2318 = vmatpush1.msra.mxu0 %v213
  %2319 = vmatprep.subr.mxu0 %v226
  %2320 = vmatpush1.msra.mxu0 %v225
  %2321 = vmatprep.subr.mxu0 %v238
  %2322 = vmatpush1.msra.mxu0 %v237
  %2323 = vmatprep.subr.mxu0 %v250
  %2324 = vmatpush1.msra.mxu0 %v249
  %2325 = vmatprep.subr.mxu0 %v262
  %2326 = vmatpush1.msra.mxu0 %v261
  %2327 = vmatprep.subr.mxu0 %v274
  %2328 = vmatpush1.msra.mxu0 %v273
  %2329 = vmatprep.subr.mxu0 %v286
  %2330 = vmatpush1.msra.mxu0 %v285
  %2331 = vmatprep.subr.mxu0 %v298
  %2332 = vmatpush1.msra.mxu0 %v297
  %2333 = vmatprep.subr.mxu0 %v310
  %2334 = vmatpush1.msra.mxu0 %v309
  %2335 = vmatprep.subr.mxu0 %v322
  %2336 = vmatpush1.msra.mxu0 %v321
  %2337 = vmatprep.subr.mxu0 %v334
  %2338 = vmatpush1.msra.mxu0 %v333
  %2339 = vmatprep.subr.mxu0 %v346
  %2340 = vmatpush1.msra.mxu0 %v345
  %2341 = vmatprep.subr.mxu0 %v358
  %2342 = vmatpush1.msra.mxu0 %v357
  %2343 = vmatprep.subr.mxu0 %v370
  %2344 = vmatpush1.msra.mxu0 %v369
  %2345 = vmatprep.subr.mxu0 %v382
  %2346 = vmatpush1.msra.mxu0 %v381
  %2347 = vmatprep.subr.mxu0 %v394
  %2348 = vmatpush1.msra.mxu0 %v393
  %2349 = vmatprep.subr.mxu0 %v406
  %2350 = vmatpush1.msra.mxu0 %v405
  %2351 = vmatprep.mubr.f32.mxu0 %v21
  %2352 = vmatmul.mubr.f32.gmra.mrb[0].mxu0 %v20
  %v2353 = vpop.f32.mrb[0].mxu0
  %v2354 = vadd.f32 %v1402, %v2353
  %v2355 = vpop.f32.mrb[0].mxu0
  %v2356 = vadd.f32 %v1406, %v2355
  %2357 = vdwg.mxu0
  %2358 = vmatprep.subr.mxu0 %v418
  %2359 = vmatpush1.msra.mxu0 %v417
  %2360 = vmatprep.subr.mxu0 %v430
  %2361 = vmatpush1.msra.mxu0 %v429
  %2362 = vmatprep.subr.mxu0 %v442
  %2363 = vmatpush1.msra.mxu0 %v441
  %2364 = vmatprep.subr.mxu0 %v454
  %2365 = vmatpush1.msra.mxu0 %v453
  %2366 = vmatprep.subr.mxu0 %v466
  %2367 = vmatpush1.msra.mxu0 %v465
  %2368 = vmatprep.subr.mxu0 %v478
  %2369 = vmatpush1.msra.mxu0 %v477
  %2370 = vmatprep.subr.mxu0 %v490
  %2371 = vmatpush1.msra.mxu0 %v489
  %2372 = vmatprep.subr.mxu0 %v502
  %2373 = vmatpush1.msra.mxu0 %v501
  %2374 = vmatprep.subr.mxu0 %v514
  %2375 = vmatpush1.msra.mxu0 %v513
  %2376 = vmatprep.subr.mxu0 %v526
  %2377 = vmatpush1.msra.mxu0 %v525
  %2378 = vmatprep.subr.mxu0 %v538
  %2379 = vmatpush1.msra.mxu0 %v537
  %2380 = vmatprep.subr.mxu0 %v550
  %2381 = vmatpush1.msra.mxu0 %v549
  %2382 = vmatprep.subr.mxu0 %v562
  %2383 = vmatpush1.msra.mxu0 %v561
  %2384 = vmatprep.subr.mxu0 %v574
  %2385 = vmatpush1.msra.mxu0 %v573
  %2386 = vmatprep.subr.mxu0 %v586
  %2387 = vmatpush1.msra.mxu0 %v585
  %2388 = vmatprep.subr.mxu0 %v598
  %2389 = vmatpush1.msra.mxu0 %v597
  %2390 = vmatprep.subr.mxu0 %v610
  %2391 = vmatpush1.msra.mxu0 %v609
  %2392 = vmatprep.subr.mxu0 %v622
  %2393 = vmatpush1.msra.mxu0 %v621
  %2394 = vmatprep.subr.mxu0 %v634
  %2395 = vmatpush1.msra.mxu0 %v633
  %2396 = vmatprep.subr.mxu0 %v646
  %2397 = vmatpush1.msra.mxu0 %v645
  %2398 = vmatprep.subr.mxu0 %v658
  %2399 = vmatpush1.msra.mxu0 %v657
  %2400 = vmatprep.subr.mxu0 %v670
  %2401 = vmatpush1.msra.mxu0 %v669
  %2402 = vmatprep.subr.mxu0 %v682
  %2403 = vmatpush1.msra.mxu0 %v681
  %2404 = vmatprep.subr.mxu0 %v694
  %2405 = vmatpush1.msra.mxu0 %v693
  %2406 = vmatprep.subr.mxu0 %v706
  %2407 = vmatpush1.msra.mxu0 %v705
  %2408 = vmatprep.subr.mxu0 %v718
  %2409 = vmatpush1.msra.mxu0 %v717
  %2410 = vmatprep.subr.mxu0 %v730
  %2411 = vmatpush1.msra.mxu0 %v729
  %2412 = vmatprep.subr.mxu0 %v742
  %2413 = vmatpush1.msra.mxu0 %v741
  %2414 = vmatprep.subr.mxu0 %v754
  %2415 = vmatpush1.msra.mxu0 %v753
  %2416 = vmatprep.subr.mxu0 %v766
  %2417 = vmatpush1.msra.mxu0 %v765
  %2418 = vmatprep.subr.mxu0 %v778
  %2419 = vmatpush1.msra.mxu0 %v777
  %2420 = vmatprep.subr.mxu0 %v790
  %2421 = vmatpush1.msra.mxu0 %v789
  %2422 = vmatprep.mubr.f32.mxu0 %v23
  %2423 = vmatmul.mubr.f32.gmra.mrb[0].mxu0 %v22
  %v2424 = vpop.f32.mrb[0].mxu0
  %v2425 = vadd.f32 %v2354, %v2424
  %v2426 = vpop.f32.mrb[0].mxu0
  %v2427 = vadd.f32 %v2356, %v2426
  %2428 = vdwg.mxu0
  %2429 = vmatprep.subr.mxu0 %v802
  %2430 = vmatpush1.msra.mxu0 %v801
  %2431 = vmatprep.subr.mxu0 %v814
  %2432 = vmatpush1.msra.mxu0 %v813
  %2433 = vmatprep.subr.mxu0 %v826
  %2434 = vmatpush1.msra.mxu0 %v825
  %2435 = vmatprep.subr.mxu0 %v838
  %2436 = vmatpush1.msra.mxu0 %v837
  %2437 = vmatprep.subr.mxu0 %v850
  %2438 = vmatpush1.msra.mxu0 %v849
  %2439 = vmatprep.subr.mxu0 %v862
  %2440 = vmatpush1.msra.mxu0 %v861
  %2441 = vmatprep.subr.mxu0 %v874
  %2442 = vmatpush1.msra.mxu0 %v873
  %2443 = vmatprep.subr.mxu0 %v886
  %2444 = vmatpush1.msra.mxu0 %v885
  %2445 = vmatprep.subr.mxu0 %v898
  %2446 = vmatpush1.msra.mxu0 %v897
  %2447 = vmatprep.subr.mxu0 %v910
  %2448 = vmatpush1.msra.mxu0 %v909
  %2449 = vmatprep.subr.mxu0 %v922
  %2450 = vmatpush1.msra.mxu0 %v921
  %2451 = vmatprep.subr.mxu0 %v934
  %2452 = vmatpush1.msra.mxu0 %v933
  %2453 = vmatprep.subr.mxu0 %v946
  %2454 = vmatpush1.msra.mxu0 %v945
  %2455 = vmatprep.subr.mxu0 %v958
  %2456 = vmatpush1.msra.mxu0 %v957
  %2457 = vmatprep.subr.mxu0 %v970
  %2458 = vmatpush1.msra.mxu0 %v969
  %2459 = vmatprep.subr.mxu0 %v982
  %2460 = vmatpush1.msra.mxu0 %v981
  %2461 = vmatprep.subr.mxu0 %v994
  %2462 = vmatpush1.msra.mxu0 %v993
  %2463 = vmatprep.subr.mxu0 %v1006
  %2464 = vmatpush1.msra.mxu0 %v1005
  %2465 = vmatprep.subr.mxu0 %v1018
  %2466 = vmatpush1.msra.mxu0 %v1017
  %2467 = vmatprep.subr.mxu0 %v1030
  %2468 = vmatpush1.msra.mxu0 %v1029
  %2469 = vmatprep.subr.mxu0 %v1042
  %2470 = vmatpush1.msra.mxu0 %v1041
  %2471 = vmatprep.subr.mxu0 %v1054
  %2472 = vmatpush1.msra.mxu0 %v1053
  %2473 = vmatprep.subr.mxu0 %v1066
  %2474 = vmatpush1.msra.mxu0 %v1065
  %2475 = vmatprep.subr.mxu0 %v1078
  %2476 = vmatpush1.msra.mxu0 %v1077
  %2477 = vmatprep.subr.mxu0 %v1090
  %2478 = vmatpush1.msra.mxu0 %v1089
  %2479 = vmatprep.subr.mxu0 %v1102
  %2480 = vmatpush1.msra.mxu0 %v1101
  %2481 = vmatprep.subr.mxu0 %v1114
  %2482 = vmatpush1.msra.mxu0 %v1113
  %2483 = vmatprep.subr.mxu0 %v1126
  %2484 = vmatpush1.msra.mxu0 %v1125
  %2485 = vmatprep.subr.mxu0 %v1138
  %2486 = vmatpush1.msra.mxu0 %v1137
  %2487 = vmatprep.subr.mxu0 %v1150
  %2488 = vmatpush1.msra.mxu0 %v1149
  %2489 = vmatprep.subr.mxu0 %v1162
  %2490 = vmatpush1.msra.mxu0 %v1161
  %2491 = vmatprep.subr.mxu0 %v1174
  %2492 = vmatpush1.msra.mxu0 %v1173
  %2493 = vmatprep.mubr.f32.mxu0 %v25
  %2494 = vmatmul.mubr.f32.gmra.mrb[0].mxu0 %v24
  %v2495 = vpop.f32.mrb[0].mxu0
  %v2496 = vadd.f32 %v2425, %v2495
  %v2497 = vpop.f32.mrb[0].mxu0
  %v2498 = vadd.f32 %v2427, %v2497
  %2499 = vdwg.mxu0
  %2500 = vmatprep.subr.mxu0 %v1186
  %2501 = vmatpush1.msra.mxu0 %v1185
  %2502 = vmatprep.subr.mxu0 %v1198
  %2503 = vmatpush1.msra.mxu0 %v1197
  %2504 = vmatprep.subr.mxu0 %v1210
  %2505 = vmatpush1.msra.mxu0 %v1209
  %2506 = vmatprep.subr.mxu0 %v1222
  %2507 = vmatpush1.msra.mxu0 %v1221
  %2508 = vmatprep.subr.mxu0 %v1234
  %2509 = vmatpush1.msra.mxu0 %v1233
  %2510 = vmatprep.subr.mxu0 %v1246
  %2511 = vmatpush1.msra.mxu0 %v1245
  %2512 = vmatprep.subr.mxu0 %v1258
  %2513 = vmatpush1.msra.mxu0 %v1257
  %2514 = vmatprep.subr.mxu0 %v1270
  %2515 = vmatpush1.msra.mxu0 %v1269
  %2516 = vmatprep.subr.mxu0 %v1282
  %2517 = vmatpush1.msra.mxu0 %v1281
  %2518 = vmatprep.subr.mxu0 %v1294
  %2519 = vmatpush1.msra.mxu0 %v1293
  %2520 = vmatprep.subr.mxu0 %v1306
  %2521 = vmatpush1.msra.mxu0 %v1305
  %2522 = vmatprep.subr.mxu0 %v1318
  %2523 = vmatpush1.msra.mxu0 %v1317
  %2524 = vmatprep.subr.mxu0 %v1330
  %2525 = vmatpush1.msra.mxu0 %v1329
  %2526 = vmatprep.subr.mxu0 %v1342
  %2527 = vmatpush1.msra.mxu0 %v1341
  %2528 = vmatprep.subr.mxu0 %v1354
  %2529 = vmatpush1.msra.mxu0 %v1353
  %2530 = vmatprep.subr.mxu0 %v1366
  %2531 = vmatpush1.msra.mxu0 %v1365
  %2532 = vmatprep.subr.mxu0 0.0
  %2533 = vmatpush1.msra.mxu0 0.0
  %2534 = vmatprep.subr.mxu0 0.0
  %2535 = vmatpush1.msra.mxu0 0.0
  %2536 = vmatprep.subr.mxu0 0.0
  %2537 = vmatpush1.msra.mxu0 0.0
  %2538 = vmatprep.subr.mxu0 0.0
  %2539 = vmatpush1.msra.mxu0 0.0
  %2540 = vmatprep.subr.mxu0 0.0
  %2541 = vmatpush1.msra.mxu0 0.0
  %2542 = vmatprep.subr.mxu0 0.0
  %2543 = vmatpush1.msra.mxu0 0.0
  %2544 = vmatprep.subr.mxu0 0.0
  %2545 = vmatpush1.msra.mxu0 0.0
  %2546 = vmatprep.subr.mxu0 0.0
  %2547 = vmatpush1.msra.mxu0 0.0
  %2548 = vmatprep.subr.mxu0 0.0
  %2549 = vmatpush1.msra.mxu0 0.0
  %2550 = vmatprep.subr.mxu0 0.0
  %2551 = vmatpush1.msra.mxu0 0.0
  %2552 = vmatprep.subr.mxu0 0.0
  %2553 = vmatpush1.msra.mxu0 0.0
  %2554 = vmatprep.subr.mxu0 0.0
  %2555 = vmatpush1.msra.mxu0 0.0
  %2556 = vmatprep.subr.mxu0 0.0
  %2557 = vmatpush1.msra.mxu0 0.0
  %2558 = vmatprep.subr.mxu0 0.0
  %2559 = vmatpush1.msra.mxu0 0.0
  %2560 = vmatprep.subr.mxu0 0.0
  %2561 = vmatpush1.msra.mxu0 0.0
  %2562 = vmatprep.subr.mxu0 0.0
  %2563 = vmatpush1.msra.mxu0 0.0
  %2564 = vmatprep.mubr.f32.mxu0 0.0
  %2565 = vmatmul.mubr.f32.gmra.mrb[0].mxu0 %v26
  %v2566 = vpop.f32.mrb[0].mxu0
  %v2567 = vadd.f32 %v2496, %v2566
  %v2568 = vpop.f32.mrb[0].mxu0
  %v2569 = vadd.f32 %v2498, %v2568
  %2570 = vdwg.mxu0
  %2571 = vmatprep.subr.mxu0 %v36
  %2572 = vmatpush1.msra.mxu0 %v35
  %2573 = vmatprep.subr.mxu0 %v48
  %2574 = vmatpush1.msra.mxu0 %v47
  %2575 = vmatprep.subr.mxu0 %v60
  %2576 = vmatpush1.msra.mxu0 %v59
  %2577 = vmatprep.subr.mxu0 %v72
  %2578 = vmatpush1.msra.mxu0 %v71
  %2579 = vmatprep.subr.mxu0 %v84
  %2580 = vmatpush1.msra.mxu0 %v83
  %2581 = vmatprep.subr.mxu0 %v96
  %2582 = vmatpush1.msra.mxu0 %v95
  %2583 = vmatprep.subr.mxu0 %v108
  %2584 = vmatpush1.msra.mxu0 %v107
  %2585 = vmatprep.subr.mxu0 %v120
  %2586 = vmatpush1.msra.mxu0 %v119
  %2587 = vmatprep.subr.mxu0 %v132
  %2588 = vmatpush1.msra.mxu0 %v131
  %2589 = vmatprep.subr.mxu0 %v144
  %2590 = vmatpush1.msra.mxu0 %v143
  %2591 = vmatprep.subr.mxu0 %v156
  %2592 = vmatpush1.msra.mxu0 %v155
  %2593 = vmatprep.subr.mxu0 %v168
  %2594 = vmatpush1.msra.mxu0 %v167
  %2595 = vmatprep.subr.mxu0 %v180
  %2596 = vmatpush1.msra.mxu0 %v179
  %2597 = vmatprep.subr.mxu0 %v192
  %2598 = vmatpush1.msra.mxu0 %v191
  %2599 = vmatprep.subr.mxu0 %v204
  %2600 = vmatpush1.msra.mxu0 %v203
  %2601 = vmatprep.subr.mxu0 %v216
  %2602 = vmatpush1.msra.mxu0 %v215
  %2603 = vmatprep.subr.mxu0 %v228
  %2604 = vmatpush1.msra.mxu0 %v227
  %2605 = vmatprep.subr.mxu0 %v240
  %2606 = vmatpush1.msra.mxu0 %v239
  %2607 = vmatprep.subr.mxu0 %v252
  %2608 = vmatpush1.msra.mxu0 %v251
  %2609 = vmatprep.subr.mxu0 %v264
  %2610 = vmatpush1.msra.mxu0 %v263
  %2611 = vmatprep.subr.mxu0 %v276
  %2612 = vmatpush1.msra.mxu0 %v275
  %2613 = vmatprep.subr.mxu0 %v288
  %2614 = vmatpush1.msra.mxu0 %v287
  %2615 = vmatprep.subr.mxu0 %v300
  %2616 = vmatpush1.msra.mxu0 %v299
  %2617 = vmatprep.subr.mxu0 %v312
  %2618 = vmatpush1.msra.mxu0 %v311
  %2619 = vmatprep.subr.mxu0 %v324
  %2620 = vmatpush1.msra.mxu0 %v323
  %2621 = vmatprep.subr.mxu0 %v336
  %2622 = vmatpush1.msra.mxu0 %v335
  %2623 = vmatprep.subr.mxu0 %v348
  %2624 = vmatpush1.msra.mxu0 %v347
  %2625 = vmatprep.subr.mxu0 %v360
  %2626 = vmatpush1.msra.mxu0 %v359
  %2627 = vmatprep.subr.mxu0 %v372
  %2628 = vmatpush1.msra.mxu0 %v371
  %2629 = vmatprep.subr.mxu0 %v384
  %2630 = vmatpush1.msra.mxu0 %v383
  %2631 = vmatprep.subr.mxu0 %v396
  %2632 = vmatpush1.msra.mxu0 %v395
  %2633 = vmatprep.subr.mxu0 %v408
  %2634 = vmatpush1.msra.mxu0 %v407
  %2635 = vmatprep.mubr.f32.mxu0 %v21
  %2636 = vmatmul.mubr.f32.gmra.mrb[0].mxu0 %v20
  %v2637 = vpop.f32.mrb[0].mxu0
  %v2638 = vadd.f32 %v1410, %v2637
  %v2639 = vpop.f32.mrb[0].mxu0
  %v2640 = vadd.f32 %v1414, %v2639
  %2641 = vdwg.mxu0
  %2642 = vmatprep.subr.mxu0 %v420
  %2643 = vmatpush1.msra.mxu0 %v419
  %2644 = vmatprep.subr.mxu0 %v432
  %2645 = vmatpush1.msra.mxu0 %v431
  %2646 = vmatprep.subr.mxu0 %v444
  %2647 = vmatpush1.msra.mxu0 %v443
  %2648 = vmatprep.subr.mxu0 %v456
  %2649 = vmatpush1.msra.mxu0 %v455
  %2650 = vmatprep.subr.mxu0 %v468
  %2651 = vmatpush1.msra.mxu0 %v467
  %2652 = vmatprep.subr.mxu0 %v480
  %2653 = vmatpush1.msra.mxu0 %v479
  %2654 = vmatprep.subr.mxu0 %v492
  %2655 = vmatpush1.msra.mxu0 %v491
  %2656 = vmatprep.subr.mxu0 %v504
  %2657 = vmatpush1.msra.mxu0 %v503
  %2658 = vmatprep.subr.mxu0 %v516
  %2659 = vmatpush1.msra.mxu0 %v515
  %2660 = vmatprep.subr.mxu0 %v528
  %2661 = vmatpush1.msra.mxu0 %v527
  %2662 = vmatprep.subr.mxu0 %v540
  %2663 = vmatpush1.msra.mxu0 %v539
  %2664 = vmatprep.subr.mxu0 %v552
  %2665 = vmatpush1.msra.mxu0 %v551
  %2666 = vmatprep.subr.mxu0 %v564
  %2667 = vmatpush1.msra.mxu0 %v563
  %2668 = vmatprep.subr.mxu0 %v576
  %2669 = vmatpush1.msra.mxu0 %v575
  %2670 = vmatprep.subr.mxu0 %v588
  %2671 = vmatpush1.msra.mxu0 %v587
  %2672 = vmatprep.subr.mxu0 %v600
  %2673 = vmatpush1.msra.mxu0 %v599
  %2674 = vmatprep.subr.mxu0 %v612
  %2675 = vmatpush1.msra.mxu0 %v611
  %2676 = vmatprep.subr.mxu0 %v624
  %2677 = vmatpush1.msra.mxu0 %v623
  %2678 = vmatprep.subr.mxu0 %v636
  %2679 = vmatpush1.msra.mxu0 %v635
  %2680 = vmatprep.subr.mxu0 %v648
  %2681 = vmatpush1.msra.mxu0 %v647
  %2682 = vmatprep.subr.mxu0 %v660
  %2683 = vmatpush1.msra.mxu0 %v659
  %2684 = vmatprep.subr.mxu0 %v672
  %2685 = vmatpush1.msra.mxu0 %v671
  %2686 = vmatprep.subr.mxu0 %v684
  %2687 = vmatpush1.msra.mxu0 %v683
  %2688 = vmatprep.subr.mxu0 %v696
  %2689 = vmatpush1.msra.mxu0 %v695
  %2690 = vmatprep.subr.mxu0 %v708
  %2691 = vmatpush1.msra.mxu0 %v707
  %2692 = vmatprep.subr.mxu0 %v720
  %2693 = vmatpush1.msra.mxu0 %v719
  %2694 = vmatprep.subr.mxu0 %v732
  %2695 = vmatpush1.msra.mxu0 %v731
  %2696 = vmatprep.subr.mxu0 %v744
  %2697 = vmatpush1.msra.mxu0 %v743
  %2698 = vmatprep.subr.mxu0 %v756
  %2699 = vmatpush1.msra.mxu0 %v755
  %2700 = vmatprep.subr.mxu0 %v768
  %2701 = vmatpush1.msra.mxu0 %v767
  %2702 = vmatprep.subr.mxu0 %v780
  %2703 = vmatpush1.msra.mxu0 %v779
  %2704 = vmatprep.subr.mxu0 %v792
  %2705 = vmatpush1.msra.mxu0 %v791
  %2706 = vmatprep.mubr.f32.mxu0 %v23
  %2707 = vmatmul.mubr.f32.gmra.mrb[0].mxu0 %v22
  %v2708 = vpop.f32.mrb[0].mxu0
  %v2709 = vadd.f32 %v2638, %v2708
  %v2710 = vpop.f32.mrb[0].mxu0
  %v2711 = vadd.f32 %v2640, %v2710
  %2712 = vdwg.mxu0
  %2713 = vmatprep.subr.mxu0 %v804
  %2714 = vmatpush1.msra.mxu0 %v803
  %2715 = vmatprep.subr.mxu0 %v816
  %2716 = vmatpush1.msra.mxu0 %v815
  %2717 = vmatprep.subr.mxu0 %v828
  %2718 = vmatpush1.msra.mxu0 %v827
  %2719 = vmatprep.subr.mxu0 %v840
  %2720 = vmatpush1.msra.mxu0 %v839
  %2721 = vmatprep.subr.mxu0 %v852
  %2722 = vmatpush1.msra.mxu0 %v851
  %2723 = vmatprep.subr.mxu0 %v864
  %2724 = vmatpush1.msra.mxu0 %v863
  %2725 = vmatprep.subr.mxu0 %v876
  %2726 = vmatpush1.msra.mxu0 %v875
  %2727 = vmatprep.subr.mxu0 %v888
  %2728 = vmatpush1.msra.mxu0 %v887
  %2729 = vmatprep.subr.mxu0 %v900
  %2730 = vmatpush1.msra.mxu0 %v899
  %2731 = vmatprep.subr.mxu0 %v912
  %2732 = vmatpush1.msra.mxu0 %v911
  %2733 = vmatprep.subr.mxu0 %v924
  %2734 = vmatpush1.msra.mxu0 %v923
  %2735 = vmatprep.subr.mxu0 %v936
  %2736 = vmatpush1.msra.mxu0 %v935
  %2737 = vmatprep.subr.mxu0 %v948
  %2738 = vmatpush1.msra.mxu0 %v947
  %2739 = vmatprep.subr.mxu0 %v960
  %2740 = vmatpush1.msra.mxu0 %v959
  %2741 = vmatprep.subr.mxu0 %v972
  %2742 = vmatpush1.msra.mxu0 %v971
  %2743 = vmatprep.subr.mxu0 %v984
  %2744 = vmatpush1.msra.mxu0 %v983
  %2745 = vmatprep.subr.mxu0 %v996
  %2746 = vmatpush1.msra.mxu0 %v995
  %2747 = vmatprep.subr.mxu0 %v1008
  %2748 = vmatpush1.msra.mxu0 %v1007
  %2749 = vmatprep.subr.mxu0 %v1020
  %2750 = vmatpush1.msra.mxu0 %v1019
  %2751 = vmatprep.subr.mxu0 %v1032
  %2752 = vmatpush1.msra.mxu0 %v1031
  %2753 = vmatprep.subr.mxu0 %v1044
  %2754 = vmatpush1.msra.mxu0 %v1043
  %2755 = vmatprep.subr.mxu0 %v1056
  %2756 = vmatpush1.msra.mxu0 %v1055
  %2757 = vmatprep.subr.mxu0 %v1068
  %2758 = vmatpush1.msra.mxu0 %v1067
  %2759 = vmatprep.subr.mxu0 %v1080
  %2760 = vmatpush1.msra.mxu0 %v1079
  %2761 = vmatprep.subr.mxu0 %v1092
  %2762 = vmatpush1.msra.mxu0 %v1091
  %2763 = vmatprep.subr.mxu0 %v1104
  %2764 = vmatpush1.msra.mxu0 %v1103
  %2765 = vmatprep.subr.mxu0 %v1116
  %2766 = vmatpush1.msra.mxu0 %v1115
  %2767 = vmatprep.subr.mxu0 %v1128
  %2768 = vmatpush1.msra.mxu0 %v1127
  %2769 = vmatprep.subr.mxu0 %v1140
  %2770 = vmatpush1.msra.mxu0 %v1139
  %2771 = vmatprep.subr.mxu0 %v1152
  %2772 = vmatpush1.msra.mxu0 %v1151
  %2773 = vmatprep.subr.mxu0 %v1164
  %2774 = vmatpush1.msra.mxu0 %v1163
  %2775 = vmatprep.subr.mxu0 %v1176
  %2776 = vmatpush1.msra.mxu0 %v1175
  %2777 = vmatprep.mubr.f32.mxu0 %v25
  %2778 = vmatmul.mubr.f32.gmra.mrb[0].mxu0 %v24
  %v2779 = vpop.f32.mrb[0].mxu0
  %v2780 = vadd.f32 %v2709, %v2779
  %v2781 = vpop.f32.mrb[0].mxu0
  %v2782 = vadd.f32 %v2711, %v2781
  %2783 = vdwg.mxu0
  %2784 = vmatprep.subr.mxu0 %v1188
  %2785 = vmatpush1.msra.mxu0 %v1187
  %2786 = vmatprep.subr.mxu0 %v1200
  %2787 = vmatpush1.msra.mxu0 %v1199
  %2788 = vmatprep.subr.mxu0 %v1212
  %2789 = vmatpush1.msra.mxu0 %v1211
  %2790 = vmatprep.subr.mxu0 %v1224
  %2791 = vmatpush1.msra.mxu0 %v1223
  %2792 = vmatprep.subr.mxu0 %v1236
  %2793 = vmatpush1.msra.mxu0 %v1235
  %2794 = vmatprep.subr.mxu0 %v1248
  %2795 = vmatpush1.msra.mxu0 %v1247
  %2796 = vmatprep.subr.mxu0 %v1260
  %2797 = vmatpush1.msra.mxu0 %v1259
  %2798 = vmatprep.subr.mxu0 %v1272
  %2799 = vmatpush1.msra.mxu0 %v1271
  %2800 = vmatprep.subr.mxu0 %v1284
  %2801 = vmatpush1.msra.mxu0 %v1283
  %2802 = vmatprep.subr.mxu0 %v1296
  %2803 = vmatpush1.msra.mxu0 %v1295
  %2804 = vmatprep.subr.mxu0 %v1308
  %2805 = vmatpush1.msra.mxu0 %v1307
  %2806 = vmatprep.subr.mxu0 %v1320
  %2807 = vmatpush1.msra.mxu0 %v1319
  %2808 = vmatprep.subr.mxu0 %v1332
  %2809 = vmatpush1.msra.mxu0 %v1331
  %2810 = vmatprep.subr.mxu0 %v1344
  %2811 = vmatpush1.msra.mxu0 %v1343
  %2812 = vmatprep.subr.mxu0 %v1356
  %2813 = vmatpush1.msra.mxu0 %v1355
  %2814 = vmatprep.subr.mxu0 %v1368
  %2815 = vmatpush1.msra.mxu0 %v1367
  %2816 = vmatprep.subr.mxu0 0.0
  %2817 = vmatpush1.msra.mxu0 0.0
  %2818 = vmatprep.subr.mxu0 0.0
  %2819 = vmatpush1.msra.mxu0 0.0
  %2820 = vmatprep.subr.mxu0 0.0
  %2821 = vmatpush1.msra.mxu0 0.0
  %2822 = vmatprep.subr.mxu0 0.0
  %2823 = vmatpush1.msra.mxu0 0.0
  %2824 = vmatprep.subr.mxu0 0.0
  %2825 = vmatpush1.msra.mxu0 0.0
  %2826 = vmatprep.subr.mxu0 0.0
  %2827 = vmatpush1.msra.mxu0 0.0
  %2828 = vmatprep.subr.mxu0 0.0
  %2829 = vmatpush1.msra.mxu0 0.0
  %2830 = vmatprep.subr.mxu0 0.0
  %2831 = vmatpush1.msra.mxu0 0.0
  %2832 = vmatprep.subr.mxu0 0.0
  %2833 = vmatpush1.msra.mxu0 0.0
  %2834 = vmatprep.subr.mxu0 0.0
  %2835 = vmatpush1.msra.mxu0 0.0
  %2836 = vmatprep.subr.mxu0 0.0
  %2837 = vmatpush1.msra.mxu0 0.0
  %2838 = vmatprep.subr.mxu0 0.0
  %2839 = vmatpush1.msra.mxu0 0.0
  %2840 = vmatprep.subr.mxu0 0.0
  %2841 = vmatpush1.msra.mxu0 0.0
  %2842 = vmatprep.subr.mxu0 0.0
  %2843 = vmatpush1.msra.mxu0 0.0
  %2844 = vmatprep.subr.mxu0 0.0
  %2845 = vmatpush1.msra.mxu0 0.0
  %2846 = vmatprep.subr.mxu0 0.0
  %2847 = vmatpush1.msra.mxu0 0.0
  %2848 = vmatprep.mubr.f32.mxu0 0.0
  %2849 = vmatmul.mubr.f32.gmra.mrb[0].mxu0 %v26
  %v2850 = vpop.f32.mrb[0].mxu0
  %v2851 = vadd.f32 %v2780, %v2850
  %v2852 = vpop.f32.mrb[0].mxu0
  %v2853 = vadd.f32 %v2782, %v2852
  %2854 = vdwg.mxu0
  %2855 = vmatprep.subr.mxu0 %v38
  %2856 = vmatpush1.msra.mxu0 %v37
  %2857 = vmatprep.subr.mxu0 %v50
  %2858 = vmatpush1.msra.mxu0 %v49
  %2859 = vmatprep.subr.mxu0 %v62
  %2860 = vmatpush1.msra.mxu0 %v61
  %2861 = vmatprep.subr.mxu0 %v74
  %2862 = vmatpush1.msra.mxu0 %v73
  %2863 = vmatprep.subr.mxu0 %v86
  %2864 = vmatpush1.msra.mxu0 %v85
  %2865 = vmatprep.subr.mxu0 %v98
  %2866 = vmatpush1.msra.mxu0 %v97
  %2867 = vmatprep.subr.mxu0 %v110
  %2868 = vmatpush1.msra.mxu0 %v109
  %2869 = vmatprep.subr.mxu0 %v122
  %2870 = vmatpush1.msra.mxu0 %v121
  %2871 = vmatprep.subr.mxu0 %v134
  %2872 = vmatpush1.msra.mxu0 %v133
  %2873 = vmatprep.subr.mxu0 %v146
  %2874 = vmatpush1.msra.mxu0 %v145
  %2875 = vmatprep.subr.mxu0 %v158
  %2876 = vmatpush1.msra.mxu0 %v157
  %2877 = vmatprep.subr.mxu0 %v170
  %2878 = vmatpush1.msra.mxu0 %v169
  %2879 = vmatprep.subr.mxu0 %v182
  %2880 = vmatpush1.msra.mxu0 %v181
  %2881 = vmatprep.subr.mxu0 %v194
  %2882 = vmatpush1.msra.mxu0 %v193
  %2883 = vmatprep.subr.mxu0 %v206
  %2884 = vmatpush1.msra.mxu0 %v205
  %2885 = vmatprep.subr.mxu0 %v218
  %2886 = vmatpush1.msra.mxu0 %v217
  %2887 = vmatprep.subr.mxu0 %v230
  %2888 = vmatpush1.msra.mxu0 %v229
  %2889 = vmatprep.subr.mxu0 %v242
  %2890 = vmatpush1.msra.mxu0 %v241
  %2891 = vmatprep.subr.mxu0 %v254
  %2892 = vmatpush1.msra.mxu0 %v253
  %2893 = vmatprep.subr.mxu0 %v266
  %2894 = vmatpush1.msra.mxu0 %v265
  %2895 = vmatprep.subr.mxu0 %v278
  %2896 = vmatpush1.msra.mxu0 %v277
  %2897 = vmatprep.subr.mxu0 %v290
  %2898 = vmatpush1.msra.mxu0 %v289
  %2899 = vmatprep.subr.mxu0 %v302
  %2900 = vmatpush1.msra.mxu0 %v301
  %2901 = vmatprep.subr.mxu0 %v314
  %2902 = vmatpush1.msra.mxu0 %v313
  %2903 = vmatprep.subr.mxu0 %v326
  %2904 = vmatpush1.msra.mxu0 %v325
  %2905 = vmatprep.subr.mxu0 %v338
  %2906 = vmatpush1.msra.mxu0 %v337
  %2907 = vmatprep.subr.mxu0 %v350
  %2908 = vmatpush1.msra.mxu0 %v349
  %2909 = vmatprep.subr.mxu0 %v362
  %2910 = vmatpush1.msra.mxu0 %v361
  %2911 = vmatprep.subr.mxu0 %v374
  %2912 = vmatpush1.msra.mxu0 %v373
  %2913 = vmatprep.subr.mxu0 %v386
  %2914 = vmatpush1.msra.mxu0 %v385
  %2915 = vmatprep.subr.mxu0 %v398
  %2916 = vmatpush1.msra.mxu0 %v397
  %2917 = vmatprep.subr.mxu0 %v410
  %2918 = vmatpush1.msra.mxu0 %v409
  %2919 = vmatprep.mubr.f32.mxu0 %v21
  %2920 = vmatmul.mubr.f32.gmra.mrb[0].mxu0 %v20
  %v2921 = vpop.f32.mrb[0].mxu0
  %v2922 = vadd.f32 %v1418, %v2921
  %v2923 = vpop.f32.mrb[0].mxu0
  %v2924 = vadd.f32 %v1422, %v2923
  %2925 = vdwg.mxu0
  %2926 = vmatprep.subr.mxu0 %v422
  %2927 = vmatpush1.msra.mxu0 %v421
  %2928 = vmatprep.subr.mxu0 %v434
  %2929 = vmatpush1.msra.mxu0 %v433
  %2930 = vmatprep.subr.mxu0 %v446
  %2931 = vmatpush1.msra.mxu0 %v445
  %2932 = vmatprep.subr.mxu0 %v458
  %2933 = vmatpush1.msra.mxu0 %v457
  %2934 = vmatprep.subr.mxu0 %v470
  %2935 = vmatpush1.msra.mxu0 %v469
  %2936 = vmatprep.subr.mxu0 %v482
  %2937 = vmatpush1.msra.mxu0 %v481
  %2938 = vmatprep.subr.mxu0 %v494
  %2939 = vmatpush1.msra.mxu0 %v493
  %2940 = vmatprep.subr.mxu0 %v506
  %2941 = vmatpush1.msra.mxu0 %v505
  %2942 = vmatprep.subr.mxu0 %v518
  %2943 = vmatpush1.msra.mxu0 %v517
  %2944 = vmatprep.subr.mxu0 %v530
  %2945 = vmatpush1.msra.mxu0 %v529
  %2946 = vmatprep.subr.mxu0 %v542
  %2947 = vmatpush1.msra.mxu0 %v541
  %2948 = vmatprep.subr.mxu0 %v554
  %2949 = vmatpush1.msra.mxu0 %v553
  %2950 = vmatprep.subr.mxu0 %v566
  %2951 = vmatpush1.msra.mxu0 %v565
  %2952 = vmatprep.subr.mxu0 %v578
  %2953 = vmatpush1.msra.mxu0 %v577
  %2954 = vmatprep.subr.mxu0 %v590
  %2955 = vmatpush1.msra.mxu0 %v589
  %2956 = vmatprep.subr.mxu0 %v602
  %2957 = vmatpush1.msra.mxu0 %v601
  %2958 = vmatprep.subr.mxu0 %v614
  %2959 = vmatpush1.msra.mxu0 %v613
  %2960 = vmatprep.subr.mxu0 %v626
  %2961 = vmatpush1.msra.mxu0 %v625
  %2962 = vmatprep.subr.mxu0 %v638
  %2963 = vmatpush1.msra.mxu0 %v637
  %2964 = vmatprep.subr.mxu0 %v650
  %2965 = vmatpush1.msra.mxu0 %v649
  %2966 = vmatprep.subr.mxu0 %v662
  %2967 = vmatpush1.msra.mxu0 %v661
  %2968 = vmatprep.subr.mxu0 %v674
  %2969 = vmatpush1.msra.mxu0 %v673
  %2970 = vmatprep.subr.mxu0 %v686
  %2971 = vmatpush1.msra.mxu0 %v685
  %2972 = vmatprep.subr.mxu0 %v698
  %2973 = vmatpush1.msra.mxu0 %v697
  %2974 = vmatprep.subr.mxu0 %v710
  %2975 = vmatpush1.msra.mxu0 %v709
  %2976 = vmatprep.subr.mxu0 %v722
  %2977 = vmatpush1.msra.mxu0 %v721
  %2978 = vmatprep.subr.mxu0 %v734
  %2979 = vmatpush1.msra.mxu0 %v733
  %2980 = vmatprep.subr.mxu0 %v746
  %2981 = vmatpush1.msra.mxu0 %v745
  %2982 = vmatprep.subr.mxu0 %v758
  %2983 = vmatpush1.msra.mxu0 %v757
  %2984 = vmatprep.subr.mxu0 %v770
  %2985 = vmatpush1.msra.mxu0 %v769
  %2986 = vmatprep.subr.mxu0 %v782
  %2987 = vmatpush1.msra.mxu0 %v781
  %2988 = vmatprep.subr.mxu0 %v794
  %2989 = vmatpush1.msra.mxu0 %v793
  %2990 = vmatprep.mubr.f32.mxu0 %v23
  %2991 = vmatmul.mubr.f32.gmra.mrb[0].mxu0 %v22
  %v2992 = vpop.f32.mrb[0].mxu0
  %v2993 = vadd.f32 %v2922, %v2992
  %v2994 = vpop.f32.mrb[0].mxu0
  %v2995 = vadd.f32 %v2924, %v2994
  %2996 = vdwg.mxu0
  %2997 = vmatprep.subr.mxu0 %v806
  %2998 = vmatpush1.msra.mxu0 %v805
  %2999 = vmatprep.subr.mxu0 %v818
  %3000 = vmatpush1.msra.mxu0 %v817
  %3001 = vmatprep.subr.mxu0 %v830
  %3002 = vmatpush1.msra.mxu0 %v829
  %3003 = vmatprep.subr.mxu0 %v842
  %3004 = vmatpush1.msra.mxu0 %v841
  %3005 = vmatprep.subr.mxu0 %v854
  %3006 = vmatpush1.msra.mxu0 %v853
  %3007 = vmatprep.subr.mxu0 %v866
  %3008 = vmatpush1.msra.mxu0 %v865
  %3009 = vmatprep.subr.mxu0 %v878
  %3010 = vmatpush1.msra.mxu0 %v877
  %3011 = vmatprep.subr.mxu0 %v890
  %3012 = vmatpush1.msra.mxu0 %v889
  %3013 = vmatprep.subr.mxu0 %v902
  %3014 = vmatpush1.msra.mxu0 %v901
  %3015 = vmatprep.subr.mxu0 %v914
  %3016 = vmatpush1.msra.mxu0 %v913
  %3017 = vmatprep.subr.mxu0 %v926
  %3018 = vmatpush1.msra.mxu0 %v925
  %3019 = vmatprep.subr.mxu0 %v938
  %3020 = vmatpush1.msra.mxu0 %v937
  %3021 = vmatprep.subr.mxu0 %v950
  %3022 = vmatpush1.msra.mxu0 %v949
  %3023 = vmatprep.subr.mxu0 %v962
  %3024 = vmatpush1.msra.mxu0 %v961
  %3025 = vmatprep.subr.mxu0 %v974
  %3026 = vmatpush1.msra.mxu0 %v973
  %3027 = vmatprep.subr.mxu0 %v986
  %3028 = vmatpush1.msra.mxu0 %v985
  %3029 = vmatprep.subr.mxu0 %v998
  %3030 = vmatpush1.msra.mxu0 %v997
  %3031 = vmatprep.subr.mxu0 %v1010
  %3032 = vmatpush1.msra.mxu0 %v1009
  %3033 = vmatprep.subr.mxu0 %v1022
  %3034 = vmatpush1.msra.mxu0 %v1021
  %3035 = vmatprep.subr.mxu0 %v1034
  %3036 = vmatpush1.msra.mxu0 %v1033
  %3037 = vmatprep.subr.mxu0 %v1046
  %3038 = vmatpush1.msra.mxu0 %v1045
  %3039 = vmatprep.subr.mxu0 %v1058
  %3040 = vmatpush1.msra.mxu0 %v1057
  %3041 = vmatprep.subr.mxu0 %v1070
  %3042 = vmatpush1.msra.mxu0 %v1069
  %3043 = vmatprep.subr.mxu0 %v1082
  %3044 = vmatpush1.msra.mxu0 %v1081
  %3045 = vmatprep.subr.mxu0 %v1094
  %3046 = vmatpush1.msra.mxu0 %v1093
  %3047 = vmatprep.subr.mxu0 %v1106
  %3048 = vmatpush1.msra.mxu0 %v1105
  %3049 = vmatprep.subr.mxu0 %v1118
  %3050 = vmatpush1.msra.mxu0 %v1117
  %3051 = vmatprep.subr.mxu0 %v1130
  %3052 = vmatpush1.msra.mxu0 %v1129
  %3053 = vmatprep.subr.mxu0 %v1142
  %3054 = vmatpush1.msra.mxu0 %v1141
  %3055 = vmatprep.subr.mxu0 %v1154
  %3056 = vmatpush1.msra.mxu0 %v1153
  %3057 = vmatprep.subr.mxu0 %v1166
  %3058 = vmatpush1.msra.mxu0 %v1165
  %3059 = vmatprep.subr.mxu0 %v1178
  %3060 = vmatpush1.msra.mxu0 %v1177
  %3061 = vmatprep.mubr.f32.mxu0 %v25
  %3062 = vmatmul.mubr.f32.gmra.mrb[0].mxu0 %v24
  %v3063 = vpop.f32.mrb[0].mxu0
  %v3064 = vadd.f32 %v2993, %v3063
  %v3065 = vpop.f32.mrb[0].mxu0
  %v3066 = vadd.f32 %v2995, %v3065
  %3067 = vdwg.mxu0
  %3068 = vmatprep.subr.mxu0 %v1190
  %3069 = vmatpush1.msra.mxu0 %v1189
  %3070 = vmatprep.subr.mxu0 %v1202
  %3071 = vmatpush1.msra.mxu0 %v1201
  %3072 = vmatprep.subr.mxu0 %v1214
  %3073 = vmatpush1.msra.mxu0 %v1213
  %3074 = vmatprep.subr.mxu0 %v1226
  %3075 = vmatpush1.msra.mxu0 %v1225
  %3076 = vmatprep.subr.mxu0 %v1238
  %3077 = vmatpush1.msra.mxu0 %v1237
  %3078 = vmatprep.subr.mxu0 %v1250
  %3079 = vmatpush1.msra.mxu0 %v1249
  %3080 = vmatprep.subr.mxu0 %v1262
  %3081 = vmatpush1.msra.mxu0 %v1261
  %3082 = vmatprep.subr.mxu0 %v1274
  %3083 = vmatpush1.msra.mxu0 %v1273
  %3084 = vmatprep.subr.mxu0 %v1286
  %3085 = vmatpush1.msra.mxu0 %v1285
  %3086 = vmatprep.subr.mxu0 %v1298
  %3087 = vmatpush1.msra.mxu0 %v1297
  %3088 = vmatprep.subr.mxu0 %v1310
  %3089 = vmatpush1.msra.mxu0 %v1309
  %3090 = vmatprep.subr.mxu0 %v1322
  %3091 = vmatpush1.msra.mxu0 %v1321
  %3092 = vmatprep.subr.mxu0 %v1334
  %3093 = vmatpush1.msra.mxu0 %v1333
  %3094 = vmatprep.subr.mxu0 %v1346
  %3095 = vmatpush1.msra.mxu0 %v1345
  %3096 = vmatprep.subr.mxu0 %v1358
  %3097 = vmatpush1.msra.mxu0 %v1357
  %3098 = vmatprep.subr.mxu0 %v1370
  %3099 = vmatpush1.msra.mxu0 %v1369
  %3100 = vmatprep.subr.mxu0 0.0
  %3101 = vmatpush1.msra.mxu0 0.0
  %3102 = vmatprep.subr.mxu0 0.0
  %3103 = vmatpush1.msra.mxu0 0.0
  %3104 = vmatprep.subr.mxu0 0.0
  %3105 = vmatpush1.msra.mxu0 0.0
  %3106 = vmatprep.subr.mxu0 0.0
  %3107 = vmatpush1.msra.mxu0 0.0
  %3108 = vmatprep.subr.mxu0 0.0
  %3109 = vmatpush1.msra.mxu0 0.0
  %3110 = vmatprep.subr.mxu0 0.0
  %3111 = vmatpush1.msra.mxu0 0.0
  %3112 = vmatprep.subr.mxu0 0.0
  %3113 = vmatpush1.msra.mxu0 0.0
  %3114 = vmatprep.subr.mxu0 0.0
  %3115 = vmatpush1.msra.mxu0 0.0
  %3116 = vmatprep.subr.mxu0 0.0
  %3117 = vmatpush1.msra.mxu0 0.0
  %3118 = vmatprep.subr.mxu0 0.0
  %3119 = vmatpush1.msra.mxu0 0.0
  %3120 = vmatprep.subr.mxu0 0.0
  %3121 = vmatpush1.msra.mxu0 0.0
  %3122 = vmatprep.subr.mxu0 0.0
  %3123 = vmatpush1.msra.mxu0 0.0
  %3124 = vmatprep.subr.mxu0 0.0
  %3125 = vmatpush1.msra.mxu0 0.0
  %3126 = vmatprep.subr.mxu0 0.0
  %3127 = vmatpush1.msra.mxu0 0.0
  %3128 = vmatprep.subr.mxu0 0.0
  %3129 = vmatpush1.msra.mxu0 0.0
  %3130 = vmatprep.subr.mxu0 0.0
  %3131 = vmatpush1.msra.mxu0 0.0
  %3132 = vmatprep.mubr.f32.mxu0 0.0
  %3133 = vmatmul.mubr.f32.gmra.mrb[0].mxu0 %v26
  %v3134 = vpop.f32.mrb[0].mxu0
  %v3135 = vadd.f32 %v3064, %v3134
  %v3136 = vpop.f32.mrb[0].mxu0
  %v3137 = vadd.f32 %v3066, %v3136
  %3138 = vdwg.mxu0
  %vm3139 = vcmp.gt.f32.partialorder 0.0, 1.3
  %v3140 = vadd.f32 %v1715, 0.0
  %v3141 = vadd.f32 %v1717, 0.0
  %v3142 = vadd.f32 %v1999, 0.0
  %v3143 = vadd.f32 %v2001, 0.0
  %v3144 = vadd.f32 %v2283, 0.0
  %v3145 = vadd.f32 %v2285, 0.0
  %v3146 = vadd.f32 %v2567, 0.0
  %v3147 = vadd.f32 %v2569, 0.0
  %v3148 = vadd.f32 %v2851, 0.0
  %v3149 = vadd.f32 %v2853, 0.0
  %v3150 = vadd.f32 %v3135, 0.0
  %v3151 = vadd.f32 %v3137, 0.0
  %v3152 = vsel %vm3139, 0.0, %v3140
  %v3153 = vsel %vm3139, 0.0, %v3141
  %v3154 = vsel %vm3139, 0.0, %v3142
  %v3155 = vsel %vm3139, 0.0, %v3143
  %v3156 = vsel %vm3139, 0.0, %v3144
  %v3157 = vsel %vm3139, 0.0, %v3145
  %v3158 = vsel %vm3139, 0.0, %v3146
  %v3159 = vsel %vm3139, 0.0, %v3147
  %v3160 = vsel %vm3139, 0.0, %v3148
  %v3161 = vsel %vm3139, 0.0, %v3149
  %v3162 = vsel %vm3139, 0.0, %v3150
  %v3163 = vsel %vm3139, 0.0, %v3151
  %vm3164 = vcmp.gt.f32.partialorder %v3152, 1.3
  %vm3165 = vcmp.gt.f32.partialorder %v3153, 1.3
  %vm3166 = vcmp.gt.f32.partialorder %v3154, 1.3
  %vm3167 = vcmp.gt.f32.partialorder %v3155, 1.3
  %vm3168 = vcmp.gt.f32.partialorder %v3156, 1.3
  %vm3169 = vcmp.gt.f32.partialorder %v3157, 1.3
  %vm3170 = vcmp.gt.f32.partialorder %v3158, 1.3
  %vm3171 = vcmp.gt.f32.partialorder %v3159, 1.3
  %vm3172 = vcmp.gt.f32.partialorder %v3160, 1.3
  %vm3173 = vcmp.gt.f32.partialorder %v3161, 1.3
  %vm3174 = vcmp.gt.f32.partialorder %v3162, 1.3
  %vm3175 = vcmp.gt.f32.partialorder %v3163, 1.3
  %v3176 = vsel %vm3164, 1, 0
  %v3177 = vsel %vm3165, 1, 0
  %v3178 = vsel %vm3166, 1, 0
  %v3179 = vsel %vm3167, 1, 0
  %v3180 = vsel %vm3168, 1, 0
  %v3181 = vsel %vm3169, 1, 0
  %v3182 = vsel %vm3170, 1, 0
  %v3183 = vsel %vm3171, 1, 0
  %v3184 = vsel %vm3172, 1, 0
  %v3185 = vsel %vm3173, 1, 0
  %v3186 = vsel %vm3174, 1, 0
  %v3187 = vsel %vm3175, 1, 0
  %v3188 = vcvt.s32.f32 %v3176
  %v3189 = vcvt.s32.f32 %v3177
  %v3190 = vcvt.s32.f32 %v3178
  %v3191 = vcvt.s32.f32 %v3179
  %v3192 = vcvt.s32.f32 %v3180
  %v3193 = vcvt.s32.f32 %v3181
  %v3194 = vcvt.s32.f32 %v3182
  %v3195 = vcvt.s32.f32 %v3183
  %v3196 = vcvt.s32.f32 %v3184
  %v3197 = vcvt.s32.f32 %v3185
  %v3198 = vcvt.s32.f32 %v3186
  %v3199 = vcvt.s32.f32 %v3187
  %3200 = vst [vmem:[#allocation2] sm:$0xff] %v3188
  %3201 = vst [vmem:[#allocation2 + $0x8] sm:$0xff] %v3189
  %3202 = vst [vmem:[#allocation2 + $0x10] sm:$0xff] %v3190
  %3203 = vst [vmem:[#allocation2 + $0x18] sm:$0xff] %v3191
  %3204 = vst [vmem:[#allocation2 + $0x20] sm:$0xff] %v3192
  %3205 = vst [vmem:[#allocation2 + $0x28] sm:$0xff] %v3193
  %3206 = vst [vmem:[#allocation2 + $0x30] sm:$0xff] %v3194
  %3207 = vst [vmem:[#allocation2 + $0x38] sm:$0xff] %v3195
  %3208 = vst [vmem:[#allocation2 + $0x40] sm:$0xff] %v3196
  %3209 = vst [vmem:[#allocation2 + $0x48] sm:$0xff] %v3197
  %3210 = vst [vmem:[#allocation2 + $0x50] sm:$0xff] %v3198
  %3211 = vst [vmem:[#allocation2 + $0x58] sm:$0xff] %v3199
  %v3212 = vmul.f32 %v3152, 0.8
  %v3213 = vmul.f32 %v3153, 0.8
  %v3214 = vmul.f32 %v3154, 0.8
  %v3215 = vmul.f32 %v3155, 0.8
  %v3216 = vmul.f32 %v3156, 0.8
  %v3217 = vmul.f32 %v3157, 0.8
  %v3218 = vmul.f32 %v3158, 0.8
  %v3219 = vmul.f32 %v3159, 0.8
  %v3220 = vmul.f32 %v3160, 0.8
  %v3221 = vmul.f32 %v3161, 0.8
  %v3222 = vmul.f32 %v3162, 0.8
  %v3223 = vmul.f32 %v3163, 0.8
  %v3224 = vadd.f32 %v3212, %v1715
  %v3225 = vadd.f32 %v3213, %v1717
  %v3226 = vadd.f32 %v3214, %v1999
  %v3227 = vadd.f32 %v3215, %v2001
  %v3228 = vadd.f32 %v3216, %v2283
  %v3229 = vadd.f32 %v3217, %v2285
  %v3230 = vadd.f32 %v3218, %v2567
  %v3231 = vadd.f32 %v3219, %v2569
  %v3232 = vadd.f32 %v3220, %v2851
  %v3233 = vadd.f32 %v3221, %v2853
  %v3234 = vadd.f32 %v3222, %v3135
  %v3235 = vadd.f32 %v3223, %v3137
  %v3236 = vsel %vm3164, 0.0, %v3224
  %v3237 = vsel %vm3165, 0.0, %v3225
  %v3238 = vsel %vm3166, 0.0, %v3226
  %v3239 = vsel %vm3167, 0.0, %v3227
  %v3240 = vsel %vm3168, 0.0, %v3228
  %v3241 = vsel %vm3169, 0.0, %v3229
  %v3242 = vsel %vm3170, 0.0, %v3230
  %v3243 = vsel %vm3171, 0.0, %v3231
  %v3244 = vsel %vm3172, 0.0, %v3232
  %v3245 = vsel %vm3173, 0.0, %v3233
  %v3246 = vsel %vm3174, 0.0, %v3234
  %v3247 = vsel %vm3175, 0.0, %v3235
  %vm3248 = vcmp.gt.f32.partialorder %v3236, 1.3
  %vm3249 = vcmp.gt.f32.partialorder %v3237, 1.3
  %vm3250 = vcmp.gt.f32.partialorder %v3238, 1.3
  %vm3251 = vcmp.gt.f32.partialorder %v3239, 1.3
  %vm3252 = vcmp.gt.f32.partialorder %v3240, 1.3
  %vm3253 = vcmp.gt.f32.partialorder %v3241, 1.3
  %vm3254 = vcmp.gt.f32.partialorder %v3242, 1.3
  %vm3255 = vcmp.gt.f32.partialorder %v3243, 1.3
  %vm3256 = vcmp.gt.f32.partialorder %v3244, 1.3
  %vm3257 = vcmp.gt.f32.partialorder %v3245, 1.3
  %vm3258 = vcmp.gt.f32.partialorder %v3246, 1.3
  %vm3259 = vcmp.gt.f32.partialorder %v3247, 1.3
  %v3260 = vsel %vm3248, 1, 0
  %v3261 = vsel %vm3249, 1, 0
  %v3262 = vsel %vm3250, 1, 0
  %v3263 = vsel %vm3251, 1, 0
  %v3264 = vsel %vm3252, 1, 0
  %v3265 = vsel %vm3253, 1, 0
  %v3266 = vsel %vm3254, 1, 0
  %v3267 = vsel %vm3255, 1, 0
  %v3268 = vsel %vm3256, 1, 0
  %v3269 = vsel %vm3257, 1, 0
  %v3270 = vsel %vm3258, 1, 0
  %v3271 = vsel %vm3259, 1, 0
  %v3272 = vcvt.s32.f32 %v3260
  %v3273 = vcvt.s32.f32 %v3261
  %v3274 = vcvt.s32.f32 %v3262
  %v3275 = vcvt.s32.f32 %v3263
  %v3276 = vcvt.s32.f32 %v3264
  %v3277 = vcvt.s32.f32 %v3265
  %v3278 = vcvt.s32.f32 %v3266
  %v3279 = vcvt.s32.f32 %v3267
  %v3280 = vcvt.s32.f32 %v3268
  %v3281 = vcvt.s32.f32 %v3269
  %v3282 = vcvt.s32.f32 %v3270
  %v3283 = vcvt.s32.f32 %v3271
  %3284 = vst [vmem:[#allocation2 + $0x60] sm:$0xff] %v3272
  %3285 = vst [vmem:[#allocation2 + $0x68] sm:$0xff] %v3273
  %3286 = vst [vmem:[#allocation2 + $0x70] sm:$0xff] %v3274
  %3287 = vst [vmem:[#allocation2 + $0x78] sm:$0xff] %v3275
  %3288 = vst [vmem:[#allocation2 + $0x80] sm:$0xff] %v3276
  %3289 = vst [vmem:[#allocation2 + $0x88] sm:$0xff] %v3277
  %3290 = vst [vmem:[#allocation2 + $0x90] sm:$0xff] %v3278
  %3291 = vst [vmem:[#allocation2 + $0x98] sm:$0xff] %v3279
  %3292 = vst [vmem:[#allocation2 + $0xa0] sm:$0xff] %v3280
  %3293 = vst [vmem:[#allocation2 + $0xa8] sm:$0xff] %v3281
  %3294 = vst [vmem:[#allocation2 + $0xb0] sm:$0xff] %v3282
  %3295 = vst [vmem:[#allocation2 + $0xb8] sm:$0xff] %v3283
  %v3296 = vmul.f32 %v3236, 0.8
  %v3297 = vmul.f32 %v3237, 0.8
  %v3298 = vmul.f32 %v3238, 0.8
  %v3299 = vmul.f32 %v3239, 0.8
  %v3300 = vmul.f32 %v3240, 0.8
  %v3301 = vmul.f32 %v3241, 0.8
  %v3302 = vmul.f32 %v3242, 0.8
  %v3303 = vmul.f32 %v3243, 0.8
  %v3304 = vmul.f32 %v3244, 0.8
  %v3305 = vmul.f32 %v3245, 0.8
  %v3306 = vmul.f32 %v3246, 0.8
  %v3307 = vmul.f32 %v3247, 0.8
  %v3308 = vadd.f32 %v3296, %v1715
  %v3309 = vadd.f32 %v3297, %v1717
  %v3310 = vadd.f32 %v3298, %v1999
  %v3311 = vadd.f32 %v3299, %v2001
  %v3312 = vadd.f32 %v3300, %v2283
  %v3313 = vadd.f32 %v3301, %v2285
  %v3314 = vadd.f32 %v3302, %v2567
  %v3315 = vadd.f32 %v3303, %v2569
  %v3316 = vadd.f32 %v3304, %v2851
  %v3317 = vadd.f32 %v3305, %v2853
  %v3318 = vadd.f32 %v3306, %v3135
  %v3319 = vadd.f32 %v3307, %v3137
  %v3320 = vsel %vm3248, 0.0, %v3308
  %v3321 = vsel %vm3249, 0.0, %v3309
  %v3322 = vsel %vm3250, 0.0, %v3310
  %v3323 = vsel %vm3251, 0.0, %v3311
  %v3324 = vsel %vm3252, 0.0, %v3312
  %v3325 = vsel %vm3253, 0.0, %v3313
  %v3326 = vsel %vm3254, 0.0, %v3314
  %v3327 = vsel %vm3255, 0.0, %v3315
  %v3328 = vsel %vm3256, 0.0, %v3316
  %v3329 = vsel %vm3257, 0.0, %v3317
  %v3330 = vsel %vm3258, 0.0, %v3318
  %v3331 = vsel %vm3259, 0.0, %v3319
  %vm3332 = vcmp.gt.f32.partialorder %v3320, 1.3
  %vm3333 = vcmp.gt.f32.partialorder %v3321, 1.3
  %vm3334 = vcmp.gt.f32.partialorder %v3322, 1.3
  %vm3335 = vcmp.gt.f32.partialorder %v3323, 1.3
  %vm3336 = vcmp.gt.f32.partialorder %v3324, 1.3
  %vm3337 = vcmp.gt.f32.partialorder %v3325, 1.3
  %vm3338 = vcmp.gt.f32.partialorder %v3326, 1.3
  %vm3339 = vcmp.gt.f32.partialorder %v3327, 1.3
  %vm3340 = vcmp.gt.f32.partialorder %v3328, 1.3
  %vm3341 = vcmp.gt.f32.partialorder %v3329, 1.3
  %vm3342 = vcmp.gt.f32.partialorder %v3330, 1.3
  %vm3343 = vcmp.gt.f32.partialorder %v3331, 1.3
  %v3344 = vsel %vm3332, 1, 0
  %v3345 = vsel %vm3333, 1, 0
  %v3346 = vsel %vm3334, 1, 0
  %v3347 = vsel %vm3335, 1, 0
  %v3348 = vsel %vm3336, 1, 0
  %v3349 = vsel %vm3337, 1, 0
  %v3350 = vsel %vm3338, 1, 0
  %v3351 = vsel %vm3339, 1, 0
  %v3352 = vsel %vm3340, 1, 0
  %v3353 = vsel %vm3341, 1, 0
  %v3354 = vsel %vm3342, 1, 0
  %v3355 = vsel %vm3343, 1, 0
  %v3356 = vcvt.s32.f32 %v3344
  %v3357 = vcvt.s32.f32 %v3345
  %v3358 = vcvt.s32.f32 %v3346
  %v3359 = vcvt.s32.f32 %v3347
  %v3360 = vcvt.s32.f32 %v3348
  %v3361 = vcvt.s32.f32 %v3349
  %v3362 = vcvt.s32.f32 %v3350
  %v3363 = vcvt.s32.f32 %v3351
  %v3364 = vcvt.s32.f32 %v3352
  %v3365 = vcvt.s32.f32 %v3353
  %v3366 = vcvt.s32.f32 %v3354
  %v3367 = vcvt.s32.f32 %v3355
  %3368 = vst [vmem:[#allocation2 + $0xc0] sm:$0xff] %v3356
  %3369 = vst [vmem:[#allocation2 + $0xc8] sm:$0xff] %v3357
  %3370 = vst [vmem:[#allocation2 + $0xd0] sm:$0xff] %v3358
  %3371 = vst [vmem:[#allocation2 + $0xd8] sm:$0xff] %v3359
  %3372 = vst [vmem:[#allocation2 + $0xe0] sm:$0xff] %v3360
  %3373 = vst [vmem:[#allocation2 + $0xe8] sm:$0xff] %v3361
  %3374 = vst [vmem:[#allocation2 + $0xf0] sm:$0xff] %v3362
  %3375 = vst [vmem:[#allocation2 + $0xf8] sm:$0xff] %v3363
  %3376 = vst [vmem:[#allocation2 + $0x100] sm:$0xff] %v3364
  %3377 = vst [vmem:[#allocation2 + $0x108] sm:$0xff] %v3365
  %3378 = vst [vmem:[#allocation2 + $0x110] sm:$0xff] %v3366
  %3379 = vst [vmem:[#allocation2 + $0x118] sm:$0xff] %v3367
  %v3380 = vmul.f32 %v3320, 0.8
  %v3381 = vmul.f32 %v3321, 0.8
  %v3382 = vmul.f32 %v3322, 0.8
  %v3383 = vmul.f32 %v3323, 0.8
  %v3384 = vmul.f32 %v3324, 0.8
  %v3385 = vmul.f32 %v3325, 0.8
  %v3386 = vmul.f32 %v3326, 0.8
  %v3387 = vmul.f32 %v3327, 0.8
  %v3388 = vmul.f32 %v3328, 0.8
  %v3389 = vmul.f32 %v3329, 0.8
  %v3390 = vmul.f32 %v3330, 0.8
  %v3391 = vmul.f32 %v3331, 0.8
  %v3392 = vadd.f32 %v3380, %v1715
  %v3393 = vadd.f32 %v3381, %v1717
  %v3394 = vadd.f32 %v3382, %v1999
  %v3395 = vadd.f32 %v3383, %v2001
  %v3396 = vadd.f32 %v3384, %v2283
  %v3397 = vadd.f32 %v3385, %v2285
  %v3398 = vadd.f32 %v3386, %v2567
  %v3399 = vadd.f32 %v3387, %v2569
  %v3400 = vadd.f32 %v3388, %v2851
  %v3401 = vadd.f32 %v3389, %v2853
  %v3402 = vadd.f32 %v3390, %v3135
  %v3403 = vadd.f32 %v3391, %v3137
  %v3404 = vsel %vm3332, 0.0, %v3392
  %v3405 = vsel %vm3333, 0.0, %v3393
  %v3406 = vsel %vm3334, 0.0, %v3394
  %v3407 = vsel %vm3335, 0.0, %v3395
  %v3408 = vsel %vm3336, 0.0, %v3396
  %v3409 = vsel %vm3337, 0.0, %v3397
  %v3410 = vsel %vm3338, 0.0, %v3398
  %v3411 = vsel %vm3339, 0.0, %v3399
  %v3412 = vsel %vm3340, 0.0, %v3400
  %v3413 = vsel %vm3341, 0.0, %v3401
  %v3414 = vsel %vm3342, 0.0, %v3402
  %v3415 = vsel %vm3343, 0.0, %v3403
  %vm3416 = vcmp.gt.f32.partialorder %v3404, 1.3
  %vm3417 = vcmp.gt.f32.partialorder %v3405, 1.3
  %vm3418 = vcmp.gt.f32.partialorder %v3406, 1.3
  %vm3419 = vcmp.gt.f32.partialorder %v3407, 1.3
  %vm3420 = vcmp.gt.f32.partialorder %v3408, 1.3
  %vm3421 = vcmp.gt.f32.partialorder %v3409, 1.3
  %vm3422 = vcmp.gt.f32.partialorder %v3410, 1.3
  %vm3423 = vcmp.gt.f32.partialorder %v3411, 1.3
  %vm3424 = vcmp.gt.f32.partialorder %v3412, 1.3
  %vm3425 = vcmp.gt.f32.partialorder %v3413, 1.3
  %vm3426 = vcmp.gt.f32.partialorder %v3414, 1.3
  %vm3427 = vcmp.gt.f32.partialorder %v3415, 1.3
  %v3428 = vsel %vm3416, 1, 0
  %v3429 = vsel %vm3417, 1, 0
  %v3430 = vsel %vm3418, 1, 0
  %v3431 = vsel %vm3419, 1, 0
  %v3432 = vsel %vm3420, 1, 0
  %v3433 = vsel %vm3421, 1, 0
  %v3434 = vsel %vm3422, 1, 0
  %v3435 = vsel %vm3423, 1, 0
  %v3436 = vsel %vm3424, 1, 0
  %v3437 = vsel %vm3425, 1, 0
  %v3438 = vsel %vm3426, 1, 0
  %v3439 = vsel %vm3427, 1, 0
  %v3440 = vcvt.s32.f32 %v3428
  %v3441 = vcvt.s32.f32 %v3429
  %v3442 = vcvt.s32.f32 %v3430
  %v3443 = vcvt.s32.f32 %v3431
  %v3444 = vcvt.s32.f32 %v3432
  %v3445 = vcvt.s32.f32 %v3433
  %v3446 = vcvt.s32.f32 %v3434
  %v3447 = vcvt.s32.f32 %v3435
  %v3448 = vcvt.s32.f32 %v3436
  %v3449 = vcvt.s32.f32 %v3437
  %v3450 = vcvt.s32.f32 %v3438
  %v3451 = vcvt.s32.f32 %v3439
  %3452 = vst [vmem:[#allocation2 + $0x120] sm:$0xff] %v3440
  %3453 = vst [vmem:[#allocation2 + $0x128] sm:$0xff] %v3441
  %3454 = vst [vmem:[#allocation2 + $0x130] sm:$0xff] %v3442
  %3455 = vst [vmem:[#allocation2 + $0x138] sm:$0xff] %v3443
  %3456 = vst [vmem:[#allocation2 + $0x140] sm:$0xff] %v3444
  %3457 = vst [vmem:[#allocation2 + $0x148] sm:$0xff] %v3445
  %3458 = vst [vmem:[#allocation2 + $0x150] sm:$0xff] %v3446
  %3459 = vst [vmem:[#allocation2 + $0x158] sm:$0xff] %v3447
  %3460 = vst [vmem:[#allocation2 + $0x160] sm:$0xff] %v3448
  %3461 = vst [vmem:[#allocation2 + $0x168] sm:$0xff] %v3449
  %3462 = vst [vmem:[#allocation2 + $0x170] sm:$0xff] %v3450
  %3463 = vst [vmem:[#allocation2 + $0x178] sm:$0xff] %v3451
  %v3464 = vmul.f32 %v3404, 0.8
  %v3465 = vmul.f32 %v3405, 0.8
  %v3466 = vmul.f32 %v3406, 0.8
  %v3467 = vmul.f32 %v3407, 0.8
  %v3468 = vmul.f32 %v3408, 0.8
  %v3469 = vmul.f32 %v3409, 0.8
  %v3470 = vmul.f32 %v3410, 0.8
  %v3471 = vmul.f32 %v3411, 0.8
  %v3472 = vmul.f32 %v3412, 0.8
  %v3473 = vmul.f32 %v3413, 0.8
  %v3474 = vmul.f32 %v3414, 0.8
  %v3475 = vmul.f32 %v3415, 0.8
  %v3476 = vadd.f32 %v3464, %v1715
  %v3477 = vadd.f32 %v3465, %v1717
  %v3478 = vadd.f32 %v3466, %v1999
  %v3479 = vadd.f32 %v3467, %v2001
  %v3480 = vadd.f32 %v3468, %v2283
  %v3481 = vadd.f32 %v3469, %v2285
  %v3482 = vadd.f32 %v3470, %v2567
  %v3483 = vadd.f32 %v3471, %v2569
  %v3484 = vadd.f32 %v3472, %v2851
  %v3485 = vadd.f32 %v3473, %v2853
  %v3486 = vadd.f32 %v3474, %v3135
  %v3487 = vadd.f32 %v3475, %v3137
  %v3488 = vsel %vm3416, 0.0, %v3476
  %v3489 = vsel %vm3417, 0.0, %v3477
  %v3490 = vsel %vm3418, 0.0, %v3478
  %v3491 = vsel %vm3419, 0.0, %v3479
  %v3492 = vsel %vm3420, 0.0, %v3480
  %v3493 = vsel %vm3421, 0.0, %v3481
  %v3494 = vsel %vm3422, 0.0, %v3482
  %v3495 = vsel %vm3423, 0.0, %v3483
  %v3496 = vsel %vm3424, 0.0, %v3484
  %v3497 = vsel %vm3425, 0.0, %v3485
  %v3498 = vsel %vm3426, 0.0, %v3486
  %v3499 = vsel %vm3427, 0.0, %v3487
  %vm3500 = vcmp.gt.f32.partialorder %v3488, 1.3
  %vm3501 = vcmp.gt.f32.partialorder %v3489, 1.3
  %vm3502 = vcmp.gt.f32.partialorder %v3490, 1.3
  %vm3503 = vcmp.gt.f32.partialorder %v3491, 1.3
  %vm3504 = vcmp.gt.f32.partialorder %v3492, 1.3
  %vm3505 = vcmp.gt.f32.partialorder %v3493, 1.3
  %vm3506 = vcmp.gt.f32.partialorder %v3494, 1.3
  %vm3507 = vcmp.gt.f32.partialorder %v3495, 1.3
  %vm3508 = vcmp.gt.f32.partialorder %v3496, 1.3
  %vm3509 = vcmp.gt.f32.partialorder %v3497, 1.3
  %vm3510 = vcmp.gt.f32.partialorder %v3498, 1.3
  %vm3511 = vcmp.gt.f32.partialorder %v3499, 1.3
  %v3512 = vsel %vm3500, 1, 0
  %v3513 = vsel %vm3501, 1, 0
  %v3514 = vsel %vm3502, 1, 0
  %v3515 = vsel %vm3503, 1, 0
  %v3516 = vsel %vm3504, 1, 0
  %v3517 = vsel %vm3505, 1, 0
  %v3518 = vsel %vm3506, 1, 0
  %v3519 = vsel %vm3507, 1, 0
  %v3520 = vsel %vm3508, 1, 0
  %v3521 = vsel %vm3509, 1, 0
  %v3522 = vsel %vm3510, 1, 0
  %v3523 = vsel %vm3511, 1, 0
  %v3524 = vcvt.s32.f32 %v3512
  %v3525 = vcvt.s32.f32 %v3513
  %v3526 = vcvt.s32.f32 %v3514
  %v3527 = vcvt.s32.f32 %v3515
  %v3528 = vcvt.s32.f32 %v3516
  %v3529 = vcvt.s32.f32 %v3517
  %v3530 = vcvt.s32.f32 %v3518
  %v3531 = vcvt.s32.f32 %v3519
  %v3532 = vcvt.s32.f32 %v3520
  %v3533 = vcvt.s32.f32 %v3521
  %v3534 = vcvt.s32.f32 %v3522
  %v3535 = vcvt.s32.f32 %v3523
  %3536 = vst [vmem:[#allocation2 + $0x180] sm:$0xff] %v3524
  %3537 = vst [vmem:[#allocation2 + $0x188] sm:$0xff] %v3525
  %3538 = vst [vmem:[#allocation2 + $0x190] sm:$0xff] %v3526
  %3539 = vst [vmem:[#allocation2 + $0x198] sm:$0xff] %v3527
  %3540 = vst [vmem:[#allocation2 + $0x1a0] sm:$0xff] %v3528
  %3541 = vst [vmem:[#allocation2 + $0x1a8] sm:$0xff] %v3529
  %3542 = vst [vmem:[#allocation2 + $0x1b0] sm:$0xff] %v3530
  %3543 = vst [vmem:[#allocation2 + $0x1b8] sm:$0xff] %v3531
  %3544 = vst [vmem:[#allocation2 + $0x1c0] sm:$0xff] %v3532
  %3545 = vst [vmem:[#allocation2 + $0x1c8] sm:$0xff] %v3533
  %3546 = vst [vmem:[#allocation2 + $0x1d0] sm:$0xff] %v3534
  %3547 = vst [vmem:[#allocation2 + $0x1d8] sm:$0xff] %v3535
  %v3548 = vmul.f32 %v3488, 0.8
  %v3549 = vmul.f32 %v3489, 0.8
  %v3550 = vmul.f32 %v3490, 0.8
  %v3551 = vmul.f32 %v3491, 0.8
  %v3552 = vmul.f32 %v3492, 0.8
  %v3553 = vmul.f32 %v3493, 0.8
  %v3554 = vmul.f32 %v3494, 0.8
  %v3555 = vmul.f32 %v3495, 0.8
  %v3556 = vmul.f32 %v3496, 0.8
  %v3557 = vmul.f32 %v3497, 0.8
  %v3558 = vmul.f32 %v3498, 0.8
  %v3559 = vmul.f32 %v3499, 0.8
  %v3560 = vadd.f32 %v3548, %v1715
  %v3561 = vadd.f32 %v3549, %v1717
  %v3562 = vadd.f32 %v3550, %v1999
  %v3563 = vadd.f32 %v3551, %v2001
  %v3564 = vadd.f32 %v3552, %v2283
  %v3565 = vadd.f32 %v3553, %v2285
  %v3566 = vadd.f32 %v3554, %v2567
  %v3567 = vadd.f32 %v3555, %v2569
  %v3568 = vadd.f32 %v3556, %v2851
  %v3569 = vadd.f32 %v3557, %v2853
  %v3570 = vadd.f32 %v3558, %v3135
  %v3571 = vadd.f32 %v3559, %v3137
  %v3572 = vsel %vm3500, 0.0, %v3560
  %v3573 = vsel %vm3501, 0.0, %v3561
  %v3574 = vsel %vm3502, 0.0, %v3562
  %v3575 = vsel %vm3503, 0.0, %v3563
  %v3576 = vsel %vm3504, 0.0, %v3564
  %v3577 = vsel %vm3505, 0.0, %v3565
  %v3578 = vsel %vm3506, 0.0, %v3566
  %v3579 = vsel %vm3507, 0.0, %v3567
  %v3580 = vsel %vm3508, 0.0, %v3568
  %v3581 = vsel %vm3509, 0.0, %v3569
  %v3582 = vsel %vm3510, 0.0, %v3570
  %v3583 = vsel %vm3511, 0.0, %v3571
  %vm3584 = vcmp.gt.f32.partialorder %v3572, 1.3
  %vm3585 = vcmp.gt.f32.partialorder %v3573, 1.3
  %vm3586 = vcmp.gt.f32.partialorder %v3574, 1.3
  %vm3587 = vcmp.gt.f32.partialorder %v3575, 1.3
  %vm3588 = vcmp.gt.f32.partialorder %v3576, 1.3
  %vm3589 = vcmp.gt.f32.partialorder %v3577, 1.3
  %vm3590 = vcmp.gt.f32.partialorder %v3578, 1.3
  %vm3591 = vcmp.gt.f32.partialorder %v3579, 1.3
  %vm3592 = vcmp.gt.f32.partialorder %v3580, 1.3
  %vm3593 = vcmp.gt.f32.partialorder %v3581, 1.3
  %vm3594 = vcmp.gt.f32.partialorder %v3582, 1.3
  %vm3595 = vcmp.gt.f32.partialorder %v3583, 1.3
  %v3596 = vsel %vm3584, 1, 0
  %v3597 = vsel %vm3585, 1, 0
  %v3598 = vsel %vm3586, 1, 0
  %v3599 = vsel %vm3587, 1, 0
  %v3600 = vsel %vm3588, 1, 0
  %v3601 = vsel %vm3589, 1, 0
  %v3602 = vsel %vm3590, 1, 0
  %v3603 = vsel %vm3591, 1, 0
  %v3604 = vsel %vm3592, 1, 0
  %v3605 = vsel %vm3593, 1, 0
  %v3606 = vsel %vm3594, 1, 0
  %v3607 = vsel %vm3595, 1, 0
  %v3608 = vcvt.s32.f32 %v3596
  %v3609 = vcvt.s32.f32 %v3597
  %v3610 = vcvt.s32.f32 %v3598
  %v3611 = vcvt.s32.f32 %v3599
  %v3612 = vcvt.s32.f32 %v3600
  %v3613 = vcvt.s32.f32 %v3601
  %v3614 = vcvt.s32.f32 %v3602
  %v3615 = vcvt.s32.f32 %v3603
  %v3616 = vcvt.s32.f32 %v3604
  %v3617 = vcvt.s32.f32 %v3605
  %v3618 = vcvt.s32.f32 %v3606
  %v3619 = vcvt.s32.f32 %v3607
  %3620 = vst [vmem:[#allocation2 + $0x1e0] sm:$0xff] %v3608
  %3621 = vst [vmem:[#allocation2 + $0x1e8] sm:$0xff] %v3609
  %3622 = vst [vmem:[#allocation2 + $0x1f0] sm:$0xff] %v3610
  %3623 = vst [vmem:[#allocation2 + $0x1f8] sm:$0xff] %v3611
  %3624 = vst [vmem:[#allocation2 + $0x200] sm:$0xff] %v3612
  %3625 = vst [vmem:[#allocation2 + $0x208] sm:$0xff] %v3613
  %3626 = vst [vmem:[#allocation2 + $0x210] sm:$0xff] %v3614
  %3627 = vst [vmem:[#allocation2 + $0x218] sm:$0xff] %v3615
  %3628 = vst [vmem:[#allocation2 + $0x220] sm:$0xff] %v3616
  %3629 = vst [vmem:[#allocation2 + $0x228] sm:$0xff] %v3617
  %3630 = vst [vmem:[#allocation2 + $0x230] sm:$0xff] %v3618
  %3631 = vst [vmem:[#allocation2 + $0x238] sm:$0xff] %v3619
  %v3632 = vmul.f32 %v3572, 0.8
  %v3633 = vmul.f32 %v3573, 0.8
  %v3634 = vmul.f32 %v3574, 0.8
  %v3635 = vmul.f32 %v3575, 0.8
  %v3636 = vmul.f32 %v3576, 0.8
  %v3637 = vmul.f32 %v3577, 0.8
  %v3638 = vmul.f32 %v3578, 0.8
  %v3639 = vmul.f32 %v3579, 0.8
  %v3640 = vmul.f32 %v3580, 0.8
  %v3641 = vmul.f32 %v3581, 0.8
  %v3642 = vmul.f32 %v3582, 0.8
  %v3643 = vmul.f32 %v3583, 0.8
  %v3644 = vadd.f32 %v3632, %v1715
  %v3645 = vadd.f32 %v3633, %v1717
  %v3646 = vadd.f32 %v3634, %v1999
  %v3647 = vadd.f32 %v3635, %v2001
  %v3648 = vadd.f32 %v3636, %v2283
  %v3649 = vadd.f32 %v3637, %v2285
  %v3650 = vadd.f32 %v3638, %v2567
  %v3651 = vadd.f32 %v3639, %v2569
  %v3652 = vadd.f32 %v3640, %v2851
  %v3653 = vadd.f32 %v3641, %v2853
  %v3654 = vadd.f32 %v3642, %v3135
  %v3655 = vadd.f32 %v3643, %v3137
  %v3656 = vsel %vm3584, 0.0, %v3644
  %v3657 = vsel %vm3585, 0.0, %v3645
  %v3658 = vsel %vm3586, 0.0, %v3646
  %v3659 = vsel %vm3587, 0.0, %v3647
  %v3660 = vsel %vm3588, 0.0, %v3648
  %v3661 = vsel %vm3589, 0.0, %v3649
  %v3662 = vsel %vm3590, 0.0, %v3650
  %v3663 = vsel %vm3591, 0.0, %v3651
  %v3664 = vsel %vm3592, 0.0, %v3652
  %v3665 = vsel %vm3593, 0.0, %v3653
  %v3666 = vsel %vm3594, 0.0, %v3654
  %v3667 = vsel %vm3595, 0.0, %v3655
  %vm3668 = vcmp.gt.f32.partialorder %v3656, 1.3
  %vm3669 = vcmp.gt.f32.partialorder %v3657, 1.3
  %vm3670 = vcmp.gt.f32.partialorder %v3658, 1.3
  %vm3671 = vcmp.gt.f32.partialorder %v3659, 1.3
  %vm3672 = vcmp.gt.f32.partialorder %v3660, 1.3
  %vm3673 = vcmp.gt.f32.partialorder %v3661, 1.3
  %vm3674 = vcmp.gt.f32.partialorder %v3662, 1.3
  %vm3675 = vcmp.gt.f32.partialorder %v3663, 1.3
  %vm3676 = vcmp.gt.f32.partialorder %v3664, 1.3
  %vm3677 = vcmp.gt.f32.partialorder %v3665, 1.3
  %vm3678 = vcmp.gt.f32.partialorder %v3666, 1.3
  %vm3679 = vcmp.gt.f32.partialorder %v3667, 1.3
  %v3680 = vsel %vm3668, 1, 0
  %v3681 = vsel %vm3669, 1, 0
  %v3682 = vsel %vm3670, 1, 0
  %v3683 = vsel %vm3671, 1, 0
  %v3684 = vsel %vm3672, 1, 0
  %v3685 = vsel %vm3673, 1, 0
  %v3686 = vsel %vm3674, 1, 0
  %v3687 = vsel %vm3675, 1, 0
  %v3688 = vsel %vm3676, 1, 0
  %v3689 = vsel %vm3677, 1, 0
  %v3690 = vsel %vm3678, 1, 0
  %v3691 = vsel %vm3679, 1, 0
  %v3692 = vcvt.s32.f32 %v3680
  %v3693 = vcvt.s32.f32 %v3681
  %v3694 = vcvt.s32.f32 %v3682
  %v3695 = vcvt.s32.f32 %v3683
  %v3696 = vcvt.s32.f32 %v3684
  %v3697 = vcvt.s32.f32 %v3685
  %v3698 = vcvt.s32.f32 %v3686
  %v3699 = vcvt.s32.f32 %v3687
  %v3700 = vcvt.s32.f32 %v3688
  %v3701 = vcvt.s32.f32 %v3689
  %v3702 = vcvt.s32.f32 %v3690
  %v3703 = vcvt.s32.f32 %v3691
  %3704 = vst [vmem:[#allocation2 + $0x240] sm:$0xff] %v3692
  %3705 = vst [vmem:[#allocation2 + $0x248] sm:$0xff] %v3693
  %3706 = vst [vmem:[#allocation2 + $0x250] sm:$0xff] %v3694
  %3707 = vst [vmem:[#allocation2 + $0x258] sm:$0xff] %v3695
  %3708 = vst [vmem:[#allocation2 + $0x260] sm:$0xff] %v3696
  %3709 = vst [vmem:[#allocation2 + $0x268] sm:$0xff] %v3697
  %3710 = vst [vmem:[#allocation2 + $0x270] sm:$0xff] %v3698
  %3711 = vst [vmem:[#allocation2 + $0x278] sm:$0xff] %v3699
  %3712 = vst [vmem:[#allocation2 + $0x280] sm:$0xff] %v3700
  %3713 = vst [vmem:[#allocation2 + $0x288] sm:$0xff] %v3701
  %3714 = vst [vmem:[#allocation2 + $0x290] sm:$0xff] %v3702
  %3715 = vst [vmem:[#allocation2 + $0x298] sm:$0xff] %v3703
  %v3716 = vmul.f32 %v3656, 0.8
  %v3717 = vmul.f32 %v3657, 0.8
  %v3718 = vmul.f32 %v3658, 0.8
  %v3719 = vmul.f32 %v3659, 0.8
  %v3720 = vmul.f32 %v3660, 0.8
  %v3721 = vmul.f32 %v3661, 0.8
  %v3722 = vmul.f32 %v3662, 0.8
  %v3723 = vmul.f32 %v3663, 0.8
  %v3724 = vmul.f32 %v3664, 0.8
  %v3725 = vmul.f32 %v3665, 0.8
  %v3726 = vmul.f32 %v3666, 0.8
  %v3727 = vmul.f32 %v3667, 0.8
  %v3728 = vadd.f32 %v3716, %v1715
  %v3729 = vadd.f32 %v3717, %v1717
  %v3730 = vadd.f32 %v3718, %v1999
  %v3731 = vadd.f32 %v3719, %v2001
  %v3732 = vadd.f32 %v3720, %v2283
  %v3733 = vadd.f32 %v3721, %v2285
  %v3734 = vadd.f32 %v3722, %v2567
  %v3735 = vadd.f32 %v3723, %v2569
  %v3736 = vadd.f32 %v3724, %v2851
  %v3737 = vadd.f32 %v3725, %v2853
  %v3738 = vadd.f32 %v3726, %v3135
  %v3739 = vadd.f32 %v3727, %v3137
  %v3740 = vsel %vm3668, 0.0, %v3728
  %v3741 = vsel %vm3669, 0.0, %v3729
  %v3742 = vsel %vm3670, 0.0, %v3730
  %v3743 = vsel %vm3671, 0.0, %v3731
  %v3744 = vsel %vm3672, 0.0, %v3732
  %v3745 = vsel %vm3673, 0.0, %v3733
  %v3746 = vsel %vm3674, 0.0, %v3734
  %v3747 = vsel %vm3675, 0.0, %v3735
  %v3748 = vsel %vm3676, 0.0, %v3736
  %v3749 = vsel %vm3677, 0.0, %v3737
  %v3750 = vsel %vm3678, 0.0, %v3738
  %v3751 = vsel %vm3679, 0.0, %v3739
  %vm3752 = vcmp.gt.f32.partialorder %v3740, 1.3
  %vm3753 = vcmp.gt.f32.partialorder %v3741, 1.3
  %vm3754 = vcmp.gt.f32.partialorder %v3742, 1.3
  %vm3755 = vcmp.gt.f32.partialorder %v3743, 1.3
  %vm3756 = vcmp.gt.f32.partialorder %v3744, 1.3
  %vm3757 = vcmp.gt.f32.partialorder %v3745, 1.3
  %vm3758 = vcmp.gt.f32.partialorder %v3746, 1.3
  %vm3759 = vcmp.gt.f32.partialorder %v3747, 1.3
  %vm3760 = vcmp.gt.f32.partialorder %v3748, 1.3
  %vm3761 = vcmp.gt.f32.partialorder %v3749, 1.3
  %vm3762 = vcmp.gt.f32.partialorder %v3750, 1.3
  %vm3763 = vcmp.gt.f32.partialorder %v3751, 1.3
  %v3764 = vsel %vm3752, 1, 0
  %v3765 = vsel %vm3753, 1, 0
  %v3766 = vsel %vm3754, 1, 0
  %v3767 = vsel %vm3755, 1, 0
  %v3768 = vsel %vm3756, 1, 0
  %v3769 = vsel %vm3757, 1, 0
  %v3770 = vsel %vm3758, 1, 0
  %v3771 = vsel %vm3759, 1, 0
  %v3772 = vsel %vm3760, 1, 0
  %v3773 = vsel %vm3761, 1, 0
  %v3774 = vsel %vm3762, 1, 0
  %v3775 = vsel %vm3763, 1, 0
  %v3776 = vcvt.s32.f32 %v3764
  %v3777 = vcvt.s32.f32 %v3765
  %v3778 = vcvt.s32.f32 %v3766
  %v3779 = vcvt.s32.f32 %v3767
  %v3780 = vcvt.s32.f32 %v3768
  %v3781 = vcvt.s32.f32 %v3769
  %v3782 = vcvt.s32.f32 %v3770
  %v3783 = vcvt.s32.f32 %v3771
  %v3784 = vcvt.s32.f32 %v3772
  %v3785 = vcvt.s32.f32 %v3773
  %v3786 = vcvt.s32.f32 %v3774
  %v3787 = vcvt.s32.f32 %v3775
  %3788 = vst [vmem:[#allocation2 + $0x2a0] sm:$0xff] %v3776
  %3789 = vst [vmem:[#allocation2 + $0x2a8] sm:$0xff] %v3777
  %3790 = vst [vmem:[#allocation2 + $0x2b0] sm:$0xff] %v3778
  %3791 = vst [vmem:[#allocation2 + $0x2b8] sm:$0xff] %v3779
  %3792 = vst [vmem:[#allocation2 + $0x2c0] sm:$0xff] %v3780
  %3793 = vst [vmem:[#allocation2 + $0x2c8] sm:$0xff] %v3781
  %3794 = vst [vmem:[#allocation2 + $0x2d0] sm:$0xff] %v3782
  %3795 = vst [vmem:[#allocation2 + $0x2d8] sm:$0xff] %v3783
  %3796 = vst [vmem:[#allocation2 + $0x2e0] sm:$0xff] %v3784
  %3797 = vst [vmem:[#allocation2 + $0x2e8] sm:$0xff] %v3785
  %3798 = vst [vmem:[#allocation2 + $0x2f0] sm:$0xff] %v3786
  %3799 = vst [vmem:[#allocation2 + $0x2f8] sm:$0xff] %v3787
  %v3800 = vmul.f32 %v3740, 0.8
  %v3801 = vmul.f32 %v3741, 0.8
  %v3802 = vmul.f32 %v3742, 0.8
  %v3803 = vmul.f32 %v3743, 0.8
  %v3804 = vmul.f32 %v3744, 0.8
  %v3805 = vmul.f32 %v3745, 0.8
  %v3806 = vmul.f32 %v3746, 0.8
  %v3807 = vmul.f32 %v3747, 0.8
  %v3808 = vmul.f32 %v3748, 0.8
  %v3809 = vmul.f32 %v3749, 0.8
  %v3810 = vmul.f32 %v3750, 0.8
  %v3811 = vmul.f32 %v3751, 0.8
  %v3812 = vadd.f32 %v3800, %v1715
  %v3813 = vadd.f32 %v3801, %v1717
  %v3814 = vadd.f32 %v3802, %v1999
  %v3815 = vadd.f32 %v3803, %v2001
  %v3816 = vadd.f32 %v3804, %v2283
  %v3817 = vadd.f32 %v3805, %v2285
  %v3818 = vadd.f32 %v3806, %v2567
  %v3819 = vadd.f32 %v3807, %v2569
  %v3820 = vadd.f32 %v3808, %v2851
  %v3821 = vadd.f32 %v3809, %v2853
  %v3822 = vadd.f32 %v3810, %v3135
  %v3823 = vadd.f32 %v3811, %v3137
  %v3824 = vsel %vm3752, 0.0, %v3812
  %v3825 = vsel %vm3753, 0.0, %v3813
  %v3826 = vsel %vm3754, 0.0, %v3814
  %v3827 = vsel %vm3755, 0.0, %v3815
  %v3828 = vsel %vm3756, 0.0, %v3816
  %v3829 = vsel %vm3757, 0.0, %v3817
  %v3830 = vsel %vm3758, 0.0, %v3818
  %v3831 = vsel %vm3759, 0.0, %v3819
  %v3832 = vsel %vm3760, 0.0, %v3820
  %v3833 = vsel %vm3761, 0.0, %v3821
  %v3834 = vsel %vm3762, 0.0, %v3822
  %v3835 = vsel %vm3763, 0.0, %v3823
  %vm3836 = vcmp.gt.f32.partialorder %v3824, 1.3
  %vm3837 = vcmp.gt.f32.partialorder %v3825, 1.3
  %vm3838 = vcmp.gt.f32.partialorder %v3826, 1.3
  %vm3839 = vcmp.gt.f32.partialorder %v3827, 1.3
  %vm3840 = vcmp.gt.f32.partialorder %v3828, 1.3
  %vm3841 = vcmp.gt.f32.partialorder %v3829, 1.3
  %vm3842 = vcmp.gt.f32.partialorder %v3830, 1.3
  %vm3843 = vcmp.gt.f32.partialorder %v3831, 1.3
  %vm3844 = vcmp.gt.f32.partialorder %v3832, 1.3
  %vm3845 = vcmp.gt.f32.partialorder %v3833, 1.3
  %vm3846 = vcmp.gt.f32.partialorder %v3834, 1.3
  %vm3847 = vcmp.gt.f32.partialorder %v3835, 1.3
  %v3848 = vsel %vm3836, 1, 0
  %v3849 = vsel %vm3837, 1, 0
  %v3850 = vsel %vm3838, 1, 0
  %v3851 = vsel %vm3839, 1, 0
  %v3852 = vsel %vm3840, 1, 0
  %v3853 = vsel %vm3841, 1, 0
  %v3854 = vsel %vm3842, 1, 0
  %v3855 = vsel %vm3843, 1, 0
  %v3856 = vsel %vm3844, 1, 0
  %v3857 = vsel %vm3845, 1, 0
  %v3858 = vsel %vm3846, 1, 0
  %v3859 = vsel %vm3847, 1, 0
  %v3860 = vcvt.s32.f32 %v3848
  %v3861 = vcvt.s32.f32 %v3849
  %v3862 = vcvt.s32.f32 %v3850
  %v3863 = vcvt.s32.f32 %v3851
  %v3864 = vcvt.s32.f32 %v3852
  %v3865 = vcvt.s32.f32 %v3853
  %v3866 = vcvt.s32.f32 %v3854
  %v3867 = vcvt.s32.f32 %v3855
  %v3868 = vcvt.s32.f32 %v3856
  %v3869 = vcvt.s32.f32 %v3857
  %v3870 = vcvt.s32.f32 %v3858
  %v3871 = vcvt.s32.f32 %v3859
  %3872 = vst [vmem:[#allocation2 + $0x300] sm:$0xff] %v3860
  %3873 = vst [vmem:[#allocation2 + $0x308] sm:$0xff] %v3861
  %3874 = vst [vmem:[#allocation2 + $0x310] sm:$0xff] %v3862
  %3875 = vst [vmem:[#allocation2 + $0x318] sm:$0xff] %v3863
  %3876 = vst [vmem:[#allocation2 + $0x320] sm:$0xff] %v3864
  %3877 = vst [vmem:[#allocation2 + $0x328] sm:$0xff] %v3865
  %3878 = vst [vmem:[#allocation2 + $0x330] sm:$0xff] %v3866
  %3879 = vst [vmem:[#allocation2 + $0x338] sm:$0xff] %v3867
  %3880 = vst [vmem:[#allocation2 + $0x340] sm:$0xff] %v3868
  %3881 = vst [vmem:[#allocation2 + $0x348] sm:$0xff] %v3869
  %3882 = vst [vmem:[#allocation2 + $0x350] sm:$0xff] %v3870
  %3883 = vst [vmem:[#allocation2 + $0x358] sm:$0xff] %v3871
  %v3884 = vmul.f32 %v3824, 0.8
  %v3885 = vmul.f32 %v3825, 0.8
  %v3886 = vmul.f32 %v3826, 0.8
  %v3887 = vmul.f32 %v3827, 0.8
  %v3888 = vmul.f32 %v3828, 0.8
  %v3889 = vmul.f32 %v3829, 0.8
  %v3890 = vmul.f32 %v3830, 0.8
  %v3891 = vmul.f32 %v3831, 0.8
  %v3892 = vmul.f32 %v3832, 0.8
  %v3893 = vmul.f32 %v3833, 0.8
  %v3894 = vmul.f32 %v3834, 0.8
  %v3895 = vmul.f32 %v3835, 0.8
  %v3896 = vadd.f32 %v3884, %v1715
  %v3897 = vadd.f32 %v3885, %v1717
  %v3898 = vadd.f32 %v3886, %v1999
  %v3899 = vadd.f32 %v3887, %v2001
  %v3900 = vadd.f32 %v3888, %v2283
  %v3901 = vadd.f32 %v3889, %v2285
  %v3902 = vadd.f32 %v3890, %v2567
  %v3903 = vadd.f32 %v3891, %v2569
  %v3904 = vadd.f32 %v3892, %v2851
  %v3905 = vadd.f32 %v3893, %v2853
  %v3906 = vadd.f32 %v3894, %v3135
  %v3907 = vadd.f32 %v3895, %v3137
  %v3908 = vsel %vm3836, 0.0, %v3896
  %v3909 = vsel %vm3837, 0.0, %v3897
  %v3910 = vsel %vm3838, 0.0, %v3898
  %v3911 = vsel %vm3839, 0.0, %v3899
  %v3912 = vsel %vm3840, 0.0, %v3900
  %v3913 = vsel %vm3841, 0.0, %v3901
  %v3914 = vsel %vm3842, 0.0, %v3902
  %v3915 = vsel %vm3843, 0.0, %v3903
  %v3916 = vsel %vm3844, 0.0, %v3904
  %v3917 = vsel %vm3845, 0.0, %v3905
  %v3918 = vsel %vm3846, 0.0, %v3906
  %v3919 = vsel %vm3847, 0.0, %v3907
  %vm3920 = vcmp.gt.f32.partialorder %v3908, 1.3
  %vm3921 = vcmp.gt.f32.partialorder %v3909, 1.3
  %vm3922 = vcmp.gt.f32.partialorder %v3910, 1.3
  %vm3923 = vcmp.gt.f32.partialorder %v3911, 1.3
  %vm3924 = vcmp.gt.f32.partialorder %v3912, 1.3
  %vm3925 = vcmp.gt.f32.partialorder %v3913, 1.3
  %vm3926 = vcmp.gt.f32.partialorder %v3914, 1.3
  %vm3927 = vcmp.gt.f32.partialorder %v3915, 1.3
  %vm3928 = vcmp.gt.f32.partialorder %v3916, 1.3
  %vm3929 = vcmp.gt.f32.partialorder %v3917, 1.3
  %vm3930 = vcmp.gt.f32.partialorder %v3918, 1.3
  %vm3931 = vcmp.gt.f32.partialorder %v3919, 1.3
  %v3932 = vsel %vm3920, 1, 0
  %v3933 = vsel %vm3921, 1, 0
  %v3934 = vsel %vm3922, 1, 0
  %v3935 = vsel %vm3923, 1, 0
  %v3936 = vsel %vm3924, 1, 0
  %v3937 = vsel %vm3925, 1, 0
  %v3938 = vsel %vm3926, 1, 0
  %v3939 = vsel %vm3927, 1, 0
  %v3940 = vsel %vm3928, 1, 0
  %v3941 = vsel %vm3929, 1, 0
  %v3942 = vsel %vm3930, 1, 0
  %v3943 = vsel %vm3931, 1, 0
  %v3944 = vcvt.s32.f32 %v3932
  %v3945 = vcvt.s32.f32 %v3933
  %v3946 = vcvt.s32.f32 %v3934
  %v3947 = vcvt.s32.f32 %v3935
  %v3948 = vcvt.s32.f32 %v3936
  %v3949 = vcvt.s32.f32 %v3937
  %v3950 = vcvt.s32.f32 %v3938
  %v3951 = vcvt.s32.f32 %v3939
  %v3952 = vcvt.s32.f32 %v3940
  %v3953 = vcvt.s32.f32 %v3941
  %v3954 = vcvt.s32.f32 %v3942
  %v3955 = vcvt.s32.f32 %v3943
  %3956 = vst [vmem:[#allocation2 + $0x360] sm:$0xff] %v3944
  %3957 = vst [vmem:[#allocation2 + $0x368] sm:$0xff] %v3945
  %3958 = vst [vmem:[#allocation2 + $0x370] sm:$0xff] %v3946
  %3959 = vst [vmem:[#allocation2 + $0x378] sm:$0xff] %v3947
  %3960 = vst [vmem:[#allocation2 + $0x380] sm:$0xff] %v3948
  %3961 = vst [vmem:[#allocation2 + $0x388] sm:$0xff] %v3949
  %3962 = vst [vmem:[#allocation2 + $0x390] sm:$0xff] %v3950
  %3963 = vst [vmem:[#allocation2 + $0x398] sm:$0xff] %v3951
  %3964 = vst [vmem:[#allocation2 + $0x3a0] sm:$0xff] %v3952
  %3965 = vst [vmem:[#allocation2 + $0x3a8] sm:$0xff] %v3953
  %3966 = vst [vmem:[#allocation2 + $0x3b0] sm:$0xff] %v3954
  %3967 = vst [vmem:[#allocation2 + $0x3b8] sm:$0xff] %v3955
  %v3968 = vmul.f32 %v3908, 0.8
  %v3969 = vmul.f32 %v3909, 0.8
  %v3970 = vmul.f32 %v3910, 0.8
  %v3971 = vmul.f32 %v3911, 0.8
  %v3972 = vmul.f32 %v3912, 0.8
  %v3973 = vmul.f32 %v3913, 0.8
  %v3974 = vmul.f32 %v3914, 0.8
  %v3975 = vmul.f32 %v3915, 0.8
  %v3976 = vmul.f32 %v3916, 0.8
  %v3977 = vmul.f32 %v3917, 0.8
  %v3978 = vmul.f32 %v3918, 0.8
  %v3979 = vmul.f32 %v3919, 0.8
  %v3980 = vadd.f32 %v3968, %v1715
  %v3981 = vadd.f32 %v3969, %v1717
  %v3982 = vadd.f32 %v3970, %v1999
  %v3983 = vadd.f32 %v3971, %v2001
  %v3984 = vadd.f32 %v3972, %v2283
  %v3985 = vadd.f32 %v3973, %v2285
  %v3986 = vadd.f32 %v3974, %v2567
  %v3987 = vadd.f32 %v3975, %v2569
  %v3988 = vadd.f32 %v3976, %v2851
  %v3989 = vadd.f32 %v3977, %v2853
  %v3990 = vadd.f32 %v3978, %v3135
  %v3991 = vadd.f32 %v3979, %v3137
  %v3992 = vsel %vm3920, 0.0, %v3980
  %v3993 = vsel %vm3921, 0.0, %v3981
  %v3994 = vsel %vm3922, 0.0, %v3982
  %v3995 = vsel %vm3923, 0.0, %v3983
  %v3996 = vsel %vm3924, 0.0, %v3984
  %v3997 = vsel %vm3925, 0.0, %v3985
  %v3998 = vsel %vm3926, 0.0, %v3986
  %v3999 = vsel %vm3927, 0.0, %v3987
  %v4000 = vsel %vm3928, 0.0, %v3988
  %v4001 = vsel %vm3929, 0.0, %v3989
  %v4002 = vsel %vm3930, 0.0, %v3990
  %v4003 = vsel %vm3931, 0.0, %v3991
  %vm4004 = vcmp.gt.f32.partialorder %v3992, 1.3
  %vm4005 = vcmp.gt.f32.partialorder %v3993, 1.3
  %vm4006 = vcmp.gt.f32.partialorder %v3994, 1.3
  %vm4007 = vcmp.gt.f32.partialorder %v3995, 1.3
  %vm4008 = vcmp.gt.f32.partialorder %v3996, 1.3
  %vm4009 = vcmp.gt.f32.partialorder %v3997, 1.3
  %vm4010 = vcmp.gt.f32.partialorder %v3998, 1.3
  %vm4011 = vcmp.gt.f32.partialorder %v3999, 1.3
  %vm4012 = vcmp.gt.f32.partialorder %v4000, 1.3
  %vm4013 = vcmp.gt.f32.partialorder %v4001, 1.3
  %vm4014 = vcmp.gt.f32.partialorder %v4002, 1.3
  %vm4015 = vcmp.gt.f32.partialorder %v4003, 1.3
  %v4016 = vsel %vm4004, 1, 0
  %v4017 = vsel %vm4005, 1, 0
  %v4018 = vsel %vm4006, 1, 0
  %v4019 = vsel %vm4007, 1, 0
  %v4020 = vsel %vm4008, 1, 0
  %v4021 = vsel %vm4009, 1, 0
  %v4022 = vsel %vm4010, 1, 0
  %v4023 = vsel %vm4011, 1, 0
  %v4024 = vsel %vm4012, 1, 0
  %v4025 = vsel %vm4013, 1, 0
  %v4026 = vsel %vm4014, 1, 0
  %v4027 = vsel %vm4015, 1, 0
  %v4028 = vcvt.s32.f32 %v4016
  %v4029 = vcvt.s32.f32 %v4017
  %v4030 = vcvt.s32.f32 %v4018
  %v4031 = vcvt.s32.f32 %v4019
  %v4032 = vcvt.s32.f32 %v4020
  %v4033 = vcvt.s32.f32 %v4021
  %v4034 = vcvt.s32.f32 %v4022
  %v4035 = vcvt.s32.f32 %v4023
  %v4036 = vcvt.s32.f32 %v4024
  %v4037 = vcvt.s32.f32 %v4025
  %v4038 = vcvt.s32.f32 %v4026
  %v4039 = vcvt.s32.f32 %v4027
  %4040 = vst [vmem:[#allocation2 + $0x3c0] sm:$0xff] %v4028
  %4041 = vst [vmem:[#allocation2 + $0x3c8] sm:$0xff] %v4029
  %4042 = vst [vmem:[#allocation2 + $0x3d0] sm:$0xff] %v4030
  %4043 = vst [vmem:[#allocation2 + $0x3d8] sm:$0xff] %v4031
  %4044 = vst [vmem:[#allocation2 + $0x3e0] sm:$0xff] %v4032
  %4045 = vst [vmem:[#allocation2 + $0x3e8] sm:$0xff] %v4033
  %4046 = vst [vmem:[#allocation2 + $0x3f0] sm:$0xff] %v4034
  %4047 = vst [vmem:[#allocation2 + $0x3f8] sm:$0xff] %v4035
  %4048 = vst [vmem:[#allocation2 + $0x400] sm:$0xff] %v4036
  %4049 = vst [vmem:[#allocation2 + $0x408] sm:$0xff] %v4037
  %4050 = vst [vmem:[#allocation2 + $0x410] sm:$0xff] %v4038
  %4051 = vst [vmem:[#allocation2 + $0x418] sm:$0xff] %v4039
  %v4052 = vmul.f32 %v3992, 0.8
  %v4053 = vmul.f32 %v3993, 0.8
  %v4054 = vmul.f32 %v3994, 0.8
  %v4055 = vmul.f32 %v3995, 0.8
  %v4056 = vmul.f32 %v3996, 0.8
  %v4057 = vmul.f32 %v3997, 0.8
  %v4058 = vmul.f32 %v3998, 0.8
  %v4059 = vmul.f32 %v3999, 0.8
  %v4060 = vmul.f32 %v4000, 0.8
  %v4061 = vmul.f32 %v4001, 0.8
  %v4062 = vmul.f32 %v4002, 0.8
  %v4063 = vmul.f32 %v4003, 0.8
  %v4064 = vadd.f32 %v4052, %v1715
  %v4065 = vadd.f32 %v4053, %v1717
  %v4066 = vadd.f32 %v4054, %v1999
  %v4067 = vadd.f32 %v4055, %v2001
  %v4068 = vadd.f32 %v4056, %v2283
  %v4069 = vadd.f32 %v4057, %v2285
  %v4070 = vadd.f32 %v4058, %v2567
  %v4071 = vadd.f32 %v4059, %v2569
  %v4072 = vadd.f32 %v4060, %v2851
  %v4073 = vadd.f32 %v4061, %v2853
  %v4074 = vadd.f32 %v4062, %v3135
  %v4075 = vadd.f32 %v4063, %v3137
  %v4076 = vsel %vm4004, 0.0, %v4064
  %v4077 = vsel %vm4005, 0.0, %v4065
  %v4078 = vsel %vm4006, 0.0, %v4066
  %v4079 = vsel %vm4007, 0.0, %v4067
  %v4080 = vsel %vm4008, 0.0, %v4068
  %v4081 = vsel %vm4009, 0.0, %v4069
  %v4082 = vsel %vm4010, 0.0, %v4070
  %v4083 = vsel %vm4011, 0.0, %v4071
  %v4084 = vsel %vm4012, 0.0, %v4072
  %v4085 = vsel %vm4013, 0.0, %v4073
  %v4086 = vsel %vm4014, 0.0, %v4074
  %v4087 = vsel %vm4015, 0.0, %v4075
  %vm4088 = vcmp.gt.f32.partialorder %v4076, 1.3
  %vm4089 = vcmp.gt.f32.partialorder %v4077, 1.3
  %vm4090 = vcmp.gt.f32.partialorder %v4078, 1.3
  %vm4091 = vcmp.gt.f32.partialorder %v4079, 1.3
  %vm4092 = vcmp.gt.f32.partialorder %v4080, 1.3
  %vm4093 = vcmp.gt.f32.partialorder %v4081, 1.3
  %vm4094 = vcmp.gt.f32.partialorder %v4082, 1.3
  %vm4095 = vcmp.gt.f32.partialorder %v4083, 1.3
  %vm4096 = vcmp.gt.f32.partialorder %v4084, 1.3
  %vm4097 = vcmp.gt.f32.partialorder %v4085, 1.3
  %vm4098 = vcmp.gt.f32.partialorder %v4086, 1.3
  %vm4099 = vcmp.gt.f32.partialorder %v4087, 1.3
  %v4100 = vsel %vm4088, 1, 0
  %v4101 = vsel %vm4089, 1, 0
  %v4102 = vsel %vm4090, 1, 0
  %v4103 = vsel %vm4091, 1, 0
  %v4104 = vsel %vm4092, 1, 0
  %v4105 = vsel %vm4093, 1, 0
  %v4106 = vsel %vm4094, 1, 0
  %v4107 = vsel %vm4095, 1, 0
  %v4108 = vsel %vm4096, 1, 0
  %v4109 = vsel %vm4097, 1, 0
  %v4110 = vsel %vm4098, 1, 0
  %v4111 = vsel %vm4099, 1, 0
  %v4112 = vcvt.s32.f32 %v4100
  %v4113 = vcvt.s32.f32 %v4101
  %v4114 = vcvt.s32.f32 %v4102
  %v4115 = vcvt.s32.f32 %v4103
  %v4116 = vcvt.s32.f32 %v4104
  %v4117 = vcvt.s32.f32 %v4105
  %v4118 = vcvt.s32.f32 %v4106
  %v4119 = vcvt.s32.f32 %v4107
  %v4120 = vcvt.s32.f32 %v4108
  %v4121 = vcvt.s32.f32 %v4109
  %v4122 = vcvt.s32.f32 %v4110
  %v4123 = vcvt.s32.f32 %v4111
  %4124 = vst [vmem:[#allocation2 + $0x420] sm:$0xff] %v4112
  %4125 = vst [vmem:[#allocation2 + $0x428] sm:$0xff] %v4113
  %4126 = vst [vmem:[#allocation2 + $0x430] sm:$0xff] %v4114
  %4127 = vst [vmem:[#allocation2 + $0x438] sm:$0xff] %v4115
  %4128 = vst [vmem:[#allocation2 + $0x440] sm:$0xff] %v4116
  %4129 = vst [vmem:[#allocation2 + $0x448] sm:$0xff] %v4117
  %4130 = vst [vmem:[#allocation2 + $0x450] sm:$0xff] %v4118
  %4131 = vst [vmem:[#allocation2 + $0x458] sm:$0xff] %v4119
  %4132 = vst [vmem:[#allocation2 + $0x460] sm:$0xff] %v4120
  %4133 = vst [vmem:[#allocation2 + $0x468] sm:$0xff] %v4121
  %4134 = vst [vmem:[#allocation2 + $0x470] sm:$0xff] %v4122
  %4135 = vst [vmem:[#allocation2 + $0x478] sm:$0xff] %v4123
  %v4136 = vmul.f32 %v4076, 0.8
  %v4137 = vmul.f32 %v4077, 0.8
  %v4138 = vmul.f32 %v4078, 0.8
  %v4139 = vmul.f32 %v4079, 0.8
  %v4140 = vmul.f32 %v4080, 0.8
  %v4141 = vmul.f32 %v4081, 0.8
  %v4142 = vmul.f32 %v4082, 0.8
  %v4143 = vmul.f32 %v4083, 0.8
  %v4144 = vmul.f32 %v4084, 0.8
  %v4145 = vmul.f32 %v4085, 0.8
  %v4146 = vmul.f32 %v4086, 0.8
  %v4147 = vmul.f32 %v4087, 0.8
  %v4148 = vadd.f32 %v4136, %v1715
  %v4149 = vadd.f32 %v4137, %v1717
  %v4150 = vadd.f32 %v4138, %v1999
  %v4151 = vadd.f32 %v4139, %v2001
  %v4152 = vadd.f32 %v4140, %v2283
  %v4153 = vadd.f32 %v4141, %v2285
  %v4154 = vadd.f32 %v4142, %v2567
  %v4155 = vadd.f32 %v4143, %v2569
  %v4156 = vadd.f32 %v4144, %v2851
  %v4157 = vadd.f32 %v4145, %v2853
  %v4158 = vadd.f32 %v4146, %v3135
  %v4159 = vadd.f32 %v4147, %v3137
  %v4160 = vsel %vm4088, 0.0, %v4148
  %v4161 = vsel %vm4089, 0.0, %v4149
  %v4162 = vsel %vm4090, 0.0, %v4150
  %v4163 = vsel %vm4091, 0.0, %v4151
  %v4164 = vsel %vm4092, 0.0, %v4152
  %v4165 = vsel %vm4093, 0.0, %v4153
  %v4166 = vsel %vm4094, 0.0, %v4154
  %v4167 = vsel %vm4095, 0.0, %v4155
  %v4168 = vsel %vm4096, 0.0, %v4156
  %v4169 = vsel %vm4097, 0.0, %v4157
  %v4170 = vsel %vm4098, 0.0, %v4158
  %v4171 = vsel %vm4099, 0.0, %v4159
  %vm4172 = vcmp.gt.f32.partialorder %v4160, 1.3
  %vm4173 = vcmp.gt.f32.partialorder %v4161, 1.3
  %vm4174 = vcmp.gt.f32.partialorder %v4162, 1.3
  %vm4175 = vcmp.gt.f32.partialorder %v4163, 1.3
  %vm4176 = vcmp.gt.f32.partialorder %v4164, 1.3
  %vm4177 = vcmp.gt.f32.partialorder %v4165, 1.3
  %vm4178 = vcmp.gt.f32.partialorder %v4166, 1.3
  %vm4179 = vcmp.gt.f32.partialorder %v4167, 1.3
  %vm4180 = vcmp.gt.f32.partialorder %v4168, 1.3
  %vm4181 = vcmp.gt.f32.partialorder %v4169, 1.3
  %vm4182 = vcmp.gt.f32.partialorder %v4170, 1.3
  %vm4183 = vcmp.gt.f32.partialorder %v4171, 1.3
  %v4184 = vsel %vm4172, 1, 0
  %v4185 = vsel %vm4173, 1, 0
  %v4186 = vsel %vm4174, 1, 0
  %v4187 = vsel %vm4175, 1, 0
  %v4188 = vsel %vm4176, 1, 0
  %v4189 = vsel %vm4177, 1, 0
  %v4190 = vsel %vm4178, 1, 0
  %v4191 = vsel %vm4179, 1, 0
  %v4192 = vsel %vm4180, 1, 0
  %v4193 = vsel %vm4181, 1, 0
  %v4194 = vsel %vm4182, 1, 0
  %v4195 = vsel %vm4183, 1, 0
  %v4196 = vcvt.s32.f32 %v4184
  %v4197 = vcvt.s32.f32 %v4185
  %v4198 = vcvt.s32.f32 %v4186
  %v4199 = vcvt.s32.f32 %v4187
  %v4200 = vcvt.s32.f32 %v4188
  %v4201 = vcvt.s32.f32 %v4189
  %v4202 = vcvt.s32.f32 %v4190
  %v4203 = vcvt.s32.f32 %v4191
  %v4204 = vcvt.s32.f32 %v4192
  %v4205 = vcvt.s32.f32 %v4193
  %v4206 = vcvt.s32.f32 %v4194
  %v4207 = vcvt.s32.f32 %v4195
  %4208 = vst [vmem:[#allocation2 + $0x480] sm:$0xff] %v4196
  %4209 = vst [vmem:[#allocation2 + $0x488] sm:$0xff] %v4197
  %4210 = vst [vmem:[#allocation2 + $0x490] sm:$0xff] %v4198
  %4211 = vst [vmem:[#allocation2 + $0x498] sm:$0xff] %v4199
  %4212 = vst [vmem:[#allocation2 + $0x4a0] sm:$0xff] %v4200
  %4213 = vst [vmem:[#allocation2 + $0x4a8] sm:$0xff] %v4201
  %4214 = vst [vmem:[#allocation2 + $0x4b0] sm:$0xff] %v4202
  %4215 = vst [vmem:[#allocation2 + $0x4b8] sm:$0xff] %v4203
  %4216 = vst [vmem:[#allocation2 + $0x4c0] sm:$0xff] %v4204
  %4217 = vst [vmem:[#allocation2 + $0x4c8] sm:$0xff] %v4205
  %4218 = vst [vmem:[#allocation2 + $0x4d0] sm:$0xff] %v4206
  %4219 = vst [vmem:[#allocation2 + $0x4d8] sm:$0xff] %v4207
  %v4220 = vmul.f32 %v4160, 0.8
  %v4221 = vmul.f32 %v4161, 0.8
  %v4222 = vmul.f32 %v4162, 0.8
  %v4223 = vmul.f32 %v4163, 0.8
  %v4224 = vmul.f32 %v4164, 0.8
  %v4225 = vmul.f32 %v4165, 0.8
  %v4226 = vmul.f32 %v4166, 0.8
  %v4227 = vmul.f32 %v4167, 0.8
  %v4228 = vmul.f32 %v4168, 0.8
  %v4229 = vmul.f32 %v4169, 0.8
  %v4230 = vmul.f32 %v4170, 0.8
  %v4231 = vmul.f32 %v4171, 0.8
  %v4232 = vadd.f32 %v4220, %v1715
  %v4233 = vadd.f32 %v4221, %v1717
  %v4234 = vadd.f32 %v4222, %v1999
  %v4235 = vadd.f32 %v4223, %v2001
  %v4236 = vadd.f32 %v4224, %v2283
  %v4237 = vadd.f32 %v4225, %v2285
  %v4238 = vadd.f32 %v4226, %v2567
  %v4239 = vadd.f32 %v4227, %v2569
  %v4240 = vadd.f32 %v4228, %v2851
  %v4241 = vadd.f32 %v4229, %v2853
  %v4242 = vadd.f32 %v4230, %v3135
  %v4243 = vadd.f32 %v4231, %v3137
  %v4244 = vsel %vm4172, 0.0, %v4232
  %v4245 = vsel %vm4173, 0.0, %v4233
  %v4246 = vsel %vm4174, 0.0, %v4234
  %v4247 = vsel %vm4175, 0.0, %v4235
  %v4248 = vsel %vm4176, 0.0, %v4236
  %v4249 = vsel %vm4177, 0.0, %v4237
  %v4250 = vsel %vm4178, 0.0, %v4238
  %v4251 = vsel %vm4179, 0.0, %v4239
  %v4252 = vsel %vm4180, 0.0, %v4240
  %v4253 = vsel %vm4181, 0.0, %v4241
  %v4254 = vsel %vm4182, 0.0, %v4242
  %v4255 = vsel %vm4183, 0.0, %v4243
  %vm4256 = vcmp.gt.f32.partialorder %v4244, 1.3
  %vm4257 = vcmp.gt.f32.partialorder %v4245, 1.3
  %vm4258 = vcmp.gt.f32.partialorder %v4246, 1.3
  %vm4259 = vcmp.gt.f32.partialorder %v4247, 1.3
  %vm4260 = vcmp.gt.f32.partialorder %v4248, 1.3
  %vm4261 = vcmp.gt.f32.partialorder %v4249, 1.3
  %vm4262 = vcmp.gt.f32.partialorder %v4250, 1.3
  %vm4263 = vcmp.gt.f32.partialorder %v4251, 1.3
  %vm4264 = vcmp.gt.f32.partialorder %v4252, 1.3
  %vm4265 = vcmp.gt.f32.partialorder %v4253, 1.3
  %vm4266 = vcmp.gt.f32.partialorder %v4254, 1.3
  %vm4267 = vcmp.gt.f32.partialorder %v4255, 1.3
  %v4268 = vsel %vm4256, 1, 0
  %v4269 = vsel %vm4257, 1, 0
  %v4270 = vsel %vm4258, 1, 0
  %v4271 = vsel %vm4259, 1, 0
  %v4272 = vsel %vm4260, 1, 0
  %v4273 = vsel %vm4261, 1, 0
  %v4274 = vsel %vm4262, 1, 0
  %v4275 = vsel %vm4263, 1, 0
  %v4276 = vsel %vm4264, 1, 0
  %v4277 = vsel %vm4265, 1, 0
  %v4278 = vsel %vm4266, 1, 0
  %v4279 = vsel %vm4267, 1, 0
  %v4280 = vcvt.s32.f32 %v4268
  %v4281 = vcvt.s32.f32 %v4269
  %v4282 = vcvt.s32.f32 %v4270
  %v4283 = vcvt.s32.f32 %v4271
  %v4284 = vcvt.s32.f32 %v4272
  %v4285 = vcvt.s32.f32 %v4273
  %v4286 = vcvt.s32.f32 %v4274
  %v4287 = vcvt.s32.f32 %v4275
  %v4288 = vcvt.s32.f32 %v4276
  %v4289 = vcvt.s32.f32 %v4277
  %v4290 = vcvt.s32.f32 %v4278
  %v4291 = vcvt.s32.f32 %v4279
  %4292 = vst [vmem:[#allocation2 + $0x4e0] sm:$0xff] %v4280
  %4293 = vst [vmem:[#allocation2 + $0x4e8] sm:$0xff] %v4281
  %4294 = vst [vmem:[#allocation2 + $0x4f0] sm:$0xff] %v4282
  %4295 = vst [vmem:[#allocation2 + $0x4f8] sm:$0xff] %v4283
  %4296 = vst [vmem:[#allocation2 + $0x500] sm:$0xff] %v4284
  %4297 = vst [vmem:[#allocation2 + $0x508] sm:$0xff] %v4285
  %4298 = vst [vmem:[#allocation2 + $0x510] sm:$0xff] %v4286
  %4299 = vst [vmem:[#allocation2 + $0x518] sm:$0xff] %v4287
  %4300 = vst [vmem:[#allocation2 + $0x520] sm:$0xff] %v4288
  %4301 = vst [vmem:[#allocation2 + $0x528] sm:$0xff] %v4289
  %4302 = vst [vmem:[#allocation2 + $0x530] sm:$0xff] %v4290
  %4303 = vst [vmem:[#allocation2 + $0x538] sm:$0xff] %v4291
  %v4304 = vmul.f32 %v4244, 0.8
  %v4305 = vmul.f32 %v4245, 0.8
  %v4306 = vmul.f32 %v4246, 0.8
  %v4307 = vmul.f32 %v4247, 0.8
  %v4308 = vmul.f32 %v4248, 0.8
  %v4309 = vmul.f32 %v4249, 0.8
  %v4310 = vmul.f32 %v4250, 0.8
  %v4311 = vmul.f32 %v4251, 0.8
  %v4312 = vmul.f32 %v4252, 0.8
  %v4313 = vmul.f32 %v4253, 0.8
  %v4314 = vmul.f32 %v4254, 0.8
  %v4315 = vmul.f32 %v4255, 0.8
  %v4316 = vadd.f32 %v4304, %v1715
  %v4317 = vadd.f32 %v4305, %v1717
  %v4318 = vadd.f32 %v4306, %v1999
  %v4319 = vadd.f32 %v4307, %v2001
  %v4320 = vadd.f32 %v4308, %v2283
  %v4321 = vadd.f32 %v4309, %v2285
  %v4322 = vadd.f32 %v4310, %v2567
  %v4323 = vadd.f32 %v4311, %v2569
  %v4324 = vadd.f32 %v4312, %v2851
  %v4325 = vadd.f32 %v4313, %v2853
  %v4326 = vadd.f32 %v4314, %v3135
  %v4327 = vadd.f32 %v4315, %v3137
  %v4328 = vsel %vm4256, 0.0, %v4316
  %v4329 = vsel %vm4257, 0.0, %v4317
  %v4330 = vsel %vm4258, 0.0, %v4318
  %v4331 = vsel %vm4259, 0.0, %v4319
  %v4332 = vsel %vm4260, 0.0, %v4320
  %v4333 = vsel %vm4261, 0.0, %v4321
  %v4334 = vsel %vm4262, 0.0, %v4322
  %v4335 = vsel %vm4263, 0.0, %v4323
  %v4336 = vsel %vm4264, 0.0, %v4324
  %v4337 = vsel %vm4265, 0.0, %v4325
  %v4338 = vsel %vm4266, 0.0, %v4326
  %v4339 = vsel %vm4267, 0.0, %v4327
  %vm4340 = vcmp.gt.f32.partialorder %v4328, 1.3
  %vm4341 = vcmp.gt.f32.partialorder %v4329, 1.3
  %vm4342 = vcmp.gt.f32.partialorder %v4330, 1.3
  %vm4343 = vcmp.gt.f32.partialorder %v4331, 1.3
  %vm4344 = vcmp.gt.f32.partialorder %v4332, 1.3
  %vm4345 = vcmp.gt.f32.partialorder %v4333, 1.3
  %vm4346 = vcmp.gt.f32.partialorder %v4334, 1.3
  %vm4347 = vcmp.gt.f32.partialorder %v4335, 1.3
  %vm4348 = vcmp.gt.f32.partialorder %v4336, 1.3
  %vm4349 = vcmp.gt.f32.partialorder %v4337, 1.3
  %vm4350 = vcmp.gt.f32.partialorder %v4338, 1.3
  %vm4351 = vcmp.gt.f32.partialorder %v4339, 1.3
  %v4352 = vsel %vm4340, 1, 0
  %v4353 = vsel %vm4341, 1, 0
  %v4354 = vsel %vm4342, 1, 0
  %v4355 = vsel %vm4343, 1, 0
  %v4356 = vsel %vm4344, 1, 0
  %v4357 = vsel %vm4345, 1, 0
  %v4358 = vsel %vm4346, 1, 0
  %v4359 = vsel %vm4347, 1, 0
  %v4360 = vsel %vm4348, 1, 0
  %v4361 = vsel %vm4349, 1, 0
  %v4362 = vsel %vm4350, 1, 0
  %v4363 = vsel %vm4351, 1, 0
  %v4364 = vcvt.s32.f32 %v4352
  %v4365 = vcvt.s32.f32 %v4353
  %v4366 = vcvt.s32.f32 %v4354
  %v4367 = vcvt.s32.f32 %v4355
  %v4368 = vcvt.s32.f32 %v4356
  %v4369 = vcvt.s32.f32 %v4357
  %v4370 = vcvt.s32.f32 %v4358
  %v4371 = vcvt.s32.f32 %v4359
  %v4372 = vcvt.s32.f32 %v4360
  %v4373 = vcvt.s32.f32 %v4361
  %v4374 = vcvt.s32.f32 %v4362
  %v4375 = vcvt.s32.f32 %v4363
  %4376 = vst [vmem:[#allocation2 + $0x540] sm:$0xff] %v4364
  %4377 = vst [vmem:[#allocation2 + $0x548] sm:$0xff] %v4365
  %4378 = vst [vmem:[#allocation2 + $0x550] sm:$0xff] %v4366
  %4379 = vst [vmem:[#allocation2 + $0x558] sm:$0xff] %v4367
  %4380 = vst [vmem:[#allocation2 + $0x560] sm:$0xff] %v4368
  %4381 = vst [vmem:[#allocation2 + $0x568] sm:$0xff] %v4369
  %4382 = vst [vmem:[#allocation2 + $0x570] sm:$0xff] %v4370
  %4383 = vst [vmem:[#allocation2 + $0x578] sm:$0xff] %v4371
  %4384 = vst [vmem:[#allocation2 + $0x580] sm:$0xff] %v4372
  %4385 = vst [vmem:[#allocation2 + $0x588] sm:$0xff] %v4373
  %4386 = vst [vmem:[#allocation2 + $0x590] sm:$0xff] %v4374
  %4387 = vst [vmem:[#allocation2 + $0x598] sm:$0xff] %v4375
  %v4388 = vmul.f32 %v4328, 0.8
  %v4389 = vmul.f32 %v4329, 0.8
  %v4390 = vmul.f32 %v4330, 0.8
  %v4391 = vmul.f32 %v4331, 0.8
  %v4392 = vmul.f32 %v4332, 0.8
  %v4393 = vmul.f32 %v4333, 0.8
  %v4394 = vmul.f32 %v4334, 0.8
  %v4395 = vmul.f32 %v4335, 0.8
  %v4396 = vmul.f32 %v4336, 0.8
  %v4397 = vmul.f32 %v4337, 0.8
  %v4398 = vmul.f32 %v4338, 0.8
  %v4399 = vmul.f32 %v4339, 0.8
  %v4400 = vadd.f32 %v4388, %v1715
  %v4401 = vadd.f32 %v4389, %v1717
  %v4402 = vadd.f32 %v4390, %v1999
  %v4403 = vadd.f32 %v4391, %v2001
  %v4404 = vadd.f32 %v4392, %v2283
  %v4405 = vadd.f32 %v4393, %v2285
  %v4406 = vadd.f32 %v4394, %v2567
  %v4407 = vadd.f32 %v4395, %v2569
  %v4408 = vadd.f32 %v4396, %v2851
  %v4409 = vadd.f32 %v4397, %v2853
  %v4410 = vadd.f32 %v4398, %v3135
  %v4411 = vadd.f32 %v4399, %v3137
  %v4412 = vsel %vm4340, 0.0, %v4400
  %v4413 = vsel %vm4341, 0.0, %v4401
  %v4414 = vsel %vm4342, 0.0, %v4402
  %v4415 = vsel %vm4343, 0.0, %v4403
  %v4416 = vsel %vm4344, 0.0, %v4404
  %v4417 = vsel %vm4345, 0.0, %v4405
  %v4418 = vsel %vm4346, 0.0, %v4406
  %v4419 = vsel %vm4347, 0.0, %v4407
  %v4420 = vsel %vm4348, 0.0, %v4408
  %v4421 = vsel %vm4349, 0.0, %v4409
  %v4422 = vsel %vm4350, 0.0, %v4410
  %v4423 = vsel %vm4351, 0.0, %v4411
  %vm4424 = vcmp.gt.f32.partialorder %v4412, 1.3
  %vm4425 = vcmp.gt.f32.partialorder %v4413, 1.3
  %vm4426 = vcmp.gt.f32.partialorder %v4414, 1.3
  %vm4427 = vcmp.gt.f32.partialorder %v4415, 1.3
  %vm4428 = vcmp.gt.f32.partialorder %v4416, 1.3
  %vm4429 = vcmp.gt.f32.partialorder %v4417, 1.3
  %vm4430 = vcmp.gt.f32.partialorder %v4418, 1.3
  %vm4431 = vcmp.gt.f32.partialorder %v4419, 1.3
  %vm4432 = vcmp.gt.f32.partialorder %v4420, 1.3
  %vm4433 = vcmp.gt.f32.partialorder %v4421, 1.3
  %vm4434 = vcmp.gt.f32.partialorder %v4422, 1.3
  %vm4435 = vcmp.gt.f32.partialorder %v4423, 1.3
  %v4436 = vsel %vm4424, 1, 0
  %v4437 = vsel %vm4425, 1, 0
  %v4438 = vsel %vm4426, 1, 0
  %v4439 = vsel %vm4427, 1, 0
  %v4440 = vsel %vm4428, 1, 0
  %v4441 = vsel %vm4429, 1, 0
  %v4442 = vsel %vm4430, 1, 0
  %v4443 = vsel %vm4431, 1, 0
  %v4444 = vsel %vm4432, 1, 0
  %v4445 = vsel %vm4433, 1, 0
  %v4446 = vsel %vm4434, 1, 0
  %v4447 = vsel %vm4435, 1, 0
  %v4448 = vcvt.s32.f32 %v4436
  %v4449 = vcvt.s32.f32 %v4437
  %v4450 = vcvt.s32.f32 %v4438
  %v4451 = vcvt.s32.f32 %v4439
  %v4452 = vcvt.s32.f32 %v4440
  %v4453 = vcvt.s32.f32 %v4441
  %v4454 = vcvt.s32.f32 %v4442
  %v4455 = vcvt.s32.f32 %v4443
  %v4456 = vcvt.s32.f32 %v4444
  %v4457 = vcvt.s32.f32 %v4445
  %v4458 = vcvt.s32.f32 %v4446
  %v4459 = vcvt.s32.f32 %v4447
  %4460 = vst [vmem:[#allocation2 + $0x5a0] sm:$0xff] %v4448
  %4461 = vst [vmem:[#allocation2 + $0x5a8] sm:$0xff] %v4449
  %4462 = vst [vmem:[#allocation2 + $0x5b0] sm:$0xff] %v4450
  %4463 = vst [vmem:[#allocation2 + $0x5b8] sm:$0xff] %v4451
  %4464 = vst [vmem:[#allocation2 + $0x5c0] sm:$0xff] %v4452
  %4465 = vst [vmem:[#allocation2 + $0x5c8] sm:$0xff] %v4453
  %4466 = vst [vmem:[#allocation2 + $0x5d0] sm:$0xff] %v4454
  %4467 = vst [vmem:[#allocation2 + $0x5d8] sm:$0xff] %v4455
  %4468 = vst [vmem:[#allocation2 + $0x5e0] sm:$0xff] %v4456
  %4469 = vst [vmem:[#allocation2 + $0x5e8] sm:$0xff] %v4457
  %4470 = vst [vmem:[#allocation2 + $0x5f0] sm:$0xff] %v4458
  %4471 = vst [vmem:[#allocation2 + $0x5f8] sm:$0xff] %v4459
  %v4472 = vmul.f32 %v4412, 0.8
  %v4473 = vmul.f32 %v4413, 0.8
  %v4474 = vmul.f32 %v4414, 0.8
  %v4475 = vmul.f32 %v4415, 0.8
  %v4476 = vmul.f32 %v4416, 0.8
  %v4477 = vmul.f32 %v4417, 0.8
  %v4478 = vmul.f32 %v4418, 0.8
  %v4479 = vmul.f32 %v4419, 0.8
  %v4480 = vmul.f32 %v4420, 0.8
  %v4481 = vmul.f32 %v4421, 0.8
  %v4482 = vmul.f32 %v4422, 0.8
  %v4483 = vmul.f32 %v4423, 0.8
  %v4484 = vadd.f32 %v4472, %v1715
  %v4485 = vadd.f32 %v4473, %v1717
  %v4486 = vadd.f32 %v4474, %v1999
  %v4487 = vadd.f32 %v4475, %v2001
  %v4488 = vadd.f32 %v4476, %v2283
  %v4489 = vadd.f32 %v4477, %v2285
  %v4490 = vadd.f32 %v4478, %v2567
  %v4491 = vadd.f32 %v4479, %v2569
  %v4492 = vadd.f32 %v4480, %v2851
  %v4493 = vadd.f32 %v4481, %v2853
  %v4494 = vadd.f32 %v4482, %v3135
  %v4495 = vadd.f32 %v4483, %v3137
  %v4496 = vsel %vm4424, 0.0, %v4484
  %v4497 = vsel %vm4425, 0.0, %v4485
  %v4498 = vsel %vm4426, 0.0, %v4486
  %v4499 = vsel %vm4427, 0.0, %v4487
  %v4500 = vsel %vm4428, 0.0, %v4488
  %v4501 = vsel %vm4429, 0.0, %v4489
  %v4502 = vsel %vm4430, 0.0, %v4490
  %v4503 = vsel %vm4431, 0.0, %v4491
  %v4504 = vsel %vm4432, 0.0, %v4492
  %v4505 = vsel %vm4433, 0.0, %v4493
  %v4506 = vsel %vm4434, 0.0, %v4494
  %v4507 = vsel %vm4435, 0.0, %v4495
  %vm4508 = vcmp.gt.f32.partialorder %v4496, 1.3
  %vm4509 = vcmp.gt.f32.partialorder %v4497, 1.3
  %vm4510 = vcmp.gt.f32.partialorder %v4498, 1.3
  %vm4511 = vcmp.gt.f32.partialorder %v4499, 1.3
  %vm4512 = vcmp.gt.f32.partialorder %v4500, 1.3
  %vm4513 = vcmp.gt.f32.partialorder %v4501, 1.3
  %vm4514 = vcmp.gt.f32.partialorder %v4502, 1.3
  %vm4515 = vcmp.gt.f32.partialorder %v4503, 1.3
  %vm4516 = vcmp.gt.f32.partialorder %v4504, 1.3
  %vm4517 = vcmp.gt.f32.partialorder %v4505, 1.3
  %vm4518 = vcmp.gt.f32.partialorder %v4506, 1.3
  %vm4519 = vcmp.gt.f32.partialorder %v4507, 1.3
  %v4520 = vsel %vm4508, 1, 0
  %v4521 = vsel %vm4509, 1, 0
  %v4522 = vsel %vm4510, 1, 0
  %v4523 = vsel %vm4511, 1, 0
  %v4524 = vsel %vm4512, 1, 0
  %v4525 = vsel %vm4513, 1, 0
  %v4526 = vsel %vm4514, 1, 0
  %v4527 = vsel %vm4515, 1, 0
  %v4528 = vsel %vm4516, 1, 0
  %v4529 = vsel %vm4517, 1, 0
  %v4530 = vsel %vm4518, 1, 0
  %v4531 = vsel %vm4519, 1, 0
  %v4532 = vcvt.s32.f32 %v4520
  %v4533 = vcvt.s32.f32 %v4521
  %v4534 = vcvt.s32.f32 %v4522
  %v4535 = vcvt.s32.f32 %v4523
  %v4536 = vcvt.s32.f32 %v4524
  %v4537 = vcvt.s32.f32 %v4525
  %v4538 = vcvt.s32.f32 %v4526
  %v4539 = vcvt.s32.f32 %v4527
  %v4540 = vcvt.s32.f32 %v4528
  %v4541 = vcvt.s32.f32 %v4529
  %v4542 = vcvt.s32.f32 %v4530
  %v4543 = vcvt.s32.f32 %v4531
  %4544 = vst [vmem:[#allocation2 + $0x600] sm:$0xff] %v4532
  %4545 = vst [vmem:[#allocation2 + $0x608] sm:$0xff] %v4533
  %4546 = vst [vmem:[#allocation2 + $0x610] sm:$0xff] %v4534
  %4547 = vst [vmem:[#allocation2 + $0x618] sm:$0xff] %v4535
  %4548 = vst [vmem:[#allocation2 + $0x620] sm:$0xff] %v4536
  %4549 = vst [vmem:[#allocation2 + $0x628] sm:$0xff] %v4537
  %4550 = vst [vmem:[#allocation2 + $0x630] sm:$0xff] %v4538
  %4551 = vst [vmem:[#allocation2 + $0x638] sm:$0xff] %v4539
  %4552 = vst [vmem:[#allocation2 + $0x640] sm:$0xff] %v4540
  %4553 = vst [vmem:[#allocation2 + $0x648] sm:$0xff] %v4541
  %4554 = vst [vmem:[#allocation2 + $0x650] sm:$0xff] %v4542
  %4555 = vst [vmem:[#allocation2 + $0x658] sm:$0xff] %v4543
  %v4556 = vmul.f32 %v4496, 0.8
  %v4557 = vmul.f32 %v4497, 0.8
  %v4558 = vmul.f32 %v4498, 0.8
  %v4559 = vmul.f32 %v4499, 0.8
  %v4560 = vmul.f32 %v4500, 0.8
  %v4561 = vmul.f32 %v4501, 0.8
  %v4562 = vmul.f32 %v4502, 0.8
  %v4563 = vmul.f32 %v4503, 0.8
  %v4564 = vmul.f32 %v4504, 0.8
  %v4565 = vmul.f32 %v4505, 0.8
  %v4566 = vmul.f32 %v4506, 0.8
  %v4567 = vmul.f32 %v4507, 0.8
  %v4568 = vadd.f32 %v4556, %v1715
  %v4569 = vadd.f32 %v4557, %v1717
  %v4570 = vadd.f32 %v4558, %v1999
  %v4571 = vadd.f32 %v4559, %v2001
  %v4572 = vadd.f32 %v4560, %v2283
  %v4573 = vadd.f32 %v4561, %v2285
  %v4574 = vadd.f32 %v4562, %v2567
  %v4575 = vadd.f32 %v4563, %v2569
  %v4576 = vadd.f32 %v4564, %v2851
  %v4577 = vadd.f32 %v4565, %v2853
  %v4578 = vadd.f32 %v4566, %v3135
  %v4579 = vadd.f32 %v4567, %v3137
  %v4580 = vsel %vm4508, 0.0, %v4568
  %v4581 = vsel %vm4509, 0.0, %v4569
  %v4582 = vsel %vm4510, 0.0, %v4570
  %v4583 = vsel %vm4511, 0.0, %v4571
  %v4584 = vsel %vm4512, 0.0, %v4572
  %v4585 = vsel %vm4513, 0.0, %v4573
  %v4586 = vsel %vm4514, 0.0, %v4574
  %v4587 = vsel %vm4515, 0.0, %v4575
  %v4588 = vsel %vm4516, 0.0, %v4576
  %v4589 = vsel %vm4517, 0.0, %v4577
  %v4590 = vsel %vm4518, 0.0, %v4578
  %v4591 = vsel %vm4519, 0.0, %v4579
  %vm4592 = vcmp.gt.f32.partialorder %v4580, 1.3
  %vm4593 = vcmp.gt.f32.partialorder %v4581, 1.3
  %vm4594 = vcmp.gt.f32.partialorder %v4582, 1.3
  %vm4595 = vcmp.gt.f32.partialorder %v4583, 1.3
  %vm4596 = vcmp.gt.f32.partialorder %v4584, 1.3
  %vm4597 = vcmp.gt.f32.partialorder %v4585, 1.3
  %vm4598 = vcmp.gt.f32.partialorder %v4586, 1.3
  %vm4599 = vcmp.gt.f32.partialorder %v4587, 1.3
  %vm4600 = vcmp.gt.f32.partialorder %v4588, 1.3
  %vm4601 = vcmp.gt.f32.partialorder %v4589, 1.3
  %vm4602 = vcmp.gt.f32.partialorder %v4590, 1.3
  %vm4603 = vcmp.gt.f32.partialorder %v4591, 1.3
  %v4604 = vsel %vm4592, 1, 0
  %v4605 = vsel %vm4593, 1, 0
  %v4606 = vsel %vm4594, 1, 0
  %v4607 = vsel %vm4595, 1, 0
  %v4608 = vsel %vm4596, 1, 0
  %v4609 = vsel %vm4597, 1, 0
  %v4610 = vsel %vm4598, 1, 0
  %v4611 = vsel %vm4599, 1, 0
  %v4612 = vsel %vm4600, 1, 0
  %v4613 = vsel %vm4601, 1, 0
  %v4614 = vsel %vm4602, 1, 0
  %v4615 = vsel %vm4603, 1, 0
  %v4616 = vcvt.s32.f32 %v4604
  %v4617 = vcvt.s32.f32 %v4605
  %v4618 = vcvt.s32.f32 %v4606
  %v4619 = vcvt.s32.f32 %v4607
  %v4620 = vcvt.s32.f32 %v4608
  %v4621 = vcvt.s32.f32 %v4609
  %v4622 = vcvt.s32.f32 %v4610
  %v4623 = vcvt.s32.f32 %v4611
  %v4624 = vcvt.s32.f32 %v4612
  %v4625 = vcvt.s32.f32 %v4613
  %v4626 = vcvt.s32.f32 %v4614
  %v4627 = vcvt.s32.f32 %v4615
  %4628 = vst [vmem:[#allocation2 + $0x660] sm:$0xff] %v4616
  %4629 = vst [vmem:[#allocation2 + $0x668] sm:$0xff] %v4617
  %4630 = vst [vmem:[#allocation2 + $0x670] sm:$0xff] %v4618
  %4631 = vst [vmem:[#allocation2 + $0x678] sm:$0xff] %v4619
  %4632 = vst [vmem:[#allocation2 + $0x680] sm:$0xff] %v4620
  %4633 = vst [vmem:[#allocation2 + $0x688] sm:$0xff] %v4621
  %4634 = vst [vmem:[#allocation2 + $0x690] sm:$0xff] %v4622
  %4635 = vst [vmem:[#allocation2 + $0x698] sm:$0xff] %v4623
  %4636 = vst [vmem:[#allocation2 + $0x6a0] sm:$0xff] %v4624
  %4637 = vst [vmem:[#allocation2 + $0x6a8] sm:$0xff] %v4625
  %4638 = vst [vmem:[#allocation2 + $0x6b0] sm:$0xff] %v4626
  %4639 = vst [vmem:[#allocation2 + $0x6b8] sm:$0xff] %v4627
  %v4640 = vmul.f32 %v4580, 0.8
  %v4641 = vmul.f32 %v4581, 0.8
  %v4642 = vmul.f32 %v4582, 0.8
  %v4643 = vmul.f32 %v4583, 0.8
  %v4644 = vmul.f32 %v4584, 0.8
  %v4645 = vmul.f32 %v4585, 0.8
  %v4646 = vmul.f32 %v4586, 0.8
  %v4647 = vmul.f32 %v4587, 0.8
  %v4648 = vmul.f32 %v4588, 0.8
  %v4649 = vmul.f32 %v4589, 0.8
  %v4650 = vmul.f32 %v4590, 0.8
  %v4651 = vmul.f32 %v4591, 0.8
  %v4652 = vadd.f32 %v4640, %v1715
  %v4653 = vadd.f32 %v4641, %v1717
  %v4654 = vadd.f32 %v4642, %v1999
  %v4655 = vadd.f32 %v4643, %v2001
  %v4656 = vadd.f32 %v4644, %v2283
  %v4657 = vadd.f32 %v4645, %v2285
  %v4658 = vadd.f32 %v4646, %v2567
  %v4659 = vadd.f32 %v4647, %v2569
  %v4660 = vadd.f32 %v4648, %v2851
  %v4661 = vadd.f32 %v4649, %v2853
  %v4662 = vadd.f32 %v4650, %v3135
  %v4663 = vadd.f32 %v4651, %v3137
  %v4664 = vsel %vm4592, 0.0, %v4652
  %v4665 = vsel %vm4593, 0.0, %v4653
  %v4666 = vsel %vm4594, 0.0, %v4654
  %v4667 = vsel %vm4595, 0.0, %v4655
  %v4668 = vsel %vm4596, 0.0, %v4656
  %v4669 = vsel %vm4597, 0.0, %v4657
  %v4670 = vsel %vm4598, 0.0, %v4658
  %v4671 = vsel %vm4599, 0.0, %v4659
  %v4672 = vsel %vm4600, 0.0, %v4660
  %v4673 = vsel %vm4601, 0.0, %v4661
  %v4674 = vsel %vm4602, 0.0, %v4662
  %v4675 = vsel %vm4603, 0.0, %v4663
  %vm4676 = vcmp.gt.f32.partialorder %v4664, 1.3
  %vm4677 = vcmp.gt.f32.partialorder %v4665, 1.3
  %vm4678 = vcmp.gt.f32.partialorder %v4666, 1.3
  %vm4679 = vcmp.gt.f32.partialorder %v4667, 1.3
  %vm4680 = vcmp.gt.f32.partialorder %v4668, 1.3
  %vm4681 = vcmp.gt.f32.partialorder %v4669, 1.3
  %vm4682 = vcmp.gt.f32.partialorder %v4670, 1.3
  %vm4683 = vcmp.gt.f32.partialorder %v4671, 1.3
  %vm4684 = vcmp.gt.f32.partialorder %v4672, 1.3
  %vm4685 = vcmp.gt.f32.partialorder %v4673, 1.3
  %vm4686 = vcmp.gt.f32.partialorder %v4674, 1.3
  %vm4687 = vcmp.gt.f32.partialorder %v4675, 1.3
  %v4688 = vsel %vm4676, 1, 0
  %v4689 = vsel %vm4677, 1, 0
  %v4690 = vsel %vm4678, 1, 0
  %v4691 = vsel %vm4679, 1, 0
  %v4692 = vsel %vm4680, 1, 0
  %v4693 = vsel %vm4681, 1, 0
  %v4694 = vsel %vm4682, 1, 0
  %v4695 = vsel %vm4683, 1, 0
  %v4696 = vsel %vm4684, 1, 0
  %v4697 = vsel %vm4685, 1, 0
  %v4698 = vsel %vm4686, 1, 0
  %v4699 = vsel %vm4687, 1, 0
  %v4700 = vcvt.s32.f32 %v4688
  %v4701 = vcvt.s32.f32 %v4689
  %v4702 = vcvt.s32.f32 %v4690
  %v4703 = vcvt.s32.f32 %v4691
  %v4704 = vcvt.s32.f32 %v4692
  %v4705 = vcvt.s32.f32 %v4693
  %v4706 = vcvt.s32.f32 %v4694
  %v4707 = vcvt.s32.f32 %v4695
  %v4708 = vcvt.s32.f32 %v4696
  %v4709 = vcvt.s32.f32 %v4697
  %v4710 = vcvt.s32.f32 %v4698
  %v4711 = vcvt.s32.f32 %v4699
  %4712 = vst [vmem:[#allocation2 + $0x6c0] sm:$0xff] %v4700
  %4713 = vst [vmem:[#allocation2 + $0x6c8] sm:$0xff] %v4701
  %4714 = vst [vmem:[#allocation2 + $0x6d0] sm:$0xff] %v4702
  %4715 = vst [vmem:[#allocation2 + $0x6d8] sm:$0xff] %v4703
  %4716 = vst [vmem:[#allocation2 + $0x6e0] sm:$0xff] %v4704
  %4717 = vst [vmem:[#allocation2 + $0x6e8] sm:$0xff] %v4705
  %4718 = vst [vmem:[#allocation2 + $0x6f0] sm:$0xff] %v4706
  %4719 = vst [vmem:[#allocation2 + $0x6f8] sm:$0xff] %v4707
  %4720 = vst [vmem:[#allocation2 + $0x700] sm:$0xff] %v4708
  %4721 = vst [vmem:[#allocation2 + $0x708] sm:$0xff] %v4709
  %4722 = vst [vmem:[#allocation2 + $0x710] sm:$0xff] %v4710
  %4723 = vst [vmem:[#allocation2 + $0x718] sm:$0xff] %v4711
  %v4724 = vmul.f32 %v4664, 0.8
  %v4725 = vmul.f32 %v4665, 0.8
  %v4726 = vmul.f32 %v4666, 0.8
  %v4727 = vmul.f32 %v4667, 0.8
  %v4728 = vmul.f32 %v4668, 0.8
  %v4729 = vmul.f32 %v4669, 0.8
  %v4730 = vmul.f32 %v4670, 0.8
  %v4731 = vmul.f32 %v4671, 0.8
  %v4732 = vmul.f32 %v4672, 0.8
  %v4733 = vmul.f32 %v4673, 0.8
  %v4734 = vmul.f32 %v4674, 0.8
  %v4735 = vmul.f32 %v4675, 0.8
  %v4736 = vadd.f32 %v4724, %v1715
  %v4737 = vadd.f32 %v4725, %v1717
  %v4738 = vadd.f32 %v4726, %v1999
  %v4739 = vadd.f32 %v4727, %v2001
  %v4740 = vadd.f32 %v4728, %v2283
  %v4741 = vadd.f32 %v4729, %v2285
  %v4742 = vadd.f32 %v4730, %v2567
  %v4743 = vadd.f32 %v4731, %v2569
  %v4744 = vadd.f32 %v4732, %v2851
  %v4745 = vadd.f32 %v4733, %v2853
  %v4746 = vadd.f32 %v4734, %v3135
  %v4747 = vadd.f32 %v4735, %v3137
  %v4748 = vsel %vm4676, 0.0, %v4736
  %v4749 = vsel %vm4677, 0.0, %v4737
  %v4750 = vsel %vm4678, 0.0, %v4738
  %v4751 = vsel %vm4679, 0.0, %v4739
  %v4752 = vsel %vm4680, 0.0, %v4740
  %v4753 = vsel %vm4681, 0.0, %v4741
  %v4754 = vsel %vm4682, 0.0, %v4742
  %v4755 = vsel %vm4683, 0.0, %v4743
  %v4756 = vsel %vm4684, 0.0, %v4744
  %v4757 = vsel %vm4685, 0.0, %v4745
  %v4758 = vsel %vm4686, 0.0, %v4746
  %v4759 = vsel %vm4687, 0.0, %v4747
  %vm4760 = vcmp.gt.f32.partialorder %v4748, 1.3
  %vm4761 = vcmp.gt.f32.partialorder %v4749, 1.3
  %vm4762 = vcmp.gt.f32.partialorder %v4750, 1.3
  %vm4763 = vcmp.gt.f32.partialorder %v4751, 1.3
  %vm4764 = vcmp.gt.f32.partialorder %v4752, 1.3
  %vm4765 = vcmp.gt.f32.partialorder %v4753, 1.3
  %vm4766 = vcmp.gt.f32.partialorder %v4754, 1.3
  %vm4767 = vcmp.gt.f32.partialorder %v4755, 1.3
  %vm4768 = vcmp.gt.f32.partialorder %v4756, 1.3
  %vm4769 = vcmp.gt.f32.partialorder %v4757, 1.3
  %vm4770 = vcmp.gt.f32.partialorder %v4758, 1.3
  %vm4771 = vcmp.gt.f32.partialorder %v4759, 1.3
  %v4772 = vsel %vm4760, 1, 0
  %v4773 = vsel %vm4761, 1, 0
  %v4774 = vsel %vm4762, 1, 0
  %v4775 = vsel %vm4763, 1, 0
  %v4776 = vsel %vm4764, 1, 0
  %v4777 = vsel %vm4765, 1, 0
  %v4778 = vsel %vm4766, 1, 0
  %v4779 = vsel %vm4767, 1, 0
  %v4780 = vsel %vm4768, 1, 0
  %v4781 = vsel %vm4769, 1, 0
  %v4782 = vsel %vm4770, 1, 0
  %v4783 = vsel %vm4771, 1, 0
  %v4784 = vcvt.s32.f32 %v4772
  %v4785 = vcvt.s32.f32 %v4773
  %v4786 = vcvt.s32.f32 %v4774
  %v4787 = vcvt.s32.f32 %v4775
  %v4788 = vcvt.s32.f32 %v4776
  %v4789 = vcvt.s32.f32 %v4777
  %v4790 = vcvt.s32.f32 %v4778
  %v4791 = vcvt.s32.f32 %v4779
  %v4792 = vcvt.s32.f32 %v4780
  %v4793 = vcvt.s32.f32 %v4781
  %v4794 = vcvt.s32.f32 %v4782
  %v4795 = vcvt.s32.f32 %v4783
  %4796 = vst [vmem:[#allocation2 + $0x720] sm:$0xff] %v4784
  %4797 = vst [vmem:[#allocation2 + $0x728] sm:$0xff] %v4785
  %4798 = vst [vmem:[#allocation2 + $0x730] sm:$0xff] %v4786
  %4799 = vst [vmem:[#allocation2 + $0x738] sm:$0xff] %v4787
  %4800 = vst [vmem:[#allocation2 + $0x740] sm:$0xff] %v4788
  %4801 = vst [vmem:[#allocation2 + $0x748] sm:$0xff] %v4789
  %4802 = vst [vmem:[#allocation2 + $0x750] sm:$0xff] %v4790
  %4803 = vst [vmem:[#allocation2 + $0x758] sm:$0xff] %v4791
  %4804 = vst [vmem:[#allocation2 + $0x760] sm:$0xff] %v4792
  %4805 = vst [vmem:[#allocation2 + $0x768] sm:$0xff] %v4793
  %4806 = vst [vmem:[#allocation2 + $0x770] sm:$0xff] %v4794
  %4807 = vst [vmem:[#allocation2 + $0x778] sm:$0xff] %v4795
  %v4808 = vmul.f32 %v4748, 0.8
  %v4809 = vmul.f32 %v4749, 0.8
  %v4810 = vmul.f32 %v4750, 0.8
  %v4811 = vmul.f32 %v4751, 0.8
  %v4812 = vmul.f32 %v4752, 0.8
  %v4813 = vmul.f32 %v4753, 0.8
  %v4814 = vmul.f32 %v4754, 0.8
  %v4815 = vmul.f32 %v4755, 0.8
  %v4816 = vmul.f32 %v4756, 0.8
  %v4817 = vmul.f32 %v4757, 0.8
  %v4818 = vmul.f32 %v4758, 0.8
  %v4819 = vmul.f32 %v4759, 0.8
  %v4820 = vadd.f32 %v4808, %v1715
  %v4821 = vadd.f32 %v4809, %v1717
  %v4822 = vadd.f32 %v4810, %v1999
  %v4823 = vadd.f32 %v4811, %v2001
  %v4824 = vadd.f32 %v4812, %v2283
  %v4825 = vadd.f32 %v4813, %v2285
  %v4826 = vadd.f32 %v4814, %v2567
  %v4827 = vadd.f32 %v4815, %v2569
  %v4828 = vadd.f32 %v4816, %v2851
  %v4829 = vadd.f32 %v4817, %v2853
  %v4830 = vadd.f32 %v4818, %v3135
  %v4831 = vadd.f32 %v4819, %v3137
  %v4832 = vsel %vm4760, 0.0, %v4820
  %v4833 = vsel %vm4761, 0.0, %v4821
  %v4834 = vsel %vm4762, 0.0, %v4822
  %v4835 = vsel %vm4763, 0.0, %v4823
  %v4836 = vsel %vm4764, 0.0, %v4824
  %v4837 = vsel %vm4765, 0.0, %v4825
  %v4838 = vsel %vm4766, 0.0, %v4826
  %v4839 = vsel %vm4767, 0.0, %v4827
  %v4840 = vsel %vm4768, 0.0, %v4828
  %v4841 = vsel %vm4769, 0.0, %v4829
  %v4842 = vsel %vm4770, 0.0, %v4830
  %v4843 = vsel %vm4771, 0.0, %v4831
  %vm4844 = vcmp.gt.f32.partialorder %v4832, 1.3
  %vm4845 = vcmp.gt.f32.partialorder %v4833, 1.3
  %vm4846 = vcmp.gt.f32.partialorder %v4834, 1.3
  %vm4847 = vcmp.gt.f32.partialorder %v4835, 1.3
  %vm4848 = vcmp.gt.f32.partialorder %v4836, 1.3
  %vm4849 = vcmp.gt.f32.partialorder %v4837, 1.3
  %vm4850 = vcmp.gt.f32.partialorder %v4838, 1.3
  %vm4851 = vcmp.gt.f32.partialorder %v4839, 1.3
  %vm4852 = vcmp.gt.f32.partialorder %v4840, 1.3
  %vm4853 = vcmp.gt.f32.partialorder %v4841, 1.3
  %vm4854 = vcmp.gt.f32.partialorder %v4842, 1.3
  %vm4855 = vcmp.gt.f32.partialorder %v4843, 1.3
  %v4856 = vsel %vm4844, 1, 0
  %v4857 = vsel %vm4845, 1, 0
  %v4858 = vsel %vm4846, 1, 0
  %v4859 = vsel %vm4847, 1, 0
  %v4860 = vsel %vm4848, 1, 0
  %v4861 = vsel %vm4849, 1, 0
  %v4862 = vsel %vm4850, 1, 0
  %v4863 = vsel %vm4851, 1, 0
  %v4864 = vsel %vm4852, 1, 0
  %v4865 = vsel %vm4853, 1, 0
  %v4866 = vsel %vm4854, 1, 0
  %v4867 = vsel %vm4855, 1, 0
  %v4868 = vcvt.s32.f32 %v4856
  %v4869 = vcvt.s32.f32 %v4857
  %v4870 = vcvt.s32.f32 %v4858
  %v4871 = vcvt.s32.f32 %v4859
  %v4872 = vcvt.s32.f32 %v4860
  %v4873 = vcvt.s32.f32 %v4861
  %v4874 = vcvt.s32.f32 %v4862
  %v4875 = vcvt.s32.f32 %v4863
  %v4876 = vcvt.s32.f32 %v4864
  %v4877 = vcvt.s32.f32 %v4865
  %v4878 = vcvt.s32.f32 %v4866
  %v4879 = vcvt.s32.f32 %v4867
  %4880 = vst [vmem:[#allocation2 + $0x780] sm:$0xff] %v4868
  %4881 = vst [vmem:[#allocation2 + $0x788] sm:$0xff] %v4869
  %4882 = vst [vmem:[#allocation2 + $0x790] sm:$0xff] %v4870
  %4883 = vst [vmem:[#allocation2 + $0x798] sm:$0xff] %v4871
  %4884 = vst [vmem:[#allocation2 + $0x7a0] sm:$0xff] %v4872
  %4885 = vst [vmem:[#allocation2 + $0x7a8] sm:$0xff] %v4873
  %4886 = vst [vmem:[#allocation2 + $0x7b0] sm:$0xff] %v4874
  %4887 = vst [vmem:[#allocation2 + $0x7b8] sm:$0xff] %v4875
  %4888 = vst [vmem:[#allocation2 + $0x7c0] sm:$0xff] %v4876
  %4889 = vst [vmem:[#allocation2 + $0x7c8] sm:$0xff] %v4877
  %4890 = vst [vmem:[#allocation2 + $0x7d0] sm:$0xff] %v4878
  %4891 = vst [vmem:[#allocation2 + $0x7d8] sm:$0xff] %v4879
  %v4892 = vmul.f32 %v4832, 0.8
  %v4893 = vmul.f32 %v4833, 0.8
  %v4894 = vmul.f32 %v4834, 0.8
  %v4895 = vmul.f32 %v4835, 0.8
  %v4896 = vmul.f32 %v4836, 0.8
  %v4897 = vmul.f32 %v4837, 0.8
  %v4898 = vmul.f32 %v4838, 0.8
  %v4899 = vmul.f32 %v4839, 0.8
  %v4900 = vmul.f32 %v4840, 0.8
  %v4901 = vmul.f32 %v4841, 0.8
  %v4902 = vmul.f32 %v4842, 0.8
  %v4903 = vmul.f32 %v4843, 0.8
  %v4904 = vadd.f32 %v4892, %v1715
  %v4905 = vadd.f32 %v4893, %v1717
  %v4906 = vadd.f32 %v4894, %v1999
  %v4907 = vadd.f32 %v4895, %v2001
  %v4908 = vadd.f32 %v4896, %v2283
  %v4909 = vadd.f32 %v4897, %v2285
  %v4910 = vadd.f32 %v4898, %v2567
  %v4911 = vadd.f32 %v4899, %v2569
  %v4912 = vadd.f32 %v4900, %v2851
  %v4913 = vadd.f32 %v4901, %v2853
  %v4914 = vadd.f32 %v4902, %v3135
  %v4915 = vadd.f32 %v4903, %v3137
  %v4916 = vsel %vm4844, 0.0, %v4904
  %v4917 = vsel %vm4845, 0.0, %v4905
  %v4918 = vsel %vm4846, 0.0, %v4906
  %v4919 = vsel %vm4847, 0.0, %v4907
  %v4920 = vsel %vm4848, 0.0, %v4908
  %v4921 = vsel %vm4849, 0.0, %v4909
  %v4922 = vsel %vm4850, 0.0, %v4910
  %v4923 = vsel %vm4851, 0.0, %v4911
  %v4924 = vsel %vm4852, 0.0, %v4912
  %v4925 = vsel %vm4853, 0.0, %v4913
  %v4926 = vsel %vm4854, 0.0, %v4914
  %v4927 = vsel %vm4855, 0.0, %v4915
  %vm4928 = vcmp.gt.f32.partialorder %v4916, 1.3
  %vm4929 = vcmp.gt.f32.partialorder %v4917, 1.3
  %vm4930 = vcmp.gt.f32.partialorder %v4918, 1.3
  %vm4931 = vcmp.gt.f32.partialorder %v4919, 1.3
  %vm4932 = vcmp.gt.f32.partialorder %v4920, 1.3
  %vm4933 = vcmp.gt.f32.partialorder %v4921, 1.3
  %vm4934 = vcmp.gt.f32.partialorder %v4922, 1.3
  %vm4935 = vcmp.gt.f32.partialorder %v4923, 1.3
  %vm4936 = vcmp.gt.f32.partialorder %v4924, 1.3
  %vm4937 = vcmp.gt.f32.partialorder %v4925, 1.3
  %vm4938 = vcmp.gt.f32.partialorder %v4926, 1.3
  %vm4939 = vcmp.gt.f32.partialorder %v4927, 1.3
  %v4940 = vsel %vm4928, 1, 0
  %v4941 = vsel %vm4929, 1, 0
  %v4942 = vsel %vm4930, 1, 0
  %v4943 = vsel %vm4931, 1, 0
  %v4944 = vsel %vm4932, 1, 0
  %v4945 = vsel %vm4933, 1, 0
  %v4946 = vsel %vm4934, 1, 0
  %v4947 = vsel %vm4935, 1, 0
  %v4948 = vsel %vm4936, 1, 0
  %v4949 = vsel %vm4937, 1, 0
  %v4950 = vsel %vm4938, 1, 0
  %v4951 = vsel %vm4939, 1, 0
  %v4952 = vcvt.s32.f32 %v4940
  %v4953 = vcvt.s32.f32 %v4941
  %v4954 = vcvt.s32.f32 %v4942
  %v4955 = vcvt.s32.f32 %v4943
  %v4956 = vcvt.s32.f32 %v4944
  %v4957 = vcvt.s32.f32 %v4945
  %v4958 = vcvt.s32.f32 %v4946
  %v4959 = vcvt.s32.f32 %v4947
  %v4960 = vcvt.s32.f32 %v4948
  %v4961 = vcvt.s32.f32 %v4949
  %v4962 = vcvt.s32.f32 %v4950
  %v4963 = vcvt.s32.f32 %v4951
  %4964 = vst [vmem:[#allocation2 + $0x7e0] sm:$0xff] %v4952
  %4965 = vst [vmem:[#allocation2 + $0x7e8] sm:$0xff] %v4953
  %4966 = vst [vmem:[#allocation2 + $0x7f0] sm:$0xff] %v4954
  %4967 = vst [vmem:[#allocation2 + $0x7f8] sm:$0xff] %v4955
  %4968 = vst [vmem:[#allocation2 + $0x800] sm:$0xff] %v4956
  %4969 = vst [vmem:[#allocation2 + $0x808] sm:$0xff] %v4957
  %4970 = vst [vmem:[#allocation2 + $0x810] sm:$0xff] %v4958
  %4971 = vst [vmem:[#allocation2 + $0x818] sm:$0xff] %v4959
  %4972 = vst [vmem:[#allocation2 + $0x820] sm:$0xff] %v4960
  %4973 = vst [vmem:[#allocation2 + $0x828] sm:$0xff] %v4961
  %4974 = vst [vmem:[#allocation2 + $0x830] sm:$0xff] %v4962
  %4975 = vst [vmem:[#allocation2 + $0x838] sm:$0xff] %v4963
  %v4976 = vmul.f32 %v4916, 0.8
  %v4977 = vmul.f32 %v4917, 0.8
  %v4978 = vmul.f32 %v4918, 0.8
  %v4979 = vmul.f32 %v4919, 0.8
  %v4980 = vmul.f32 %v4920, 0.8
  %v4981 = vmul.f32 %v4921, 0.8
  %v4982 = vmul.f32 %v4922, 0.8
  %v4983 = vmul.f32 %v4923, 0.8
  %v4984 = vmul.f32 %v4924, 0.8
  %v4985 = vmul.f32 %v4925, 0.8
  %v4986 = vmul.f32 %v4926, 0.8
  %v4987 = vmul.f32 %v4927, 0.8
  %v4988 = vadd.f32 %v4976, %v1715
  %v4989 = vadd.f32 %v4977, %v1717
  %v4990 = vadd.f32 %v4978, %v1999
  %v4991 = vadd.f32 %v4979, %v2001
  %v4992 = vadd.f32 %v4980, %v2283
  %v4993 = vadd.f32 %v4981, %v2285
  %v4994 = vadd.f32 %v4982, %v2567
  %v4995 = vadd.f32 %v4983, %v2569
  %v4996 = vadd.f32 %v4984, %v2851
  %v4997 = vadd.f32 %v4985, %v2853
  %v4998 = vadd.f32 %v4986, %v3135
  %v4999 = vadd.f32 %v4987, %v3137
  %v5000 = vsel %vm4928, 0.0, %v4988
  %v5001 = vsel %vm4929, 0.0, %v4989
  %v5002 = vsel %vm4930, 0.0, %v4990
  %v5003 = vsel %vm4931, 0.0, %v4991
  %v5004 = vsel %vm4932, 0.0, %v4992
  %v5005 = vsel %vm4933, 0.0, %v4993
  %v5006 = vsel %vm4934, 0.0, %v4994
  %v5007 = vsel %vm4935, 0.0, %v4995
  %v5008 = vsel %vm4936, 0.0, %v4996
  %v5009 = vsel %vm4937, 0.0, %v4997
  %v5010 = vsel %vm4938, 0.0, %v4998
  %v5011 = vsel %vm4939, 0.0, %v4999
  %vm5012 = vcmp.gt.f32.partialorder %v5000, 1.3
  %vm5013 = vcmp.gt.f32.partialorder %v5001, 1.3
  %vm5014 = vcmp.gt.f32.partialorder %v5002, 1.3
  %vm5015 = vcmp.gt.f32.partialorder %v5003, 1.3
  %vm5016 = vcmp.gt.f32.partialorder %v5004, 1.3
  %vm5017 = vcmp.gt.f32.partialorder %v5005, 1.3
  %vm5018 = vcmp.gt.f32.partialorder %v5006, 1.3
  %vm5019 = vcmp.gt.f32.partialorder %v5007, 1.3
  %vm5020 = vcmp.gt.f32.partialorder %v5008, 1.3
  %vm5021 = vcmp.gt.f32.partialorder %v5009, 1.3
  %vm5022 = vcmp.gt.f32.partialorder %v5010, 1.3
  %vm5023 = vcmp.gt.f32.partialorder %v5011, 1.3
  %v5024 = vsel %vm5012, 1, 0
  %v5025 = vsel %vm5013, 1, 0
  %v5026 = vsel %vm5014, 1, 0
  %v5027 = vsel %vm5015, 1, 0
  %v5028 = vsel %vm5016, 1, 0
  %v5029 = vsel %vm5017, 1, 0
  %v5030 = vsel %vm5018, 1, 0
  %v5031 = vsel %vm5019, 1, 0
  %v5032 = vsel %vm5020, 1, 0
  %v5033 = vsel %vm5021, 1, 0
  %v5034 = vsel %vm5022, 1, 0
  %v5035 = vsel %vm5023, 1, 0
  %v5036 = vcvt.s32.f32 %v5024
  %v5037 = vcvt.s32.f32 %v5025
  %v5038 = vcvt.s32.f32 %v5026
  %v5039 = vcvt.s32.f32 %v5027
  %v5040 = vcvt.s32.f32 %v5028
  %v5041 = vcvt.s32.f32 %v5029
  %v5042 = vcvt.s32.f32 %v5030
  %v5043 = vcvt.s32.f32 %v5031
  %v5044 = vcvt.s32.f32 %v5032
  %v5045 = vcvt.s32.f32 %v5033
  %v5046 = vcvt.s32.f32 %v5034
  %v5047 = vcvt.s32.f32 %v5035
  %5048 = vst [vmem:[#allocation2 + $0x840] sm:$0xff] %v5036
  %5049 = vst [vmem:[#allocation2 + $0x848] sm:$0xff] %v5037
  %5050 = vst [vmem:[#allocation2 + $0x850] sm:$0xff] %v5038
  %5051 = vst [vmem:[#allocation2 + $0x858] sm:$0xff] %v5039
  %5052 = vst [vmem:[#allocation2 + $0x860] sm:$0xff] %v5040
  %5053 = vst [vmem:[#allocation2 + $0x868] sm:$0xff] %v5041
  %5054 = vst [vmem:[#allocation2 + $0x870] sm:$0xff] %v5042
  %5055 = vst [vmem:[#allocation2 + $0x878] sm:$0xff] %v5043
  %5056 = vst [vmem:[#allocation2 + $0x880] sm:$0xff] %v5044
  %5057 = vst [vmem:[#allocation2 + $0x888] sm:$0xff] %v5045
  %5058 = vst [vmem:[#allocation2 + $0x890] sm:$0xff] %v5046
  %5059 = vst [vmem:[#allocation2 + $0x898] sm:$0xff] %v5047
  %v5060 = vmul.f32 %v5000, 0.8
  %v5061 = vmul.f32 %v5001, 0.8
  %v5062 = vmul.f32 %v5002, 0.8
  %v5063 = vmul.f32 %v5003, 0.8
  %v5064 = vmul.f32 %v5004, 0.8
  %v5065 = vmul.f32 %v5005, 0.8
  %v5066 = vmul.f32 %v5006, 0.8
  %v5067 = vmul.f32 %v5007, 0.8
  %v5068 = vmul.f32 %v5008, 0.8
  %v5069 = vmul.f32 %v5009, 0.8
  %v5070 = vmul.f32 %v5010, 0.8
  %v5071 = vmul.f32 %v5011, 0.8
  %v5072 = vadd.f32 %v5060, %v1715
  %v5073 = vadd.f32 %v5061, %v1717
  %v5074 = vadd.f32 %v5062, %v1999
  %v5075 = vadd.f32 %v5063, %v2001
  %v5076 = vadd.f32 %v5064, %v2283
  %v5077 = vadd.f32 %v5065, %v2285
  %v5078 = vadd.f32 %v5066, %v2567
  %v5079 = vadd.f32 %v5067, %v2569
  %v5080 = vadd.f32 %v5068, %v2851
  %v5081 = vadd.f32 %v5069, %v2853
  %v5082 = vadd.f32 %v5070, %v3135
  %v5083 = vadd.f32 %v5071, %v3137
  %v5084 = vsel %vm5012, 0.0, %v5072
  %v5085 = vsel %vm5013, 0.0, %v5073
  %v5086 = vsel %vm5014, 0.0, %v5074
  %v5087 = vsel %vm5015, 0.0, %v5075
  %v5088 = vsel %vm5016, 0.0, %v5076
  %v5089 = vsel %vm5017, 0.0, %v5077
  %v5090 = vsel %vm5018, 0.0, %v5078
  %v5091 = vsel %vm5019, 0.0, %v5079
  %v5092 = vsel %vm5020, 0.0, %v5080
  %v5093 = vsel %vm5021, 0.0, %v5081
  %v5094 = vsel %vm5022, 0.0, %v5082
  %v5095 = vsel %vm5023, 0.0, %v5083
  %vm5096 = vcmp.gt.f32.partialorder %v5084, 1.3
  %vm5097 = vcmp.gt.f32.partialorder %v5085, 1.3
  %vm5098 = vcmp.gt.f32.partialorder %v5086, 1.3
  %vm5099 = vcmp.gt.f32.partialorder %v5087, 1.3
  %vm5100 = vcmp.gt.f32.partialorder %v5088, 1.3
  %vm5101 = vcmp.gt.f32.partialorder %v5089, 1.3
  %vm5102 = vcmp.gt.f32.partialorder %v5090, 1.3
  %vm5103 = vcmp.gt.f32.partialorder %v5091, 1.3
  %vm5104 = vcmp.gt.f32.partialorder %v5092, 1.3
  %vm5105 = vcmp.gt.f32.partialorder %v5093, 1.3
  %vm5106 = vcmp.gt.f32.partialorder %v5094, 1.3
  %vm5107 = vcmp.gt.f32.partialorder %v5095, 1.3
  %v5108 = vsel %vm5096, 1, 0
  %v5109 = vsel %vm5097, 1, 0
  %v5110 = vsel %vm5098, 1, 0
  %v5111 = vsel %vm5099, 1, 0
  %v5112 = vsel %vm5100, 1, 0
  %v5113 = vsel %vm5101, 1, 0
  %v5114 = vsel %vm5102, 1, 0
  %v5115 = vsel %vm5103, 1, 0
  %v5116 = vsel %vm5104, 1, 0
  %v5117 = vsel %vm5105, 1, 0
  %v5118 = vsel %vm5106, 1, 0
  %v5119 = vsel %vm5107, 1, 0
  %v5120 = vcvt.s32.f32 %v5108
  %v5121 = vcvt.s32.f32 %v5109
  %v5122 = vcvt.s32.f32 %v5110
  %v5123 = vcvt.s32.f32 %v5111
  %v5124 = vcvt.s32.f32 %v5112
  %v5125 = vcvt.s32.f32 %v5113
  %v5126 = vcvt.s32.f32 %v5114
  %v5127 = vcvt.s32.f32 %v5115
  %v5128 = vcvt.s32.f32 %v5116
  %v5129 = vcvt.s32.f32 %v5117
  %v5130 = vcvt.s32.f32 %v5118
  %v5131 = vcvt.s32.f32 %v5119
  %5132 = vst [vmem:[#allocation2 + $0x8a0] sm:$0xff] %v5120
  %5133 = vst [vmem:[#allocation2 + $0x8a8] sm:$0xff] %v5121
  %5134 = vst [vmem:[#allocation2 + $0x8b0] sm:$0xff] %v5122
  %5135 = vst [vmem:[#allocation2 + $0x8b8] sm:$0xff] %v5123
  %5136 = vst [vmem:[#allocation2 + $0x8c0] sm:$0xff] %v5124
  %5137 = vst [vmem:[#allocation2 + $0x8c8] sm:$0xff] %v5125
  %5138 = vst [vmem:[#allocation2 + $0x8d0] sm:$0xff] %v5126
  %5139 = vst [vmem:[#allocation2 + $0x8d8] sm:$0xff] %v5127
  %5140 = vst [vmem:[#allocation2 + $0x8e0] sm:$0xff] %v5128
  %5141 = vst [vmem:[#allocation2 + $0x8e8] sm:$0xff] %v5129
  %5142 = vst [vmem:[#allocation2 + $0x8f0] sm:$0xff] %v5130
  %5143 = vst [vmem:[#allocation2 + $0x8f8] sm:$0xff] %v5131
  %v5144 = vmul.f32 %v5084, 0.8
  %v5145 = vmul.f32 %v5085, 0.8
  %v5146 = vmul.f32 %v5086, 0.8
  %v5147 = vmul.f32 %v5087, 0.8
  %v5148 = vmul.f32 %v5088, 0.8
  %v5149 = vmul.f32 %v5089, 0.8
  %v5150 = vmul.f32 %v5090, 0.8
  %v5151 = vmul.f32 %v5091, 0.8
  %v5152 = vmul.f32 %v5092, 0.8
  %v5153 = vmul.f32 %v5093, 0.8
  %v5154 = vmul.f32 %v5094, 0.8
  %v5155 = vmul.f32 %v5095, 0.8
  %v5156 = vadd.f32 %v5144, %v1715
  %v5157 = vadd.f32 %v5145, %v1717
  %v5158 = vadd.f32 %v5146, %v1999
  %v5159 = vadd.f32 %v5147, %v2001
  %v5160 = vadd.f32 %v5148, %v2283
  %v5161 = vadd.f32 %v5149, %v2285
  %v5162 = vadd.f32 %v5150, %v2567
  %v5163 = vadd.f32 %v5151, %v2569
  %v5164 = vadd.f32 %v5152, %v2851
  %v5165 = vadd.f32 %v5153, %v2853
  %v5166 = vadd.f32 %v5154, %v3135
  %v5167 = vadd.f32 %v5155, %v3137
  %v5168 = vsel %vm5096, 0.0, %v5156
  %v5169 = vsel %vm5097, 0.0, %v5157
  %v5170 = vsel %vm5098, 0.0, %v5158
  %v5171 = vsel %vm5099, 0.0, %v5159
  %v5172 = vsel %vm5100, 0.0, %v5160
  %v5173 = vsel %vm5101, 0.0, %v5161
  %v5174 = vsel %vm5102, 0.0, %v5162
  %v5175 = vsel %vm5103, 0.0, %v5163
  %v5176 = vsel %vm5104, 0.0, %v5164
  %v5177 = vsel %vm5105, 0.0, %v5165
  %v5178 = vsel %vm5106, 0.0, %v5166
  %v5179 = vsel %vm5107, 0.0, %v5167
  %vm5180 = vcmp.gt.f32.partialorder %v5168, 1.3
  %vm5181 = vcmp.gt.f32.partialorder %v5169, 1.3
  %vm5182 = vcmp.gt.f32.partialorder %v5170, 1.3
  %vm5183 = vcmp.gt.f32.partialorder %v5171, 1.3
  %vm5184 = vcmp.gt.f32.partialorder %v5172, 1.3
  %vm5185 = vcmp.gt.f32.partialorder %v5173, 1.3
  %vm5186 = vcmp.gt.f32.partialorder %v5174, 1.3
  %vm5187 = vcmp.gt.f32.partialorder %v5175, 1.3
  %vm5188 = vcmp.gt.f32.partialorder %v5176, 1.3
  %vm5189 = vcmp.gt.f32.partialorder %v5177, 1.3
  %vm5190 = vcmp.gt.f32.partialorder %v5178, 1.3
  %vm5191 = vcmp.gt.f32.partialorder %v5179, 1.3
  %v5192 = vsel %vm5180, 1, 0
  %v5193 = vsel %vm5181, 1, 0
  %v5194 = vsel %vm5182, 1, 0
  %v5195 = vsel %vm5183, 1, 0
  %v5196 = vsel %vm5184, 1, 0
  %v5197 = vsel %vm5185, 1, 0
  %v5198 = vsel %vm5186, 1, 0
  %v5199 = vsel %vm5187, 1, 0
  %v5200 = vsel %vm5188, 1, 0
  %v5201 = vsel %vm5189, 1, 0
  %v5202 = vsel %vm5190, 1, 0
  %v5203 = vsel %vm5191, 1, 0
  %v5204 = vcvt.s32.f32 %v5192
  %v5205 = vcvt.s32.f32 %v5193
  %v5206 = vcvt.s32.f32 %v5194
  %v5207 = vcvt.s32.f32 %v5195
  %v5208 = vcvt.s32.f32 %v5196
  %v5209 = vcvt.s32.f32 %v5197
  %v5210 = vcvt.s32.f32 %v5198
  %v5211 = vcvt.s32.f32 %v5199
  %v5212 = vcvt.s32.f32 %v5200
  %v5213 = vcvt.s32.f32 %v5201
  %v5214 = vcvt.s32.f32 %v5202
  %v5215 = vcvt.s32.f32 %v5203
  %5216 = vst [vmem:[#allocation2 + $0x900] sm:$0xff] %v5204
  %5217 = vst [vmem:[#allocation2 + $0x908] sm:$0xff] %v5205
  %5218 = vst [vmem:[#allocation2 + $0x910] sm:$0xff] %v5206
  %5219 = vst [vmem:[#allocation2 + $0x918] sm:$0xff] %v5207
  %5220 = vst [vmem:[#allocation2 + $0x920] sm:$0xff] %v5208
  %5221 = vst [vmem:[#allocation2 + $0x928] sm:$0xff] %v5209
  %5222 = vst [vmem:[#allocation2 + $0x930] sm:$0xff] %v5210
  %5223 = vst [vmem:[#allocation2 + $0x938] sm:$0xff] %v5211
  %5224 = vst [vmem:[#allocation2 + $0x940] sm:$0xff] %v5212
  %5225 = vst [vmem:[#allocation2 + $0x948] sm:$0xff] %v5213
  %5226 = vst [vmem:[#allocation2 + $0x950] sm:$0xff] %v5214
  %5227 = vst [vmem:[#allocation2 + $0x958] sm:$0xff] %v5215
  %v5228 = vld [vmem:[#allocation2] sm:$0xff]
  %v5229 = vld [vmem:[#allocation2 + $0x8] sm:$0xff]
  %v5230 = vld [vmem:[#allocation2 + $0x10] sm:$0xff]
  %v5231 = vld [vmem:[#allocation2 + $0x18] sm:$0xff]
  %v5232 = vld [vmem:[#allocation2 + $0x20] sm:$0xff]
  %v5233 = vld [vmem:[#allocation2 + $0x28] sm:$0xff]
  %v5234 = vld [vmem:[#allocation2 + $0x30] sm:$0xff]
  %v5235 = vld [vmem:[#allocation2 + $0x38] sm:$0xff]
  %v5236 = vld [vmem:[#allocation2 + $0x40] sm:$0xff]
  %v5237 = vld [vmem:[#allocation2 + $0x48] sm:$0xff]
  %v5238 = vld [vmem:[#allocation2 + $0x50] sm:$0xff]
  %v5239 = vld [vmem:[#allocation2 + $0x58] sm:$0xff]
  %v5240 = vld [vmem:[#allocation2 + $0x60] sm:$0xff]
  %v5241 = vld [vmem:[#allocation2 + $0x68] sm:$0xff]
  %v5242 = vld [vmem:[#allocation2 + $0x70] sm:$0xff]
  %v5243 = vld [vmem:[#allocation2 + $0x78] sm:$0xff]
  %v5244 = vld [vmem:[#allocation2 + $0x80] sm:$0xff]
  %v5245 = vld [vmem:[#allocation2 + $0x88] sm:$0xff]
  %v5246 = vld [vmem:[#allocation2 + $0x90] sm:$0xff]
  %v5247 = vld [vmem:[#allocation2 + $0x98] sm:$0xff]
  %v5248 = vld [vmem:[#allocation2 + $0xa0] sm:$0xff]
  %v5249 = vld [vmem:[#allocation2 + $0xa8] sm:$0xff]
  %v5250 = vld [vmem:[#allocation2 + $0xb0] sm:$0xff]
  %v5251 = vld [vmem:[#allocation2 + $0xb8] sm:$0xff]
  %v5252 = vld [vmem:[#allocation2 + $0xc0] sm:$0xff]
  %v5253 = vld [vmem:[#allocation2 + $0xc8] sm:$0xff]
  %v5254 = vld [vmem:[#allocation2 + $0xd0] sm:$0xff]
  %v5255 = vld [vmem:[#allocation2 + $0xd8] sm:$0xff]
  %v5256 = vld [vmem:[#allocation2 + $0xe0] sm:$0xff]
  %v5257 = vld [vmem:[#allocation2 + $0xe8] sm:$0xff]
  %v5258 = vld [vmem:[#allocation2 + $0xf0] sm:$0xff]
  %v5259 = vld [vmem:[#allocation2 + $0xf8] sm:$0xff]
  %v5260 = vld [vmem:[#allocation2 + $0x100] sm:$0xff]
  %v5261 = vld [vmem:[#allocation2 + $0x108] sm:$0xff]
  %v5262 = vld [vmem:[#allocation2 + $0x110] sm:$0xff]
  %v5263 = vld [vmem:[#allocation2 + $0x118] sm:$0xff]
  %v5264 = vld [vmem:[#allocation2 + $0x120] sm:$0xff]
  %v5265 = vld [vmem:[#allocation2 + $0x128] sm:$0xff]
  %v5266 = vld [vmem:[#allocation2 + $0x130] sm:$0xff]
  %v5267 = vld [vmem:[#allocation2 + $0x138] sm:$0xff]
  %v5268 = vld [vmem:[#allocation2 + $0x140] sm:$0xff]
  %v5269 = vld [vmem:[#allocation2 + $0x148] sm:$0xff]
  %v5270 = vld [vmem:[#allocation2 + $0x150] sm:$0xff]
  %v5271 = vld [vmem:[#allocation2 + $0x158] sm:$0xff]
  %v5272 = vld [vmem:[#allocation2 + $0x160] sm:$0xff]
  %v5273 = vld [vmem:[#allocation2 + $0x168] sm:$0xff]
  %v5274 = vld [vmem:[#allocation2 + $0x170] sm:$0xff]
  %v5275 = vld [vmem:[#allocation2 + $0x178] sm:$0xff]
  %v5276 = vld [vmem:[#allocation2 + $0x180] sm:$0xff]
  %v5277 = vld [vmem:[#allocation2 + $0x188] sm:$0xff]
  %v5278 = vld [vmem:[#allocation2 + $0x190] sm:$0xff]
  %v5279 = vld [vmem:[#allocation2 + $0x198] sm:$0xff]
  %v5280 = vld [vmem:[#allocation2 + $0x1a0] sm:$0xff]
  %v5281 = vld [vmem:[#allocation2 + $0x1a8] sm:$0xff]
  %v5282 = vld [vmem:[#allocation2 + $0x1b0] sm:$0xff]
  %v5283 = vld [vmem:[#allocation2 + $0x1b8] sm:$0xff]
  %v5284 = vld [vmem:[#allocation2 + $0x1c0] sm:$0xff]
  %v5285 = vld [vmem:[#allocation2 + $0x1c8] sm:$0xff]
  %v5286 = vld [vmem:[#allocation2 + $0x1d0] sm:$0xff]
  %v5287 = vld [vmem:[#allocation2 + $0x1d8] sm:$0xff]
  %v5288 = vld [vmem:[#allocation2 + $0x1e0] sm:$0xff]
  %v5289 = vld [vmem:[#allocation2 + $0x1e8] sm:$0xff]
  %v5290 = vld [vmem:[#allocation2 + $0x1f0] sm:$0xff]
  %v5291 = vld [vmem:[#allocation2 + $0x1f8] sm:$0xff]
  %v5292 = vld [vmem:[#allocation2 + $0x200] sm:$0xff]
  %v5293 = vld [vmem:[#allocation2 + $0x208] sm:$0xff]
  %v5294 = vld [vmem:[#allocation2 + $0x210] sm:$0xff]
  %v5295 = vld [vmem:[#allocation2 + $0x218] sm:$0xff]
  %v5296 = vld [vmem:[#allocation2 + $0x220] sm:$0xff]
  %v5297 = vld [vmem:[#allocation2 + $0x228] sm:$0xff]
  %v5298 = vld [vmem:[#allocation2 + $0x230] sm:$0xff]
  %v5299 = vld [vmem:[#allocation2 + $0x238] sm:$0xff]
  %v5300 = vld [vmem:[#allocation2 + $0x240] sm:$0xff]
  %v5301 = vld [vmem:[#allocation2 + $0x248] sm:$0xff]
  %v5302 = vld [vmem:[#allocation2 + $0x250] sm:$0xff]
  %v5303 = vld [vmem:[#allocation2 + $0x258] sm:$0xff]
  %v5304 = vld [vmem:[#allocation2 + $0x260] sm:$0xff]
  %v5305 = vld [vmem:[#allocation2 + $0x268] sm:$0xff]
  %v5306 = vld [vmem:[#allocation2 + $0x270] sm:$0xff]
  %v5307 = vld [vmem:[#allocation2 + $0x278] sm:$0xff]
  %v5308 = vld [vmem:[#allocation2 + $0x280] sm:$0xff]
  %v5309 = vld [vmem:[#allocation2 + $0x288] sm:$0xff]
  %v5310 = vld [vmem:[#allocation2 + $0x290] sm:$0xff]
  %v5311 = vld [vmem:[#allocation2 + $0x298] sm:$0xff]
  %v5312 = vld [vmem:[#allocation2 + $0x2a0] sm:$0xff]
  %v5313 = vld [vmem:[#allocation2 + $0x2a8] sm:$0xff]
  %v5314 = vld [vmem:[#allocation2 + $0x2b0] sm:$0xff]
  %v5315 = vld [vmem:[#allocation2 + $0x2b8] sm:$0xff]
  %v5316 = vld [vmem:[#allocation2 + $0x2c0] sm:$0xff]
  %v5317 = vld [vmem:[#allocation2 + $0x2c8] sm:$0xff]
  %v5318 = vld [vmem:[#allocation2 + $0x2d0] sm:$0xff]
  %v5319 = vld [vmem:[#allocation2 + $0x2d8] sm:$0xff]
  %v5320 = vld [vmem:[#allocation2 + $0x2e0] sm:$0xff]
  %v5321 = vld [vmem:[#allocation2 + $0x2e8] sm:$0xff]
  %v5322 = vld [vmem:[#allocation2 + $0x2f0] sm:$0xff]
  %v5323 = vld [vmem:[#allocation2 + $0x2f8] sm:$0xff]
  %v5324 = vld [vmem:[#allocation2 + $0x300] sm:$0xff]
  %v5325 = vld [vmem:[#allocation2 + $0x308] sm:$0xff]
  %v5326 = vld [vmem:[#allocation2 + $0x310] sm:$0xff]
  %v5327 = vld [vmem:[#allocation2 + $0x318] sm:$0xff]
  %v5328 = vld [vmem:[#allocation2 + $0x320] sm:$0xff]
  %v5329 = vld [vmem:[#allocation2 + $0x328] sm:$0xff]
  %v5330 = vld [vmem:[#allocation2 + $0x330] sm:$0xff]
  %v5331 = vld [vmem:[#allocation2 + $0x338] sm:$0xff]
  %v5332 = vld [vmem:[#allocation2 + $0x340] sm:$0xff]
  %v5333 = vld [vmem:[#allocation2 + $0x348] sm:$0xff]
  %v5334 = vld [vmem:[#allocation2 + $0x350] sm:$0xff]
  %v5335 = vld [vmem:[#allocation2 + $0x358] sm:$0xff]
  %v5336 = vld [vmem:[#allocation2 + $0x360] sm:$0xff]
  %v5337 = vld [vmem:[#allocation2 + $0x368] sm:$0xff]
  %v5338 = vld [vmem:[#allocation2 + $0x370] sm:$0xff]
  %v5339 = vld [vmem:[#allocation2 + $0x378] sm:$0xff]
  %v5340 = vld [vmem:[#allocation2 + $0x380] sm:$0xff]
  %v5341 = vld [vmem:[#allocation2 + $0x388] sm:$0xff]
  %v5342 = vld [vmem:[#allocation2 + $0x390] sm:$0xff]
  %v5343 = vld [vmem:[#allocation2 + $0x398] sm:$0xff]
  %v5344 = vld [vmem:[#allocation2 + $0x3a0] sm:$0xff]
  %v5345 = vld [vmem:[#allocation2 + $0x3a8] sm:$0xff]
  %v5346 = vld [vmem:[#allocation2 + $0x3b0] sm:$0xff]
  %v5347 = vld [vmem:[#allocation2 + $0x3b8] sm:$0xff]
  %v5348 = vld [vmem:[#allocation2 + $0x3c0] sm:$0xff]
  %v5349 = vld [vmem:[#allocation2 + $0x3c8] sm:$0xff]
  %v5350 = vld [vmem:[#allocation2 + $0x3d0] sm:$0xff]
  %v5351 = vld [vmem:[#allocation2 + $0x3d8] sm:$0xff]
  %v5352 = vld [vmem:[#allocation2 + $0x3e0] sm:$0xff]
  %v5353 = vld [vmem:[#allocation2 + $0x3e8] sm:$0xff]
  %v5354 = vld [vmem:[#allocation2 + $0x3f0] sm:$0xff]
  %v5355 = vld [vmem:[#allocation2 + $0x3f8] sm:$0xff]
  %v5356 = vld [vmem:[#allocation2 + $0x400] sm:$0xff]
  %v5357 = vld [vmem:[#allocation2 + $0x408] sm:$0xff]
  %v5358 = vld [vmem:[#allocation2 + $0x410] sm:$0xff]
  %v5359 = vld [vmem:[#allocation2 + $0x418] sm:$0xff]
  %v5360 = vld [vmem:[#allocation2 + $0x420] sm:$0xff]
  %v5361 = vld [vmem:[#allocation2 + $0x428] sm:$0xff]
  %v5362 = vld [vmem:[#allocation2 + $0x430] sm:$0xff]
  %v5363 = vld [vmem:[#allocation2 + $0x438] sm:$0xff]
  %v5364 = vld [vmem:[#allocation2 + $0x440] sm:$0xff]
  %v5365 = vld [vmem:[#allocation2 + $0x448] sm:$0xff]
  %v5366 = vld [vmem:[#allocation2 + $0x450] sm:$0xff]
  %v5367 = vld [vmem:[#allocation2 + $0x458] sm:$0xff]
  %v5368 = vld [vmem:[#allocation2 + $0x460] sm:$0xff]
  %v5369 = vld [vmem:[#allocation2 + $0x468] sm:$0xff]
  %v5370 = vld [vmem:[#allocation2 + $0x470] sm:$0xff]
  %v5371 = vld [vmem:[#allocation2 + $0x478] sm:$0xff]
  %v5372 = vld [vmem:[#allocation2 + $0x480] sm:$0xff]
  %v5373 = vld [vmem:[#allocation2 + $0x488] sm:$0xff]
  %v5374 = vld [vmem:[#allocation2 + $0x490] sm:$0xff]
  %v5375 = vld [vmem:[#allocation2 + $0x498] sm:$0xff]
  %v5376 = vld [vmem:[#allocation2 + $0x4a0] sm:$0xff]
  %v5377 = vld [vmem:[#allocation2 + $0x4a8] sm:$0xff]
  %v5378 = vld [vmem:[#allocation2 + $0x4b0] sm:$0xff]
  %v5379 = vld [vmem:[#allocation2 + $0x4b8] sm:$0xff]
  %v5380 = vld [vmem:[#allocation2 + $0x4c0] sm:$0xff]
  %v5381 = vld [vmem:[#allocation2 + $0x4c8] sm:$0xff]
  %v5382 = vld [vmem:[#allocation2 + $0x4d0] sm:$0xff]
  %v5383 = vld [vmem:[#allocation2 + $0x4d8] sm:$0xff]
  %v5384 = vld [vmem:[#allocation2 + $0x4e0] sm:$0xff]
  %v5385 = vld [vmem:[#allocation2 + $0x4e8] sm:$0xff]
  %v5386 = vld [vmem:[#allocation2 + $0x4f0] sm:$0xff]
  %v5387 = vld [vmem:[#allocation2 + $0x4f8] sm:$0xff]
  %v5388 = vld [vmem:[#allocation2 + $0x500] sm:$0xff]
  %v5389 = vld [vmem:[#allocation2 + $0x508] sm:$0xff]
  %v5390 = vld [vmem:[#allocation2 + $0x510] sm:$0xff]
  %v5391 = vld [vmem:[#allocation2 + $0x518] sm:$0xff]
  %v5392 = vld [vmem:[#allocation2 + $0x520] sm:$0xff]
  %v5393 = vld [vmem:[#allocation2 + $0x528] sm:$0xff]
  %v5394 = vld [vmem:[#allocation2 + $0x530] sm:$0xff]
  %v5395 = vld [vmem:[#allocation2 + $0x538] sm:$0xff]
  %v5396 = vld [vmem:[#allocation2 + $0x540] sm:$0xff]
  %v5397 = vld [vmem:[#allocation2 + $0x548] sm:$0xff]
  %v5398 = vld [vmem:[#allocation2 + $0x550] sm:$0xff]
  %v5399 = vld [vmem:[#allocation2 + $0x558] sm:$0xff]
  %v5400 = vld [vmem:[#allocation2 + $0x560] sm:$0xff]
  %v5401 = vld [vmem:[#allocation2 + $0x568] sm:$0xff]
  %v5402 = vld [vmem:[#allocation2 + $0x570] sm:$0xff]
  %v5403 = vld [vmem:[#allocation2 + $0x578] sm:$0xff]
  %v5404 = vld [vmem:[#allocation2 + $0x580] sm:$0xff]
  %v5405 = vld [vmem:[#allocation2 + $0x588] sm:$0xff]
  %v5406 = vld [vmem:[#allocation2 + $0x590] sm:$0xff]
  %v5407 = vld [vmem:[#allocation2 + $0x598] sm:$0xff]
  %v5408 = vld [vmem:[#allocation2 + $0x5a0] sm:$0xff]
  %v5409 = vld [vmem:[#allocation2 + $0x5a8] sm:$0xff]
  %v5410 = vld [vmem:[#allocation2 + $0x5b0] sm:$0xff]
  %v5411 = vld [vmem:[#allocation2 + $0x5b8] sm:$0xff]
  %v5412 = vld [vmem:[#allocation2 + $0x5c0] sm:$0xff]
  %v5413 = vld [vmem:[#allocation2 + $0x5c8] sm:$0xff]
  %v5414 = vld [vmem:[#allocation2 + $0x5d0] sm:$0xff]
  %v5415 = vld [vmem:[#allocation2 + $0x5d8] sm:$0xff]
  %v5416 = vld [vmem:[#allocation2 + $0x5e0] sm:$0xff]
  %v5417 = vld [vmem:[#allocation2 + $0x5e8] sm:$0xff]
  %v5418 = vld [vmem:[#allocation2 + $0x5f0] sm:$0xff]
  %v5419 = vld [vmem:[#allocation2 + $0x5f8] sm:$0xff]
  %v5420 = vld [vmem:[#allocation2 + $0x600] sm:$0xff]
  %v5421 = vld [vmem:[#allocation2 + $0x608] sm:$0xff]
  %v5422 = vld [vmem:[#allocation2 + $0x610] sm:$0xff]
  %v5423 = vld [vmem:[#allocation2 + $0x618] sm:$0xff]
  %v5424 = vld [vmem:[#allocation2 + $0x620] sm:$0xff]
  %v5425 = vld [vmem:[#allocation2 + $0x628] sm:$0xff]
  %v5426 = vld [vmem:[#allocation2 + $0x630] sm:$0xff]
  %v5427 = vld [vmem:[#allocation2 + $0x638] sm:$0xff]
  %v5428 = vld [vmem:[#allocation2 + $0x640] sm:$0xff]
  %v5429 = vld [vmem:[#allocation2 + $0x648] sm:$0xff]
  %v5430 = vld [vmem:[#allocation2 + $0x650] sm:$0xff]
  %v5431 = vld [vmem:[#allocation2 + $0x658] sm:$0xff]
  %v5432 = vld [vmem:[#allocation2 + $0x660] sm:$0xff]
  %v5433 = vld [vmem:[#allocation2 + $0x668] sm:$0xff]
  %v5434 = vld [vmem:[#allocation2 + $0x670] sm:$0xff]
  %v5435 = vld [vmem:[#allocation2 + $0x678] sm:$0xff]
  %v5436 = vld [vmem:[#allocation2 + $0x680] sm:$0xff]
  %v5437 = vld [vmem:[#allocation2 + $0x688] sm:$0xff]
  %v5438 = vld [vmem:[#allocation2 + $0x690] sm:$0xff]
  %v5439 = vld [vmem:[#allocation2 + $0x698] sm:$0xff]
  %v5440 = vld [vmem:[#allocation2 + $0x6a0] sm:$0xff]
  %v5441 = vld [vmem:[#allocation2 + $0x6a8] sm:$0xff]
  %v5442 = vld [vmem:[#allocation2 + $0x6b0] sm:$0xff]
  %v5443 = vld [vmem:[#allocation2 + $0x6b8] sm:$0xff]
  %v5444 = vld [vmem:[#allocation2 + $0x6c0] sm:$0xff]
  %v5445 = vld [vmem:[#allocation2 + $0x6c8] sm:$0xff]
  %v5446 = vld [vmem:[#allocation2 + $0x6d0] sm:$0xff]
  %v5447 = vld [vmem:[#allocation2 + $0x6d8] sm:$0xff]
  %v5448 = vld [vmem:[#allocation2 + $0x6e0] sm:$0xff]
  %v5449 = vld [vmem:[#allocation2 + $0x6e8] sm:$0xff]
  %v5450 = vld [vmem:[#allocation2 + $0x6f0] sm:$0xff]
  %v5451 = vld [vmem:[#allocation2 + $0x6f8] sm:$0xff]
  %v5452 = vld [vmem:[#allocation2 + $0x700] sm:$0xff]
  %v5453 = vld [vmem:[#allocation2 + $0x708] sm:$0xff]
  %v5454 = vld [vmem:[#allocation2 + $0x710] sm:$0xff]
  %v5455 = vld [vmem:[#allocation2 + $0x718] sm:$0xff]
  %v5456 = vld [vmem:[#allocation2 + $0x720] sm:$0xff]
  %v5457 = vld [vmem:[#allocation2 + $0x728] sm:$0xff]
  %v5458 = vld [vmem:[#allocation2 + $0x730] sm:$0xff]
  %v5459 = vld [vmem:[#allocation2 + $0x738] sm:$0xff]
  %v5460 = vld [vmem:[#allocation2 + $0x740] sm:$0xff]
  %v5461 = vld [vmem:[#allocation2 + $0x748] sm:$0xff]
  %v5462 = vld [vmem:[#allocation2 + $0x750] sm:$0xff]
  %v5463 = vld [vmem:[#allocation2 + $0x758] sm:$0xff]
  %v5464 = vld [vmem:[#allocation2 + $0x760] sm:$0xff]
  %v5465 = vld [vmem:[#allocation2 + $0x768] sm:$0xff]
  %v5466 = vld [vmem:[#allocation2 + $0x770] sm:$0xff]
  %v5467 = vld [vmem:[#allocation2 + $0x778] sm:$0xff]
  %v5468 = vld [vmem:[#allocation2 + $0x780] sm:$0xff]
  %v5469 = vld [vmem:[#allocation2 + $0x788] sm:$0xff]
  %v5470 = vld [vmem:[#allocation2 + $0x790] sm:$0xff]
  %v5471 = vld [vmem:[#allocation2 + $0x798] sm:$0xff]
  %v5472 = vld [vmem:[#allocation2 + $0x7a0] sm:$0xff]
  %v5473 = vld [vmem:[#allocation2 + $0x7a8] sm:$0xff]
  %v5474 = vld [vmem:[#allocation2 + $0x7b0] sm:$0xff]
  %v5475 = vld [vmem:[#allocation2 + $0x7b8] sm:$0xff]
  %v5476 = vld [vmem:[#allocation2 + $0x7c0] sm:$0xff]
  %v5477 = vld [vmem:[#allocation2 + $0x7c8] sm:$0xff]
  %v5478 = vld [vmem:[#allocation2 + $0x7d0] sm:$0xff]
  %v5479 = vld [vmem:[#allocation2 + $0x7d8] sm:$0xff]
  %v5480 = vld [vmem:[#allocation2 + $0x7e0] sm:$0xff]
  %v5481 = vld [vmem:[#allocation2 + $0x7e8] sm:$0xff]
  %v5482 = vld [vmem:[#allocation2 + $0x7f0] sm:$0xff]
  %v5483 = vld [vmem:[#allocation2 + $0x7f8] sm:$0xff]
  %v5484 = vld [vmem:[#allocation2 + $0x800] sm:$0xff]
  %v5485 = vld [vmem:[#allocation2 + $0x808] sm:$0xff]
  %v5486 = vld [vmem:[#allocation2 + $0x810] sm:$0xff]
  %v5487 = vld [vmem:[#allocation2 + $0x818] sm:$0xff]
  %v5488 = vld [vmem:[#allocation2 + $0x820] sm:$0xff]
  %v5489 = vld [vmem:[#allocation2 + $0x828] sm:$0xff]
  %v5490 = vld [vmem:[#allocation2 + $0x830] sm:$0xff]
  %v5491 = vld [vmem:[#allocation2 + $0x838] sm:$0xff]
  %v5492 = vld [vmem:[#allocation2 + $0x840] sm:$0xff]
  %v5493 = vld [vmem:[#allocation2 + $0x848] sm:$0xff]
  %v5494 = vld [vmem:[#allocation2 + $0x850] sm:$0xff]
  %v5495 = vld [vmem:[#allocation2 + $0x858] sm:$0xff]
  %v5496 = vld [vmem:[#allocation2 + $0x860] sm:$0xff]
  %v5497 = vld [vmem:[#allocation2 + $0x868] sm:$0xff]
  %v5498 = vld [vmem:[#allocation2 + $0x870] sm:$0xff]
  %v5499 = vld [vmem:[#allocation2 + $0x878] sm:$0xff]
  %v5500 = vld [vmem:[#allocation2 + $0x880] sm:$0xff]
  %v5501 = vld [vmem:[#allocation2 + $0x888] sm:$0xff]
  %v5502 = vld [vmem:[#allocation2 + $0x890] sm:$0xff]
  %v5503 = vld [vmem:[#allocation2 + $0x898] sm:$0xff]
  %v5504 = vld [vmem:[#allocation2 + $0x8a0] sm:$0xff]
  %v5505 = vld [vmem:[#allocation2 + $0x8a8] sm:$0xff]
  %v5506 = vld [vmem:[#allocation2 + $0x8b0] sm:$0xff]
  %v5507 = vld [vmem:[#allocation2 + $0x8b8] sm:$0xff]
  %v5508 = vld [vmem:[#allocation2 + $0x8c0] sm:$0xff]
  %v5509 = vld [vmem:[#allocation2 + $0x8c8] sm:$0xff]
  %v5510 = vld [vmem:[#allocation2 + $0x8d0] sm:$0xff]
  %v5511 = vld [vmem:[#allocation2 + $0x8d8] sm:$0xff]
  %v5512 = vld [vmem:[#allocation2 + $0x8e0] sm:$0xff]
  %v5513 = vld [vmem:[#allocation2 + $0x8e8] sm:$0xff]
  %v5514 = vld [vmem:[#allocation2 + $0x8f0] sm:$0xff]
  %v5515 = vld [vmem:[#allocation2 + $0x8f8] sm:$0xff]
  %v5516 = vld [vmem:[#allocation2 + $0x900] sm:$0xff]
  %v5517 = vld [vmem:[#allocation2 + $0x908] sm:$0xff]
  %v5518 = vld [vmem:[#allocation2 + $0x910] sm:$0xff]
  %v5519 = vld [vmem:[#allocation2 + $0x918] sm:$0xff]
  %v5520 = vld [vmem:[#allocation2 + $0x920] sm:$0xff]
  %v5521 = vld [vmem:[#allocation2 + $0x928] sm:$0xff]
  %v5522 = vld [vmem:[#allocation2 + $0x930] sm:$0xff]
  %v5523 = vld [vmem:[#allocation2 + $0x938] sm:$0xff]
  %v5524 = vld [vmem:[#allocation2 + $0x940] sm:$0xff]
  %v5525 = vld [vmem:[#allocation2 + $0x948] sm:$0xff]
  %v5526 = vld [vmem:[#allocation2 + $0x950] sm:$0xff]
  %v5527 = vld [vmem:[#allocation2 + $0x958] sm:$0xff]
  %v5528 = vld [vmem:[%s3] sm:$0xff]
  %v5529 = vld [vmem:[%s3 + $0x8] sm:$0xff]
  %v5530 = vld [vmem:[%s3 + $0x10] sm:$0xff]
  %v5531 = vld [vmem:[%s3 + $0x18] sm:$0xff]
  %v5532 = vld [vmem:[%s3 + $0x20] sm:$0xff]
  %v5533 = vld [vmem:[%s3 + $0x28] sm:$0xff]
  %v5534 = vld [vmem:[%s3 + $0x30] sm:$0xff]
  %v5535 = vld [vmem:[%s3 + $0x38] sm:$0xff]
  %v5536 = vld [vmem:[%s3 + $0x40] sm:$0xff]
  %v5537 = vld [vmem:[%s3 + $0x48] sm:$0xff]
  %v5538 = vld [vmem:[%s3 + $0x50] sm:$0xff]
  %v5539 = vld [vmem:[%s3 + $0x58] sm:$0xff]
  %v5540 = vld [vmem:[%s3 + $0x60] sm:$0xff]
  %v5541 = vld [vmem:[%s3 + $0x68] sm:$0xff]
  %v5542 = vld [vmem:[%s3 + $0x70] sm:$0xff]
  %v5543 = vld [vmem:[%s3 + $0x78] sm:$0xff]
  %v5544 = vld [vmem:[%s3 + $0x80] sm:$0xff]
  %v5545 = vld [vmem:[%s3 + $0x88] sm:$0xff]
  %v5546 = vld [vmem:[%s3 + $0x90] sm:$0xff]
  %v5547 = vld [vmem:[%s3 + $0x98] sm:$0xff]
  %v5548 = vld [vmem:[%s3 + $0xa0] sm:$0xff]
  %v5549 = vld [vmem:[%s3 + $0xa8] sm:$0xff]
  %v5550 = vld [vmem:[%s3 + $0xb0] sm:$0xff]
  %v5551 = vld [vmem:[%s3 + $0xb8] sm:$0xff]
  %v5552 = vld [vmem:[%s3 + $0xc0] sm:$0xff]
  %v5553 = vld [vmem:[%s3 + $0xc8] sm:$0xff]
  %v5554 = vld [vmem:[%s3 + $0xd0] sm:$0xff]
  %v5555 = vld [vmem:[%s3 + $0xd8] sm:$0xff]
  %v5556 = vld [vmem:[%s3 + $0xe0] sm:$0xff]
  %v5557 = vld [vmem:[%s3 + $0xe8] sm:$0xff]
  %v5558 = vld [vmem:[%s3 + $0xf0] sm:$0xff]
  %v5559 = vld [vmem:[%s3 + $0xf8] sm:$0xff]
  %v5560 = vld [vmem:[%s3 + $0x100] sm:$0xff]
  %v5561 = vld [vmem:[%s3 + $0x108] sm:$0xff]
  %v5562 = vld [vmem:[%s3 + $0x110] sm:$0xff]
  %v5563 = vld [vmem:[%s3 + $0x118] sm:$0xff]
  %v5564 = vld [vmem:[%s3 + $0x120] sm:$0xff]
  %v5565 = vld [vmem:[%s3 + $0x128] sm:$0xff]
  %v5566 = vld [vmem:[%s3 + $0x130] sm:$0xff]
  %v5567 = vld [vmem:[%s3 + $0x138] sm:$0xff]
  %v5568 = vld [vmem:[%s3 + $0x140] sm:$0xff]
  %v5569 = vld [vmem:[%s3 + $0x148] sm:$0xff]
  %v5570 = vld [vmem:[%s3 + $0x150] sm:$0xff]
  %v5571 = vld [vmem:[%s3 + $0x158] sm:$0xff]
  %v5572 = vld [vmem:[%s3 + $0x160] sm:$0xff]
  %v5573 = vld [vmem:[%s3 + $0x168] sm:$0xff]
  %v5574 = vld [vmem:[%s3 + $0x170] sm:$0xff]
  %v5575 = vld [vmem:[%s3 + $0x178] sm:$0xff]
  %v5576 = vld [vmem:[%s3 + $0x180] sm:$0xff]
  %v5577 = vld [vmem:[%s3 + $0x188] sm:$0xff]
  %v5578 = vld [vmem:[%s3 + $0x190] sm:$0xff]
  %v5579 = vld [vmem:[%s3 + $0x198] sm:$0xff]
  %v5580 = vld [vmem:[%s3 + $0x1a0] sm:$0xff]
  %v5581 = vld [vmem:[%s3 + $0x1a8] sm:$0xff]
  %v5582 = vld [vmem:[%s3 + $0x1b0] sm:$0xff]
  %v5583 = vld [vmem:[%s3 + $0x1b8] sm:$0xff]
  %v5584 = vld [vmem:[%s3 + $0x1c0] sm:$0xff]
  %v5585 = vld [vmem:[%s3 + $0x1c8] sm:$0xff]
  %v5586 = vld [vmem:[%s3 + $0x1d0] sm:$0xff]
  %v5587 = vld [vmem:[%s3 + $0x1d8] sm:$0xff]
  %v5588 = vld [vmem:[%s3 + $0x1e0] sm:$0xff]
  %v5589 = vld [vmem:[%s3 + $0x1e8] sm:$0xff]
  %v5590 = vld [vmem:[%s3 + $0x1f0] sm:$0xff]
  %v5591 = vld [vmem:[%s3 + $0x1f8] sm:$0xff]
  %v5592 = vld [vmem:[%s3 + $0x200] sm:$0xff]
  %v5593 = vld [vmem:[%s3 + $0x208] sm:$0xff]
  %v5594 = vld [vmem:[%s3 + $0x210] sm:$0xff]
  %v5595 = vld [vmem:[%s3 + $0x218] sm:$0xff]
  %v5596 = vld [vmem:[%s3 + $0x220] sm:$0xff]
  %v5597 = vld [vmem:[%s3 + $0x228] sm:$0xff]
  %v5598 = vld [vmem:[%s3 + $0x230] sm:$0xff]
  %v5599 = vld [vmem:[%s3 + $0x238] sm:$0xff]
  %v5600 = vld [vmem:[%s3 + $0x240] sm:$0xff]
  %v5601 = vld [vmem:[%s3 + $0x248] sm:$0xff]
  %v5602 = vld [vmem:[%s3 + $0x250] sm:$0xff]
  %v5603 = vld [vmem:[%s3 + $0x258] sm:$0xff]
  %v5604 = vld [vmem:[%s3 + $0x260] sm:$0xff]
  %v5605 = vld [vmem:[%s3 + $0x268] sm:$0xff]
  %v5606 = vld [vmem:[%s3 + $0x270] sm:$0xff]
  %v5607 = vld [vmem:[%s3 + $0x278] sm:$0xff]
  %v5608 = vld [vmem:[%s3 + $0x280] sm:$0xff]
  %v5609 = vld [vmem:[%s3 + $0x288] sm:$0xff]
  %v5610 = vld [vmem:[%s3 + $0x290] sm:$0xff]
  %v5611 = vld [vmem:[%s3 + $0x298] sm:$0xff]
  %v5612 = vld [vmem:[%s3 + $0x2a0] sm:$0xff]
  %v5613 = vld [vmem:[%s3 + $0x2a8] sm:$0xff]
  %v5614 = vld [vmem:[%s3 + $0x2b0] sm:$0xff]
  %v5615 = vld [vmem:[%s3 + $0x2b8] sm:$0xff]
  %v5616 = vld [vmem:[%s3 + $0x2c0] sm:$0xff]
  %v5617 = vld [vmem:[%s3 + $0x2c8] sm:$0xff]
  %v5618 = vld [vmem:[%s3 + $0x2d0] sm:$0xff]
  %v5619 = vld [vmem:[%s3 + $0x2d8] sm:$0xff]
  %v5620 = vld [vmem:[%s3 + $0x2e0] sm:$0xff]
  %v5621 = vld [vmem:[%s3 + $0x2e8] sm:$0xff]
  %v5622 = vld [vmem:[%s3 + $0x2f0] sm:$0xff]
  %v5623 = vld [vmem:[%s3 + $0x2f8] sm:$0xff]
  %v5624 = vld [vmem:[%s3 + $0x300] sm:$0xff]
  %v5625 = vld [vmem:[%s3 + $0x308] sm:$0xff]
  %v5626 = vld [vmem:[%s3 + $0x310] sm:$0xff]
  %v5627 = vld [vmem:[%s3 + $0x318] sm:$0xff]
  %v5628 = vld [vmem:[%s3 + $0x320] sm:$0xff]
  %v5629 = vld [vmem:[%s3 + $0x328] sm:$0xff]
  %v5630 = vld [vmem:[%s3 + $0x330] sm:$0xff]
  %v5631 = vld [vmem:[%s3 + $0x338] sm:$0xff]
  %v5632 = vld [vmem:[%s3 + $0x340] sm:$0xff]
  %v5633 = vld [vmem:[%s3 + $0x348] sm:$0xff]
  %v5634 = vld [vmem:[%s3 + $0x350] sm:$0xff]
  %v5635 = vld [vmem:[%s3 + $0x358] sm:$0xff]
  %v5636 = vld [vmem:[%s3 + $0x360] sm:$0xff]
  %v5637 = vld [vmem:[%s3 + $0x368] sm:$0xff]
  %v5638 = vld [vmem:[%s3 + $0x370] sm:$0xff]
  %v5639 = vld [vmem:[%s3 + $0x378] sm:$0xff]
  %v5640 = vld [vmem:[%s3 + $0x380] sm:$0xff]
  %v5641 = vld [vmem:[%s3 + $0x388] sm:$0xff]
  %v5642 = vld [vmem:[%s3 + $0x390] sm:$0xff]
  %v5643 = vld [vmem:[%s3 + $0x398] sm:$0xff]
  %v5644 = vld [vmem:[%s3 + $0x3a0] sm:$0xff]
  %v5645 = vld [vmem:[%s3 + $0x3a8] sm:$0xff]
  %v5646 = vld [vmem:[%s3 + $0x3b0] sm:$0xff]
  %v5647 = vld [vmem:[%s3 + $0x3b8] sm:$0xff]
  %v5648 = vld [vmem:[%s3 + $0x3c0] sm:$0xff]
  %v5649 = vld [vmem:[%s3 + $0x3c8] sm:$0xff]
  %v5650 = vld [vmem:[%s3 + $0x3d0] sm:$0xff]
  %v5651 = vld [vmem:[%s3 + $0x3d8] sm:$0xff]
  %v5652 = vld [vmem:[%s3 + $0x3e0] sm:$0xff]
  %v5653 = vld [vmem:[%s3 + $0x3e8] sm:$0xff]
  %v5654 = vld [vmem:[%s3 + $0x3f0] sm:$0xff]
  %v5655 = vld [vmem:[%s3 + $0x3f8] sm:$0xff]
  %v5656 = vld [vmem:[%s3 + $0x400] sm:$0xff]
  %v5657 = vld [vmem:[%s3 + $0x408] sm:$0xff]
  %v5658 = vld [vmem:[%s3 + $0x410] sm:$0xff]
  %v5659 = vld [vmem:[%s3 + $0x418] sm:$0xff]
  %v5660 = vld [vmem:[%s3 + $0x420] sm:$0xff]
  %v5661 = vld [vmem:[%s3 + $0x428] sm:$0xff]
  %v5662 = vld [vmem:[%s3 + $0x430] sm:$0xff]
  %v5663 = vld [vmem:[%s3 + $0x438] sm:$0xff]
  %v5664 = vld [vmem:[%s3 + $0x440] sm:$0xff]
  %v5665 = vld [vmem:[%s3 + $0x448] sm:$0xff]
  %v5666 = vld [vmem:[%s3 + $0x450] sm:$0xff]
  %v5667 = vld [vmem:[%s3 + $0x458] sm:$0xff]
  %v5668 = vld [vmem:[%s3 + $0x460] sm:$0xff]
  %v5669 = vld [vmem:[%s3 + $0x468] sm:$0xff]
  %v5670 = vld [vmem:[%s3 + $0x470] sm:$0xff]
  %v5671 = vld [vmem:[%s3 + $0x478] sm:$0xff]
  %v5672 = vld [vmem:[%s3 + $0x480] sm:$0xff]
  %v5673 = vld [vmem:[%s3 + $0x488] sm:$0xff]
  %v5674 = vld [vmem:[%s3 + $0x490] sm:$0xff]
  %v5675 = vld [vmem:[%s3 + $0x498] sm:$0xff]
  %v5676 = vld [vmem:[%s3 + $0x4a0] sm:$0xff]
  %v5677 = vld [vmem:[%s3 + $0x4a8] sm:$0xff]
  %v5678 = vld [vmem:[%s3 + $0x4b0] sm:$0xff]
  %v5679 = vld [vmem:[%s3 + $0x4b8] sm:$0xff]
  %v5680 = vld [vmem:[%s3 + $0x4c0] sm:$0xff]
  %v5681 = vld [vmem:[%s3 + $0x4c8] sm:$0xff]
  %v5682 = vld [vmem:[%s3 + $0x4d0] sm:$0xff]
  %v5683 = vld [vmem:[%s3 + $0x4d8] sm:$0xff]
  %v5684 = vld [vmem:[%s3 + $0x4e0] sm:$0xff]
  %v5685 = vld [vmem:[%s3 + $0x4e8] sm:$0xff]
  %v5686 = vld [vmem:[%s3 + $0x4f0] sm:$0xff]
  %v5687 = vld [vmem:[%s3 + $0x4f8] sm:$0xff]
  %v5688 = vld [vmem:[%s3 + $0x500] sm:$0xff]
  %v5689 = vld [vmem:[%s3 + $0x508] sm:$0xff]
  %v5690 = vld [vmem:[%s3 + $0x510] sm:$0xff]
  %v5691 = vld [vmem:[%s3 + $0x518] sm:$0xff]
  %v5692 = vld [vmem:[%s3 + $0x520] sm:$0xff]
  %v5693 = vld [vmem:[%s3 + $0x528] sm:$0xff]
  %v5694 = vld [vmem:[%s3 + $0x530] sm:$0xff]
  %v5695 = vld [vmem:[%s3 + $0x538] sm:$0xff]
  %v5696 = vld [vmem:[%s3 + $0x540] sm:$0xff]
  %v5697 = vld [vmem:[%s3 + $0x548] sm:$0xff]
  %v5698 = vld [vmem:[%s3 + $0x550] sm:$0xff]
  %v5699 = vld [vmem:[%s3 + $0x558] sm:$0xff]
  %v5700 = vld [vmem:[%s3 + $0x560] sm:$0xff]
  %v5701 = vld [vmem:[%s3 + $0x568] sm:$0xff]
  %v5702 = vld [vmem:[%s3 + $0x570] sm:$0xff]
  %v5703 = vld [vmem:[%s3 + $0x578] sm:$0xff]
  %v5704 = vld [vmem:[%s3 + $0x580] sm:$0xff]
  %v5705 = vld [vmem:[%s3 + $0x588] sm:$0xff]
  %v5706 = vld [vmem:[%s3 + $0x590] sm:$0xff]
  %v5707 = vld [vmem:[%s3 + $0x598] sm:$0xff]
  %v5708 = vld [vmem:[%s3 + $0x5a0] sm:$0xff]
  %v5709 = vld [vmem:[%s3 + $0x5a8] sm:$0xff]
  %v5710 = vld [vmem:[%s3 + $0x5b0] sm:$0xff]
  %v5711 = vld [vmem:[%s3 + $0x5b8] sm:$0xff]
  %v5712 = vld [vmem:[%s3 + $0x5c0] sm:$0xff]
  %v5713 = vld [vmem:[%s3 + $0x5c8] sm:$0xff]
  %v5714 = vld [vmem:[%s3 + $0x5d0] sm:$0xff]
  %v5715 = vld [vmem:[%s3 + $0x5d8] sm:$0xff]
  %v5716 = vld [vmem:[%s3 + $0x5e0] sm:$0xff]
  %v5717 = vld [vmem:[%s3 + $0x5e8] sm:$0xff]
  %v5718 = vld [vmem:[%s3 + $0x5f0] sm:$0xff]
  %v5719 = vld [vmem:[%s3 + $0x5f8] sm:$0xff]
  %v5720 = vld [vmem:[%s4] sm:$0x1]
  %v5722 = vlaneseq
  %v5723 = vshrl.u32 %v5722, 7
  %v5724 = vsub.s32 0, %v5723
  %v5725 = vrot.slane %v5720, %v5724
  %5727 = vmatprep.subr.mxu0 0.0
  %5728 = vmatpush1.msra.mxu0 %v5528
  %5729 = vmatprep.subr.mxu0 0.0
  %5730 = vmatpush1.msra.mxu0 %v5529
  %5731 = vmatprep.subr.mxu0 0.0
  %5732 = vmatpush1.msra.mxu0 %v5530
  %5733 = vmatprep.subr.mxu0 0.0
  %5734 = vmatpush1.msra.mxu0 %v5531
  %5735 = vmatprep.subr.mxu0 0.0
  %5736 = vmatpush1.msra.mxu0 %v5532
  %5737 = vmatprep.subr.mxu0 0.0
  %5738 = vmatpush1.msra.mxu0 %v5533
  %5739 = vmatprep.subr.mxu0 0.0
  %5740 = vmatpush1.msra.mxu0 %v5534
  %5741 = vmatprep.subr.mxu0 0.0
  %5742 = vmatpush1.msra.mxu0 %v5535
  %5743 = vmatprep.subr.mxu0 0.0
  %5744 = vmatpush1.msra.mxu0 %v5536
  %5745 = vmatprep.subr.mxu0 0.0
  %5746 = vmatpush1.msra.mxu0 %v5537
  %5747 = vmatprep.subr.mxu0 0.0
  %5748 = vmatpush1.msra.mxu0 %v5538
  %5749 = vmatprep.subr.mxu0 0.0
  %5750 = vmatpush1.msra.mxu0 %v5539
  %5751 = vmatprep.subr.mxu0 0.0
  %5752 = vmatpush1.msra.mxu0 %v5540
  %5753 = vmatprep.subr.mxu0 0.0
  %5754 = vmatpush1.msra.mxu0 %v5541
  %5755 = vmatprep.subr.mxu0 0.0
  %5756 = vmatpush1.msra.mxu0 %v5542
  %5757 = vmatprep.subr.mxu0 0.0
  %5758 = vmatpush1.msra.mxu0 %v5543
  %5759 = vmatprep.subr.mxu0 0.0
  %5760 = vmatpush1.msra.mxu0 %v5544
  %5761 = vmatprep.subr.mxu0 0.0
  %5762 = vmatpush1.msra.mxu0 %v5545
  %5763 = vmatprep.subr.mxu0 0.0
  %5764 = vmatpush1.msra.mxu0 %v5546
  %5765 = vmatprep.subr.mxu0 0.0
  %5766 = vmatpush1.msra.mxu0 %v5547
  %5767 = vmatprep.subr.mxu0 0.0
  %5768 = vmatpush1.msra.mxu0 %v5548
  %5769 = vmatprep.subr.mxu0 0.0
  %5770 = vmatpush1.msra.mxu0 %v5549
  %5771 = vmatprep.subr.mxu0 0.0
  %5772 = vmatpush1.msra.mxu0 %v5550
  %5773 = vmatprep.subr.mxu0 0.0
  %5774 = vmatpush1.msra.mxu0 %v5551
  %5775 = vmatprep.subr.mxu0 0.0
  %5776 = vmatpush1.msra.mxu0 %v5552
  %5777 = vmatprep.subr.mxu0 0.0
  %5778 = vmatpush1.msra.mxu0 %v5553
  %5779 = vmatprep.subr.mxu0 0.0
  %5780 = vmatpush1.msra.mxu0 %v5554
  %5781 = vmatprep.subr.mxu0 0.0
  %5782 = vmatpush1.msra.mxu0 %v5555
  %5783 = vmatprep.subr.mxu0 0.0
  %5784 = vmatpush1.msra.mxu0 %v5556
  %5785 = vmatprep.subr.mxu0 0.0
  %5786 = vmatpush1.msra.mxu0 %v5557
  %5787 = vmatprep.subr.mxu0 0.0
  %5788 = vmatpush1.msra.mxu0 %v5558
  %5789 = vmatprep.subr.mxu0 0.0
  %5790 = vmatpush1.msra.mxu0 %v5559
  %5791 = vmatprep.mubr.f32.mxu0 %v5229
  %5792 = vmatmul.mubr.f32.gmra.mrb[0].mxu0 %v5228
  %v5793 = vpop.f32.mrb[0].mxu0
  %v5794 = vadd.f32 %v5725, %v5793
  %v5795 = vpop.f32.mrb[0].mxu0
  %5796 = vmatprep.mubr.f32.mxu0 %v5241
  %5797 = vmatmul.mubr.f32.gmra.mrb[0].mxu0 %v5240
  %v5798 = vpop.f32.mrb[0].mxu0
  %v5799 = vadd.f32 %v5725, %v5798
  %v5800 = vpop.f32.mrb[0].mxu0
  %5801 = vmatprep.mubr.f32.mxu0 %v5253
  %5802 = vmatmul.mubr.f32.gmra.mrb[0].mxu0 %v5252
  %v5803 = vpop.f32.mrb[0].mxu0
  %v5804 = vadd.f32 %v5725, %v5803
  %v5805 = vpop.f32.mrb[0].mxu0
  %5806 = vmatprep.mubr.f32.mxu0 %v5265
  %5807 = vmatmul.mubr.f32.gmra.mrb[0].mxu0 %v5264
  %v5808 = vpop.f32.mrb[0].mxu0
  %v5809 = vadd.f32 %v5725, %v5808
  %v5810 = vpop.f32.mrb[0].mxu0
  %5811 = vmatprep.mubr.f32.mxu0 %v5277
  %5812 = vmatmul.mubr.f32.gmra.mrb[0].mxu0 %v5276
  %v5813 = vpop.f32.mrb[0].mxu0
  %v5814 = vadd.f32 %v5725, %v5813
  %v5815 = vpop.f32.mrb[0].mxu0
  %5816 = vmatprep.mubr.f32.mxu0 %v5289
  %5817 = vmatmul.mubr.f32.gmra.mrb[0].mxu0 %v5288
  %v5818 = vpop.f32.mrb[0].mxu0
  %v5819 = vadd.f32 %v5725, %v5818
  %v5820 = vpop.f32.mrb[0].mxu0
  %5821 = vmatprep.mubr.f32.mxu0 %v5301
  %5822 = vmatmul.mubr.f32.gmra.mrb[0].mxu0 %v5300
  %v5823 = vpop.f32.mrb[0].mxu0
  %v5824 = vadd.f32 %v5725, %v5823
  %v5825 = vpop.f32.mrb[0].mxu0
  %5826 = vmatprep.mubr.f32.mxu0 %v5313
  %5827 = vmatmul.mubr.f32.gmra.mrb[0].mxu0 %v5312
  %v5828 = vpop.f32.mrb[0].mxu0
  %v5829 = vadd.f32 %v5725, %v5828
  %v5830 = vpop.f32.mrb[0].mxu0
  %5831 = vmatprep.mubr.f32.mxu0 %v5325
  %5832 = vmatmul.mubr.f32.gmra.mrb[0].mxu0 %v5324
  %v5833 = vpop.f32.mrb[0].mxu0
  %v5834 = vadd.f32 %v5725, %v5833
  %v5835 = vpop.f32.mrb[0].mxu0
  %5836 = vmatprep.mubr.f32.mxu0 %v5337
  %5837 = vmatmul.mubr.f32.gmra.mrb[0].mxu0 %v5336
  %v5838 = vpop.f32.mrb[0].mxu0
  %v5839 = vadd.f32 %v5725, %v5838
  %v5840 = vpop.f32.mrb[0].mxu0
  %5841 = vmatprep.mubr.f32.mxu0 %v5349
  %5842 = vmatmul.mubr.f32.gmra.mrb[0].mxu0 %v5348
  %v5843 = vpop.f32.mrb[0].mxu0
  %v5844 = vadd.f32 %v5725, %v5843
  %v5845 = vpop.f32.mrb[0].mxu0
  %5846 = vmatprep.mubr.f32.mxu0 %v5361
  %5847 = vmatmul.mubr.f32.gmra.mrb[0].mxu0 %v5360
  %v5848 = vpop.f32.mrb[0].mxu0
  %v5849 = vadd.f32 %v5725, %v5848
  %v5850 = vpop.f32.mrb[0].mxu0
  %5851 = vmatprep.mubr.f32.mxu0 %v5373
  %5852 = vmatmul.mubr.f32.gmra.mrb[0].mxu0 %v5372
  %v5853 = vpop.f32.mrb[0].mxu0
  %v5854 = vadd.f32 %v5725, %v5853
  %v5855 = vpop.f32.mrb[0].mxu0
  %5856 = vmatprep.mubr.f32.mxu0 %v5385
  %5857 = vmatmul.mubr.f32.gmra.mrb[0].mxu0 %v5384
  %v5858 = vpop.f32.mrb[0].mxu0
  %v5859 = vadd.f32 %v5725, %v5858
  %v5860 = vpop.f32.mrb[0].mxu0
  %5861 = vmatprep.mubr.f32.mxu0 %v5397
  %5862 = vmatmul.mubr.f32.gmra.mrb[0].mxu0 %v5396
  %v5863 = vpop.f32.mrb[0].mxu0
  %v5864 = vadd.f32 %v5725, %v5863
  %v5865 = vpop.f32.mrb[0].mxu0
  %5866 = vmatprep.mubr.f32.mxu0 %v5409
  %5867 = vmatmul.mubr.f32.gmra.mrb[0].mxu0 %v5408
  %v5868 = vpop.f32.mrb[0].mxu0
  %v5869 = vadd.f32 %v5725, %v5868
  %v5870 = vpop.f32.mrb[0].mxu0
  %5871 = vmatprep.mubr.f32.mxu0 %v5421
  %5872 = vmatmul.mubr.f32.gmra.mrb[0].mxu0 %v5420
  %v5873 = vpop.f32.mrb[0].mxu0
  %v5874 = vadd.f32 %v5725, %v5873
  %v5875 = vpop.f32.mrb[0].mxu0
  %5876 = vmatprep.mubr.f32.mxu0 %v5433
  %5877 = vmatmul.mubr.f32.gmra.mrb[0].mxu0 %v5432
  %v5878 = vpop.f32.mrb[0].mxu0
  %v5879 = vadd.f32 %v5725, %v5878
  %v5880 = vpop.f32.mrb[0].mxu0
  %5881 = vmatprep.mubr.f32.mxu0 %v5445
  %5882 = vmatmul.mubr.f32.gmra.mrb[0].mxu0 %v5444
  %v5883 = vpop.f32.mrb[0].mxu0
  %v5884 = vadd.f32 %v5725, %v5883
  %v5885 = vpop.f32.mrb[0].mxu0
  %5886 = vmatprep.mubr.f32.mxu0 %v5457
  %5887 = vmatmul.mubr.f32.gmra.mrb[0].mxu0 %v5456
  %v5888 = vpop.f32.mrb[0].mxu0
  %v5889 = vadd.f32 %v5725, %v5888
  %v5890 = vpop.f32.mrb[0].mxu0
  %5891 = vmatprep.mubr.f32.mxu0 %v5469
  %5892 = vmatmul.mubr.f32.gmra.mrb[0].mxu0 %v5468
  %v5893 = vpop.f32.mrb[0].mxu0
  %v5894 = vadd.f32 %v5725, %v5893
  %v5895 = vpop.f32.mrb[0].mxu0
  %5896 = vmatprep.mubr.f32.mxu0 %v5481
  %5897 = vmatmul.mubr.f32.gmra.mrb[0].mxu0 %v5480
  %v5898 = vpop.f32.mrb[0].mxu0
  %v5899 = vadd.f32 %v5725, %v5898
  %v5900 = vpop.f32.mrb[0].mxu0
  %5901 = vmatprep.mubr.f32.mxu0 %v5493
  %5902 = vmatmul.mubr.f32.gmra.mrb[0].mxu0 %v5492
  %v5903 = vpop.f32.mrb[0].mxu0
  %v5904 = vadd.f32 %v5725, %v5903
  %v5905 = vpop.f32.mrb[0].mxu0
  %5906 = vmatprep.mubr.f32.mxu0 %v5505
  %5907 = vmatmul.mubr.f32.gmra.mrb[0].mxu0 %v5504
  %v5908 = vpop.f32.mrb[0].mxu0
  %v5909 = vadd.f32 %v5725, %v5908
  %v5910 = vpop.f32.mrb[0].mxu0
  %5911 = vmatprep.mubr.f32.mxu0 %v5517
  %5912 = vmatmul.mubr.f32.gmra.mrb[0].mxu0 %v5516
  %v5913 = vpop.f32.mrb[0].mxu0
  %v5914 = vadd.f32 %v5725, %v5913
  %v5915 = vpop.f32.mrb[0].mxu0
  %5916 = vdwg.mxu0
  %5917 = vmatprep.subr.mxu0 0.0
  %5918 = vmatpush1.msra.mxu0 %v5560
  %5919 = vmatprep.subr.mxu0 0.0
  %5920 = vmatpush1.msra.mxu0 %v5561
  %5921 = vmatprep.subr.mxu0 0.0
  %5922 = vmatpush1.msra.mxu0 %v5562
  %5923 = vmatprep.subr.mxu0 0.0
  %5924 = vmatpush1.msra.mxu0 %v5563
  %5925 = vmatprep.subr.mxu0 0.0
  %5926 = vmatpush1.msra.mxu0 %v5564
  %5927 = vmatprep.subr.mxu0 0.0
  %5928 = vmatpush1.msra.mxu0 %v5565
  %5929 = vmatprep.subr.mxu0 0.0
  %5930 = vmatpush1.msra.mxu0 %v5566
  %5931 = vmatprep.subr.mxu0 0.0
  %5932 = vmatpush1.msra.mxu0 %v5567
  %5933 = vmatprep.subr.mxu0 0.0
  %5934 = vmatpush1.msra.mxu0 %v5568
  %5935 = vmatprep.subr.mxu0 0.0
  %5936 = vmatpush1.msra.mxu0 %v5569
  %5937 = vmatprep.subr.mxu0 0.0
  %5938 = vmatpush1.msra.mxu0 %v5570
  %5939 = vmatprep.subr.mxu0 0.0
  %5940 = vmatpush1.msra.mxu0 %v5571
  %5941 = vmatprep.subr.mxu0 0.0
  %5942 = vmatpush1.msra.mxu0 %v5572
  %5943 = vmatprep.subr.mxu0 0.0
  %5944 = vmatpush1.msra.mxu0 %v5573
  %5945 = vmatprep.subr.mxu0 0.0
  %5946 = vmatpush1.msra.mxu0 %v5574
  %5947 = vmatprep.subr.mxu0 0.0
  %5948 = vmatpush1.msra.mxu0 %v5575
  %5949 = vmatprep.subr.mxu0 0.0
  %5950 = vmatpush1.msra.mxu0 %v5576
  %5951 = vmatprep.subr.mxu0 0.0
  %5952 = vmatpush1.msra.mxu0 %v5577
  %5953 = vmatprep.subr.mxu0 0.0
  %5954 = vmatpush1.msra.mxu0 %v5578
  %5955 = vmatprep.subr.mxu0 0.0
  %5956 = vmatpush1.msra.mxu0 %v5579
  %5957 = vmatprep.subr.mxu0 0.0
  %5958 = vmatpush1.msra.mxu0 %v5580
  %5959 = vmatprep.subr.mxu0 0.0
  %5960 = vmatpush1.msra.mxu0 %v5581
  %5961 = vmatprep.subr.mxu0 0.0
  %5962 = vmatpush1.msra.mxu0 %v5582
  %5963 = vmatprep.subr.mxu0 0.0
  %5964 = vmatpush1.msra.mxu0 %v5583
  %5965 = vmatprep.subr.mxu0 0.0
  %5966 = vmatpush1.msra.mxu0 %v5584
  %5967 = vmatprep.subr.mxu0 0.0
  %5968 = vmatpush1.msra.mxu0 %v5585
  %5969 = vmatprep.subr.mxu0 0.0
  %5970 = vmatpush1.msra.mxu0 %v5586
  %5971 = vmatprep.subr.mxu0 0.0
  %5972 = vmatpush1.msra.mxu0 %v5587
  %5973 = vmatprep.subr.mxu0 0.0
  %5974 = vmatpush1.msra.mxu0 %v5588
  %5975 = vmatprep.subr.mxu0 0.0
  %5976 = vmatpush1.msra.mxu0 %v5589
  %5977 = vmatprep.subr.mxu0 0.0
  %5978 = vmatpush1.msra.mxu0 %v5590
  %5979 = vmatprep.subr.mxu0 0.0
  %5980 = vmatpush1.msra.mxu0 %v5591
  %5981 = vmatprep.mubr.f32.mxu0 %v5231
  %5982 = vmatmul.mubr.f32.gmra.mrb[0].mxu0 %v5230
  %v5983 = vpop.f32.mrb[0].mxu0
  %v5984 = vadd.f32 %v5794, %v5983
  %v5985 = vpop.f32.mrb[0].mxu0
  %5986 = vmatprep.mubr.f32.mxu0 %v5243
  %5987 = vmatmul.mubr.f32.gmra.mrb[0].mxu0 %v5242
  %v5988 = vpop.f32.mrb[0].mxu0
  %v5989 = vadd.f32 %v5799, %v5988
  %v5990 = vpop.f32.mrb[0].mxu0
  %5991 = vmatprep.mubr.f32.mxu0 %v5255
  %5992 = vmatmul.mubr.f32.gmra.mrb[0].mxu0 %v5254
  %v5993 = vpop.f32.mrb[0].mxu0
  %v5994 = vadd.f32 %v5804, %v5993
  %v5995 = vpop.f32.mrb[0].mxu0
  %5996 = vmatprep.mubr.f32.mxu0 %v5267
  %5997 = vmatmul.mubr.f32.gmra.mrb[0].mxu0 %v5266
  %v5998 = vpop.f32.mrb[0].mxu0
  %v5999 = vadd.f32 %v5809, %v5998
  %v6000 = vpop.f32.mrb[0].mxu0
  %6001 = vmatprep.mubr.f32.mxu0 %v5279
  %6002 = vmatmul.mubr.f32.gmra.mrb[0].mxu0 %v5278
  %v6003 = vpop.f32.mrb[0].mxu0
  %v6004 = vadd.f32 %v5814, %v6003
  %v6005 = vpop.f32.mrb[0].mxu0
  %6006 = vmatprep.mubr.f32.mxu0 %v5291
  %6007 = vmatmul.mubr.f32.gmra.mrb[0].mxu0 %v5290
  %v6008 = vpop.f32.mrb[0].mxu0
  %v6009 = vadd.f32 %v5819, %v6008
  %v6010 = vpop.f32.mrb[0].mxu0
  %6011 = vmatprep.mubr.f32.mxu0 %v5303
  %6012 = vmatmul.mubr.f32.gmra.mrb[0].mxu0 %v5302
  %v6013 = vpop.f32.mrb[0].mxu0
  %v6014 = vadd.f32 %v5824, %v6013
  %v6015 = vpop.f32.mrb[0].mxu0
  %6016 = vmatprep.mubr.f32.mxu0 %v5315
  %6017 = vmatmul.mubr.f32.gmra.mrb[0].mxu0 %v5314
  %v6018 = vpop.f32.mrb[0].mxu0
  %v6019 = vadd.f32 %v5829, %v6018
  %v6020 = vpop.f32.mrb[0].mxu0
  %6021 = vmatprep.mubr.f32.mxu0 %v5327
  %6022 = vmatmul.mubr.f32.gmra.mrb[0].mxu0 %v5326
  %v6023 = vpop.f32.mrb[0].mxu0
  %v6024 = vadd.f32 %v5834, %v6023
  %v6025 = vpop.f32.mrb[0].mxu0
  %6026 = vmatprep.mubr.f32.mxu0 %v5339
  %6027 = vmatmul.mubr.f32.gmra.mrb[0].mxu0 %v5338
  %v6028 = vpop.f32.mrb[0].mxu0
  %v6029 = vadd.f32 %v5839, %v6028
  %v6030 = vpop.f32.mrb[0].mxu0
  %6031 = vmatprep.mubr.f32.mxu0 %v5351
  %6032 = vmatmul.mubr.f32.gmra.mrb[0].mxu0 %v5350
  %v6033 = vpop.f32.mrb[0].mxu0
  %v6034 = vadd.f32 %v5844, %v6033
  %v6035 = vpop.f32.mrb[0].mxu0
  %6036 = vmatprep.mubr.f32.mxu0 %v5363
  %6037 = vmatmul.mubr.f32.gmra.mrb[0].mxu0 %v5362
  %v6038 = vpop.f32.mrb[0].mxu0
  %v6039 = vadd.f32 %v5849, %v6038
  %v6040 = vpop.f32.mrb[0].mxu0
  %6041 = vmatprep.mubr.f32.mxu0 %v5375
  %6042 = vmatmul.mubr.f32.gmra.mrb[0].mxu0 %v5374
  %v6043 = vpop.f32.mrb[0].mxu0
  %v6044 = vadd.f32 %v5854, %v6043
  %v6045 = vpop.f32.mrb[0].mxu0
  %6046 = vmatprep.mubr.f32.mxu0 %v5387
  %6047 = vmatmul.mubr.f32.gmra.mrb[0].mxu0 %v5386
  %v6048 = vpop.f32.mrb[0].mxu0
  %v6049 = vadd.f32 %v5859, %v6048
  %v6050 = vpop.f32.mrb[0].mxu0
  %6051 = vmatprep.mubr.f32.mxu0 %v5399
  %6052 = vmatmul.mubr.f32.gmra.mrb[0].mxu0 %v5398
  %v6053 = vpop.f32.mrb[0].mxu0
  %v6054 = vadd.f32 %v5864, %v6053
  %v6055 = vpop.f32.mrb[0].mxu0
  %6056 = vmatprep.mubr.f32.mxu0 %v5411
  %6057 = vmatmul.mubr.f32.gmra.mrb[0].mxu0 %v5410
  %v6058 = vpop.f32.mrb[0].mxu0
  %v6059 = vadd.f32 %v5869, %v6058
  %v6060 = vpop.f32.mrb[0].mxu0
  %6061 = vmatprep.mubr.f32.mxu0 %v5423
  %6062 = vmatmul.mubr.f32.gmra.mrb[0].mxu0 %v5422
  %v6063 = vpop.f32.mrb[0].mxu0
  %v6064 = vadd.f32 %v5874, %v6063
  %v6065 = vpop.f32.mrb[0].mxu0
  %6066 = vmatprep.mubr.f32.mxu0 %v5435
  %6067 = vmatmul.mubr.f32.gmra.mrb[0].mxu0 %v5434
  %v6068 = vpop.f32.mrb[0].mxu0
  %v6069 = vadd.f32 %v5879, %v6068
  %v6070 = vpop.f32.mrb[0].mxu0
  %6071 = vmatprep.mubr.f32.mxu0 %v5447
  %6072 = vmatmul.mubr.f32.gmra.mrb[0].mxu0 %v5446
  %v6073 = vpop.f32.mrb[0].mxu0
  %v6074 = vadd.f32 %v5884, %v6073
  %v6075 = vpop.f32.mrb[0].mxu0
  %6076 = vmatprep.mubr.f32.mxu0 %v5459
  %6077 = vmatmul.mubr.f32.gmra.mrb[0].mxu0 %v5458
  %v6078 = vpop.f32.mrb[0].mxu0
  %v6079 = vadd.f32 %v5889, %v6078
  %v6080 = vpop.f32.mrb[0].mxu0
  %6081 = vmatprep.mubr.f32.mxu0 %v5471
  %6082 = vmatmul.mubr.f32.gmra.mrb[0].mxu0 %v5470
  %v6083 = vpop.f32.mrb[0].mxu0
  %v6084 = vadd.f32 %v5894, %v6083
  %v6085 = vpop.f32.mrb[0].mxu0
  %6086 = vmatprep.mubr.f32.mxu0 %v5483
  %6087 = vmatmul.mubr.f32.gmra.mrb[0].mxu0 %v5482
  %v6088 = vpop.f32.mrb[0].mxu0
  %v6089 = vadd.f32 %v5899, %v6088
  %v6090 = vpop.f32.mrb[0].mxu0
  %6091 = vmatprep.mubr.f32.mxu0 %v5495
  %6092 = vmatmul.mubr.f32.gmra.mrb[0].mxu0 %v5494
  %v6093 = vpop.f32.mrb[0].mxu0
  %v6094 = vadd.f32 %v5904, %v6093
  %v6095 = vpop.f32.mrb[0].mxu0
  %6096 = vmatprep.mubr.f32.mxu0 %v5507
  %6097 = vmatmul.mubr.f32.gmra.mrb[0].mxu0 %v5506
  %v6098 = vpop.f32.mrb[0].mxu0
  %v6099 = vadd.f32 %v5909, %v6098
  %v6100 = vpop.f32.mrb[0].mxu0
  %6101 = vmatprep.mubr.f32.mxu0 %v5519
  %6102 = vmatmul.mubr.f32.gmra.mrb[0].mxu0 %v5518
  %v6103 = vpop.f32.mrb[0].mxu0
  %v6104 = vadd.f32 %v5914, %v6103
  %v6105 = vpop.f32.mrb[0].mxu0
  %6106 = vdwg.mxu0
  %6107 = vmatprep.subr.mxu0 0.0
  %6108 = vmatpush1.msra.mxu0 %v5592
  %6109 = vmatprep.subr.mxu0 0.0
  %6110 = vmatpush1.msra.mxu0 %v5593
  %6111 = vmatprep.subr.mxu0 0.0
  %6112 = vmatpush1.msra.mxu0 %v5594
  %6113 = vmatprep.subr.mxu0 0.0
  %6114 = vmatpush1.msra.mxu0 %v5595
  %6115 = vmatprep.subr.mxu0 0.0
  %6116 = vmatpush1.msra.mxu0 %v5596
  %6117 = vmatprep.subr.mxu0 0.0
  %6118 = vmatpush1.msra.mxu0 %v5597
  %6119 = vmatprep.subr.mxu0 0.0
  %6120 = vmatpush1.msra.mxu0 %v5598
  %6121 = vmatprep.subr.mxu0 0.0
  %6122 = vmatpush1.msra.mxu0 %v5599
  %6123 = vmatprep.subr.mxu0 0.0
  %6124 = vmatpush1.msra.mxu0 %v5600
  %6125 = vmatprep.subr.mxu0 0.0
  %6126 = vmatpush1.msra.mxu0 %v5601
  %6127 = vmatprep.subr.mxu0 0.0
  %6128 = vmatpush1.msra.mxu0 %v5602
  %6129 = vmatprep.subr.mxu0 0.0
  %6130 = vmatpush1.msra.mxu0 %v5603
  %6131 = vmatprep.subr.mxu0 0.0
  %6132 = vmatpush1.msra.mxu0 %v5604
  %6133 = vmatprep.subr.mxu0 0.0
  %6134 = vmatpush1.msra.mxu0 %v5605
  %6135 = vmatprep.subr.mxu0 0.0
  %6136 = vmatpush1.msra.mxu0 %v5606
  %6137 = vmatprep.subr.mxu0 0.0
  %6138 = vmatpush1.msra.mxu0 %v5607
  %6139 = vmatprep.subr.mxu0 0.0
  %6140 = vmatpush1.msra.mxu0 %v5608
  %6141 = vmatprep.subr.mxu0 0.0
  %6142 = vmatpush1.msra.mxu0 %v5609
  %6143 = vmatprep.subr.mxu0 0.0
  %6144 = vmatpush1.msra.mxu0 %v5610
  %6145 = vmatprep.subr.mxu0 0.0
  %6146 = vmatpush1.msra.mxu0 %v5611
  %6147 = vmatprep.subr.mxu0 0.0
  %6148 = vmatpush1.msra.mxu0 %v5612
  %6149 = vmatprep.subr.mxu0 0.0
  %6150 = vmatpush1.msra.mxu0 %v5613
  %6151 = vmatprep.subr.mxu0 0.0
  %6152 = vmatpush1.msra.mxu0 %v5614
  %6153 = vmatprep.subr.mxu0 0.0
  %6154 = vmatpush1.msra.mxu0 %v5615
  %6155 = vmatprep.subr.mxu0 0.0
  %6156 = vmatpush1.msra.mxu0 %v5616
  %6157 = vmatprep.subr.mxu0 0.0
  %6158 = vmatpush1.msra.mxu0 %v5617
  %6159 = vmatprep.subr.mxu0 0.0
  %6160 = vmatpush1.msra.mxu0 %v5618
  %6161 = vmatprep.subr.mxu0 0.0
  %6162 = vmatpush1.msra.mxu0 %v5619
  %6163 = vmatprep.subr.mxu0 0.0
  %6164 = vmatpush1.msra.mxu0 %v5620
  %6165 = vmatprep.subr.mxu0 0.0
  %6166 = vmatpush1.msra.mxu0 %v5621
  %6167 = vmatprep.subr.mxu0 0.0
  %6168 = vmatpush1.msra.mxu0 %v5622
  %6169 = vmatprep.subr.mxu0 0.0
  %6170 = vmatpush1.msra.mxu0 %v5623
  %6171 = vmatprep.mubr.f32.mxu0 %v5233
  %6172 = vmatmul.mubr.f32.gmra.mrb[0].mxu0 %v5232
  %v6173 = vpop.f32.mrb[0].mxu0
  %v6174 = vadd.f32 %v5984, %v6173
  %v6175 = vpop.f32.mrb[0].mxu0
  %6176 = vmatprep.mubr.f32.mxu0 %v5245
  %6177 = vmatmul.mubr.f32.gmra.mrb[0].mxu0 %v5244
  %v6178 = vpop.f32.mrb[0].mxu0
  %v6179 = vadd.f32 %v5989, %v6178
  %v6180 = vpop.f32.mrb[0].mxu0
  %6181 = vmatprep.mubr.f32.mxu0 %v5257
  %6182 = vmatmul.mubr.f32.gmra.mrb[0].mxu0 %v5256
  %v6183 = vpop.f32.mrb[0].mxu0
  %v6184 = vadd.f32 %v5994, %v6183
  %v6185 = vpop.f32.mrb[0].mxu0
  %6186 = vmatprep.mubr.f32.mxu0 %v5269
  %6187 = vmatmul.mubr.f32.gmra.mrb[0].mxu0 %v5268
  %v6188 = vpop.f32.mrb[0].mxu0
  %v6189 = vadd.f32 %v5999, %v6188
  %v6190 = vpop.f32.mrb[0].mxu0
  %6191 = vmatprep.mubr.f32.mxu0 %v5281
  %6192 = vmatmul.mubr.f32.gmra.mrb[0].mxu0 %v5280
  %v6193 = vpop.f32.mrb[0].mxu0
  %v6194 = vadd.f32 %v6004, %v6193
  %v6195 = vpop.f32.mrb[0].mxu0
  %6196 = vmatprep.mubr.f32.mxu0 %v5293
  %6197 = vmatmul.mubr.f32.gmra.mrb[0].mxu0 %v5292
  %v6198 = vpop.f32.mrb[0].mxu0
  %v6199 = vadd.f32 %v6009, %v6198
  %v6200 = vpop.f32.mrb[0].mxu0
  %6201 = vmatprep.mubr.f32.mxu0 %v5305
  %6202 = vmatmul.mubr.f32.gmra.mrb[0].mxu0 %v5304
  %v6203 = vpop.f32.mrb[0].mxu0
  %v6204 = vadd.f32 %v6014, %v6203
  %v6205 = vpop.f32.mrb[0].mxu0
  %6206 = vmatprep.mubr.f32.mxu0 %v5317
  %6207 = vmatmul.mubr.f32.gmra.mrb[0].mxu0 %v5316
  %v6208 = vpop.f32.mrb[0].mxu0
  %v6209 = vadd.f32 %v6019, %v6208
  %v6210 = vpop.f32.mrb[0].mxu0
  %6211 = vmatprep.mubr.f32.mxu0 %v5329
  %6212 = vmatmul.mubr.f32.gmra.mrb[0].mxu0 %v5328
  %v6213 = vpop.f32.mrb[0].mxu0
  %v6214 = vadd.f32 %v6024, %v6213
  %v6215 = vpop.f32.mrb[0].mxu0
  %6216 = vmatprep.mubr.f32.mxu0 %v5341
  %6217 = vmatmul.mubr.f32.gmra.mrb[0].mxu0 %v5340
  %v6218 = vpop.f32.mrb[0].mxu0
  %v6219 = vadd.f32 %v6029, %v6218
  %v6220 = vpop.f32.mrb[0].mxu0
  %6221 = vmatprep.mubr.f32.mxu0 %v5353
  %6222 = vmatmul.mubr.f32.gmra.mrb[0].mxu0 %v5352
  %v6223 = vpop.f32.mrb[0].mxu0
  %v6224 = vadd.f32 %v6034, %v6223
  %v6225 = vpop.f32.mrb[0].mxu0
  %6226 = vmatprep.mubr.f32.mxu0 %v5365
  %6227 = vmatmul.mubr.f32.gmra.mrb[0].mxu0 %v5364
  %v6228 = vpop.f32.mrb[0].mxu0
  %v6229 = vadd.f32 %v6039, %v6228
  %v6230 = vpop.f32.mrb[0].mxu0
  %6231 = vmatprep.mubr.f32.mxu0 %v5377
  %6232 = vmatmul.mubr.f32.gmra.mrb[0].mxu0 %v5376
  %v6233 = vpop.f32.mrb[0].mxu0
  %v6234 = vadd.f32 %v6044, %v6233
  %v6235 = vpop.f32.mrb[0].mxu0
  %6236 = vmatprep.mubr.f32.mxu0 %v5389
  %6237 = vmatmul.mubr.f32.gmra.mrb[0].mxu0 %v5388
  %v6238 = vpop.f32.mrb[0].mxu0
  %v6239 = vadd.f32 %v6049, %v6238
  %v6240 = vpop.f32.mrb[0].mxu0
  %6241 = vmatprep.mubr.f32.mxu0 %v5401
  %6242 = vmatmul.mubr.f32.gmra.mrb[0].mxu0 %v5400
  %v6243 = vpop.f32.mrb[0].mxu0
  %v6244 = vadd.f32 %v6054, %v6243
  %v6245 = vpop.f32.mrb[0].mxu0
  %6246 = vmatprep.mubr.f32.mxu0 %v5413
  %6247 = vmatmul.mubr.f32.gmra.mrb[0].mxu0 %v5412
  %v6248 = vpop.f32.mrb[0].mxu0
  %v6249 = vadd.f32 %v6059, %v6248
  %v6250 = vpop.f32.mrb[0].mxu0
  %6251 = vmatprep.mubr.f32.mxu0 %v5425
  %6252 = vmatmul.mubr.f32.gmra.mrb[0].mxu0 %v5424
  %v6253 = vpop.f32.mrb[0].mxu0
  %v6254 = vadd.f32 %v6064, %v6253
  %v6255 = vpop.f32.mrb[0].mxu0
  %6256 = vmatprep.mubr.f32.mxu0 %v5437
  %6257 = vmatmul.mubr.f32.gmra.mrb[0].mxu0 %v5436
  %v6258 = vpop.f32.mrb[0].mxu0
  %v6259 = vadd.f32 %v6069, %v6258
  %v6260 = vpop.f32.mrb[0].mxu0
  %6261 = vmatprep.mubr.f32.mxu0 %v5449
  %6262 = vmatmul.mubr.f32.gmra.mrb[0].mxu0 %v5448
  %v6263 = vpop.f32.mrb[0].mxu0
  %v6264 = vadd.f32 %v6074, %v6263
  %v6265 = vpop.f32.mrb[0].mxu0
  %6266 = vmatprep.mubr.f32.mxu0 %v5461
  %6267 = vmatmul.mubr.f32.gmra.mrb[0].mxu0 %v5460
  %v6268 = vpop.f32.mrb[0].mxu0
  %v6269 = vadd.f32 %v6079, %v6268
  %v6270 = vpop.f32.mrb[0].mxu0
  %6271 = vmatprep.mubr.f32.mxu0 %v5473
  %6272 = vmatmul.mubr.f32.gmra.mrb[0].mxu0 %v5472
  %v6273 = vpop.f32.mrb[0].mxu0
  %v6274 = vadd.f32 %v6084, %v6273
  %v6275 = vpop.f32.mrb[0].mxu0
  %6276 = vmatprep.mubr.f32.mxu0 %v5485
  %6277 = vmatmul.mubr.f32.gmra.mrb[0].mxu0 %v5484
  %v6278 = vpop.f32.mrb[0].mxu0
  %v6279 = vadd.f32 %v6089, %v6278
  %v6280 = vpop.f32.mrb[0].mxu0
  %6281 = vmatprep.mubr.f32.mxu0 %v5497
  %6282 = vmatmul.mubr.f32.gmra.mrb[0].mxu0 %v5496
  %v6283 = vpop.f32.mrb[0].mxu0
  %v6284 = vadd.f32 %v6094, %v6283
  %v6285 = vpop.f32.mrb[0].mxu0
  %6286 = vmatprep.mubr.f32.mxu0 %v5509
  %6287 = vmatmul.mubr.f32.gmra.mrb[0].mxu0 %v5508
  %v6288 = vpop.f32.mrb[0].mxu0
  %v6289 = vadd.f32 %v6099, %v6288
  %v6290 = vpop.f32.mrb[0].mxu0
  %6291 = vmatprep.mubr.f32.mxu0 %v5521
  %6292 = vmatmul.mubr.f32.gmra.mrb[0].mxu0 %v5520
  %v6293 = vpop.f32.mrb[0].mxu0
  %v6294 = vadd.f32 %v6104, %v6293
  %v6295 = vpop.f32.mrb[0].mxu0
  %6296 = vdwg.mxu0
  %6297 = vmatprep.subr.mxu0 0.0
  %6298 = vmatpush1.msra.mxu0 %v5624
  %6299 = vmatprep.subr.mxu0 0.0
  %6300 = vmatpush1.msra.mxu0 %v5625
  %6301 = vmatprep.subr.mxu0 0.0
  %6302 = vmatpush1.msra.mxu0 %v5626
  %6303 = vmatprep.subr.mxu0 0.0
  %6304 = vmatpush1.msra.mxu0 %v5627
  %6305 = vmatprep.subr.mxu0 0.0
  %6306 = vmatpush1.msra.mxu0 %v5628
  %6307 = vmatprep.subr.mxu0 0.0
  %6308 = vmatpush1.msra.mxu0 %v5629
  %6309 = vmatprep.subr.mxu0 0.0
  %6310 = vmatpush1.msra.mxu0 %v5630
  %6311 = vmatprep.subr.mxu0 0.0
  %6312 = vmatpush1.msra.mxu0 %v5631
  %6313 = vmatprep.subr.mxu0 0.0
  %6314 = vmatpush1.msra.mxu0 %v5632
  %6315 = vmatprep.subr.mxu0 0.0
  %6316 = vmatpush1.msra.mxu0 %v5633
  %6317 = vmatprep.subr.mxu0 0.0
  %6318 = vmatpush1.msra.mxu0 %v5634
  %6319 = vmatprep.subr.mxu0 0.0
  %6320 = vmatpush1.msra.mxu0 %v5635
  %6321 = vmatprep.subr.mxu0 0.0
  %6322 = vmatpush1.msra.mxu0 %v5636
  %6323 = vmatprep.subr.mxu0 0.0
  %6324 = vmatpush1.msra.mxu0 %v5637
  %6325 = vmatprep.subr.mxu0 0.0
  %6326 = vmatpush1.msra.mxu0 %v5638
  %6327 = vmatprep.subr.mxu0 0.0
  %6328 = vmatpush1.msra.mxu0 %v5639
  %6329 = vmatprep.subr.mxu0 0.0
  %6330 = vmatpush1.msra.mxu0 %v5640
  %6331 = vmatprep.subr.mxu0 0.0
  %6332 = vmatpush1.msra.mxu0 %v5641
  %6333 = vmatprep.subr.mxu0 0.0
  %6334 = vmatpush1.msra.mxu0 %v5642
  %6335 = vmatprep.subr.mxu0 0.0
  %6336 = vmatpush1.msra.mxu0 %v5643
  %6337 = vmatprep.subr.mxu0 0.0
  %6338 = vmatpush1.msra.mxu0 %v5644
  %6339 = vmatprep.subr.mxu0 0.0
  %6340 = vmatpush1.msra.mxu0 %v5645
  %6341 = vmatprep.subr.mxu0 0.0
  %6342 = vmatpush1.msra.mxu0 %v5646
  %6343 = vmatprep.subr.mxu0 0.0
  %6344 = vmatpush1.msra.mxu0 %v5647
  %6345 = vmatprep.subr.mxu0 0.0
  %6346 = vmatpush1.msra.mxu0 %v5648
  %6347 = vmatprep.subr.mxu0 0.0
  %6348 = vmatpush1.msra.mxu0 %v5649
  %6349 = vmatprep.subr.mxu0 0.0
  %6350 = vmatpush1.msra.mxu0 %v5650
  %6351 = vmatprep.subr.mxu0 0.0
  %6352 = vmatpush1.msra.mxu0 %v5651
  %6353 = vmatprep.subr.mxu0 0.0
  %6354 = vmatpush1.msra.mxu0 %v5652
  %6355 = vmatprep.subr.mxu0 0.0
  %6356 = vmatpush1.msra.mxu0 %v5653
  %6357 = vmatprep.subr.mxu0 0.0
  %6358 = vmatpush1.msra.mxu0 %v5654
  %6359 = vmatprep.subr.mxu0 0.0
  %6360 = vmatpush1.msra.mxu0 %v5655
  %6361 = vmatprep.mubr.f32.mxu0 %v5235
  %6362 = vmatmul.mubr.f32.gmra.mrb[0].mxu0 %v5234
  %v6363 = vpop.f32.mrb[0].mxu0
  %v6364 = vadd.f32 %v6174, %v6363
  %v6365 = vpop.f32.mrb[0].mxu0
  %6366 = vmatprep.mubr.f32.mxu0 %v5247
  %6367 = vmatmul.mubr.f32.gmra.mrb[0].mxu0 %v5246
  %v6368 = vpop.f32.mrb[0].mxu0
  %v6369 = vadd.f32 %v6179, %v6368
  %v6370 = vpop.f32.mrb[0].mxu0
  %6371 = vmatprep.mubr.f32.mxu0 %v5259
  %6372 = vmatmul.mubr.f32.gmra.mrb[0].mxu0 %v5258
  %v6373 = vpop.f32.mrb[0].mxu0
  %v6374 = vadd.f32 %v6184, %v6373
  %v6375 = vpop.f32.mrb[0].mxu0
  %6376 = vmatprep.mubr.f32.mxu0 %v5271
  %6377 = vmatmul.mubr.f32.gmra.mrb[0].mxu0 %v5270
  %v6378 = vpop.f32.mrb[0].mxu0
  %v6379 = vadd.f32 %v6189, %v6378
  %v6380 = vpop.f32.mrb[0].mxu0
  %6381 = vmatprep.mubr.f32.mxu0 %v5283
  %6382 = vmatmul.mubr.f32.gmra.mrb[0].mxu0 %v5282
  %v6383 = vpop.f32.mrb[0].mxu0
  %v6384 = vadd.f32 %v6194, %v6383
  %v6385 = vpop.f32.mrb[0].mxu0
  %6386 = vmatprep.mubr.f32.mxu0 %v5295
  %6387 = vmatmul.mubr.f32.gmra.mrb[0].mxu0 %v5294
  %v6388 = vpop.f32.mrb[0].mxu0
  %v6389 = vadd.f32 %v6199, %v6388
  %v6390 = vpop.f32.mrb[0].mxu0
  %6391 = vmatprep.mubr.f32.mxu0 %v5307
  %6392 = vmatmul.mubr.f32.gmra.mrb[0].mxu0 %v5306
  %v6393 = vpop.f32.mrb[0].mxu0
  %v6394 = vadd.f32 %v6204, %v6393
  %v6395 = vpop.f32.mrb[0].mxu0
  %6396 = vmatprep.mubr.f32.mxu0 %v5319
  %6397 = vmatmul.mubr.f32.gmra.mrb[0].mxu0 %v5318
  %v6398 = vpop.f32.mrb[0].mxu0
  %v6399 = vadd.f32 %v6209, %v6398
  %v6400 = vpop.f32.mrb[0].mxu0
  %6401 = vmatprep.mubr.f32.mxu0 %v5331
  %6402 = vmatmul.mubr.f32.gmra.mrb[0].mxu0 %v5330
  %v6403 = vpop.f32.mrb[0].mxu0
  %v6404 = vadd.f32 %v6214, %v6403
  %v6405 = vpop.f32.mrb[0].mxu0
  %6406 = vmatprep.mubr.f32.mxu0 %v5343
  %6407 = vmatmul.mubr.f32.gmra.mrb[0].mxu0 %v5342
  %v6408 = vpop.f32.mrb[0].mxu0
  %v6409 = vadd.f32 %v6219, %v6408
  %v6410 = vpop.f32.mrb[0].mxu0
  %6411 = vmatprep.mubr.f32.mxu0 %v5355
  %6412 = vmatmul.mubr.f32.gmra.mrb[0].mxu0 %v5354
  %v6413 = vpop.f32.mrb[0].mxu0
  %v6414 = vadd.f32 %v6224, %v6413
  %v6415 = vpop.f32.mrb[0].mxu0
  %6416 = vmatprep.mubr.f32.mxu0 %v5367
  %6417 = vmatmul.mubr.f32.gmra.mrb[0].mxu0 %v5366
  %v6418 = vpop.f32.mrb[0].mxu0
  %v6419 = vadd.f32 %v6229, %v6418
  %v6420 = vpop.f32.mrb[0].mxu0
  %6421 = vmatprep.mubr.f32.mxu0 %v5379
  %6422 = vmatmul.mubr.f32.gmra.mrb[0].mxu0 %v5378
  %v6423 = vpop.f32.mrb[0].mxu0
  %v6424 = vadd.f32 %v6234, %v6423
  %v6425 = vpop.f32.mrb[0].mxu0
  %6426 = vmatprep.mubr.f32.mxu0 %v5391
  %6427 = vmatmul.mubr.f32.gmra.mrb[0].mxu0 %v5390
  %v6428 = vpop.f32.mrb[0].mxu0
  %v6429 = vadd.f32 %v6239, %v6428
  %v6430 = vpop.f32.mrb[0].mxu0
  %6431 = vmatprep.mubr.f32.mxu0 %v5403
  %6432 = vmatmul.mubr.f32.gmra.mrb[0].mxu0 %v5402
  %v6433 = vpop.f32.mrb[0].mxu0
  %v6434 = vadd.f32 %v6244, %v6433
  %v6435 = vpop.f32.mrb[0].mxu0
  %6436 = vmatprep.mubr.f32.mxu0 %v5415
  %6437 = vmatmul.mubr.f32.gmra.mrb[0].mxu0 %v5414
  %v6438 = vpop.f32.mrb[0].mxu0
  %v6439 = vadd.f32 %v6249, %v6438
  %v6440 = vpop.f32.mrb[0].mxu0
  %6441 = vmatprep.mubr.f32.mxu0 %v5427
  %6442 = vmatmul.mubr.f32.gmra.mrb[0].mxu0 %v5426
  %v6443 = vpop.f32.mrb[0].mxu0
  %v6444 = vadd.f32 %v6254, %v6443
  %v6445 = vpop.f32.mrb[0].mxu0
  %6446 = vmatprep.mubr.f32.mxu0 %v5439
  %6447 = vmatmul.mubr.f32.gmra.mrb[0].mxu0 %v5438
  %v6448 = vpop.f32.mrb[0].mxu0
  %v6449 = vadd.f32 %v6259, %v6448
  %v6450 = vpop.f32.mrb[0].mxu0
  %6451 = vmatprep.mubr.f32.mxu0 %v5451
  %6452 = vmatmul.mubr.f32.gmra.mrb[0].mxu0 %v5450
  %v6453 = vpop.f32.mrb[0].mxu0
  %v6454 = vadd.f32 %v6264, %v6453
  %v6455 = vpop.f32.mrb[0].mxu0
  %6456 = vmatprep.mubr.f32.mxu0 %v5463
  %6457 = vmatmul.mubr.f32.gmra.mrb[0].mxu0 %v5462
  %v6458 = vpop.f32.mrb[0].mxu0
  %v6459 = vadd.f32 %v6269, %v6458
  %v6460 = vpop.f32.mrb[0].mxu0
  %6461 = vmatprep.mubr.f32.mxu0 %v5475
  %6462 = vmatmul.mubr.f32.gmra.mrb[0].mxu0 %v5474
  %v6463 = vpop.f32.mrb[0].mxu0
  %v6464 = vadd.f32 %v6274, %v6463
  %v6465 = vpop.f32.mrb[0].mxu0
  %6466 = vmatprep.mubr.f32.mxu0 %v5487
  %6467 = vmatmul.mubr.f32.gmra.mrb[0].mxu0 %v5486
  %v6468 = vpop.f32.mrb[0].mxu0
  %v6469 = vadd.f32 %v6279, %v6468
  %v6470 = vpop.f32.mrb[0].mxu0
  %6471 = vmatprep.mubr.f32.mxu0 %v5499
  %6472 = vmatmul.mubr.f32.gmra.mrb[0].mxu0 %v5498
  %v6473 = vpop.f32.mrb[0].mxu0
  %v6474 = vadd.f32 %v6284, %v6473
  %v6475 = vpop.f32.mrb[0].mxu0
  %6476 = vmatprep.mubr.f32.mxu0 %v5511
  %6477 = vmatmul.mubr.f32.gmra.mrb[0].mxu0 %v5510
  %v6478 = vpop.f32.mrb[0].mxu0
  %v6479 = vadd.f32 %v6289, %v6478
  %v6480 = vpop.f32.mrb[0].mxu0
  %6481 = vmatprep.mubr.f32.mxu0 %v5523
  %6482 = vmatmul.mubr.f32.gmra.mrb[0].mxu0 %v5522
  %v6483 = vpop.f32.mrb[0].mxu0
  %v6484 = vadd.f32 %v6294, %v6483
  %v6485 = vpop.f32.mrb[0].mxu0
  %6486 = vdwg.mxu0
  %6487 = vmatprep.subr.mxu0 0.0
  %6488 = vmatpush1.msra.mxu0 %v5656
  %6489 = vmatprep.subr.mxu0 0.0
  %6490 = vmatpush1.msra.mxu0 %v5657
  %6491 = vmatprep.subr.mxu0 0.0
  %6492 = vmatpush1.msra.mxu0 %v5658
  %6493 = vmatprep.subr.mxu0 0.0
  %6494 = vmatpush1.msra.mxu0 %v5659
  %6495 = vmatprep.subr.mxu0 0.0
  %6496 = vmatpush1.msra.mxu0 %v5660
  %6497 = vmatprep.subr.mxu0 0.0
  %6498 = vmatpush1.msra.mxu0 %v5661
  %6499 = vmatprep.subr.mxu0 0.0
  %6500 = vmatpush1.msra.mxu0 %v5662
  %6501 = vmatprep.subr.mxu0 0.0
  %6502 = vmatpush1.msra.mxu0 %v5663
  %6503 = vmatprep.subr.mxu0 0.0
  %6504 = vmatpush1.msra.mxu0 %v5664
  %6505 = vmatprep.subr.mxu0 0.0
  %6506 = vmatpush1.msra.mxu0 %v5665
  %6507 = vmatprep.subr.mxu0 0.0
  %6508 = vmatpush1.msra.mxu0 %v5666
  %6509 = vmatprep.subr.mxu0 0.0
  %6510 = vmatpush1.msra.mxu0 %v5667
  %6511 = vmatprep.subr.mxu0 0.0
  %6512 = vmatpush1.msra.mxu0 %v5668
  %6513 = vmatprep.subr.mxu0 0.0
  %6514 = vmatpush1.msra.mxu0 %v5669
  %6515 = vmatprep.subr.mxu0 0.0
  %6516 = vmatpush1.msra.mxu0 %v5670
  %6517 = vmatprep.subr.mxu0 0.0
  %6518 = vmatpush1.msra.mxu0 %v5671
  %6519 = vmatprep.subr.mxu0 0.0
  %6520 = vmatpush1.msra.mxu0 %v5672
  %6521 = vmatprep.subr.mxu0 0.0
  %6522 = vmatpush1.msra.mxu0 %v5673
  %6523 = vmatprep.subr.mxu0 0.0
  %6524 = vmatpush1.msra.mxu0 %v5674
  %6525 = vmatprep.subr.mxu0 0.0
  %6526 = vmatpush1.msra.mxu0 %v5675
  %6527 = vmatprep.subr.mxu0 0.0
  %6528 = vmatpush1.msra.mxu0 %v5676
  %6529 = vmatprep.subr.mxu0 0.0
  %6530 = vmatpush1.msra.mxu0 %v5677
  %6531 = vmatprep.subr.mxu0 0.0
  %6532 = vmatpush1.msra.mxu0 %v5678
  %6533 = vmatprep.subr.mxu0 0.0
  %6534 = vmatpush1.msra.mxu0 %v5679
  %6535 = vmatprep.subr.mxu0 0.0
  %6536 = vmatpush1.msra.mxu0 %v5680
  %6537 = vmatprep.subr.mxu0 0.0
  %6538 = vmatpush1.msra.mxu0 %v5681
  %6539 = vmatprep.subr.mxu0 0.0
  %6540 = vmatpush1.msra.mxu0 %v5682
  %6541 = vmatprep.subr.mxu0 0.0
  %6542 = vmatpush1.msra.mxu0 %v5683
  %6543 = vmatprep.subr.mxu0 0.0
  %6544 = vmatpush1.msra.mxu0 %v5684
  %6545 = vmatprep.subr.mxu0 0.0
  %6546 = vmatpush1.msra.mxu0 %v5685
  %6547 = vmatprep.subr.mxu0 0.0
  %6548 = vmatpush1.msra.mxu0 %v5686
  %6549 = vmatprep.subr.mxu0 0.0
  %6550 = vmatpush1.msra.mxu0 %v5687
  %6551 = vmatprep.mubr.f32.mxu0 %v5237
  %6552 = vmatmul.mubr.f32.gmra.mrb[0].mxu0 %v5236
  %v6553 = vpop.f32.mrb[0].mxu0
  %v6554 = vadd.f32 %v6364, %v6553
  %v6555 = vpop.f32.mrb[0].mxu0
  %6556 = vmatprep.mubr.f32.mxu0 %v5249
  %6557 = vmatmul.mubr.f32.gmra.mrb[0].mxu0 %v5248
  %v6558 = vpop.f32.mrb[0].mxu0
  %v6559 = vadd.f32 %v6369, %v6558
  %v6560 = vpop.f32.mrb[0].mxu0
  %6561 = vmatprep.mubr.f32.mxu0 %v5261
  %6562 = vmatmul.mubr.f32.gmra.mrb[0].mxu0 %v5260
  %v6563 = vpop.f32.mrb[0].mxu0
  %v6564 = vadd.f32 %v6374, %v6563
  %v6565 = vpop.f32.mrb[0].mxu0
  %6566 = vmatprep.mubr.f32.mxu0 %v5273
  %6567 = vmatmul.mubr.f32.gmra.mrb[0].mxu0 %v5272
  %v6568 = vpop.f32.mrb[0].mxu0
  %v6569 = vadd.f32 %v6379, %v6568
  %v6570 = vpop.f32.mrb[0].mxu0
  %6571 = vmatprep.mubr.f32.mxu0 %v5285
  %6572 = vmatmul.mubr.f32.gmra.mrb[0].mxu0 %v5284
  %v6573 = vpop.f32.mrb[0].mxu0
  %v6574 = vadd.f32 %v6384, %v6573
  %v6575 = vpop.f32.mrb[0].mxu0
  %6576 = vmatprep.mubr.f32.mxu0 %v5297
  %6577 = vmatmul.mubr.f32.gmra.mrb[0].mxu0 %v5296
  %v6578 = vpop.f32.mrb[0].mxu0
  %v6579 = vadd.f32 %v6389, %v6578
  %v6580 = vpop.f32.mrb[0].mxu0
  %6581 = vmatprep.mubr.f32.mxu0 %v5309
  %6582 = vmatmul.mubr.f32.gmra.mrb[0].mxu0 %v5308
  %v6583 = vpop.f32.mrb[0].mxu0
  %v6584 = vadd.f32 %v6394, %v6583
  %v6585 = vpop.f32.mrb[0].mxu0
  %6586 = vmatprep.mubr.f32.mxu0 %v5321
  %6587 = vmatmul.mubr.f32.gmra.mrb[0].mxu0 %v5320
  %v6588 = vpop.f32.mrb[0].mxu0
  %v6589 = vadd.f32 %v6399, %v6588
  %v6590 = vpop.f32.mrb[0].mxu0
  %6591 = vmatprep.mubr.f32.mxu0 %v5333
  %6592 = vmatmul.mubr.f32.gmra.mrb[0].mxu0 %v5332
  %v6593 = vpop.f32.mrb[0].mxu0
  %v6594 = vadd.f32 %v6404, %v6593
  %v6595 = vpop.f32.mrb[0].mxu0
  %6596 = vmatprep.mubr.f32.mxu0 %v5345
  %6597 = vmatmul.mubr.f32.gmra.mrb[0].mxu0 %v5344
  %v6598 = vpop.f32.mrb[0].mxu0
  %v6599 = vadd.f32 %v6409, %v6598
  %v6600 = vpop.f32.mrb[0].mxu0
  %6601 = vmatprep.mubr.f32.mxu0 %v5357
  %6602 = vmatmul.mubr.f32.gmra.mrb[0].mxu0 %v5356
  %v6603 = vpop.f32.mrb[0].mxu0
  %v6604 = vadd.f32 %v6414, %v6603
  %v6605 = vpop.f32.mrb[0].mxu0
  %6606 = vmatprep.mubr.f32.mxu0 %v5369
  %6607 = vmatmul.mubr.f32.gmra.mrb[0].mxu0 %v5368
  %v6608 = vpop.f32.mrb[0].mxu0
  %v6609 = vadd.f32 %v6419, %v6608
  %v6610 = vpop.f32.mrb[0].mxu0
  %6611 = vmatprep.mubr.f32.mxu0 %v5381
  %6612 = vmatmul.mubr.f32.gmra.mrb[0].mxu0 %v5380
  %v6613 = vpop.f32.mrb[0].mxu0
  %v6614 = vadd.f32 %v6424, %v6613
  %v6615 = vpop.f32.mrb[0].mxu0
  %6616 = vmatprep.mubr.f32.mxu0 %v5393
  %6617 = vmatmul.mubr.f32.gmra.mrb[0].mxu0 %v5392
  %v6618 = vpop.f32.mrb[0].mxu0
  %v6619 = vadd.f32 %v6429, %v6618
  %v6620 = vpop.f32.mrb[0].mxu0
  %6621 = vmatprep.mubr.f32.mxu0 %v5405
  %6622 = vmatmul.mubr.f32.gmra.mrb[0].mxu0 %v5404
  %v6623 = vpop.f32.mrb[0].mxu0
  %v6624 = vadd.f32 %v6434, %v6623
  %v6625 = vpop.f32.mrb[0].mxu0
  %6626 = vmatprep.mubr.f32.mxu0 %v5417
  %6627 = vmatmul.mubr.f32.gmra.mrb[0].mxu0 %v5416
  %v6628 = vpop.f32.mrb[0].mxu0
  %v6629 = vadd.f32 %v6439, %v6628
  %v6630 = vpop.f32.mrb[0].mxu0
  %6631 = vmatprep.mubr.f32.mxu0 %v5429
  %6632 = vmatmul.mubr.f32.gmra.mrb[0].mxu0 %v5428
  %v6633 = vpop.f32.mrb[0].mxu0
  %v6634 = vadd.f32 %v6444, %v6633
  %v6635 = vpop.f32.mrb[0].mxu0
  %6636 = vmatprep.mubr.f32.mxu0 %v5441
  %6637 = vmatmul.mubr.f32.gmra.mrb[0].mxu0 %v5440
  %v6638 = vpop.f32.mrb[0].mxu0
  %v6639 = vadd.f32 %v6449, %v6638
  %v6640 = vpop.f32.mrb[0].mxu0
  %6641 = vmatprep.mubr.f32.mxu0 %v5453
  %6642 = vmatmul.mubr.f32.gmra.mrb[0].mxu0 %v5452
  %v6643 = vpop.f32.mrb[0].mxu0
  %v6644 = vadd.f32 %v6454, %v6643
  %v6645 = vpop.f32.mrb[0].mxu0
  %6646 = vmatprep.mubr.f32.mxu0 %v5465
  %6647 = vmatmul.mubr.f32.gmra.mrb[0].mxu0 %v5464
  %v6648 = vpop.f32.mrb[0].mxu0
  %v6649 = vadd.f32 %v6459, %v6648
  %v6650 = vpop.f32.mrb[0].mxu0
  %6651 = vmatprep.mubr.f32.mxu0 %v5477
  %6652 = vmatmul.mubr.f32.gmra.mrb[0].mxu0 %v5476
  %v6653 = vpop.f32.mrb[0].mxu0
  %v6654 = vadd.f32 %v6464, %v6653
  %v6655 = vpop.f32.mrb[0].mxu0
  %6656 = vmatprep.mubr.f32.mxu0 %v5489
  %6657 = vmatmul.mubr.f32.gmra.mrb[0].mxu0 %v5488
  %v6658 = vpop.f32.mrb[0].mxu0
  %v6659 = vadd.f32 %v6469, %v6658
  %v6660 = vpop.f32.mrb[0].mxu0
  %6661 = vmatprep.mubr.f32.mxu0 %v5501
  %6662 = vmatmul.mubr.f32.gmra.mrb[0].mxu0 %v5500
  %v6663 = vpop.f32.mrb[0].mxu0
  %v6664 = vadd.f32 %v6474, %v6663
  %v6665 = vpop.f32.mrb[0].mxu0
  %6666 = vmatprep.mubr.f32.mxu0 %v5513
  %6667 = vmatmul.mubr.f32.gmra.mrb[0].mxu0 %v5512
  %v6668 = vpop.f32.mrb[0].mxu0
  %v6669 = vadd.f32 %v6479, %v6668
  %v6670 = vpop.f32.mrb[0].mxu0
  %6671 = vmatprep.mubr.f32.mxu0 %v5525
  %6672 = vmatmul.mubr.f32.gmra.mrb[0].mxu0 %v5524
  %v6673 = vpop.f32.mrb[0].mxu0
  %v6674 = vadd.f32 %v6484, %v6673
  %v6675 = vpop.f32.mrb[0].mxu0
  %6676 = vdwg.mxu0
  %6677 = vmatprep.subr.mxu0 0.0
  %6678 = vmatpush1.msra.mxu0 %v5688
  %6679 = vmatprep.subr.mxu0 0.0
  %6680 = vmatpush1.msra.mxu0 %v5689
  %6681 = vmatprep.subr.mxu0 0.0
  %6682 = vmatpush1.msra.mxu0 %v5690
  %6683 = vmatprep.subr.mxu0 0.0
  %6684 = vmatpush1.msra.mxu0 %v5691
  %6685 = vmatprep.subr.mxu0 0.0
  %6686 = vmatpush1.msra.mxu0 %v5692
  %6687 = vmatprep.subr.mxu0 0.0
  %6688 = vmatpush1.msra.mxu0 %v5693
  %6689 = vmatprep.subr.mxu0 0.0
  %6690 = vmatpush1.msra.mxu0 %v5694
  %6691 = vmatprep.subr.mxu0 0.0
  %6692 = vmatpush1.msra.mxu0 %v5695
  %6693 = vmatprep.subr.mxu0 0.0
  %6694 = vmatpush1.msra.mxu0 %v5696
  %6695 = vmatprep.subr.mxu0 0.0
  %6696 = vmatpush1.msra.mxu0 %v5697
  %6697 = vmatprep.subr.mxu0 0.0
  %6698 = vmatpush1.msra.mxu0 %v5698
  %6699 = vmatprep.subr.mxu0 0.0
  %6700 = vmatpush1.msra.mxu0 %v5699
  %6701 = vmatprep.subr.mxu0 0.0
  %6702 = vmatpush1.msra.mxu0 %v5700
  %6703 = vmatprep.subr.mxu0 0.0
  %6704 = vmatpush1.msra.mxu0 %v5701
  %6705 = vmatprep.subr.mxu0 0.0
  %6706 = vmatpush1.msra.mxu0 %v5702
  %6707 = vmatprep.subr.mxu0 0.0
  %6708 = vmatpush1.msra.mxu0 %v5703
  %6709 = vmatprep.subr.mxu0 0.0
  %6710 = vmatpush1.msra.mxu0 %v5704
  %6711 = vmatprep.subr.mxu0 0.0
  %6712 = vmatpush1.msra.mxu0 %v5705
  %6713 = vmatprep.subr.mxu0 0.0
  %6714 = vmatpush1.msra.mxu0 %v5706
  %6715 = vmatprep.subr.mxu0 0.0
  %6716 = vmatpush1.msra.mxu0 %v5707
  %6717 = vmatprep.subr.mxu0 0.0
  %6718 = vmatpush1.msra.mxu0 %v5708
  %6719 = vmatprep.subr.mxu0 0.0
  %6720 = vmatpush1.msra.mxu0 %v5709
  %6721 = vmatprep.subr.mxu0 0.0
  %6722 = vmatpush1.msra.mxu0 %v5710
  %6723 = vmatprep.subr.mxu0 0.0
  %6724 = vmatpush1.msra.mxu0 %v5711
  %6725 = vmatprep.subr.mxu0 0.0
  %6726 = vmatpush1.msra.mxu0 %v5712
  %6727 = vmatprep.subr.mxu0 0.0
  %6728 = vmatpush1.msra.mxu0 %v5713
  %6729 = vmatprep.subr.mxu0 0.0
  %6730 = vmatpush1.msra.mxu0 %v5714
  %6731 = vmatprep.subr.mxu0 0.0
  %6732 = vmatpush1.msra.mxu0 %v5715
  %6733 = vmatprep.subr.mxu0 0.0
  %6734 = vmatpush1.msra.mxu0 %v5716
  %6735 = vmatprep.subr.mxu0 0.0
  %6736 = vmatpush1.msra.mxu0 %v5717
  %6737 = vmatprep.subr.mxu0 0.0
  %6738 = vmatpush1.msra.mxu0 %v5718
  %6739 = vmatprep.subr.mxu0 0.0
  %6740 = vmatpush1.msra.mxu0 %v5719
  %6741 = vmatprep.mubr.f32.mxu0 %v5239
  %6742 = vmatmul.mubr.f32.gmra.mrb[0].mxu0 %v5238
  %v6743 = vpop.f32.mrb[0].mxu0
  %v6744 = vadd.f32 %v6554, %v6743
  %v6745 = vpop.f32.mrb[0].mxu0
  %6746 = vmatprep.mubr.f32.mxu0 %v5251
  %6747 = vmatmul.mubr.f32.gmra.mrb[0].mxu0 %v5250
  %v6748 = vpop.f32.mrb[0].mxu0
  %v6749 = vadd.f32 %v6559, %v6748
  %v6750 = vpop.f32.mrb[0].mxu0
  %6751 = vmatprep.mubr.f32.mxu0 %v5263
  %6752 = vmatmul.mubr.f32.gmra.mrb[0].mxu0 %v5262
  %v6753 = vpop.f32.mrb[0].mxu0
  %v6754 = vadd.f32 %v6564, %v6753
  %v6755 = vpop.f32.mrb[0].mxu0
  %6756 = vmatprep.mubr.f32.mxu0 %v5275
  %6757 = vmatmul.mubr.f32.gmra.mrb[0].mxu0 %v5274
  %v6758 = vpop.f32.mrb[0].mxu0
  %v6759 = vadd.f32 %v6569, %v6758
  %v6760 = vpop.f32.mrb[0].mxu0
  %6761 = vmatprep.mubr.f32.mxu0 %v5287
  %6762 = vmatmul.mubr.f32.gmra.mrb[0].mxu0 %v5286
  %v6763 = vpop.f32.mrb[0].mxu0
  %v6764 = vadd.f32 %v6574, %v6763
  %v6765 = vpop.f32.mrb[0].mxu0
  %6766 = vmatprep.mubr.f32.mxu0 %v5299
  %6767 = vmatmul.mubr.f32.gmra.mrb[0].mxu0 %v5298
  %v6768 = vpop.f32.mrb[0].mxu0
  %v6769 = vadd.f32 %v6579, %v6768
  %v6770 = vpop.f32.mrb[0].mxu0
  %6771 = vmatprep.mubr.f32.mxu0 %v5311
  %6772 = vmatmul.mubr.f32.gmra.mrb[0].mxu0 %v5310
  %v6773 = vpop.f32.mrb[0].mxu0
  %v6774 = vadd.f32 %v6584, %v6773
  %v6775 = vpop.f32.mrb[0].mxu0
  %6776 = vmatprep.mubr.f32.mxu0 %v5323
  %6777 = vmatmul.mubr.f32.gmra.mrb[0].mxu0 %v5322
  %v6778 = vpop.f32.mrb[0].mxu0
  %v6779 = vadd.f32 %v6589, %v6778
  %v6780 = vpop.f32.mrb[0].mxu0
  %6781 = vmatprep.mubr.f32.mxu0 %v5335
  %6782 = vmatmul.mubr.f32.gmra.mrb[0].mxu0 %v5334
  %v6783 = vpop.f32.mrb[0].mxu0
  %v6784 = vadd.f32 %v6594, %v6783
  %v6785 = vpop.f32.mrb[0].mxu0
  %6786 = vmatprep.mubr.f32.mxu0 %v5347
  %6787 = vmatmul.mubr.f32.gmra.mrb[0].mxu0 %v5346
  %v6788 = vpop.f32.mrb[0].mxu0
  %v6789 = vadd.f32 %v6599, %v6788
  %v6790 = vpop.f32.mrb[0].mxu0
  %6791 = vmatprep.mubr.f32.mxu0 %v5359
  %6792 = vmatmul.mubr.f32.gmra.mrb[0].mxu0 %v5358
  %v6793 = vpop.f32.mrb[0].mxu0
  %v6794 = vadd.f32 %v6604, %v6793
  %v6795 = vpop.f32.mrb[0].mxu0
  %6796 = vmatprep.mubr.f32.mxu0 %v5371
  %6797 = vmatmul.mubr.f32.gmra.mrb[0].mxu0 %v5370
  %v6798 = vpop.f32.mrb[0].mxu0
  %v6799 = vadd.f32 %v6609, %v6798
  %v6800 = vpop.f32.mrb[0].mxu0
  %6801 = vmatprep.mubr.f32.mxu0 %v5383
  %6802 = vmatmul.mubr.f32.gmra.mrb[0].mxu0 %v5382
  %v6803 = vpop.f32.mrb[0].mxu0
  %v6804 = vadd.f32 %v6614, %v6803
  %v6805 = vpop.f32.mrb[0].mxu0
  %6806 = vmatprep.mubr.f32.mxu0 %v5395
  %6807 = vmatmul.mubr.f32.gmra.mrb[0].mxu0 %v5394
  %v6808 = vpop.f32.mrb[0].mxu0
  %v6809 = vadd.f32 %v6619, %v6808
  %v6810 = vpop.f32.mrb[0].mxu0
  %6811 = vmatprep.mubr.f32.mxu0 %v5407
  %6812 = vmatmul.mubr.f32.gmra.mrb[0].mxu0 %v5406
  %v6813 = vpop.f32.mrb[0].mxu0
  %v6814 = vadd.f32 %v6624, %v6813
  %v6815 = vpop.f32.mrb[0].mxu0
  %6816 = vmatprep.mubr.f32.mxu0 %v5419
  %6817 = vmatmul.mubr.f32.gmra.mrb[0].mxu0 %v5418
  %v6818 = vpop.f32.mrb[0].mxu0
  %v6819 = vadd.f32 %v6629, %v6818
  %v6820 = vpop.f32.mrb[0].mxu0
  %6821 = vmatprep.mubr.f32.mxu0 %v5431
  %6822 = vmatmul.mubr.f32.gmra.mrb[0].mxu0 %v5430
  %v6823 = vpop.f32.mrb[0].mxu0
  %v6824 = vadd.f32 %v6634, %v6823
  %v6825 = vpop.f32.mrb[0].mxu0
  %6826 = vmatprep.mubr.f32.mxu0 %v5443
  %6827 = vmatmul.mubr.f32.gmra.mrb[0].mxu0 %v5442
  %v6828 = vpop.f32.mrb[0].mxu0
  %v6829 = vadd.f32 %v6639, %v6828
  %v6830 = vpop.f32.mrb[0].mxu0
  %6831 = vmatprep.mubr.f32.mxu0 %v5455
  %6832 = vmatmul.mubr.f32.gmra.mrb[0].mxu0 %v5454
  %v6833 = vpop.f32.mrb[0].mxu0
  %v6834 = vadd.f32 %v6644, %v6833
  %v6835 = vpop.f32.mrb[0].mxu0
  %6836 = vmatprep.mubr.f32.mxu0 %v5467
  %6837 = vmatmul.mubr.f32.gmra.mrb[0].mxu0 %v5466
  %v6838 = vpop.f32.mrb[0].mxu0
  %v6839 = vadd.f32 %v6649, %v6838
  %v6840 = vpop.f32.mrb[0].mxu0
  %6841 = vmatprep.mubr.f32.mxu0 %v5479
  %6842 = vmatmul.mubr.f32.gmra.mrb[0].mxu0 %v5478
  %v6843 = vpop.f32.mrb[0].mxu0
  %v6844 = vadd.f32 %v6654, %v6843
  %v6845 = vpop.f32.mrb[0].mxu0
  %6846 = vmatprep.mubr.f32.mxu0 %v5491
  %6847 = vmatmul.mubr.f32.gmra.mrb[0].mxu0 %v5490
  %v6848 = vpop.f32.mrb[0].mxu0
  %v6849 = vadd.f32 %v6659, %v6848
  %v6850 = vpop.f32.mrb[0].mxu0
  %6851 = vmatprep.mubr.f32.mxu0 %v5503
  %6852 = vmatmul.mubr.f32.gmra.mrb[0].mxu0 %v5502
  %v6853 = vpop.f32.mrb[0].mxu0
  %v6854 = vadd.f32 %v6664, %v6853
  %v6855 = vpop.f32.mrb[0].mxu0
  %6856 = vmatprep.mubr.f32.mxu0 %v5515
  %6857 = vmatmul.mubr.f32.gmra.mrb[0].mxu0 %v5514
  %v6858 = vpop.f32.mrb[0].mxu0
  %v6859 = vadd.f32 %v6669, %v6858
  %v6860 = vpop.f32.mrb[0].mxu0
  %6861 = vmatprep.mubr.f32.mxu0 %v5527
  %6862 = vmatmul.mubr.f32.gmra.mrb[0].mxu0 %v5526
  %v6863 = vpop.f32.mrb[0].mxu0
  %v6864 = vadd.f32 %v6674, %v6863
  %v6865 = vpop.f32.mrb[0].mxu0
  %6866 = vdwg.mxu0
  %6867 = vst [vmem:[%s5] sm:$0xff] %v6744
  %6868 = vst [vmem:[%s5 + $0x8] sm:$0xff] %v6749
  %6869 = vst [vmem:[%s5 + $0x10] sm:$0xff] %v6754
  %6870 = vst [vmem:[%s5 + $0x18] sm:$0xff] %v6759
  %6871 = vst [vmem:[%s5 + $0x20] sm:$0xff] %v6764
  %6872 = vst [vmem:[%s5 + $0x28] sm:$0xff] %v6769
  %6873 = vst [vmem:[%s5 + $0x30] sm:$0xff] %v6774
  %6874 = vst [vmem:[%s5 + $0x38] sm:$0xff] %v6779
  %6875 = vst [vmem:[%s5 + $0x40] sm:$0xff] %v6784
  %6876 = vst [vmem:[%s5 + $0x48] sm:$0xff] %v6789
  %6877 = vst [vmem:[%s5 + $0x50] sm:$0xff] %v6794
  %6878 = vst [vmem:[%s5 + $0x58] sm:$0xff] %v6799
  %6879 = vst [vmem:[%s5 + $0x60] sm:$0xff] %v6804
  %6880 = vst [vmem:[%s5 + $0x68] sm:$0xff] %v6809
  %6881 = vst [vmem:[%s5 + $0x70] sm:$0xff] %v6814
  %6882 = vst [vmem:[%s5 + $0x78] sm:$0xff] %v6819
  %6883 = vst [vmem:[%s5 + $0x80] sm:$0xff] %v6824
  %6884 = vst [vmem:[%s5 + $0x88] sm:$0xff] %v6829
  %6885 = vst [vmem:[%s5 + $0x90] sm:$0xff] %v6834
  %6886 = vst [vmem:[%s5 + $0x98] sm:$0xff] %v6839
  %6887 = vst [vmem:[%s5 + $0xa0] sm:$0xff] %v6844
  %6888 = vst [vmem:[%s5 + $0xa8] sm:$0xff] %v6849
  %6889 = vst [vmem:[%s5 + $0xb0] sm:$0xff] %v6854
  %6890 = vst [vmem:[%s5 + $0xb8] sm:$0xff] %v6859
  %6891 = vst [vmem:[%s5 + $0xc0] sm:$0xff] %v6864
  %v6892 = vld [vmem:[%s5] sm:$0xff]
  %v6893 = vadd.f32 %v6892, 0.0
  %v6894 = vsel %vm3139, 0.0, %v6893
  %vm6895 = vcmp.gt.f32.partialorder %v6894, 1.3
  %v6896 = vsel %vm6895, 1, 0
  %v6897 = vcvt.s32.f32 %v6896
  %6898 = vst [vmem:[%s5] sm:$0xff] %v6897
  %v6899 = vld [vmem:[%s5 + $0x8] sm:$0xff]
  %v6900 = vmul.f32 %v6894, 0.8
  %v6901 = vadd.f32 %v6900, %v6899
  %v6902 = vsel %vm6895, 0.0, %v6901
  %vm6903 = vcmp.gt.f32.partialorder %v6902, 1.3
  %v6904 = vsel %vm6903, 1, 0
  %v6905 = vcvt.s32.f32 %v6904
  %6906 = vst [vmem:[%s5 + $0x8] sm:$0xff] %v6905
  %v6907 = vld [vmem:[%s5 + $0x10] sm:$0xff]
  %v6908 = vmul.f32 %v6902, 0.8
  %v6909 = vadd.f32 %v6908, %v6907
  %v6910 = vsel %vm6903, 0.0, %v6909
  %vm6911 = vcmp.gt.f32.partialorder %v6910, 1.3
  %v6912 = vsel %vm6911, 1, 0
  %v6913 = vcvt.s32.f32 %v6912
  %6914 = vst [vmem:[%s5 + $0x10] sm:$0xff] %v6913
  %v6915 = vld [vmem:[%s5 + $0x18] sm:$0xff]
  %v6916 = vmul.f32 %v6910, 0.8
  %v6917 = vadd.f32 %v6916, %v6915
  %v6918 = vsel %vm6911, 0.0, %v6917
  %vm6919 = vcmp.gt.f32.partialorder %v6918, 1.3
  %v6920 = vsel %vm6919, 1, 0
  %v6921 = vcvt.s32.f32 %v6920
  %6922 = vst [vmem:[%s5 + $0x18] sm:$0xff] %v6921
  %v6923 = vld [vmem:[%s5 + $0x20] sm:$0xff]
  %v6924 = vmul.f32 %v6918, 0.8
  %v6925 = vadd.f32 %v6924, %v6923
  %v6926 = vsel %vm6919, 0.0, %v6925
  %vm6927 = vcmp.gt.f32.partialorder %v6926, 1.3
  %v6928 = vsel %vm6927, 1, 0
  %v6929 = vcvt.s32.f32 %v6928
  %6930 = vst [vmem:[%s5 + $0x20] sm:$0xff] %v6929
  %v6931 = vld [vmem:[%s5 + $0x28] sm:$0xff]
  %v6932 = vmul.f32 %v6926, 0.8
  %v6933 = vadd.f32 %v6932, %v6931
  %v6934 = vsel %vm6927, 0.0, %v6933
  %vm6935 = vcmp.gt.f32.partialorder %v6934, 1.3
  %v6936 = vsel %vm6935, 1, 0
  %v6937 = vcvt.s32.f32 %v6936
  %6938 = vst [vmem:[%s5 + $0x28] sm:$0xff] %v6937
  %v6939 = vld [vmem:[%s5 + $0x30] sm:$0xff]
  %v6940 = vmul.f32 %v6934, 0.8
  %v6941 = vadd.f32 %v6940, %v6939
  %v6942 = vsel %vm6935, 0.0, %v6941
  %vm6943 = vcmp.gt.f32.partialorder %v6942, 1.3
  %v6944 = vsel %vm6943, 1, 0
  %v6945 = vcvt.s32.f32 %v6944
  %6946 = vst [vmem:[%s5 + $0x30] sm:$0xff] %v6945
  %v6947 = vld [vmem:[%s5 + $0x38] sm:$0xff]
  %v6948 = vmul.f32 %v6942, 0.8
  %v6949 = vadd.f32 %v6948, %v6947
  %v6950 = vsel %vm6943, 0.0, %v6949
  %vm6951 = vcmp.gt.f32.partialorder %v6950, 1.3
  %v6952 = vsel %vm6951, 1, 0
  %v6953 = vcvt.s32.f32 %v6952
  %6954 = vst [vmem:[%s5 + $0x38] sm:$0xff] %v6953
  %v6955 = vld [vmem:[%s5 + $0x40] sm:$0xff]
  %v6956 = vmul.f32 %v6950, 0.8
  %v6957 = vadd.f32 %v6956, %v6955
  %v6958 = vsel %vm6951, 0.0, %v6957
  %vm6959 = vcmp.gt.f32.partialorder %v6958, 1.3
  %v6960 = vsel %vm6959, 1, 0
  %v6961 = vcvt.s32.f32 %v6960
  %6962 = vst [vmem:[%s5 + $0x40] sm:$0xff] %v6961
  %v6963 = vld [vmem:[%s5 + $0x48] sm:$0xff]
  %v6964 = vmul.f32 %v6958, 0.8
  %v6965 = vadd.f32 %v6964, %v6963
  %v6966 = vsel %vm6959, 0.0, %v6965
  %vm6967 = vcmp.gt.f32.partialorder %v6966, 1.3
  %v6968 = vsel %vm6967, 1, 0
  %v6969 = vcvt.s32.f32 %v6968
  %6970 = vst [vmem:[%s5 + $0x48] sm:$0xff] %v6969
  %v6971 = vld [vmem:[%s5 + $0x50] sm:$0xff]
  %v6972 = vmul.f32 %v6966, 0.8
  %v6973 = vadd.f32 %v6972, %v6971
  %v6974 = vsel %vm6967, 0.0, %v6973
  %vm6975 = vcmp.gt.f32.partialorder %v6974, 1.3
  %v6976 = vsel %vm6975, 1, 0
  %v6977 = vcvt.s32.f32 %v6976
  %6978 = vst [vmem:[%s5 + $0x50] sm:$0xff] %v6977
  %v6979 = vld [vmem:[%s5 + $0x58] sm:$0xff]
  %v6980 = vmul.f32 %v6974, 0.8
  %v6981 = vadd.f32 %v6980, %v6979
  %v6982 = vsel %vm6975, 0.0, %v6981
  %vm6983 = vcmp.gt.f32.partialorder %v6982, 1.3
  %v6984 = vsel %vm6983, 1, 0
  %v6985 = vcvt.s32.f32 %v6984
  %6986 = vst [vmem:[%s5 + $0x58] sm:$0xff] %v6985
  %v6987 = vld [vmem:[%s5 + $0x60] sm:$0xff]
  %v6988 = vmul.f32 %v6982, 0.8
  %v6989 = vadd.f32 %v6988, %v6987
  %v6990 = vsel %vm6983, 0.0, %v6989
  %vm6991 = vcmp.gt.f32.partialorder %v6990, 1.3
  %v6992 = vsel %vm6991, 1, 0
  %v6993 = vcvt.s32.f32 %v6992
  %6994 = vst [vmem:[%s5 + $0x60] sm:$0xff] %v6993
  %v6995 = vld [vmem:[%s5 + $0x68] sm:$0xff]
  %v6996 = vmul.f32 %v6990, 0.8
  %v6997 = vadd.f32 %v6996, %v6995
  %v6998 = vsel %vm6991, 0.0, %v6997
  %vm6999 = vcmp.gt.f32.partialorder %v6998, 1.3
  %v7000 = vsel %vm6999, 1, 0
  %v7001 = vcvt.s32.f32 %v7000
  %7002 = vst [vmem:[%s5 + $0x68] sm:$0xff] %v7001
  %v7003 = vld [vmem:[%s5 + $0x70] sm:$0xff]
  %v7004 = vmul.f32 %v6998, 0.8
  %v7005 = vadd.f32 %v7004, %v7003
  %v7006 = vsel %vm6999, 0.0, %v7005
  %vm7007 = vcmp.gt.f32.partialorder %v7006, 1.3
  %v7008 = vsel %vm7007, 1, 0
  %v7009 = vcvt.s32.f32 %v7008
  %7010 = vst [vmem:[%s5 + $0x70] sm:$0xff] %v7009
  %v7011 = vld [vmem:[%s5 + $0x78] sm:$0xff]
  %v7012 = vmul.f32 %v7006, 0.8
  %v7013 = vadd.f32 %v7012, %v7011
  %v7014 = vsel %vm7007, 0.0, %v7013
  %vm7015 = vcmp.gt.f32.partialorder %v7014, 1.3
  %v7016 = vsel %vm7015, 1, 0
  %v7017 = vcvt.s32.f32 %v7016
  %7018 = vst [vmem:[%s5 + $0x78] sm:$0xff] %v7017
  %v7019 = vld [vmem:[%s5 + $0x80] sm:$0xff]
  %v7020 = vmul.f32 %v7014, 0.8
  %v7021 = vadd.f32 %v7020, %v7019
  %v7022 = vsel %vm7015, 0.0, %v7021
  %vm7023 = vcmp.gt.f32.partialorder %v7022, 1.3
  %v7024 = vsel %vm7023, 1, 0
  %v7025 = vcvt.s32.f32 %v7024
  %7026 = vst [vmem:[%s5 + $0x80] sm:$0xff] %v7025
  %v7027 = vld [vmem:[%s5 + $0x88] sm:$0xff]
  %v7028 = vmul.f32 %v7022, 0.8
  %v7029 = vadd.f32 %v7028, %v7027
  %v7030 = vsel %vm7023, 0.0, %v7029
  %vm7031 = vcmp.gt.f32.partialorder %v7030, 1.3
  %v7032 = vsel %vm7031, 1, 0
  %v7033 = vcvt.s32.f32 %v7032
  %7034 = vst [vmem:[%s5 + $0x88] sm:$0xff] %v7033
  %v7035 = vld [vmem:[%s5 + $0x90] sm:$0xff]
  %v7036 = vmul.f32 %v7030, 0.8
  %v7037 = vadd.f32 %v7036, %v7035
  %v7038 = vsel %vm7031, 0.0, %v7037
  %vm7039 = vcmp.gt.f32.partialorder %v7038, 1.3
  %v7040 = vsel %vm7039, 1, 0
  %v7041 = vcvt.s32.f32 %v7040
  %7042 = vst [vmem:[%s5 + $0x90] sm:$0xff] %v7041
  %v7043 = vld [vmem:[%s5 + $0x98] sm:$0xff]
  %v7044 = vmul.f32 %v7038, 0.8
  %v7045 = vadd.f32 %v7044, %v7043
  %v7046 = vsel %vm7039, 0.0, %v7045
  %vm7047 = vcmp.gt.f32.partialorder %v7046, 1.3
  %v7048 = vsel %vm7047, 1, 0
  %v7049 = vcvt.s32.f32 %v7048
  %7050 = vst [vmem:[%s5 + $0x98] sm:$0xff] %v7049
  %v7051 = vld [vmem:[%s5 + $0xa0] sm:$0xff]
  %v7052 = vmul.f32 %v7046, 0.8
  %v7053 = vadd.f32 %v7052, %v7051
  %v7054 = vsel %vm7047, 0.0, %v7053
  %vm7055 = vcmp.gt.f32.partialorder %v7054, 1.3
  %v7056 = vsel %vm7055, 1, 0
  %v7057 = vcvt.s32.f32 %v7056
  %7058 = vst [vmem:[%s5 + $0xa0] sm:$0xff] %v7057
  %v7059 = vld [vmem:[%s5 + $0xa8] sm:$0xff]
  %v7060 = vmul.f32 %v7054, 0.8
  %v7061 = vadd.f32 %v7060, %v7059
  %v7062 = vsel %vm7055, 0.0, %v7061
  %vm7063 = vcmp.gt.f32.partialorder %v7062, 1.3
  %v7064 = vsel %vm7063, 1, 0
  %v7065 = vcvt.s32.f32 %v7064
  %7066 = vst [vmem:[%s5 + $0xa8] sm:$0xff] %v7065
  %v7067 = vld [vmem:[%s5 + $0xb0] sm:$0xff]
  %v7068 = vmul.f32 %v7062, 0.8
  %v7069 = vadd.f32 %v7068, %v7067
  %v7070 = vsel %vm7063, 0.0, %v7069
  %vm7071 = vcmp.gt.f32.partialorder %v7070, 1.3
  %v7072 = vsel %vm7071, 1, 0
  %v7073 = vcvt.s32.f32 %v7072
  %7074 = vst [vmem:[%s5 + $0xb0] sm:$0xff] %v7073
  %v7075 = vld [vmem:[%s5 + $0xb8] sm:$0xff]
  %v7076 = vmul.f32 %v7070, 0.8
  %v7077 = vadd.f32 %v7076, %v7075
  %v7078 = vsel %vm7071, 0.0, %v7077
  %vm7079 = vcmp.gt.f32.partialorder %v7078, 1.3
  %v7080 = vsel %vm7079, 1, 0
  %v7081 = vcvt.s32.f32 %v7080
  %7082 = vst [vmem:[%s5 + $0xb8] sm:$0xff] %v7081
  %v7083 = vld [vmem:[%s5 + $0xc0] sm:$0xff]
  %v7084 = vmul.f32 %v7078, 0.8
  %v7085 = vadd.f32 %v7084, %v7083
  %v7086 = vsel %vm7079, 0.0, %v7085
  %vm7087 = vcmp.gt.f32.partialorder %v7086, 1.3
  %v7088 = vsel %vm7087, 1, 0
  %v7089 = vcvt.s32.f32 %v7088
  %7090 = vst [vmem:[%s5 + $0xc0] sm:$0xff] %v7089
  // Predicated region
  $region22: #{snn_forward.1} parent=0 // pred_check
    _
  $region23: #{snn_forward.1} parent=0 // pred_check_branch
    %7092 = sbr.rel (0) target = $region25
  $region24: #{snn_forward.1} parent=0 // pred_region
    _
  $region25: #{snn_forward.1} parent=0 // pred_fallthru
    _
  // Predicated region
  $region26: #{snn_forward.1} parent=0 // pred_check
    _
  $region27: #{snn_forward.1} parent=0 // pred_check_branch
    %7094 = sbr.rel (0) target = $region29
  $region28: #{snn_forward.1} parent=0 // pred_region
    _
  $region29: #{snn_forward.1} parent=0 // pred_fallthru
    _

</llo_original>
